<compile_context>
chip_gen: v7x
topology: tpu7x:2x2x1
jax: 0.10.0
libtpu: 0.0.40
codegen_flags: <defaults>
</compile_context>

<pallas_src>
import jax
import jax.numpy as jnp
from jax.experimental import pallas as pl
from jax.experimental.pallas import tpu as pltpu

_SMALL = 1e-10
_KSIZE = 3          # kernel_size=3, stride=1, padding=1 (module defaults)
_LANES = 128        # lane width / MXU column width — channel padding target
_W_OFF = 16         # interior offset on the sublane (W) axis -> bf16-aligned stores
_H_OFF = 1          # interior offset on the (untiled) H axis


def _resnet_layer_kernel(x_ref, w1_ref, b1_ref, w2_ref, b2_ref, o_ref, pad_ref):
    """One batch image per grid step (NHWC, channels on the 128-lane axis).

       x_ref   (1, H, W, C)              activation
       w?_ref  (9*C, C)   bf16           PRE-NORMALIZED weights, rows=(kh,kw,cin), cols=cout
       b?_ref  (1, C)     f32            bias
       o_ref   (1, H, W, C)              output
       pad_ref (1, H+2, W_OFF+W+1, C)    bf16 scratch: zero halo frame + interior
    """
    _, H, W, C = x_ref.shape
    M = H * W
    f32 = jnp.float32
    bf16 = jnp.bfloat16

    def elu(t):
        # ELU(alpha=1): x if x > 0 else exp(x) - 1
        return jnp.where(t > 0, t, jnp.exp(jnp.minimum(t, 0.0)) - 1.0)

    # ---- zero ONLY the halo frame that the taps actually read ----------------
    # Done every grid step on purpose: a pl.when(program_id==0) init would leave
    # the second TensorCore (megacore sharding) reading garbage.
    lo = _W_OFF - 1                      # leftmost column any tap reads
    hi = _W_OFF + W                      # rightmost column any tap reads
    zrow = jnp.zeros((1, 1, W + 2, C), bf16)
    pad_ref[:, 0:1, lo:hi + 1, :] = zrow                   # top halo row
    pad_ref[:, H + 1:H + 2, lo:hi + 1, :] = zrow           # bottom halo row
    zcol = jnp.zeros((1, H + 2, 1, C), bf16)
    pad_ref[:, :, lo:lo + 1, :] = zcol                     # left halo column
    pad_ref[:, :, hi:hi + 1, :] = zcol                     # right halo column

    def conv3x3(w_ref, b):
        # Implicit GEMM with kw-concatenated im2col: 3 dots of (M, 3C) x (3C, C)
        # instead of 9 of (M, C) x (C, C) — fills the 256-deep v6e/v7x MXU and
        # cuts vmatmul issue/drain overhead ~3x. Pure dot-accumulate chain;
        # bias only after the loop (MRB-friendly on v7x).
        acc = jnp.zeros((M, C), f32)
        for kh in range(_KSIZE):
            parts = []
            for kw in range(_KSIZE):
                ws = _W_OFF - 1 + kw
                parts.append(pad_ref[:, kh:kh + H, ws:ws + W, :].reshape(M, C))
            patch = jnp.concatenate(parts, axis=-1)                 # (M, 3C) bf16
            wk = w_ref[kh * _KSIZE * C:(kh + 1) * _KSIZE * C, :]    # (3C, C) bf16
            acc = acc + jnp.dot(patch, wk, preferred_element_type=f32)
        return acc + b

    # ---- c1 = ELU(conv1(ELU(x))) ---------------------------------------------
    pad_ref[:, _H_OFF:_H_OFF + H, _W_OFF:_W_OFF + W, :] = (
        elu(x_ref[...].astype(f32)).astype(bf16))
    c1 = elu(conv3x3(w1_ref, b1_ref[...].astype(f32)))

    # TODO(synk): dropout between the convs is omitted — module default is
    # dropout_p=0.0 (identity), and eval-mode dropout is identity anyway.

    # ---- c2 = conv2(c1) --------------------------------------------------------
    pad_ref[:, _H_OFF:_H_OFF + H, _W_OFF:_W_OFF + W, :] = (
        c1.astype(bf16).reshape(1, H, W, C))
    c2 = conv3x3(w2_ref, b2_ref[...].astype(f32))

    # ---- residual: re-read x (still resident in the pipelined VMEM input
    # buffer) instead of keeping it live across all the matmuls.
    o_ref[...] = (x_ref[...].astype(f32) + c2.reshape(1, H, W, C)).astype(o_ref.dtype)


# ----------------------------- wrapper ---------------------------------------

def _round_up(x, m):
    return (x + m - 1) // m * m


def _normalized_weight_gemm(v, gain, loggain, cin_pad, cout_pad):
    """(Cout, Cin, 3, 3) weight-norm params -> channel-padded (9*Cp, Cp) bf16 GEMM matrix.

    Weight normalization is done ONCE here (batch-invariant) instead of once
    per grid step inside the kernel.
    """
    cout, cin = v.shape[0], v.shape[1]
    v = v.astype(jnp.float32)
    g = jax.nn.softplus(gain.astype(jnp.float32)) if loggain else gain.astype(jnp.float32)
    vnorm = jnp.sqrt(jnp.sum(v * v, axis=(1, 2, 3)))                  # (Cout,)
    w = v * (g / (vnorm + _SMALL))[:, None, None, None]               # (Cout,Cin,3,3)
    w = jnp.transpose(w, (2, 3, 1, 0))                                # (kh,kw,Cin,Cout)
    w = jnp.pad(w, ((0, 0), (0, 0), (0, cin_pad - cin), (0, cout_pad - cout)))
    return w.reshape(_KSIZE * _KSIZE * cin_pad, cout_pad).astype(jnp.bfloat16)


def resnet_layer_forward(x_nchw, v1, gain1, b1, v2, gain2, b2):
    """ResNetLayer.forward (inference): x + conv2(ELU(conv1(ELU(x))))."""
    N, C, H, W = x_nchw.shape
    Cout = v1.shape[0]
    assert v1.shape == (Cout, C, _KSIZE, _KSIZE)
    assert v2.shape == (Cout, Cout, _KSIZE, _KSIZE)
    assert Cout == C, "residual add requires inchannels == outchannels"
    # TODO(synk): pad W to a multiple of 8 (with a c1 re-zero) if needed; assert for now
    # so the per-tap (1,H,W,C)->(H*W,C) reshape stays a free re-tiling.
    assert W % 8 == 0, "W must be a multiple of 8 for aligned sublane tiling"

    Cp = _round_up(C, _LANES)   # dense lane axis / full MXU columns

    w1m = _normalized_weight_gemm(v1, gain1, True, Cp, Cp)    # conv1: loggain=True
    w2m = _normalized_weight_gemm(v2, gain2, False, Cp, Cp)   # conv2: loggain=False
    b1m = jnp.pad(b1.astype(jnp.float32), (0, Cp - C)).reshape(1, Cp)
    b2m = jnp.pad(b2.astype(jnp.float32), (0, Cp - C)).reshape(1, Cp)

    # TODO(synk): the NCHW<->NHWC transposes are layout plumbing to match the
    # PyTorch interface; in an NHWC pipeline they disappear.
    x = jnp.transpose(x_nchw, (0, 2, 3, 1))                           # NHWC
    if Cp != C:
        x = jnp.pad(x, ((0, 0), (0, 0), (0, 0), (0, Cp - C)))

    w_pad = _W_OFF + W + 1   # aligned interior at offset 16, right halo = 1 read column

    out_nhwc = pl.pallas_call(
        _resnet_layer_kernel,
        out_shape=jax.ShapeDtypeStruct((N, H, W, Cp), x.dtype),
        grid_spec=pltpu.PrefetchScalarGridSpec(
            num_scalar_prefetch=0,
            grid=(N,),
            in_specs=[
                pl.BlockSpec((1, H, W, Cp), lambda n: (n, 0, 0, 0)),   # x
                pl.BlockSpec((9 * Cp, Cp), lambda n: (0, 0)),          # w1 (normalized, bf16)
                pl.BlockSpec((1, Cp), lambda n: (0, 0)),               # b1
                pl.BlockSpec((9 * Cp, Cp), lambda n: (0, 0)),          # w2 (normalized, bf16)
                pl.BlockSpec((1, Cp), lambda n: (0, 0)),               # b2
            ],
            out_specs=pl.BlockSpec((1, H, W, Cp), lambda n: (n, 0, 0, 0)),
            scratch_shapes=[pltpu.VMEM((1, H + 2, w_pad, Cp), jnp.bfloat16)],
        ),
        compiler_params=pltpu.CompilerParams(
            dimension_semantics=("parallel",),
            vmem_limit_bytes=32 * 1024 * 1024),
    )(x, w1m, b1m, w2m, b2m)

    if Cp != C:
        out_nhwc = out_nhwc[..., :C]
    return jnp.transpose(out_nhwc, (0, 3, 1, 2))                      # back to NCHW


# ---------------- pure-JAX reference (mirrors the PyTorch module) -------------

def _wnconv2d_ref(x, v, gain, b, loggain):
    g = jax.nn.softplus(gain) if loggain else gain
    vnorm = jnp.sqrt(jnp.sum(v.astype(jnp.float32) ** 2, axis=(1, 2, 3)))
    w = v * (g / (vnorm + _SMALL))[:, None, None, None]
    y = jax.lax.conv_general_dilated(
        x, w, window_strides=(1, 1), padding=((1, 1), (1, 1)),
        dimension_numbers=("NCHW", "OIHW", "NCHW"))
    return y + b[None, :, None, None]


def _resnet_layer_ref(x, v1, g1, b1, v2, g2, b2):
    a = jax.nn.elu(x)
    c1 = jax.nn.elu(_wnconv2d_ref(a, v1, g1, b1, loggain=True))
    c2 = _wnconv2d_ref(c1, v2, g2, b2, loggain=False)
    return x + c2


if __name__ == "__main__":
    key = jax.random.PRNGKey(0)
    kx, kv1, kg1, kb1, kv2, kg2, kb2 = jax.random.split(key, 7)

    N, C, H, W = 2, 4, 16, 16
    x = jax.random.normal(kx, (N, C, H, W), dtype=jnp.float32)
    v1 = 0.05 * jax.random.normal(kv1, (C, C, 3, 3), dtype=jnp.float32)
    gain1 = 0.1 * jax.random.normal(kg1, (C,), dtype=jnp.float32)   # log-gain
    b1 = 0.1 * jax.random.normal(kb1, (C,), dtype=jnp.float32)
    v2 = 0.05 * jax.random.normal(kv2, (C, C, 3, 3), dtype=jnp.float32)
    gain2 = 1.0 + 0.1 * jax.random.normal(kg2, (C,), dtype=jnp.float32)
    b2 = 0.1 * jax.random.normal(kb2, (C,), dtype=jnp.float32)

    y = resnet_layer_forward(x, v1, gain1, b1, v2, gain2, b2)
    y = jax.block_until_ready(y)

    y_ref = _resnet_layer_ref(x, v1, gain1, b1, v2, gain2, b2)
    assert y.shape == x.shape and y.dtype == x.dtype
    max_err = float(jnp.max(jnp.abs(y - y_ref)))
    # bf16 MXU operands (f32 accumulation) -> loosened tolerance vs pure-f32.
    assert max_err < 5e-2, f"max abs err {max_err}"

    print("KERNEL_OK")
</pallas_src>

<mosaic_0001>
module attributes {stable_mosaic.version = 11 : i64} {
  func.func @_resnet_layer_kernel(%arg0: i32, %arg1: memref<1x16x16x128xf32, #tpu.memory_space<vmem>>, %arg2: memref<1152x128xbf16, #tpu.memory_space<vmem>>, %arg3: memref<1x128xf32, #tpu.memory_space<vmem>>, %arg4: memref<1152x128xbf16, #tpu.memory_space<vmem>>, %arg5: memref<1x128xf32, #tpu.memory_space<vmem>>, %arg6: memref<1x16x16x128xf32, #tpu.memory_space<vmem>>, %arg7: memref<1x18x33x128xbf16, #tpu.memory_space<vmem>>) attributes {dimension_semantics = [#tpu.dimension_semantics<parallel>], iteration_bounds = array<i64: 2>, scalar_prefetch = 0 : i64, scratch_operands = 1 : i64, tpu.core_type = #tpu.core_type<tc>, window_params = [{transform_indices = @transform_0, window_bounds = array<i64: 1, 16, 16, 128>}, {pipeline_mode = #tpu.pipeline_mode<synchronous>, transform_indices = @transform_1, window_bounds = array<i64: 1152, 128>}, {pipeline_mode = #tpu.pipeline_mode<synchronous>, transform_indices = @transform_2, window_bounds = array<i64: 1, 128>}, {pipeline_mode = #tpu.pipeline_mode<synchronous>, transform_indices = @transform_3, window_bounds = array<i64: 1152, 128>}, {pipeline_mode = #tpu.pipeline_mode<synchronous>, transform_indices = @transform_4, window_bounds = array<i64: 1, 128>}, {transform_indices = @transform_5, window_bounds = array<i64: 1, 16, 16, 128>}]} {
    %cst = arith.constant 0.000000e+00 : bf16
    %0 = vector.broadcast %cst : bf16 to vector<1x1x18x128xbf16>
    %c0 = arith.constant 0 : index
    %c0_0 = arith.constant 0 : index
    %c15 = arith.constant 15 : index
    %c0_1 = arith.constant 0 : index
    %1 = vector.load %arg7[%c0, %c0_0, %c15, %c0_1] : memref<1x18x33x128xbf16, #tpu.memory_space<vmem>>, vector<1x1x18x128xbf16>
    tpu.vector_store %arg7[%c0, %c0_0, %c15, %c0_1], %0 {strides = array<i32>} : memref<1x18x33x128xbf16, #tpu.memory_space<vmem>>, vector<1x1x18x128xbf16>,
    %c0_2 = arith.constant 0 : index
    %c17 = arith.constant 17 : index
    %c15_3 = arith.constant 15 : index
    %c0_4 = arith.constant 0 : index
    %2 = vector.load %arg7[%c0_2, %c17, %c15_3, %c0_4] : memref<1x18x33x128xbf16, #tpu.memory_space<vmem>>, vector<1x1x18x128xbf16>
    tpu.vector_store %arg7[%c0_2, %c17, %c15_3, %c0_4], %0 {strides = array<i32>} : memref<1x18x33x128xbf16, #tpu.memory_space<vmem>>, vector<1x1x18x128xbf16>,
    %cst_5 = arith.constant 0.000000e+00 : bf16
    %3 = vector.broadcast %cst_5 : bf16 to vector<1x18x1x128xbf16>
    %c0_6 = arith.constant 0 : index
    %c0_7 = arith.constant 0 : index
    %c15_8 = arith.constant 15 : index
    %c0_9 = arith.constant 0 : index
    %4 = vector.load %arg7[%c0_6, %c0_7, %c15_8, %c0_9] : memref<1x18x33x128xbf16, #tpu.memory_space<vmem>>, vector<1x18x1x128xbf16>
    tpu.vector_store %arg7[%c0_6, %c0_7, %c15_8, %c0_9], %3 {strides = array<i32>} : memref<1x18x33x128xbf16, #tpu.memory_space<vmem>>, vector<1x18x1x128xbf16>,
    %c0_10 = arith.constant 0 : index
    %c0_11 = arith.constant 0 : index
    %c32 = arith.constant 32 : index
    %c0_12 = arith.constant 0 : index
    %5 = vector.load %arg7[%c0_10, %c0_11, %c32, %c0_12] : memref<1x18x33x128xbf16, #tpu.memory_space<vmem>>, vector<1x18x1x128xbf16>
    tpu.vector_store %arg7[%c0_10, %c0_11, %c32, %c0_12], %3 {strides = array<i32>} : memref<1x18x33x128xbf16, #tpu.memory_space<vmem>>, vector<1x18x1x128xbf16>,
    %c0_13 = arith.constant 0 : index
    %c0_14 = arith.constant 0 : index
    %c0_15 = arith.constant 0 : index
    %c0_16 = arith.constant 0 : index
    %6 = vector.load %arg1[%c0_13, %c0_14, %c0_15, %c0_16] : memref<1x16x16x128xf32, #tpu.memory_space<vmem>>, vector<1x16x16x128xf32>
    %cst_17 = arith.constant 0.000000e+00 : f32
    %7 = vector.broadcast %cst_17 : f32 to vector<1x16x16x128xf32>
    %8 = arith.cmpf ogt, %6, %7 : vector<1x16x16x128xf32>
    %cst_18 = arith.constant 0.000000e+00 : f32
    %9 = vector.broadcast %cst_18 : f32 to vector<1x16x16x128xf32>
    %10 = arith.minimumf %6, %9 : vector<1x16x16x128xf32>
    %11 = math.exp %10 : vector<1x16x16x128xf32>
    %cst_19 = arith.constant 1.000000e+00 : f32
    %12 = vector.broadcast %cst_19 : f32 to vector<1x16x16x128xf32>
    %13 = arith.subf %11, %12 : vector<1x16x16x128xf32>
    %14 = arith.select %8, %6, %13 : vector<1x16x16x128xi1>, vector<1x16x16x128xf32>
    %15 = arith.truncf %14 : vector<1x16x16x128xf32> to vector<1x16x16x128xbf16>
    %c0_20 = arith.constant 0 : index
    %c1 = arith.constant 1 : index
    %c16 = arith.constant 16 : index
    %c0_21 = arith.constant 0 : index
    %16 = vector.load %arg7[%c0_20, %c1, %c16, %c0_21] : memref<1x18x33x128xbf16, #tpu.memory_space<vmem>>, vector<1x16x16x128xbf16>
    tpu.vector_store %arg7[%c0_20, %c1, %c16, %c0_21], %15 {strides = array<i32>} : memref<1x18x33x128xbf16, #tpu.memory_space<vmem>>, vector<1x16x16x128xbf16>,
    %c0_22 = arith.constant 0 : index
    %c0_23 = arith.constant 0 : index
    %17 = vector.load %arg3[%c0_22, %c0_23] : memref<1x128xf32, #tpu.memory_space<vmem>>, vector<1x128xf32>
    %cst_24 = arith.constant 0.000000e+00 : f32
    %18 = vector.broadcast %cst_24 : f32 to vector<256x128xf32>
    %c0_25 = arith.constant 0 : index
    %c0_26 = arith.constant 0 : index
    %c15_27 = arith.constant 15 : index
    %c0_28 = arith.constant 0 : index
    %19 = vector.load %arg7[%c0_25, %c0_26, %c15_27, %c0_28] : memref<1x18x33x128xbf16, #tpu.memory_space<vmem>>, vector<1x16x16x128xbf16>
    %20 = vector.shape_cast %19 : vector<1x16x16x128xbf16> to vector<256x128xbf16>
    %c0_29 = arith.constant 0 : index
    %c0_30 = arith.constant 0 : index
    %c16_31 = arith.constant 16 : index
    %c0_32 = arith.constant 0 : index
    %21 = vector.load %arg7[%c0_29, %c0_30, %c16_31, %c0_32] : memref<1x18x33x128xbf16, #tpu.memory_space<vmem>>, vector<1x16x16x128xbf16>
    %22 = vector.shape_cast %21 : vector<1x16x16x128xbf16> to vector<256x128xbf16>
    %c0_33 = arith.constant 0 : index
    %c0_34 = arith.constant 0 : index
    %c17_35 = arith.constant 17 : index
    %c0_36 = arith.constant 0 : index
    %23 = vector.load %arg7[%c0_33, %c0_34, %c17_35, %c0_36] : memref<1x18x33x128xbf16, #tpu.memory_space<vmem>>, vector<1x16x16x128xbf16>
    %24 = vector.shape_cast %23 : vector<1x16x16x128xbf16> to vector<256x128xbf16>
    %25 = tpu.concatenate %20, %22, %24 in 1 : vector<256x128xbf16>, vector<256x128xbf16>, vector<256x128xbf16> -> vector<256x384xbf16>
    %c0_37 = arith.constant 0 : index
    %c0_38 = arith.constant 0 : index
    %26 = vector.load %arg2[%c0_37, %c0_38] : memref<1152x128xbf16, #tpu.memory_space<vmem>>, vector<384x128xbf16>
    %cst_39 = arith.constant dense<0.000000e+00> : vector<256x128xf32>
    %27 = tpu.matmul %25, %26, %cst_39 {dimension_numbers = #tpu.dot_dimension_numbers<[1], [0], [0], [1], [0, 0, 1, 1], [], []>} : vector<256x384xbf16>, vector<384x128xbf16>, vector<256x128xf32> -> vector<256x128xf32>
    %28 = arith.addf %18, %27 : vector<256x128xf32>
    %c0_40 = arith.constant 0 : index
    %c1_41 = arith.constant 1 : index
    %c15_42 = arith.constant 15 : index
    %c0_43 = arith.constant 0 : index
    %29 = vector.load %arg7[%c0_40, %c1_41, %c15_42, %c0_43] : memref<1x18x33x128xbf16, #tpu.memory_space<vmem>>, vector<1x16x16x128xbf16>
    %30 = vector.shape_cast %29 : vector<1x16x16x128xbf16> to vector<256x128xbf16>
    %c0_44 = arith.constant 0 : index
    %c1_45 = arith.constant 1 : index
    %c16_46 = arith.constant 16 : index
    %c0_47 = arith.constant 0 : index
    %31 = vector.load %arg7[%c0_44, %c1_45, %c16_46, %c0_47] : memref<1x18x33x128xbf16, #tpu.memory_space<vmem>>, vector<1x16x16x128xbf16>
    %32 = vector.shape_cast %31 : vector<1x16x16x128xbf16> to vector<256x128xbf16>
    %c0_48 = arith.constant 0 : index
    %c1_49 = arith.constant 1 : index
    %c17_50 = arith.constant 17 : index
    %c0_51 = arith.constant 0 : index
    %33 = vector.load %arg7[%c0_48, %c1_49, %c17_50, %c0_51] : memref<1x18x33x128xbf16, #tpu.memory_space<vmem>>, vector<1x16x16x128xbf16>
    %34 = vector.shape_cast %33 : vector<1x16x16x128xbf16> to vector<256x128xbf16>
    %35 = tpu.concatenate %30, %32, %34 in 1 : vector<256x128xbf16>, vector<256x128xbf16>, vector<256x128xbf16> -> vector<256x384xbf16>
    %c384 = arith.constant 384 : index
    %c0_52 = arith.constant 0 : index
    %36 = vector.load %arg2[%c384, %c0_52] : memref<1152x128xbf16, #tpu.memory_space<vmem>>, vector<384x128xbf16>
    %cst_53 = arith.constant dense<0.000000e+00> : vector<256x128xf32>
    %37 = tpu.matmul %35, %36, %cst_53 {dimension_numbers = #tpu.dot_dimension_numbers<[1], [0], [0], [1], [0, 0, 1, 1], [], []>} : vector<256x384xbf16>, vector<384x128xbf16>, vector<256x128xf32> -> vector<256x128xf32>
    %38 = arith.addf %28, %37 : vector<256x128xf32>
    %c0_54 = arith.constant 0 : index
    %c2 = arith.constant 2 : index
    %c15_55 = arith.constant 15 : index
    %c0_56 = arith.constant 0 : index
    %39 = vector.load %arg7[%c0_54, %c2, %c15_55, %c0_56] : memref<1x18x33x128xbf16, #tpu.memory_space<vmem>>, vector<1x16x16x128xbf16>
    %40 = vector.shape_cast %39 : vector<1x16x16x128xbf16> to vector<256x128xbf16>
    %c0_57 = arith.constant 0 : index
    %c2_58 = arith.constant 2 : index
    %c16_59 = arith.constant 16 : index
    %c0_60 = arith.constant 0 : index
    %41 = vector.load %arg7[%c0_57, %c2_58, %c16_59, %c0_60] : memref<1x18x33x128xbf16, #tpu.memory_space<vmem>>, vector<1x16x16x128xbf16>
    %42 = vector.shape_cast %41 : vector<1x16x16x128xbf16> to vector<256x128xbf16>
    %c0_61 = arith.constant 0 : index
    %c2_62 = arith.constant 2 : index
    %c17_63 = arith.constant 17 : index
    %c0_64 = arith.constant 0 : index
    %43 = vector.load %arg7[%c0_61, %c2_62, %c17_63, %c0_64] : memref<1x18x33x128xbf16, #tpu.memory_space<vmem>>, vector<1x16x16x128xbf16>
    %44 = vector.shape_cast %43 : vector<1x16x16x128xbf16> to vector<256x128xbf16>
    %45 = tpu.concatenate %40, %42, %44 in 1 : vector<256x128xbf16>, vector<256x128xbf16>, vector<256x128xbf16> -> vector<256x384xbf16>
    %c768 = arith.constant 768 : index
    %c0_65 = arith.constant 0 : index
    %46 = vector.load %arg2[%c768, %c0_65] : memref<1152x128xbf16, #tpu.memory_space<vmem>>, vector<384x128xbf16>
    %cst_66 = arith.constant dense<0.000000e+00> : vector<256x128xf32>
    %47 = tpu.matmul %45, %46, %cst_66 {dimension_numbers = #tpu.dot_dimension_numbers<[1], [0], [0], [1], [0, 0, 1, 1], [], []>} : vector<256x384xbf16>, vector<384x128xbf16>, vector<256x128xf32> -> vector<256x128xf32>
    %48 = arith.addf %38, %47 : vector<256x128xf32>
    %49 = vector.broadcast %17 : vector<1x128xf32> to vector<256x128xf32>
    %50 = arith.addf %48, %49 : vector<256x128xf32>
    %cst_67 = arith.constant 0.000000e+00 : f32
    %51 = vector.broadcast %cst_67 : f32 to vector<256x128xf32>
    %52 = arith.cmpf ogt, %50, %51 : vector<256x128xf32>
    %cst_68 = arith.constant 0.000000e+00 : f32
    %53 = vector.broadcast %cst_68 : f32 to vector<256x128xf32>
    %54 = arith.minimumf %50, %53 : vector<256x128xf32>
    %55 = math.exp %54 : vector<256x128xf32>
    %cst_69 = arith.constant 1.000000e+00 : f32
    %56 = vector.broadcast %cst_69 : f32 to vector<256x128xf32>
    %57 = arith.subf %55, %56 : vector<256x128xf32>
    %58 = arith.select %52, %50, %57 : vector<256x128xi1>, vector<256x128xf32>
    %59 = arith.truncf %58 : vector<256x128xf32> to vector<256x128xbf16>
    %60 = vector.shape_cast %59 : vector<256x128xbf16> to vector<1x16x16x128xbf16>
    %c0_70 = arith.constant 0 : index
    %c1_71 = arith.constant 1 : index
    %c16_72 = arith.constant 16 : index
    %c0_73 = arith.constant 0 : index
    %61 = vector.load %arg7[%c0_70, %c1_71, %c16_72, %c0_73] : memref<1x18x33x128xbf16, #tpu.memory_space<vmem>>, vector<1x16x16x128xbf16>
    tpu.vector_store %arg7[%c0_70, %c1_71, %c16_72, %c0_73], %60 {strides = array<i32>} : memref<1x18x33x128xbf16, #tpu.memory_space<vmem>>, vector<1x16x16x128xbf16>,
    %c0_74 = arith.constant 0 : index
    %c0_75 = arith.constant 0 : index
    %62 = vector.load %arg5[%c0_74, %c0_75] : memref<1x128xf32, #tpu.memory_space<vmem>>, vector<1x128xf32>
    %cst_76 = arith.constant 0.000000e+00 : f32
    %63 = vector.broadcast %cst_76 : f32 to vector<256x128xf32>
    %c0_77 = arith.constant 0 : index
    %c0_78 = arith.constant 0 : index
    %c15_79 = arith.constant 15 : index
    %c0_80 = arith.constant 0 : index
    %64 = vector.load %arg7[%c0_77, %c0_78, %c15_79, %c0_80] : memref<1x18x33x128xbf16, #tpu.memory_space<vmem>>, vector<1x16x16x128xbf16>
    %65 = vector.shape_cast %64 : vector<1x16x16x128xbf16> to vector<256x128xbf16>
    %c0_81 = arith.constant 0 : index
    %c0_82 = arith.constant 0 : index
    %c16_83 = arith.constant 16 : index
    %c0_84 = arith.constant 0 : index
    %66 = vector.load %arg7[%c0_81, %c0_82, %c16_83, %c0_84] : memref<1x18x33x128xbf16, #tpu.memory_space<vmem>>, vector<1x16x16x128xbf16>
    %67 = vector.shape_cast %66 : vector<1x16x16x128xbf16> to vector<256x128xbf16>
    %c0_85 = arith.constant 0 : index
    %c0_86 = arith.constant 0 : index
    %c17_87 = arith.constant 17 : index
    %c0_88 = arith.constant 0 : index
    %68 = vector.load %arg7[%c0_85, %c0_86, %c17_87, %c0_88] : memref<1x18x33x128xbf16, #tpu.memory_space<vmem>>, vector<1x16x16x128xbf16>
    %69 = vector.shape_cast %68 : vector<1x16x16x128xbf16> to vector<256x128xbf16>
    %70 = tpu.concatenate %65, %67, %69 in 1 : vector<256x128xbf16>, vector<256x128xbf16>, vector<256x128xbf16> -> vector<256x384xbf16>
    %c0_89 = arith.constant 0 : index
    %c0_90 = arith.constant 0 : index
    %71 = vector.load %arg4[%c0_89, %c0_90] : memref<1152x128xbf16, #tpu.memory_space<vmem>>, vector<384x128xbf16>
    %cst_91 = arith.constant dense<0.000000e+00> : vector<256x128xf32>
    %72 = tpu.matmul %70, %71, %cst_91 {dimension_numbers = #tpu.dot_dimension_numbers<[1], [0], [0], [1], [0, 0, 1, 1], [], []>} : vector<256x384xbf16>, vector<384x128xbf16>, vector<256x128xf32> -> vector<256x128xf32>
    %73 = arith.addf %63, %72 : vector<256x128xf32>
    %c0_92 = arith.constant 0 : index
    %c1_93 = arith.constant 1 : index
    %c15_94 = arith.constant 15 : index
    %c0_95 = arith.constant 0 : index
    %74 = vector.load %arg7[%c0_92, %c1_93, %c15_94, %c0_95] : memref<1x18x33x128xbf16, #tpu.memory_space<vmem>>, vector<1x16x16x128xbf16>
    %75 = vector.shape_cast %74 : vector<1x16x16x128xbf16> to vector<256x128xbf16>
    %c0_96 = arith.constant 0 : index
    %c1_97 = arith.constant 1 : index
    %c16_98 = arith.constant 16 : index
    %c0_99 = arith.constant 0 : index
    %76 = vector.load %arg7[%c0_96, %c1_97, %c16_98, %c0_99] : memref<1x18x33x128xbf16, #tpu.memory_space<vmem>>, vector<1x16x16x128xbf16>
    %77 = vector.shape_cast %76 : vector<1x16x16x128xbf16> to vector<256x128xbf16>
    %c0_100 = arith.constant 0 : index
    %c1_101 = arith.constant 1 : index
    %c17_102 = arith.constant 17 : index
    %c0_103 = arith.constant 0 : index
    %78 = vector.load %arg7[%c0_100, %c1_101, %c17_102, %c0_103] : memref<1x18x33x128xbf16, #tpu.memory_space<vmem>>, vector<1x16x16x128xbf16>
    %79 = vector.shape_cast %78 : vector<1x16x16x128xbf16> to vector<256x128xbf16>
    %80 = tpu.concatenate %75, %77, %79 in 1 : vector<256x128xbf16>, vector<256x128xbf16>, vector<256x128xbf16> -> vector<256x384xbf16>
    %c384_104 = arith.constant 384 : index
    %c0_105 = arith.constant 0 : index
    %81 = vector.load %arg4[%c384_104, %c0_105] : memref<1152x128xbf16, #tpu.memory_space<vmem>>, vector<384x128xbf16>
    %cst_106 = arith.constant dense<0.000000e+00> : vector<256x128xf32>
    %82 = tpu.matmul %80, %81, %cst_106 {dimension_numbers = #tpu.dot_dimension_numbers<[1], [0], [0], [1], [0, 0, 1, 1], [], []>} : vector<256x384xbf16>, vector<384x128xbf16>, vector<256x128xf32> -> vector<256x128xf32>
    %83 = arith.addf %73, %82 : vector<256x128xf32>
    %c0_107 = arith.constant 0 : index
    %c2_108 = arith.constant 2 : index
    %c15_109 = arith.constant 15 : index
    %c0_110 = arith.constant 0 : index
    %84 = vector.load %arg7[%c0_107, %c2_108, %c15_109, %c0_110] : memref<1x18x33x128xbf16, #tpu.memory_space<vmem>>, vector<1x16x16x128xbf16>
    %85 = vector.shape_cast %84 : vector<1x16x16x128xbf16> to vector<256x128xbf16>
    %c0_111 = arith.constant 0 : index
    %c2_112 = arith.constant 2 : index
    %c16_113 = arith.constant 16 : index
    %c0_114 = arith.constant 0 : index
    %86 = vector.load %arg7[%c0_111, %c2_112, %c16_113, %c0_114] : memref<1x18x33x128xbf16, #tpu.memory_space<vmem>>, vector<1x16x16x128xbf16>
    %87 = vector.shape_cast %86 : vector<1x16x16x128xbf16> to vector<256x128xbf16>
    %c0_115 = arith.constant 0 : index
    %c2_116 = arith.constant 2 : index
    %c17_117 = arith.constant 17 : index
    %c0_118 = arith.constant 0 : index
    %88 = vector.load %arg7[%c0_115, %c2_116, %c17_117, %c0_118] : memref<1x18x33x128xbf16, #tpu.memory_space<vmem>>, vector<1x16x16x128xbf16>
    %89 = vector.shape_cast %88 : vector<1x16x16x128xbf16> to vector<256x128xbf16>
    %90 = tpu.concatenate %85, %87, %89 in 1 : vector<256x128xbf16>, vector<256x128xbf16>, vector<256x128xbf16> -> vector<256x384xbf16>
    %c768_119 = arith.constant 768 : index
    %c0_120 = arith.constant 0 : index
    %91 = vector.load %arg4[%c768_119, %c0_120] : memref<1152x128xbf16, #tpu.memory_space<vmem>>, vector<384x128xbf16>
    %cst_121 = arith.constant dense<0.000000e+00> : vector<256x128xf32>
    %92 = tpu.matmul %90, %91, %cst_121 {dimension_numbers = #tpu.dot_dimension_numbers<[1], [0], [0], [1], [0, 0, 1, 1], [], []>} : vector<256x384xbf16>, vector<384x128xbf16>, vector<256x128xf32> -> vector<256x128xf32>
    %93 = arith.addf %83, %92 : vector<256x128xf32>
    %94 = vector.broadcast %62 : vector<1x128xf32> to vector<256x128xf32>
    %95 = arith.addf %93, %94 : vector<256x128xf32>
    %c0_122 = arith.constant 0 : index
    %c0_123 = arith.constant 0 : index
    %c0_124 = arith.constant 0 : index
    %c0_125 = arith.constant 0 : index
    %96 = vector.load %arg1[%c0_122, %c0_123, %c0_124, %c0_125] : memref<1x16x16x128xf32, #tpu.memory_space<vmem>>, vector<1x16x16x128xf32>
    %97 = vector.shape_cast %95 : vector<256x128xf32> to vector<1x16x16x128xf32>
    %98 = arith.addf %96, %97 : vector<1x16x16x128xf32>
    %c0_126 = arith.constant 0 : index
    %c0_127 = arith.constant 0 : index
    %c0_128 = arith.constant 0 : index
    %c0_129 = arith.constant 0 : index
    %99 = vector.load %arg6[%c0_126, %c0_127, %c0_128, %c0_129] : memref<1x16x16x128xf32, #tpu.memory_space<vmem>>, vector<1x16x16x128xf32>
    tpu.vector_store %arg6[%c0_126, %c0_127, %c0_128, %c0_129], %98 {strides = array<i32>} : memref<1x16x16x128xf32, #tpu.memory_space<vmem>>, vector<1x16x16x128xf32>,
    return
  }
  func.func @transform_0(%arg0: i32) -> (i32, i32, i32, i32) {
    %c0_i32 = arith.constant 0 : i32
    %c0_i32_0 = arith.constant 0 : i32
    %c0_i32_1 = arith.constant 0 : i32
    %c0_i32_2 = arith.constant 0 : i32
    return %arg0, %c0_i32, %c0_i32_0, %c0_i32_1 : i32, i32, i32, i32
  }
  func.func @transform_1(%arg0: i32) -> (i32, i32) {
    %c0_i32 = arith.constant 0 : i32
    %c0_i32_0 = arith.constant 0 : i32
    %c0_i32_1 = arith.constant 0 : i32
    return %c0_i32, %c0_i32_0 : i32, i32
  }
  func.func @transform_2(%arg0: i32) -> (i32, i32) {
    %c0_i32 = arith.constant 0 : i32
    %c0_i32_0 = arith.constant 0 : i32
    %c0_i32_1 = arith.constant 0 : i32
    return %c0_i32, %c0_i32_0 : i32, i32
  }
  func.func @transform_3(%arg0: i32) -> (i32, i32) {
    %c0_i32 = arith.constant 0 : i32
    %c0_i32_0 = arith.constant 0 : i32
    %c0_i32_1 = arith.constant 0 : i32
    return %c0_i32, %c0_i32_0 : i32, i32
  }
  func.func @transform_4(%arg0: i32) -> (i32, i32) {
    %c0_i32 = arith.constant 0 : i32
    %c0_i32_0 = arith.constant 0 : i32
    %c0_i32_1 = arith.constant 0 : i32
    return %c0_i32, %c0_i32_0 : i32, i32
  }
  func.func @transform_5(%arg0: i32) -> (i32, i32, i32, i32) {
    %c0_i32 = arith.constant 0 : i32
    %c0_i32_0 = arith.constant 0 : i32
    %c0_i32_1 = arith.constant 0 : i32
    %c0_i32_2 = arith.constant 0 : i32
    return %arg0, %c0_i32, %c0_i32_0, %c0_i32_1 : i32, i32, i32, i32
  }
}

</mosaic_0001>

<llo_original>
// kernel: tpu_custom_call.1
$region0: #{tpu_custom_call.1}
  #allocation0 [shape = 'u32[]', space=smem, size = 0x4, offset = 0x4, fixed_abs, tag = 'smem constant byte address 0x4 - core index']
  #allocation1 [shape = 'u32[144,128]{1,0:T(1,128)}', space=vmem, size = 0x12000, scoped, tag = 'internal scratch']
  #allocation2 [shape = 'bf16[1,18,33,128]{3,2,1,0:T(8,128)(2,1)}', space=vmem, size = 0x2d000, scoped, tag = 'scratch operand']
  %s0 = inlined_call_operand.hbm [shape: f32[2,16,16,128], index: 0, kind: input, shape index: {}]
  %s1 = inlined_call_operand.hbm [shape: bf16[1152,128], index: 1, kind: input, shape index: {}]
  %s2 = inlined_call_operand.vmem [shape: f32[1,128], index: 2, kind: input, shape index: {}]
  %s3 = inlined_call_operand.hbm [shape: bf16[1152,128], index: 3, kind: input, shape index: {}]
  %s4 = inlined_call_operand.vmem [shape: f32[1,128], index: 4, kind: input, shape index: {}]
  %s5 = inlined_call_operand.hbm [shape: f32[2,16,16,128], index: 5, kind: output, shape index: {}]
  %s6 = sld [smem:[#allocation0]]
  $region65: #{tpu_custom_call.1} parent=0
    _
  %s8 = ssub.s32 1, %s6
  %s9 = scalar_select 0, %s8, %s6
  $region1: #{tpu_custom_call.1} parent=0
    #allocation3 [shape = 'u8[262144]{0}', space=vmem, size = 0x40000, scoped, tag = 'input window, operand 0']
    #allocation4 [shape = 's32[2]{0}', space=sflag, size = 0x8, scoped, tag = 'scoped memory for tpu_custom_call.1']
    #allocation5 [shape = 's32[2]{0}', space=sflag, size = 0x8, scoped, tag = 'scoped memory for tpu_custom_call.1']
    #allocation6 [shape = 'u8[294912]{0}', space=vmem, size = 0x48000, scoped, tag = 'input window, operand 1, single buffered']
    #allocation7 [shape = 's32[1]{0}', space=sflag, size = 0x4, scoped, tag = 'scoped memory for tpu_custom_call.1']
    #allocation8 [shape = 'u8[294912]{0}', space=vmem, size = 0x48000, scoped, tag = 'input window, operand 3, single buffered']
    #allocation9 [shape = 'u8[262144]{0}', space=vmem, size = 0x40000, scoped, tag = 'output window, operand 0']
    %10 = vsyncpa [#allocation4], 0
    %s11 = scalar_lea.sflag [#allocation4], 1
    %12 = vsyncpa %s11, 0
    %13 = vsyncpa [#allocation7], 0
    %14 = vsyncpa [#allocation5], 0
    %s15 = scalar_lea.sflag [#allocation5], 1
    %16 = vsyncpa %s15, 0
    loop: start=0, step=1, limit=4
    $region2: #{tpu_custom_call.1} parent=1 // loop_pre_header
      _
    $region3: #{tpu_custom_call.1} parent=1 // loop_header
      %s18 = sphi 0, %s22
      %p19 = scmp.ge.s32.totalorder %s18, 4
      %s28 = sphi 0, %s30
      %s31 = sphi 0, %s28
      %s32 = sphi 0, %s31
      %s48 = sphi 0, %s32
      %s52 = sphi 0, %s52
      %s54 = sphi 0, %s52
      %s55 = sphi 0, %s54
      %s69 = sphi 0, %s55
      %s73 = sphi 0, %s73
      %s75 = sphi 0, %s73
      %s76 = sphi 0, %s75
      %s90 = sphi 0, %s76
      %s94 = sphi 0, %s94
      %s96 = sphi 0, %s94
      %s97 = sphi 0, %s96
      %s111 = sphi 0, %s97
      %s115 = sphi 0, %s115
      %s117 = sphi 0, %s115
      %s118 = sphi 0, %s117
      %s132 = sphi 0, %s118
      %s138 = sphi 0, %s140
      %s141 = sphi 0, %s138
      %s142 = sphi 0, %s141
      %s158 = sphi 0, %s142
    $region4: #{tpu_custom_call.1} parent=1 // loop_header_branch
      %21 = sbr.rel (%p19) target = $region8
    $region5: #{tpu_custom_call.1} parent=1 // loop_body
      %s23 = ssub.s32 %s18, 1
      %s24 = ssub.s32 %s18, 2
      %s25 = sadd.s32 %s18, 1
      %s26 = ssub.s32 %s18, %s25
      %p27 = scmp.eq.s32.totalorder %s26, 0
      %s29 = sadd.s32 %s28, 1
      %s30 = scalar_select %p27, %s28, %s29
      %p33 = pneg %p27
      %p34 = scmp.eq.s32.totalorder %s18, 1
      %p35 = por %p33, %p34
      %p36 = scmp.ne.s32.totalorder %s28, %s31
      %p37 = scmp.eq.s32.totalorder %s18, 0
      %p38 = por %p36, %p37
      %p39 = scmp.ne.s32.totalorder %s28, %s31
      %p40 = scmp.eq.s32.totalorder %s23, 1
      %p41 = por %p39, %p40
      %p42 = scmp.ne.s32.totalorder %s31, %s32
      %p43 = scmp.eq.s32.totalorder %s23, 0
      %p44 = por %p42, %p43
      %p45 = scmp.ne.s32.totalorder %s31, %s32
      %p46 = scmp.eq.s32.totalorder %s24, 1
      %p47 = por %p45, %p46
      %p49 = scmp.ne.s32.totalorder %s32, %s48
      %p50 = scmp.eq.s32.totalorder %s24, 0
      %p51 = por %p49, %p50
      %s53 = sadd.s32 %s52, 1
      %p56 = scmp.eq.s32.totalorder %s18, 1
      %p57 = scmp.ne.s32.totalorder %s52, %s54
      %p58 = scmp.eq.s32.totalorder %s18, 0
      %p59 = por %p57, %p58
      %p60 = scmp.ne.s32.totalorder %s52, %s54
      %p61 = scmp.eq.s32.totalorder %s23, 1
      %p62 = por %p60, %p61
      %p63 = scmp.ne.s32.totalorder %s54, %s55
      %p64 = scmp.eq.s32.totalorder %s23, 0
      %p65 = por %p63, %p64
      %p66 = scmp.ne.s32.totalorder %s54, %s55
      %p67 = scmp.eq.s32.totalorder %s24, 1
      %p68 = por %p66, %p67
      %p70 = scmp.ne.s32.totalorder %s55, %s69
      %p71 = scmp.eq.s32.totalorder %s24, 0
      %p72 = por %p70, %p71
      %s74 = sadd.s32 %s73, 1
      %p77 = scmp.eq.s32.totalorder %s18, 1
      %p78 = scmp.ne.s32.totalorder %s73, %s75
      %p79 = scmp.eq.s32.totalorder %s18, 0
      %p80 = por %p78, %p79
      %p81 = scmp.ne.s32.totalorder %s73, %s75
      %p82 = scmp.eq.s32.totalorder %s23, 1
      %p83 = por %p81, %p82
      %p84 = scmp.ne.s32.totalorder %s75, %s76
      %p85 = scmp.eq.s32.totalorder %s23, 0
      %p86 = por %p84, %p85
      %p87 = scmp.ne.s32.totalorder %s75, %s76
      %p88 = scmp.eq.s32.totalorder %s24, 1
      %p89 = por %p87, %p88
      %p91 = scmp.ne.s32.totalorder %s76, %s90
      %p92 = scmp.eq.s32.totalorder %s24, 0
      %p93 = por %p91, %p92
      %s95 = sadd.s32 %s94, 1
      %p98 = scmp.eq.s32.totalorder %s18, 1
      %p99 = scmp.ne.s32.totalorder %s94, %s96
      %p100 = scmp.eq.s32.totalorder %s18, 0
      %p101 = por %p99, %p100
      %p102 = scmp.ne.s32.totalorder %s94, %s96
      %p103 = scmp.eq.s32.totalorder %s23, 1
      %p104 = por %p102, %p103
      %p105 = scmp.ne.s32.totalorder %s96, %s97
      %p106 = scmp.eq.s32.totalorder %s23, 0
      %p107 = por %p105, %p106
      %p108 = scmp.ne.s32.totalorder %s96, %s97
      %p109 = scmp.eq.s32.totalorder %s24, 1
      %p110 = por %p108, %p109
      %p112 = scmp.ne.s32.totalorder %s97, %s111
      %p113 = scmp.eq.s32.totalorder %s24, 0
      %p114 = por %p112, %p113
      %s116 = sadd.s32 %s115, 1
      %p119 = scmp.eq.s32.totalorder %s18, 1
      %p120 = scmp.ne.s32.totalorder %s115, %s117
      %p121 = scmp.eq.s32.totalorder %s18, 0
      %p122 = por %p120, %p121
      %p123 = scmp.ne.s32.totalorder %s115, %s117
      %p124 = scmp.eq.s32.totalorder %s23, 1
      %p125 = por %p123, %p124
      %p126 = scmp.ne.s32.totalorder %s117, %s118
      %p127 = scmp.eq.s32.totalorder %s23, 0
      %p128 = por %p126, %p127
      %p129 = scmp.ne.s32.totalorder %s117, %s118
      %p130 = scmp.eq.s32.totalorder %s24, 1
      %p131 = por %p129, %p130
      %p133 = scmp.ne.s32.totalorder %s118, %s132
      %p134 = scmp.eq.s32.totalorder %s24, 0
      %p135 = por %p133, %p134
      %s136 = ssub.s32 %s18, %s25
      %p137 = scmp.eq.s32.totalorder %s136, 0
      %s139 = sadd.s32 %s138, 1
      %s140 = scalar_select %p137, %s138, %s139
      %p143 = pneg %p137
      %p144 = scmp.eq.s32.totalorder %s18, 1
      %p145 = por %p143, %p144
      %p146 = scmp.ne.s32.totalorder %s138, %s141
      %p147 = scmp.eq.s32.totalorder %s18, 0
      %p148 = por %p146, %p147
      %p149 = scmp.ne.s32.totalorder %s138, %s141
      %p150 = scmp.eq.s32.totalorder %s23, 1
      %p151 = por %p149, %p150
      %p152 = scmp.ne.s32.totalorder %s141, %s142
      %p153 = scmp.eq.s32.totalorder %s23, 0
      %p154 = por %p152, %p153
      %p155 = scmp.ne.s32.totalorder %s141, %s142
      %p156 = scmp.eq.s32.totalorder %s24, 1
      %p157 = por %p155, %p156
      %p159 = scmp.ne.s32.totalorder %s142, %s158
      %p160 = scmp.eq.s32.totalorder %s24, 0
      %p161 = por %p159, %p160
      %p162 = scmp.le.s32.totalorder 1, %s18
      %p163 = scmp.lt.s32.totalorder %s18, 3
      %p164 = pnand %p162, %p163
      %p165 = pneg %p164
      // Predicated region
      $region9: #{tpu_custom_call.1} parent=5 // pred_check
        _
      $region10: #{tpu_custom_call.1} parent=5 // pred_check_branch
        %167 = sbr.rel (%p164) target = $region12
      $region11: #{tpu_custom_call.1} parent=5 // pred_region
        %s168 = ssub.s32 %s18, 1
        // Predicated region
        $region13: #{tpu_custom_call.1} parent=11 // pred_check
          %p169 = pneg %p65
        $region14: #{tpu_custom_call.1} parent=11 // pred_check_branch
          %171 = sbr.rel (%p169) target = $region16
        $region15: #{tpu_custom_call.1} parent=11 // pred_region
          %s173 = ssub.s32 9216, 9216
          %174 = vsyncadd [#allocation7], %s173
          %s175 = sshll.u32 [#allocation6], 4
          %s176 = int_to_ptr.vmem [resolvable:$true] %s175
          %181 = dma.hbm_to_vmem [thread:$0]  %s1, 9216, %s176, [#allocation7], 64, 64, 4
        $region16: #{tpu_custom_call.1} parent=11 // pred_fallthru
          _
        // Predicated region
        $region17: #{tpu_custom_call.1} parent=11 // pred_check
          %p182 = pneg %p86
        $region18: #{tpu_custom_call.1} parent=11 // pred_check_branch
          %184 = sbr.rel (%p182) target = $region20
        $region19: #{tpu_custom_call.1} parent=11 // pred_region
          _
        $region20: #{tpu_custom_call.1} parent=11 // pred_fallthru
          _
        // Predicated region
        $region21: #{tpu_custom_call.1} parent=11 // pred_check
          %p185 = pneg %p107
        $region22: #{tpu_custom_call.1} parent=11 // pred_check_branch
          %187 = sbr.rel (%p185) target = $region24
        $region23: #{tpu_custom_call.1} parent=11 // pred_region
          %s189 = ssub.s32 9216, 9216
          %190 = vsyncadd [#allocation7], %s189
          %s191 = sshll.u32 [#allocation8], 4
          %s192 = int_to_ptr.vmem [resolvable:$true] %s191
          %197 = dma.hbm_to_vmem [thread:$0]  %s3, 9216, %s192, [#allocation7], 64, 64, 4
        $region24: #{tpu_custom_call.1} parent=11 // pred_fallthru
          _
        // Predicated region
        $region25: #{tpu_custom_call.1} parent=11 // pred_check
          %p198 = pneg %p128
        $region26: #{tpu_custom_call.1} parent=11 // pred_check_branch
          %200 = sbr.rel (%p198) target = $region28
        $region27: #{tpu_custom_call.1} parent=11 // pred_region
          _
        $region28: #{tpu_custom_call.1} parent=11 // pred_fallthru
          _
      $region12: #{tpu_custom_call.1} parent=5 // pred_fallthru
        _
      %p201 = scmp.lt.s32.totalorder %s18, 2
      // Predicated region
      $region29: #{tpu_custom_call.1} parent=5 // pred_check
        %p202 = pneg %p201
      $region30: #{tpu_custom_call.1} parent=5 // pred_check_branch
        %204 = sbr.rel (%p202) target = $region32
      $region31: #{tpu_custom_call.1} parent=5 // pred_region
        // Predicated region
        $region33: #{tpu_custom_call.1} parent=31 // pred_check
          %p205 = pneg %p38
        $region34: #{tpu_custom_call.1} parent=31 // pred_check_branch
          %207 = sbr.rel (%p205) target = $region36
        $region35: #{tpu_custom_call.1} parent=31 // pred_region
          %s208 = sand.u32 %s28, 1
          %s209 = scalar_lea.sflag [#allocation4], %s208
          %s210 = sand.u32 %s28, 1
          %s211 = smul.addr %s210, 256
          %s212 = scalar_lea.vmem [#allocation3], %s211
          %s214 = ssub.s32 4096, 4096
          %215 = vsyncadd %s209, %s214
          %s216 = smul.addr %s18, 32
          %s217 = smul.addr %s216, 128
          %s218 = scalar_lea.hbm %s0, %s217
          %s219 = sshll.u32 %s212, 4
          %s220 = int_to_ptr.vmem [resolvable:$true] %s219
          %225 = dma.hbm_to_vmem [thread:$0]  %s218, 4096, %s220, %s209, 128, 128, 8
        $region36: #{tpu_custom_call.1} parent=31 // pred_fallthru
          _
      $region32: #{tpu_custom_call.1} parent=5 // pred_fallthru
        _
      %p226 = scmp.le.s32.totalorder 1, %s18
      %p227 = scmp.lt.s32.totalorder %s18, 3
      %p228 = pnand %p226, %p227
      %p229 = pneg %p228
      // Predicated region
      $region37: #{tpu_custom_call.1} parent=5 // pred_check
        _
      $region38: #{tpu_custom_call.1} parent=5 // pred_check_branch
        %231 = sbr.rel (%p228) target = $region40
      $region39: #{tpu_custom_call.1} parent=5 // pred_region
        %s232 = ssub.s32 %s18, 1
        %s233 = sand.u32 %s31, 1
        %s234 = scalar_lea.sflag [#allocation4], %s233
        %s235 = sand.u32 %s31, 1
        %s236 = smul.addr %s235, 256
        %s237 = scalar_lea.vmem [#allocation3], %s236
        // Predicated region
        $region41: #{tpu_custom_call.1} parent=39 // pred_check
          %p238 = pneg %p44
        $region42: #{tpu_custom_call.1} parent=39 // pred_check_branch
          %240 = sbr.rel (%p238) target = $region44
        $region43: #{tpu_custom_call.1} parent=39 // pred_region
          %241 = dma.done %s234, 4096
        $region44: #{tpu_custom_call.1} parent=39 // pred_fallthru
          _
        // Predicated region
        $region45: #{tpu_custom_call.1} parent=39 // pred_check
          %p242 = pneg %p65
        $region46: #{tpu_custom_call.1} parent=39 // pred_check_branch
          %244 = sbr.rel (%p242) target = $region48
        $region47: #{tpu_custom_call.1} parent=39 // pred_region
          %245 = dma.done [#allocation7], 9216
        $region48: #{tpu_custom_call.1} parent=39 // pred_fallthru
          _
        // Predicated region
        $region49: #{tpu_custom_call.1} parent=39 // pred_check
          %p246 = pneg %p107
        $region50: #{tpu_custom_call.1} parent=39 // pred_check_branch
          %248 = sbr.rel (%p246) target = $region52
        $region51: #{tpu_custom_call.1} parent=39 // pred_region
          %249 = dma.done [#allocation7], 9216
        $region52: #{tpu_custom_call.1} parent=39 // pred_fallthru
          _
        %s250 = sand.u32 %s31, 1
        %s251 = scalar_lea.sflag [#allocation4], %s250
        %s252 = sand.u32 %s31, 1
        %s253 = smul.addr %s252, 256
        %s254 = scalar_lea.vmem [#allocation3], %s253
        %p255 = pneg %p44
        %p256 = pneg %p41
        %p257 = pneg %p65
        %p258 = pneg %p62
        %p259 = pneg %p86
        %p260 = pneg %p83
        %p261 = pneg %p107
        %p262 = pneg %p104
        %p263 = pneg %p128
        %p264 = pneg %p125
        %p265 = pneg %p154
        %p266 = pneg %p151
        %s267 = sand.u32 %s141, 1
        %s268 = scalar_lea.sflag [#allocation5], %s267
        %s269 = sand.u32 %s141, 1
        %s270 = smul.addr %s269, 256
        %s271 = scalar_lea.vmem [#allocation9], %s270
        %vm273 = vcmask 1043459
        %vm274 = vsmask.f32 7950
        %vm275 = vmand %vm273, %vm274
        %v276 = vld [vmem:[#allocation2 + $0x4] sm:$0x8]
        %v277 = vsel %vm275, 0, %v276
        %278 = vst [vmem:[#allocation2 + $0x4] sm:$0x8] %v277
        %279 = vst [vmem:[#allocation2 + $0x8] sm:$0xf] 0
        %280 = vst [vmem:[#allocation2 + $0xc] sm:$0xf] 0
        %vm281 = vcmask 1040384
        %vm282 = vsmask.f32 256
        %vm283 = vmand %vm281, %vm282
        %v284 = vld [vmem:[#allocation2 + $0x10] sm:$0x1]
        %v285 = vsel %vm283, 0, %v284
        %286 = vst [vmem:[#allocation2 + $0x10] sm:$0x1] %v285
        %s287 = scalar_lea.vmem [#allocation2], 340
        %v288 = vld [vmem:[%s287 + $0x4] sm:$0x8]
        %v289 = vsel %vm275, 0, %v288
        %290 = vst [vmem:[%s287 + $0x4] sm:$0x8] %v289
        %291 = vst [vmem:[%s287 + $0x8] sm:$0xf] 0
        %292 = vst [vmem:[%s287 + $0xc] sm:$0xf] 0
        %v293 = vld [vmem:[%s287 + $0x10] sm:$0x1]
        %v294 = vsel %vm283, 0, %v293
        %295 = vst [vmem:[%s287 + $0x10] sm:$0x1] %v294
        %v296 = vld [vmem:[#allocation2 + $0x4] sm:$0x8]
        %v297 = vsel %vm275, 0, %v296
        %298 = vst [vmem:[#allocation2 + $0x4] sm:$0x8] %v297
        %v299 = vld [vmem:[#allocation2 + $0x18] sm:$0x8]
        %v300 = vsel %vm275, 0, %v299
        %301 = vst [vmem:[#allocation2 + $0x18] sm:$0x8] %v300
        %v302 = vld [vmem:[#allocation2 + $0x2c] sm:$0x8]
        %v303 = vsel %vm275, 0, %v302
        %304 = vst [vmem:[#allocation2 + $0x2c] sm:$0x8] %v303
        %v305 = vld [vmem:[#allocation2 + $0x40] sm:$0x8]
        %v306 = vsel %vm275, 0, %v305
        %307 = vst [vmem:[#allocation2 + $0x40] sm:$0x8] %v306
        %v308 = vld [vmem:[#allocation2 + $0x54] sm:$0x8]
        %v309 = vsel %vm275, 0, %v308
        %310 = vst [vmem:[#allocation2 + $0x54] sm:$0x8] %v309
        %v311 = vld [vmem:[#allocation2 + $0x68] sm:$0x8]
        %v312 = vsel %vm275, 0, %v311
        %313 = vst [vmem:[#allocation2 + $0x68] sm:$0x8] %v312
        %v314 = vld [vmem:[#allocation2 + $0x7c] sm:$0x8]
        %v315 = vsel %vm275, 0, %v314
        %316 = vst [vmem:[#allocation2 + $0x7c] sm:$0x8] %v315
        %v317 = vld [vmem:[#allocation2 + $0x90] sm:$0x8]
        %v318 = vsel %vm275, 0, %v317
        %319 = vst [vmem:[#allocation2 + $0x90] sm:$0x8] %v318
        %v320 = vld [vmem:[#allocation2 + $0xa4] sm:$0x8]
        %v321 = vsel %vm275, 0, %v320
        %322 = vst [vmem:[#allocation2 + $0xa4] sm:$0x8] %v321
        %v323 = vld [vmem:[#allocation2 + $0xb8] sm:$0x8]
        %v324 = vsel %vm275, 0, %v323
        %325 = vst [vmem:[#allocation2 + $0xb8] sm:$0x8] %v324
        %v326 = vld [vmem:[#allocation2 + $0xcc] sm:$0x8]
        %v327 = vsel %vm275, 0, %v326
        %328 = vst [vmem:[#allocation2 + $0xcc] sm:$0x8] %v327
        %v329 = vld [vmem:[#allocation2 + $0xe0] sm:$0x8]
        %v330 = vsel %vm275, 0, %v329
        %331 = vst [vmem:[#allocation2 + $0xe0] sm:$0x8] %v330
        %v332 = vld [vmem:[#allocation2 + $0xf4] sm:$0x8]
        %v333 = vsel %vm275, 0, %v332
        %334 = vst [vmem:[#allocation2 + $0xf4] sm:$0x8] %v333
        %v335 = vld [vmem:[#allocation2 + $0x108] sm:$0x8]
        %v336 = vsel %vm275, 0, %v335
        %337 = vst [vmem:[#allocation2 + $0x108] sm:$0x8] %v336
        %v338 = vld [vmem:[#allocation2 + $0x11c] sm:$0x8]
        %v339 = vsel %vm275, 0, %v338
        %340 = vst [vmem:[#allocation2 + $0x11c] sm:$0x8] %v339
        %v341 = vld [vmem:[#allocation2 + $0x130] sm:$0x8]
        %v342 = vsel %vm275, 0, %v341
        %343 = vst [vmem:[#allocation2 + $0x130] sm:$0x8] %v342
        %v344 = vld [vmem:[#allocation2 + $0x144] sm:$0x8]
        %v345 = vsel %vm275, 0, %v344
        %346 = vst [vmem:[#allocation2 + $0x144] sm:$0x8] %v345
        %v347 = vld [vmem:[#allocation2 + $0x158] sm:$0x8]
        %v348 = vsel %vm275, 0, %v347
        %349 = vst [vmem:[#allocation2 + $0x158] sm:$0x8] %v348
        %v350 = vld [vmem:[#allocation2 + $0x10] sm:$0x1]
        %v351 = vsel %vm283, 0, %v350
        %352 = vst [vmem:[#allocation2 + $0x10] sm:$0x1] %v351
        %v353 = vld [vmem:[#allocation2 + $0x24] sm:$0x1]
        %v354 = vsel %vm283, 0, %v353
        %355 = vst [vmem:[#allocation2 + $0x24] sm:$0x1] %v354
        %v356 = vld [vmem:[#allocation2 + $0x38] sm:$0x1]
        %v357 = vsel %vm283, 0, %v356
        %358 = vst [vmem:[#allocation2 + $0x38] sm:$0x1] %v357
        %v359 = vld [vmem:[#allocation2 + $0x4c] sm:$0x1]
        %v360 = vsel %vm283, 0, %v359
        %361 = vst [vmem:[#allocation2 + $0x4c] sm:$0x1] %v360
        %v362 = vld [vmem:[#allocation2 + $0x60] sm:$0x1]
        %v363 = vsel %vm283, 0, %v362
        %364 = vst [vmem:[#allocation2 + $0x60] sm:$0x1] %v363
        %v365 = vld [vmem:[#allocation2 + $0x74] sm:$0x1]
        %v366 = vsel %vm283, 0, %v365
        %367 = vst [vmem:[#allocation2 + $0x74] sm:$0x1] %v366
        %v368 = vld [vmem:[#allocation2 + $0x88] sm:$0x1]
        %v369 = vsel %vm283, 0, %v368
        %370 = vst [vmem:[#allocation2 + $0x88] sm:$0x1] %v369
        %v371 = vld [vmem:[#allocation2 + $0x9c] sm:$0x1]
        %v372 = vsel %vm283, 0, %v371
        %373 = vst [vmem:[#allocation2 + $0x9c] sm:$0x1] %v372
        %v374 = vld [vmem:[#allocation2 + $0xb0] sm:$0x1]
        %v375 = vsel %vm283, 0, %v374
        %376 = vst [vmem:[#allocation2 + $0xb0] sm:$0x1] %v375
        %v377 = vld [vmem:[#allocation2 + $0xc4] sm:$0x1]
        %v378 = vsel %vm283, 0, %v377
        %379 = vst [vmem:[#allocation2 + $0xc4] sm:$0x1] %v378
        %v380 = vld [vmem:[#allocation2 + $0xd8] sm:$0x1]
        %v381 = vsel %vm283, 0, %v380
        %382 = vst [vmem:[#allocation2 + $0xd8] sm:$0x1] %v381
        %v383 = vld [vmem:[#allocation2 + $0xec] sm:$0x1]
        %v384 = vsel %vm283, 0, %v383
        %385 = vst [vmem:[#allocation2 + $0xec] sm:$0x1] %v384
        %v386 = vld [vmem:[#allocation2 + $0x100] sm:$0x1]
        %v387 = vsel %vm283, 0, %v386
        %388 = vst [vmem:[#allocation2 + $0x100] sm:$0x1] %v387
        %v389 = vld [vmem:[#allocation2 + $0x114] sm:$0x1]
        %v390 = vsel %vm283, 0, %v389
        %391 = vst [vmem:[#allocation2 + $0x114] sm:$0x1] %v390
        %v392 = vld [vmem:[#allocation2 + $0x128] sm:$0x1]
        %v393 = vsel %vm283, 0, %v392
        %394 = vst [vmem:[#allocation2 + $0x128] sm:$0x1] %v393
        %v395 = vld [vmem:[#allocation2 + $0x13c] sm:$0x1]
        %v396 = vsel %vm283, 0, %v395
        %397 = vst [vmem:[#allocation2 + $0x13c] sm:$0x1] %v396
        %v398 = vld [vmem:[#allocation2 + $0x150] sm:$0x1]
        %v399 = vsel %vm283, 0, %v398
        %400 = vst [vmem:[#allocation2 + $0x150] sm:$0x1] %v399
        %v401 = vld [vmem:[#allocation2 + $0x164] sm:$0x1]
        %v402 = vsel %vm283, 0, %v401
        %403 = vst [vmem:[#allocation2 + $0x164] sm:$0x1] %v402
        %v404 = vld [vmem:[%s237] sm:$0xff]
        %v405 = vld [vmem:[%s237 + $0x8] sm:$0xff]
        %v406 = vld [vmem:[%s237 + $0x10] sm:$0xff]
        %v407 = vld [vmem:[%s237 + $0x18] sm:$0xff]
        %v408 = vld [vmem:[%s237 + $0x20] sm:$0xff]
        %v409 = vld [vmem:[%s237 + $0x28] sm:$0xff]
        %v410 = vld [vmem:[%s237 + $0x30] sm:$0xff]
        %v411 = vld [vmem:[%s237 + $0x38] sm:$0xff]
        %v412 = vld [vmem:[%s237 + $0x40] sm:$0xff]
        %v413 = vld [vmem:[%s237 + $0x48] sm:$0xff]
        %v414 = vld [vmem:[%s237 + $0x50] sm:$0xff]
        %v415 = vld [vmem:[%s237 + $0x58] sm:$0xff]
        %v416 = vld [vmem:[%s237 + $0x60] sm:$0xff]
        %v417 = vld [vmem:[%s237 + $0x68] sm:$0xff]
        %v418 = vld [vmem:[%s237 + $0x70] sm:$0xff]
        %v419 = vld [vmem:[%s237 + $0x78] sm:$0xff]
        %v420 = vld [vmem:[%s237 + $0x80] sm:$0xff]
        %v421 = vld [vmem:[%s237 + $0x88] sm:$0xff]
        %v422 = vld [vmem:[%s237 + $0x90] sm:$0xff]
        %v423 = vld [vmem:[%s237 + $0x98] sm:$0xff]
        %v424 = vld [vmem:[%s237 + $0xa0] sm:$0xff]
        %v425 = vld [vmem:[%s237 + $0xa8] sm:$0xff]
        %v426 = vld [vmem:[%s237 + $0xb0] sm:$0xff]
        %v427 = vld [vmem:[%s237 + $0xb8] sm:$0xff]
        %v428 = vld [vmem:[%s237 + $0xc0] sm:$0xff]
        %v429 = vld [vmem:[%s237 + $0xc8] sm:$0xff]
        %v430 = vld [vmem:[%s237 + $0xd0] sm:$0xff]
        %v431 = vld [vmem:[%s237 + $0xd8] sm:$0xff]
        %v432 = vld [vmem:[%s237 + $0xe0] sm:$0xff]
        %v433 = vld [vmem:[%s237 + $0xe8] sm:$0xff]
        %v434 = vld [vmem:[%s237 + $0xf0] sm:$0xff]
        %v435 = vld [vmem:[%s237 + $0xf8] sm:$0xff]
        %vm436 = vcmp.gt.f32.partialorder %v404, 0.0
        %vm437 = vcmp.gt.f32.partialorder %v405, 0.0
        %vm438 = vcmp.gt.f32.partialorder %v406, 0.0
        %vm439 = vcmp.gt.f32.partialorder %v407, 0.0
        %vm440 = vcmp.gt.f32.partialorder %v408, 0.0
        %vm441 = vcmp.gt.f32.partialorder %v409, 0.0
        %vm442 = vcmp.gt.f32.partialorder %v410, 0.0
        %vm443 = vcmp.gt.f32.partialorder %v411, 0.0
        %vm444 = vcmp.gt.f32.partialorder %v412, 0.0
        %vm445 = vcmp.gt.f32.partialorder %v413, 0.0
        %vm446 = vcmp.gt.f32.partialorder %v414, 0.0
        %vm447 = vcmp.gt.f32.partialorder %v415, 0.0
        %vm448 = vcmp.gt.f32.partialorder %v416, 0.0
        %vm449 = vcmp.gt.f32.partialorder %v417, 0.0
        %vm450 = vcmp.gt.f32.partialorder %v418, 0.0
        %vm451 = vcmp.gt.f32.partialorder %v419, 0.0
        %vm452 = vcmp.gt.f32.partialorder %v420, 0.0
        %vm453 = vcmp.gt.f32.partialorder %v421, 0.0
        %vm454 = vcmp.gt.f32.partialorder %v422, 0.0
        %vm455 = vcmp.gt.f32.partialorder %v423, 0.0
        %vm456 = vcmp.gt.f32.partialorder %v424, 0.0
        %vm457 = vcmp.gt.f32.partialorder %v425, 0.0
        %vm458 = vcmp.gt.f32.partialorder %v426, 0.0
        %vm459 = vcmp.gt.f32.partialorder %v427, 0.0
        %vm460 = vcmp.gt.f32.partialorder %v428, 0.0
        %vm461 = vcmp.gt.f32.partialorder %v429, 0.0
        %vm462 = vcmp.gt.f32.partialorder %v430, 0.0
        %vm463 = vcmp.gt.f32.partialorder %v431, 0.0
        %vm464 = vcmp.gt.f32.partialorder %v432, 0.0
        %vm465 = vcmp.gt.f32.partialorder %v433, 0.0
        %vm466 = vcmp.gt.f32.partialorder %v434, 0.0
        %vm467 = vcmp.gt.f32.partialorder %v435, 0.0
        %v468 = vmin.f32 %v404, 0.0
        %v469 = vmin.f32 %v405, 0.0
        %v470 = vmin.f32 %v406, 0.0
        %v471 = vmin.f32 %v407, 0.0
        %v472 = vmin.f32 %v408, 0.0
        %v473 = vmin.f32 %v409, 0.0
        %v474 = vmin.f32 %v410, 0.0
        %v475 = vmin.f32 %v411, 0.0
        %v476 = vmin.f32 %v412, 0.0
        %v477 = vmin.f32 %v413, 0.0
        %v478 = vmin.f32 %v414, 0.0
        %v479 = vmin.f32 %v415, 0.0
        %v480 = vmin.f32 %v416, 0.0
        %v481 = vmin.f32 %v417, 0.0
        %v482 = vmin.f32 %v418, 0.0
        %v483 = vmin.f32 %v419, 0.0
        %v484 = vmin.f32 %v420, 0.0
        %v485 = vmin.f32 %v421, 0.0
        %v486 = vmin.f32 %v422, 0.0
        %v487 = vmin.f32 %v423, 0.0
        %v488 = vmin.f32 %v424, 0.0
        %v489 = vmin.f32 %v425, 0.0
        %v490 = vmin.f32 %v426, 0.0
        %v491 = vmin.f32 %v427, 0.0
        %v492 = vmin.f32 %v428, 0.0
        %v493 = vmin.f32 %v429, 0.0
        %v494 = vmin.f32 %v430, 0.0
        %v495 = vmin.f32 %v431, 0.0
        %v496 = vmin.f32 %v432, 0.0
        %v497 = vmin.f32 %v433, 0.0
        %v498 = vmin.f32 %v434, 0.0
        %v499 = vmin.f32 %v435, 0.0
        %v500 = vmul.f32 %v468, 1.442695
        %v501 = vpow.pop %v500
        %v502 = vmul.f32 %v469, 1.442695
        %v503 = vpow.pop %v502
        %v504 = vmul.f32 %v470, 1.442695
        %v505 = vpow.pop %v504
        %v506 = vmul.f32 %v471, 1.442695
        %v507 = vpow.pop %v506
        %v508 = vmul.f32 %v472, 1.442695
        %v509 = vpow.pop %v508
        %v510 = vmul.f32 %v473, 1.442695
        %v511 = vpow.pop %v510
        %v512 = vmul.f32 %v474, 1.442695
        %v513 = vpow.pop %v512
        %v514 = vmul.f32 %v475, 1.442695
        %v515 = vpow.pop %v514
        %v516 = vmul.f32 %v476, 1.442695
        %v517 = vpow.pop %v516
        %v518 = vmul.f32 %v477, 1.442695
        %v519 = vpow.pop %v518
        %v520 = vmul.f32 %v478, 1.442695
        %v521 = vpow.pop %v520
        %v522 = vmul.f32 %v479, 1.442695
        %v523 = vpow.pop %v522
        %v524 = vmul.f32 %v480, 1.442695
        %v525 = vpow.pop %v524
        %v526 = vmul.f32 %v481, 1.442695
        %v527 = vpow.pop %v526
        %v528 = vmul.f32 %v482, 1.442695
        %v529 = vpow.pop %v528
        %v530 = vmul.f32 %v483, 1.442695
        %v531 = vpow.pop %v530
        %v532 = vmul.f32 %v484, 1.442695
        %v533 = vpow.pop %v532
        %v534 = vmul.f32 %v485, 1.442695
        %v535 = vpow.pop %v534
        %v536 = vmul.f32 %v486, 1.442695
        %v537 = vpow.pop %v536
        %v538 = vmul.f32 %v487, 1.442695
        %v539 = vpow.pop %v538
        %v540 = vmul.f32 %v488, 1.442695
        %v541 = vpow.pop %v540
        %v542 = vmul.f32 %v489, 1.442695
        %v543 = vpow.pop %v542
        %v544 = vmul.f32 %v490, 1.442695
        %v545 = vpow.pop %v544
        %v546 = vmul.f32 %v491, 1.442695
        %v547 = vpow.pop %v546
        %v548 = vmul.f32 %v492, 1.442695
        %v549 = vpow.pop %v548
        %v550 = vmul.f32 %v493, 1.442695
        %v551 = vpow.pop %v550
        %v552 = vmul.f32 %v494, 1.442695
        %v553 = vpow.pop %v552
        %v554 = vmul.f32 %v495, 1.442695
        %v555 = vpow.pop %v554
        %v556 = vmul.f32 %v496, 1.442695
        %v557 = vpow.pop %v556
        %v558 = vmul.f32 %v497, 1.442695
        %v559 = vpow.pop %v558
        %v560 = vmul.f32 %v498, 1.442695
        %v561 = vpow.pop %v560
        %v562 = vmul.f32 %v499, 1.442695
        %v563 = vpow.pop %v562
        %v564 = vsub.f32 %v501, 1.0
        %v565 = vsub.f32 %v503, 1.0
        %v566 = vsub.f32 %v505, 1.0
        %v567 = vsub.f32 %v507, 1.0
        %v568 = vsub.f32 %v509, 1.0
        %v569 = vsub.f32 %v511, 1.0
        %v570 = vsub.f32 %v513, 1.0
        %v571 = vsub.f32 %v515, 1.0
        %v572 = vsub.f32 %v517, 1.0
        %v573 = vsub.f32 %v519, 1.0
        %v574 = vsub.f32 %v521, 1.0
        %v575 = vsub.f32 %v523, 1.0
        %v576 = vsub.f32 %v525, 1.0
        %v577 = vsub.f32 %v527, 1.0
        %v578 = vsub.f32 %v529, 1.0
        %v579 = vsub.f32 %v531, 1.0
        %v580 = vsub.f32 %v533, 1.0
        %v581 = vsub.f32 %v535, 1.0
        %v582 = vsub.f32 %v537, 1.0
        %v583 = vsub.f32 %v539, 1.0
        %v584 = vsub.f32 %v541, 1.0
        %v585 = vsub.f32 %v543, 1.0
        %v586 = vsub.f32 %v545, 1.0
        %v587 = vsub.f32 %v547, 1.0
        %v588 = vsub.f32 %v549, 1.0
        %v589 = vsub.f32 %v551, 1.0
        %v590 = vsub.f32 %v553, 1.0
        %v591 = vsub.f32 %v555, 1.0
        %v592 = vsub.f32 %v557, 1.0
        %v593 = vsub.f32 %v559, 1.0
        %v594 = vsub.f32 %v561, 1.0
        %v595 = vsub.f32 %v563, 1.0
        %v596 = vsel %vm436, %v404, %v564
        %v597 = vsel %vm437, %v405, %v565
        %v598 = vsel %vm438, %v406, %v566
        %v599 = vsel %vm439, %v407, %v567
        %v600 = vsel %vm440, %v408, %v568
        %v601 = vsel %vm441, %v409, %v569
        %v602 = vsel %vm442, %v410, %v570
        %v603 = vsel %vm443, %v411, %v571
        %v604 = vsel %vm444, %v412, %v572
        %v605 = vsel %vm445, %v413, %v573
        %v606 = vsel %vm446, %v414, %v574
        %v607 = vsel %vm447, %v415, %v575
        %v608 = vsel %vm448, %v416, %v576
        %v609 = vsel %vm449, %v417, %v577
        %v610 = vsel %vm450, %v418, %v578
        %v611 = vsel %vm451, %v419, %v579
        %v612 = vsel %vm452, %v420, %v580
        %v613 = vsel %vm453, %v421, %v581
        %v614 = vsel %vm454, %v422, %v582
        %v615 = vsel %vm455, %v423, %v583
        %v616 = vsel %vm456, %v424, %v584
        %v617 = vsel %vm457, %v425, %v585
        %v618 = vsel %vm458, %v426, %v586
        %v619 = vsel %vm459, %v427, %v587
        %v620 = vsel %vm460, %v428, %v588
        %v621 = vsel %vm461, %v429, %v589
        %v622 = vsel %vm462, %v430, %v590
        %v623 = vsel %vm463, %v431, %v591
        %v624 = vsel %vm464, %v432, %v592
        %v625 = vsel %vm465, %v433, %v593
        %v626 = vsel %vm466, %v434, %v594
        %v627 = vsel %vm467, %v435, %v595
        %v628 = vpack.c.bf16 %v597, %v596
        %v629 = vpack.c.bf16 %v599, %v598
        %v630 = vpack.c.bf16 %v601, %v600
        %v631 = vpack.c.bf16 %v603, %v602
        %v632 = vpack.c.bf16 %v605, %v604
        %v633 = vpack.c.bf16 %v607, %v606
        %v634 = vpack.c.bf16 %v609, %v608
        %v635 = vpack.c.bf16 %v611, %v610
        %v636 = vpack.c.bf16 %v613, %v612
        %v637 = vpack.c.bf16 %v615, %v614
        %v638 = vpack.c.bf16 %v617, %v616
        %v639 = vpack.c.bf16 %v619, %v618
        %v640 = vpack.c.bf16 %v621, %v620
        %v641 = vpack.c.bf16 %v623, %v622
        %v642 = vpack.c.bf16 %v625, %v624
        %v643 = vpack.c.bf16 %v627, %v626
        %v660 = vunpack.c.l.b16 %v628
        %v661 = vunpack.c.h.b16 %v628
        %v662 = vunpack.c.l.b16 %v629
        %v663 = vunpack.c.h.b16 %v629
        %v664 = vunpack.c.l.b16 %v630
        %v665 = vunpack.c.h.b16 %v630
        %v666 = vunpack.c.l.b16 %v631
        %v667 = vunpack.c.h.b16 %v631
        %v668 = vunpack.c.l.b16 %v632
        %v669 = vunpack.c.h.b16 %v632
        %v670 = vunpack.c.l.b16 %v633
        %v671 = vunpack.c.h.b16 %v633
        %v672 = vunpack.c.l.b16 %v634
        %v673 = vunpack.c.h.b16 %v634
        %v674 = vunpack.c.l.b16 %v635
        %v675 = vunpack.c.h.b16 %v635
        %v676 = vunpack.c.l.b16 %v636
        %v677 = vunpack.c.h.b16 %v636
        %v678 = vunpack.c.l.b16 %v637
        %v679 = vunpack.c.h.b16 %v637
        %v680 = vunpack.c.l.b16 %v638
        %v681 = vunpack.c.h.b16 %v638
        %v682 = vunpack.c.l.b16 %v639
        %v683 = vunpack.c.h.b16 %v639
        %v684 = vunpack.c.l.b16 %v640
        %v685 = vunpack.c.h.b16 %v640
        %v686 = vunpack.c.l.b16 %v641
        %v687 = vunpack.c.h.b16 %v641
        %v688 = vunpack.c.l.b16 %v642
        %v689 = vunpack.c.h.b16 %v642
        %v690 = vunpack.c.l.b16 %v643
        %v691 = vunpack.c.h.b16 %v643
        %v692 = vpack.c.b16 %v660, %v660
        %v693 = vpack.c.b16 %v661, %v661
        %v694 = vpack.c.b16 %v662, %v662
        %v695 = vpack.c.b16 %v663, %v663
        %v696 = vpack.c.b16 %v664, %v664
        %v697 = vpack.c.b16 %v665, %v665
        %v698 = vpack.c.b16 %v666, %v666
        %v699 = vpack.c.b16 %v667, %v667
        %v700 = vpack.c.b16 %v668, %v668
        %v701 = vpack.c.b16 %v669, %v669
        %v702 = vpack.c.b16 %v670, %v670
        %v703 = vpack.c.b16 %v671, %v671
        %v704 = vpack.c.b16 %v672, %v672
        %v705 = vpack.c.b16 %v673, %v673
        %v706 = vpack.c.b16 %v674, %v674
        %v707 = vpack.c.b16 %v675, %v675
        %v708 = vpack.c.b16 %v676, %v676
        %v709 = vpack.c.b16 %v677, %v677
        %v710 = vpack.c.b16 %v678, %v678
        %v711 = vpack.c.b16 %v679, %v679
        %v712 = vpack.c.b16 %v680, %v680
        %v713 = vpack.c.b16 %v681, %v681
        %v714 = vpack.c.b16 %v682, %v682
        %v715 = vpack.c.b16 %v683, %v683
        %v716 = vpack.c.b16 %v684, %v684
        %v717 = vpack.c.b16 %v685, %v685
        %v718 = vpack.c.b16 %v686, %v686
        %v719 = vpack.c.b16 %v687, %v687
        %v720 = vpack.c.b16 %v688, %v688
        %v721 = vpack.c.b16 %v689, %v689
        %v722 = vpack.c.b16 %v690, %v690
        %v723 = vpack.c.b16 %v691, %v691
        %s756 = scalar_lea.vmem [#allocation2], 20
        %757 = vst [vmem:[%s756 + $0x8] sm:$0xf] %v692
        %758 = vst [vmem:[%s756 + $0xc] sm:$0xf] %v693
        %759 = vst [vmem:[%s756 + $0x1c] sm:$0xf] %v694
        %760 = vst [vmem:[%s756 + $0x20] sm:$0xf] %v695
        %761 = vst [vmem:[%s756 + $0x30] sm:$0xf] %v696
        %762 = vst [vmem:[%s756 + $0x34] sm:$0xf] %v697
        %763 = vst [vmem:[%s756 + $0x44] sm:$0xf] %v698
        %764 = vst [vmem:[%s756 + $0x48] sm:$0xf] %v699
        %765 = vst [vmem:[%s756 + $0x58] sm:$0xf] %v700
        %766 = vst [vmem:[%s756 + $0x5c] sm:$0xf] %v701
        %767 = vst [vmem:[%s756 + $0x6c] sm:$0xf] %v702
        %768 = vst [vmem:[%s756 + $0x70] sm:$0xf] %v703
        %769 = vst [vmem:[%s756 + $0x80] sm:$0xf] %v704
        %770 = vst [vmem:[%s756 + $0x84] sm:$0xf] %v705
        %771 = vst [vmem:[%s756 + $0x94] sm:$0xf] %v706
        %772 = vst [vmem:[%s756 + $0x98] sm:$0xf] %v707
        %773 = vst [vmem:[%s756 + $0xa8] sm:$0xf] %v708
        %774 = vst [vmem:[%s756 + $0xac] sm:$0xf] %v709
        %775 = vst [vmem:[%s756 + $0xbc] sm:$0xf] %v710
        %776 = vst [vmem:[%s756 + $0xc0] sm:$0xf] %v711
        %777 = vst [vmem:[%s756 + $0xd0] sm:$0xf] %v712
        %778 = vst [vmem:[%s756 + $0xd4] sm:$0xf] %v713
        %779 = vst [vmem:[%s756 + $0xe4] sm:$0xf] %v714
        %780 = vst [vmem:[%s756 + $0xe8] sm:$0xf] %v715
        %781 = vst [vmem:[%s756 + $0xf8] sm:$0xf] %v716
        %782 = vst [vmem:[%s756 + $0xfc] sm:$0xf] %v717
        %783 = vst [vmem:[%s756 + $0x10c] sm:$0xf] %v718
        %784 = vst [vmem:[%s756 + $0x110] sm:$0xf] %v719
        %785 = vst [vmem:[%s756 + $0x120] sm:$0xf] %v720
        %786 = vst [vmem:[%s756 + $0x124] sm:$0xf] %v721
        %787 = vst [vmem:[%s756 + $0x134] sm:$0xf] %v722
        %788 = vst [vmem:[%s756 + $0x138] sm:$0xf] %v723
        %v789 = vld [vmem:[%s2] sm:$0x1]
        %v790 = vld [vmem:[#allocation2 + $0x4] sm:$0x8]
        %v791 = vld [vmem:[#allocation2 + $0x8] sm:$0xf]
        %v792 = vld [vmem:[#allocation2 + $0xc] sm:$0xf]
        %v793 = vld [vmem:[#allocation2 + $0x18] sm:$0x8]
        %v794 = vld [vmem:[#allocation2 + $0x1c] sm:$0xf]
        %v795 = vld [vmem:[#allocation2 + $0x20] sm:$0xf]
        %v796 = vld [vmem:[#allocation2 + $0x2c] sm:$0x8]
        %v797 = vld [vmem:[#allocation2 + $0x30] sm:$0xf]
        %v798 = vld [vmem:[#allocation2 + $0x34] sm:$0xf]
        %v799 = vld [vmem:[#allocation2 + $0x40] sm:$0x8]
        %v800 = vld [vmem:[#allocation2 + $0x44] sm:$0xf]
        %v801 = vld [vmem:[#allocation2 + $0x48] sm:$0xf]
        %v802 = vld [vmem:[#allocation2 + $0x54] sm:$0x8]
        %v803 = vld [vmem:[#allocation2 + $0x58] sm:$0xf]
        %v804 = vld [vmem:[#allocation2 + $0x5c] sm:$0xf]
        %v805 = vld [vmem:[#allocation2 + $0x68] sm:$0x8]
        %v806 = vld [vmem:[#allocation2 + $0x6c] sm:$0xf]
        %v807 = vld [vmem:[#allocation2 + $0x70] sm:$0xf]
        %v808 = vld [vmem:[#allocation2 + $0x7c] sm:$0x8]
        %v809 = vld [vmem:[#allocation2 + $0x80] sm:$0xf]
        %v810 = vld [vmem:[#allocation2 + $0x84] sm:$0xf]
        %v811 = vld [vmem:[#allocation2 + $0x90] sm:$0x8]
        %v812 = vld [vmem:[#allocation2 + $0x94] sm:$0xf]
        %v813 = vld [vmem:[#allocation2 + $0x98] sm:$0xf]
        %v814 = vld [vmem:[#allocation2 + $0xa4] sm:$0x8]
        %v815 = vld [vmem:[#allocation2 + $0xa8] sm:$0xf]
        %v816 = vld [vmem:[#allocation2 + $0xac] sm:$0xf]
        %v817 = vld [vmem:[#allocation2 + $0xb8] sm:$0x8]
        %v818 = vld [vmem:[#allocation2 + $0xbc] sm:$0xf]
        %v819 = vld [vmem:[#allocation2 + $0xc0] sm:$0xf]
        %v820 = vld [vmem:[#allocation2 + $0xcc] sm:$0x8]
        %v821 = vld [vmem:[#allocation2 + $0xd0] sm:$0xf]
        %v822 = vld [vmem:[#allocation2 + $0xd4] sm:$0xf]
        %v823 = vld [vmem:[#allocation2 + $0xe0] sm:$0x8]
        %v824 = vld [vmem:[#allocation2 + $0xe4] sm:$0xf]
        %v825 = vld [vmem:[#allocation2 + $0xe8] sm:$0xf]
        %v826 = vld [vmem:[#allocation2 + $0xf4] sm:$0x8]
        %v827 = vld [vmem:[#allocation2 + $0xf8] sm:$0xf]
        %v828 = vld [vmem:[#allocation2 + $0xfc] sm:$0xf]
        %v829 = vld [vmem:[#allocation2 + $0x108] sm:$0x8]
        %v830 = vld [vmem:[#allocation2 + $0x10c] sm:$0xf]
        %v831 = vld [vmem:[#allocation2 + $0x110] sm:$0xf]
        %v832 = vld [vmem:[#allocation2 + $0x11c] sm:$0x8]
        %v833 = vld [vmem:[#allocation2 + $0x120] sm:$0xf]
        %v834 = vld [vmem:[#allocation2 + $0x124] sm:$0xf]
        %v835 = vld [vmem:[#allocation2 + $0x130] sm:$0x8]
        %v836 = vld [vmem:[#allocation2 + $0x134] sm:$0xf]
        %v837 = vld [vmem:[#allocation2 + $0x138] sm:$0xf]
        %vm838 = vsmask.f32 4368
        %vm839 = vmor %vm282, %vm838
        %v841 = vshrl.u32 %v790, 16
        %v843 = vrot.slane %v841, 7
        %v844 = vrot.slane %v843, 4
        %v846 = vshrl.u32 %v791, 16
        %v848 = vrot.slane %v846, 7
        %v849 = vshll.u32 %v791, 16
        %v851 = vor.u32 %v848, %v849
        %v852 = vsel %vm839, %v844, %v851
        %v853 = vrot.slane %v848, 4
        %v855 = vshrl.u32 %v792, 16
        %v857 = vrot.slane %v855, 7
        %v858 = vshll.u32 %v792, 16
        %v860 = vor.u32 %v857, %v858
        %v861 = vsel %vm839, %v853, %v860
        %v863 = vshrl.u32 %v793, 16
        %v865 = vrot.slane %v863, 7
        %v866 = vrot.slane %v865, 4
        %v868 = vshrl.u32 %v794, 16
        %v870 = vrot.slane %v868, 7
        %v871 = vshll.u32 %v794, 16
        %v873 = vor.u32 %v870, %v871
        %v874 = vsel %vm839, %v866, %v873
        %v875 = vrot.slane %v870, 4
        %v877 = vshrl.u32 %v795, 16
        %v879 = vrot.slane %v877, 7
        %v880 = vshll.u32 %v795, 16
        %v882 = vor.u32 %v879, %v880
        %v883 = vsel %vm839, %v875, %v882
        %v885 = vshrl.u32 %v796, 16
        %v887 = vrot.slane %v885, 7
        %v888 = vrot.slane %v887, 4
        %v890 = vshrl.u32 %v797, 16
        %v892 = vrot.slane %v890, 7
        %v893 = vshll.u32 %v797, 16
        %v895 = vor.u32 %v892, %v893
        %v896 = vsel %vm839, %v888, %v895
        %v897 = vrot.slane %v892, 4
        %v899 = vshrl.u32 %v798, 16
        %v901 = vrot.slane %v899, 7
        %v902 = vshll.u32 %v798, 16
        %v904 = vor.u32 %v901, %v902
        %v905 = vsel %vm839, %v897, %v904
        %v907 = vshrl.u32 %v799, 16
        %v909 = vrot.slane %v907, 7
        %v910 = vrot.slane %v909, 4
        %v912 = vshrl.u32 %v800, 16
        %v914 = vrot.slane %v912, 7
        %v915 = vshll.u32 %v800, 16
        %v917 = vor.u32 %v914, %v915
        %v918 = vsel %vm839, %v910, %v917
        %v919 = vrot.slane %v914, 4
        %v921 = vshrl.u32 %v801, 16
        %v923 = vrot.slane %v921, 7
        %v924 = vshll.u32 %v801, 16
        %v926 = vor.u32 %v923, %v924
        %v927 = vsel %vm839, %v919, %v926
        %v929 = vshrl.u32 %v802, 16
        %v931 = vrot.slane %v929, 7
        %v932 = vrot.slane %v931, 4
        %v934 = vshrl.u32 %v803, 16
        %v936 = vrot.slane %v934, 7
        %v937 = vshll.u32 %v803, 16
        %v939 = vor.u32 %v936, %v937
        %v940 = vsel %vm839, %v932, %v939
        %v941 = vrot.slane %v936, 4
        %v943 = vshrl.u32 %v804, 16
        %v945 = vrot.slane %v943, 7
        %v946 = vshll.u32 %v804, 16
        %v948 = vor.u32 %v945, %v946
        %v949 = vsel %vm839, %v941, %v948
        %v951 = vshrl.u32 %v805, 16
        %v953 = vrot.slane %v951, 7
        %v954 = vrot.slane %v953, 4
        %v956 = vshrl.u32 %v806, 16
        %v958 = vrot.slane %v956, 7
        %v959 = vshll.u32 %v806, 16
        %v961 = vor.u32 %v958, %v959
        %v962 = vsel %vm839, %v954, %v961
        %v963 = vrot.slane %v958, 4
        %v965 = vshrl.u32 %v807, 16
        %v967 = vrot.slane %v965, 7
        %v968 = vshll.u32 %v807, 16
        %v970 = vor.u32 %v967, %v968
        %v971 = vsel %vm839, %v963, %v970
        %v973 = vshrl.u32 %v808, 16
        %v975 = vrot.slane %v973, 7
        %v976 = vrot.slane %v975, 4
        %v978 = vshrl.u32 %v809, 16
        %v980 = vrot.slane %v978, 7
        %v981 = vshll.u32 %v809, 16
        %v983 = vor.u32 %v980, %v981
        %v984 = vsel %vm839, %v976, %v983
        %v985 = vrot.slane %v980, 4
        %v987 = vshrl.u32 %v810, 16
        %v989 = vrot.slane %v987, 7
        %v990 = vshll.u32 %v810, 16
        %v992 = vor.u32 %v989, %v990
        %v993 = vsel %vm839, %v985, %v992
        %v995 = vshrl.u32 %v811, 16
        %v997 = vrot.slane %v995, 7
        %v998 = vrot.slane %v997, 4
        %v1000 = vshrl.u32 %v812, 16
        %v1002 = vrot.slane %v1000, 7
        %v1003 = vshll.u32 %v812, 16
        %v1005 = vor.u32 %v1002, %v1003
        %v1006 = vsel %vm839, %v998, %v1005
        %v1007 = vrot.slane %v1002, 4
        %v1009 = vshrl.u32 %v813, 16
        %v1011 = vrot.slane %v1009, 7
        %v1012 = vshll.u32 %v813, 16
        %v1014 = vor.u32 %v1011, %v1012
        %v1015 = vsel %vm839, %v1007, %v1014
        %v1017 = vshrl.u32 %v814, 16
        %v1019 = vrot.slane %v1017, 7
        %v1020 = vrot.slane %v1019, 4
        %v1022 = vshrl.u32 %v815, 16
        %v1024 = vrot.slane %v1022, 7
        %v1025 = vshll.u32 %v815, 16
        %v1027 = vor.u32 %v1024, %v1025
        %v1028 = vsel %vm839, %v1020, %v1027
        %v1029 = vrot.slane %v1024, 4
        %v1031 = vshrl.u32 %v816, 16
        %v1033 = vrot.slane %v1031, 7
        %v1034 = vshll.u32 %v816, 16
        %v1036 = vor.u32 %v1033, %v1034
        %v1037 = vsel %vm839, %v1029, %v1036
        %v1039 = vshrl.u32 %v817, 16
        %v1041 = vrot.slane %v1039, 7
        %v1042 = vrot.slane %v1041, 4
        %v1044 = vshrl.u32 %v818, 16
        %v1046 = vrot.slane %v1044, 7
        %v1047 = vshll.u32 %v818, 16
        %v1049 = vor.u32 %v1046, %v1047
        %v1050 = vsel %vm839, %v1042, %v1049
        %v1051 = vrot.slane %v1046, 4
        %v1053 = vshrl.u32 %v819, 16
        %v1055 = vrot.slane %v1053, 7
        %v1056 = vshll.u32 %v819, 16
        %v1058 = vor.u32 %v1055, %v1056
        %v1059 = vsel %vm839, %v1051, %v1058
        %v1061 = vshrl.u32 %v820, 16
        %v1063 = vrot.slane %v1061, 7
        %v1064 = vrot.slane %v1063, 4
        %v1066 = vshrl.u32 %v821, 16
        %v1068 = vrot.slane %v1066, 7
        %v1069 = vshll.u32 %v821, 16
        %v1071 = vor.u32 %v1068, %v1069
        %v1072 = vsel %vm839, %v1064, %v1071
        %v1073 = vrot.slane %v1068, 4
        %v1075 = vshrl.u32 %v822, 16
        %v1077 = vrot.slane %v1075, 7
        %v1078 = vshll.u32 %v822, 16
        %v1080 = vor.u32 %v1077, %v1078
        %v1081 = vsel %vm839, %v1073, %v1080
        %v1083 = vshrl.u32 %v823, 16
        %v1085 = vrot.slane %v1083, 7
        %v1086 = vrot.slane %v1085, 4
        %v1088 = vshrl.u32 %v824, 16
        %v1090 = vrot.slane %v1088, 7
        %v1091 = vshll.u32 %v824, 16
        %v1093 = vor.u32 %v1090, %v1091
        %v1094 = vsel %vm839, %v1086, %v1093
        %v1095 = vrot.slane %v1090, 4
        %v1097 = vshrl.u32 %v825, 16
        %v1099 = vrot.slane %v1097, 7
        %v1100 = vshll.u32 %v825, 16
        %v1102 = vor.u32 %v1099, %v1100
        %v1103 = vsel %vm839, %v1095, %v1102
        %v1105 = vshrl.u32 %v826, 16
        %v1107 = vrot.slane %v1105, 7
        %v1108 = vrot.slane %v1107, 4
        %v1110 = vshrl.u32 %v827, 16
        %v1112 = vrot.slane %v1110, 7
        %v1113 = vshll.u32 %v827, 16
        %v1115 = vor.u32 %v1112, %v1113
        %v1116 = vsel %vm839, %v1108, %v1115
        %v1117 = vrot.slane %v1112, 4
        %v1119 = vshrl.u32 %v828, 16
        %v1121 = vrot.slane %v1119, 7
        %v1122 = vshll.u32 %v828, 16
        %v1124 = vor.u32 %v1121, %v1122
        %v1125 = vsel %vm839, %v1117, %v1124
        %v1127 = vshrl.u32 %v829, 16
        %v1129 = vrot.slane %v1127, 7
        %v1130 = vrot.slane %v1129, 4
        %v1132 = vshrl.u32 %v830, 16
        %v1134 = vrot.slane %v1132, 7
        %v1135 = vshll.u32 %v830, 16
        %v1137 = vor.u32 %v1134, %v1135
        %v1138 = vsel %vm839, %v1130, %v1137
        %v1139 = vrot.slane %v1134, 4
        %v1141 = vshrl.u32 %v831, 16
        %v1143 = vrot.slane %v1141, 7
        %v1144 = vshll.u32 %v831, 16
        %v1146 = vor.u32 %v1143, %v1144
        %v1147 = vsel %vm839, %v1139, %v1146
        %v1149 = vshrl.u32 %v832, 16
        %v1151 = vrot.slane %v1149, 7
        %v1152 = vrot.slane %v1151, 4
        %v1154 = vshrl.u32 %v833, 16
        %v1156 = vrot.slane %v1154, 7
        %v1157 = vshll.u32 %v833, 16
        %v1159 = vor.u32 %v1156, %v1157
        %v1160 = vsel %vm839, %v1152, %v1159
        %v1161 = vrot.slane %v1156, 4
        %v1163 = vshrl.u32 %v834, 16
        %v1165 = vrot.slane %v1163, 7
        %v1166 = vshll.u32 %v834, 16
        %v1168 = vor.u32 %v1165, %v1166
        %v1169 = vsel %vm839, %v1161, %v1168
        %v1171 = vshrl.u32 %v835, 16
        %v1173 = vrot.slane %v1171, 7
        %v1174 = vrot.slane %v1173, 4
        %v1176 = vshrl.u32 %v836, 16
        %v1178 = vrot.slane %v1176, 7
        %v1179 = vshll.u32 %v836, 16
        %v1181 = vor.u32 %v1178, %v1179
        %v1182 = vsel %vm839, %v1174, %v1181
        %v1183 = vrot.slane %v1178, 4
        %v1185 = vshrl.u32 %v837, 16
        %v1187 = vrot.slane %v1185, 7
        %v1188 = vshll.u32 %v837, 16
        %v1190 = vor.u32 %v1187, %v1188
        %v1191 = vsel %vm839, %v1183, %v1190
        %v1192 = vld [vmem:[#allocation2 + $0x10] sm:$0x1]
        %v1193 = vld [vmem:[#allocation2 + $0x24] sm:$0x1]
        %v1194 = vld [vmem:[#allocation2 + $0x38] sm:$0x1]
        %v1195 = vld [vmem:[#allocation2 + $0x4c] sm:$0x1]
        %v1196 = vld [vmem:[#allocation2 + $0x60] sm:$0x1]
        %v1197 = vld [vmem:[#allocation2 + $0x74] sm:$0x1]
        %v1198 = vld [vmem:[#allocation2 + $0x88] sm:$0x1]
        %v1199 = vld [vmem:[#allocation2 + $0x9c] sm:$0x1]
        %v1200 = vld [vmem:[#allocation2 + $0xb0] sm:$0x1]
        %v1201 = vld [vmem:[#allocation2 + $0xc4] sm:$0x1]
        %v1202 = vld [vmem:[#allocation2 + $0xd8] sm:$0x1]
        %v1203 = vld [vmem:[#allocation2 + $0xec] sm:$0x1]
        %v1204 = vld [vmem:[#allocation2 + $0x100] sm:$0x1]
        %v1205 = vld [vmem:[#allocation2 + $0x114] sm:$0x1]
        %v1206 = vld [vmem:[#allocation2 + $0x128] sm:$0x1]
        %v1207 = vld [vmem:[#allocation2 + $0x13c] sm:$0x1]
        %vm1208 = vsmask.f32 3328
        %vm1209 = vsmask.f32 7440
        %vm1210 = vmor %vm1208, %vm1209
        %v1211 = vrot.slane %v846, 4
        %v1212 = vrot.slane %v849, 5
        %v1213 = vor.u32 %v1211, %v1212
        %v1214 = vrot.slane %v1213, 4
        %v1215 = vrot.slane %v858, 5
        %v1216 = vsel %vm1210, %v1214, %v1215
        %v1217 = vrot.slane %v855, 4
        %v1218 = vor.u32 %v1217, %v1215
        %v1219 = vrot.slane %v1218, 4
        %v1221 = vshll.u32 %v1192, 16
        %v1223 = vrot.slane %v1221, 5
        %v1224 = vsel %vm1210, %v1219, %v1223
        %v1225 = vrot.slane %v868, 4
        %v1226 = vrot.slane %v871, 5
        %v1227 = vor.u32 %v1225, %v1226
        %v1228 = vrot.slane %v1227, 4
        %v1229 = vrot.slane %v880, 5
        %v1230 = vsel %vm1210, %v1228, %v1229
        %v1231 = vrot.slane %v877, 4
        %v1232 = vor.u32 %v1231, %v1229
        %v1233 = vrot.slane %v1232, 4
        %v1235 = vshll.u32 %v1193, 16
        %v1237 = vrot.slane %v1235, 5
        %v1238 = vsel %vm1210, %v1233, %v1237
        %v1239 = vrot.slane %v890, 4
        %v1240 = vrot.slane %v893, 5
        %v1241 = vor.u32 %v1239, %v1240
        %v1242 = vrot.slane %v1241, 4
        %v1243 = vrot.slane %v902, 5
        %v1244 = vsel %vm1210, %v1242, %v1243
        %v1245 = vrot.slane %v899, 4
        %v1246 = vor.u32 %v1245, %v1243
        %v1247 = vrot.slane %v1246, 4
        %v1249 = vshll.u32 %v1194, 16
        %v1251 = vrot.slane %v1249, 5
        %v1252 = vsel %vm1210, %v1247, %v1251
        %v1253 = vrot.slane %v912, 4
        %v1254 = vrot.slane %v915, 5
        %v1255 = vor.u32 %v1253, %v1254
        %v1256 = vrot.slane %v1255, 4
        %v1257 = vrot.slane %v924, 5
        %v1258 = vsel %vm1210, %v1256, %v1257
        %v1259 = vrot.slane %v921, 4
        %v1260 = vor.u32 %v1259, %v1257
        %v1261 = vrot.slane %v1260, 4
        %v1263 = vshll.u32 %v1195, 16
        %v1265 = vrot.slane %v1263, 5
        %v1266 = vsel %vm1210, %v1261, %v1265
        %v1267 = vrot.slane %v934, 4
        %v1268 = vrot.slane %v937, 5
        %v1269 = vor.u32 %v1267, %v1268
        %v1270 = vrot.slane %v1269, 4
        %v1271 = vrot.slane %v946, 5
        %v1272 = vsel %vm1210, %v1270, %v1271
        %v1273 = vrot.slane %v943, 4
        %v1274 = vor.u32 %v1273, %v1271
        %v1275 = vrot.slane %v1274, 4
        %v1277 = vshll.u32 %v1196, 16
        %v1279 = vrot.slane %v1277, 5
        %v1280 = vsel %vm1210, %v1275, %v1279
        %v1281 = vrot.slane %v956, 4
        %v1282 = vrot.slane %v959, 5
        %v1283 = vor.u32 %v1281, %v1282
        %v1284 = vrot.slane %v1283, 4
        %v1285 = vrot.slane %v968, 5
        %v1286 = vsel %vm1210, %v1284, %v1285
        %v1287 = vrot.slane %v965, 4
        %v1288 = vor.u32 %v1287, %v1285
        %v1289 = vrot.slane %v1288, 4
        %v1291 = vshll.u32 %v1197, 16
        %v1293 = vrot.slane %v1291, 5
        %v1294 = vsel %vm1210, %v1289, %v1293
        %v1295 = vrot.slane %v978, 4
        %v1296 = vrot.slane %v981, 5
        %v1297 = vor.u32 %v1295, %v1296
        %v1298 = vrot.slane %v1297, 4
        %v1299 = vrot.slane %v990, 5
        %v1300 = vsel %vm1210, %v1298, %v1299
        %v1301 = vrot.slane %v987, 4
        %v1302 = vor.u32 %v1301, %v1299
        %v1303 = vrot.slane %v1302, 4
        %v1305 = vshll.u32 %v1198, 16
        %v1307 = vrot.slane %v1305, 5
        %v1308 = vsel %vm1210, %v1303, %v1307
        %v1309 = vrot.slane %v1000, 4
        %v1310 = vrot.slane %v1003, 5
        %v1311 = vor.u32 %v1309, %v1310
        %v1312 = vrot.slane %v1311, 4
        %v1313 = vrot.slane %v1012, 5
        %v1314 = vsel %vm1210, %v1312, %v1313
        %v1315 = vrot.slane %v1009, 4
        %v1316 = vor.u32 %v1315, %v1313
        %v1317 = vrot.slane %v1316, 4
        %v1319 = vshll.u32 %v1199, 16
        %v1321 = vrot.slane %v1319, 5
        %v1322 = vsel %vm1210, %v1317, %v1321
        %v1323 = vrot.slane %v1022, 4
        %v1324 = vrot.slane %v1025, 5
        %v1325 = vor.u32 %v1323, %v1324
        %v1326 = vrot.slane %v1325, 4
        %v1327 = vrot.slane %v1034, 5
        %v1328 = vsel %vm1210, %v1326, %v1327
        %v1329 = vrot.slane %v1031, 4
        %v1330 = vor.u32 %v1329, %v1327
        %v1331 = vrot.slane %v1330, 4
        %v1333 = vshll.u32 %v1200, 16
        %v1335 = vrot.slane %v1333, 5
        %v1336 = vsel %vm1210, %v1331, %v1335
        %v1337 = vrot.slane %v1044, 4
        %v1338 = vrot.slane %v1047, 5
        %v1339 = vor.u32 %v1337, %v1338
        %v1340 = vrot.slane %v1339, 4
        %v1341 = vrot.slane %v1056, 5
        %v1342 = vsel %vm1210, %v1340, %v1341
        %v1343 = vrot.slane %v1053, 4
        %v1344 = vor.u32 %v1343, %v1341
        %v1345 = vrot.slane %v1344, 4
        %v1347 = vshll.u32 %v1201, 16
        %v1349 = vrot.slane %v1347, 5
        %v1350 = vsel %vm1210, %v1345, %v1349
        %v1351 = vrot.slane %v1066, 4
        %v1352 = vrot.slane %v1069, 5
        %v1353 = vor.u32 %v1351, %v1352
        %v1354 = vrot.slane %v1353, 4
        %v1355 = vrot.slane %v1078, 5
        %v1356 = vsel %vm1210, %v1354, %v1355
        %v1357 = vrot.slane %v1075, 4
        %v1358 = vor.u32 %v1357, %v1355
        %v1359 = vrot.slane %v1358, 4
        %v1361 = vshll.u32 %v1202, 16
        %v1363 = vrot.slane %v1361, 5
        %v1364 = vsel %vm1210, %v1359, %v1363
        %v1365 = vrot.slane %v1088, 4
        %v1366 = vrot.slane %v1091, 5
        %v1367 = vor.u32 %v1365, %v1366
        %v1368 = vrot.slane %v1367, 4
        %v1369 = vrot.slane %v1100, 5
        %v1370 = vsel %vm1210, %v1368, %v1369
        %v1371 = vrot.slane %v1097, 4
        %v1372 = vor.u32 %v1371, %v1369
        %v1373 = vrot.slane %v1372, 4
        %v1375 = vshll.u32 %v1203, 16
        %v1377 = vrot.slane %v1375, 5
        %v1378 = vsel %vm1210, %v1373, %v1377
        %v1379 = vrot.slane %v1110, 4
        %v1380 = vrot.slane %v1113, 5
        %v1381 = vor.u32 %v1379, %v1380
        %v1382 = vrot.slane %v1381, 4
        %v1383 = vrot.slane %v1122, 5
        %v1384 = vsel %vm1210, %v1382, %v1383
        %v1385 = vrot.slane %v1119, 4
        %v1386 = vor.u32 %v1385, %v1383
        %v1387 = vrot.slane %v1386, 4
        %v1389 = vshll.u32 %v1204, 16
        %v1391 = vrot.slane %v1389, 5
        %v1392 = vsel %vm1210, %v1387, %v1391
        %v1393 = vrot.slane %v1132, 4
        %v1394 = vrot.slane %v1135, 5
        %v1395 = vor.u32 %v1393, %v1394
        %v1396 = vrot.slane %v1395, 4
        %v1397 = vrot.slane %v1144, 5
        %v1398 = vsel %vm1210, %v1396, %v1397
        %v1399 = vrot.slane %v1141, 4
        %v1400 = vor.u32 %v1399, %v1397
        %v1401 = vrot.slane %v1400, 4
        %v1403 = vshll.u32 %v1205, 16
        %v1405 = vrot.slane %v1403, 5
        %v1406 = vsel %vm1210, %v1401, %v1405
        %v1407 = vrot.slane %v1154, 4
        %v1408 = vrot.slane %v1157, 5
        %v1409 = vor.u32 %v1407, %v1408
        %v1410 = vrot.slane %v1409, 4
        %v1411 = vrot.slane %v1166, 5
        %v1412 = vsel %vm1210, %v1410, %v1411
        %v1413 = vrot.slane %v1163, 4
        %v1414 = vor.u32 %v1413, %v1411
        %v1415 = vrot.slane %v1414, 4
        %v1417 = vshll.u32 %v1206, 16
        %v1419 = vrot.slane %v1417, 5
        %v1420 = vsel %vm1210, %v1415, %v1419
        %v1421 = vrot.slane %v1176, 4
        %v1422 = vrot.slane %v1179, 5
        %v1423 = vor.u32 %v1421, %v1422
        %v1424 = vrot.slane %v1423, 4
        %v1425 = vrot.slane %v1188, 5
        %v1426 = vsel %vm1210, %v1424, %v1425
        %v1427 = vrot.slane %v1185, 4
        %v1428 = vor.u32 %v1427, %v1425
        %v1429 = vrot.slane %v1428, 4
        %v1431 = vshll.u32 %v1207, 16
        %v1433 = vrot.slane %v1431, 5
        %v1434 = vsel %vm1210, %v1429, %v1433
        %v1435 = vunpack.c.l.b16 %v852
        %v1436 = vunpack.c.l.b16 %v861
        %v1437 = vunpack.c.l.b16 %v874
        %v1438 = vunpack.c.l.b16 %v883
        %v1439 = vunpack.c.l.b16 %v896
        %v1440 = vunpack.c.l.b16 %v905
        %v1441 = vunpack.c.l.b16 %v918
        %v1442 = vunpack.c.l.b16 %v927
        %v1443 = vunpack.c.l.b16 %v940
        %v1444 = vunpack.c.l.b16 %v949
        %v1445 = vunpack.c.l.b16 %v962
        %v1446 = vunpack.c.l.b16 %v971
        %v1447 = vunpack.c.l.b16 %v984
        %v1448 = vunpack.c.l.b16 %v993
        %v1449 = vunpack.c.l.b16 %v1006
        %v1450 = vunpack.c.l.b16 %v1015
        %v1451 = vunpack.c.l.b16 %v1028
        %v1452 = vunpack.c.l.b16 %v1037
        %v1453 = vunpack.c.l.b16 %v1050
        %v1454 = vunpack.c.l.b16 %v1059
        %v1455 = vunpack.c.l.b16 %v1072
        %v1456 = vunpack.c.l.b16 %v1081
        %v1457 = vunpack.c.l.b16 %v1094
        %v1458 = vunpack.c.l.b16 %v1103
        %v1459 = vunpack.c.l.b16 %v1116
        %v1460 = vunpack.c.l.b16 %v1125
        %v1461 = vunpack.c.l.b16 %v1138
        %v1462 = vunpack.c.l.b16 %v1147
        %v1463 = vunpack.c.l.b16 %v1160
        %v1464 = vunpack.c.l.b16 %v1169
        %v1465 = vunpack.c.l.b16 %v1182
        %v1466 = vunpack.c.l.b16 %v1191
        %v1467 = vpack.c.b16 %v1436, %v1435
        %v1468 = vpack.c.b16 %v1438, %v1437
        %v1469 = vpack.c.b16 %v1440, %v1439
        %v1470 = vpack.c.b16 %v1442, %v1441
        %v1471 = vpack.c.b16 %v1444, %v1443
        %v1472 = vpack.c.b16 %v1446, %v1445
        %v1473 = vpack.c.b16 %v1448, %v1447
        %v1474 = vpack.c.b16 %v1450, %v1449
        %v1475 = vpack.c.b16 %v1452, %v1451
        %v1476 = vpack.c.b16 %v1454, %v1453
        %v1477 = vpack.c.b16 %v1456, %v1455
        %v1478 = vpack.c.b16 %v1458, %v1457
        %v1479 = vpack.c.b16 %v1460, %v1459
        %v1480 = vpack.c.b16 %v1462, %v1461
        %v1481 = vpack.c.b16 %v1464, %v1463
        %v1482 = vpack.c.b16 %v1466, %v1465
        %v1531 = vunpack.c.l.b16 %v791
        %v1532 = vunpack.c.l.b16 %v792
        %v1533 = vunpack.c.l.b16 %v794
        %v1534 = vunpack.c.l.b16 %v795
        %v1535 = vunpack.c.l.b16 %v797
        %v1536 = vunpack.c.l.b16 %v798
        %v1537 = vunpack.c.l.b16 %v800
        %v1538 = vunpack.c.l.b16 %v801
        %v1539 = vunpack.c.l.b16 %v803
        %v1540 = vunpack.c.l.b16 %v804
        %v1541 = vunpack.c.l.b16 %v806
        %v1542 = vunpack.c.l.b16 %v807
        %v1543 = vunpack.c.l.b16 %v809
        %v1544 = vunpack.c.l.b16 %v810
        %v1545 = vunpack.c.l.b16 %v812
        %v1546 = vunpack.c.l.b16 %v813
        %v1547 = vunpack.c.l.b16 %v815
        %v1548 = vunpack.c.l.b16 %v816
        %v1549 = vunpack.c.l.b16 %v818
        %v1550 = vunpack.c.l.b16 %v819
        %v1551 = vunpack.c.l.b16 %v821
        %v1552 = vunpack.c.l.b16 %v822
        %v1553 = vunpack.c.l.b16 %v824
        %v1554 = vunpack.c.l.b16 %v825
        %v1555 = vunpack.c.l.b16 %v827
        %v1556 = vunpack.c.l.b16 %v828
        %v1557 = vunpack.c.l.b16 %v830
        %v1558 = vunpack.c.l.b16 %v831
        %v1559 = vunpack.c.l.b16 %v833
        %v1560 = vunpack.c.l.b16 %v834
        %v1561 = vunpack.c.l.b16 %v836
        %v1562 = vunpack.c.l.b16 %v837
        %v1563 = vpack.c.b16 %v1532, %v1531
        %v1564 = vpack.c.b16 %v1534, %v1533
        %v1565 = vpack.c.b16 %v1536, %v1535
        %v1566 = vpack.c.b16 %v1538, %v1537
        %v1567 = vpack.c.b16 %v1540, %v1539
        %v1568 = vpack.c.b16 %v1542, %v1541
        %v1569 = vpack.c.b16 %v1544, %v1543
        %v1570 = vpack.c.b16 %v1546, %v1545
        %v1571 = vpack.c.b16 %v1548, %v1547
        %v1572 = vpack.c.b16 %v1550, %v1549
        %v1573 = vpack.c.b16 %v1552, %v1551
        %v1574 = vpack.c.b16 %v1554, %v1553
        %v1575 = vpack.c.b16 %v1556, %v1555
        %v1576 = vpack.c.b16 %v1558, %v1557
        %v1577 = vpack.c.b16 %v1560, %v1559
        %v1578 = vpack.c.b16 %v1562, %v1561
        %v1595 = vunpack.c.l.b16 %v1216
        %v1596 = vunpack.c.l.b16 %v1224
        %v1597 = vunpack.c.l.b16 %v1230
        %v1598 = vunpack.c.l.b16 %v1238
        %v1599 = vunpack.c.l.b16 %v1244
        %v1600 = vunpack.c.l.b16 %v1252
        %v1601 = vunpack.c.l.b16 %v1258
        %v1602 = vunpack.c.l.b16 %v1266
        %v1603 = vunpack.c.l.b16 %v1272
        %v1604 = vunpack.c.l.b16 %v1280
        %v1605 = vunpack.c.l.b16 %v1286
        %v1606 = vunpack.c.l.b16 %v1294
        %v1607 = vunpack.c.l.b16 %v1300
        %v1608 = vunpack.c.l.b16 %v1308
        %v1609 = vunpack.c.l.b16 %v1314
        %v1610 = vunpack.c.l.b16 %v1322
        %v1611 = vunpack.c.l.b16 %v1328
        %v1612 = vunpack.c.l.b16 %v1336
        %v1613 = vunpack.c.l.b16 %v1342
        %v1614 = vunpack.c.l.b16 %v1350
        %v1615 = vunpack.c.l.b16 %v1356
        %v1616 = vunpack.c.l.b16 %v1364
        %v1617 = vunpack.c.l.b16 %v1370
        %v1618 = vunpack.c.l.b16 %v1378
        %v1619 = vunpack.c.l.b16 %v1384
        %v1620 = vunpack.c.l.b16 %v1392
        %v1621 = vunpack.c.l.b16 %v1398
        %v1622 = vunpack.c.l.b16 %v1406
        %v1623 = vunpack.c.l.b16 %v1412
        %v1624 = vunpack.c.l.b16 %v1420
        %v1625 = vunpack.c.l.b16 %v1426
        %v1626 = vunpack.c.l.b16 %v1434
        %v1627 = vpack.c.b16 %v1596, %v1595
        %v1628 = vpack.c.b16 %v1598, %v1597
        %v1629 = vpack.c.b16 %v1600, %v1599
        %v1630 = vpack.c.b16 %v1602, %v1601
        %v1631 = vpack.c.b16 %v1604, %v1603
        %v1632 = vpack.c.b16 %v1606, %v1605
        %v1633 = vpack.c.b16 %v1608, %v1607
        %v1634 = vpack.c.b16 %v1610, %v1609
        %v1635 = vpack.c.b16 %v1612, %v1611
        %v1636 = vpack.c.b16 %v1614, %v1613
        %v1637 = vpack.c.b16 %v1616, %v1615
        %v1638 = vpack.c.b16 %v1618, %v1617
        %v1639 = vpack.c.b16 %v1620, %v1619
        %v1640 = vpack.c.b16 %v1622, %v1621
        %v1641 = vpack.c.b16 %v1624, %v1623
        %v1642 = vpack.c.b16 %v1626, %v1625
        %v1659 = vld [vmem:[#allocation6] sm:$0xf]
        %v1660 = vld [vmem:[#allocation6 + $0x4] sm:$0xf]
        %v1661 = vld [vmem:[#allocation6 + $0x8] sm:$0xf]
        %v1662 = vld [vmem:[#allocation6 + $0xc] sm:$0xf]
        %v1663 = vld [vmem:[#allocation6 + $0x10] sm:$0xf]
        %v1664 = vld [vmem:[#allocation6 + $0x14] sm:$0xf]
        %v1665 = vld [vmem:[#allocation6 + $0x18] sm:$0xf]
        %v1666 = vld [vmem:[#allocation6 + $0x1c] sm:$0xf]
        %v1667 = vld [vmem:[#allocation6 + $0x20] sm:$0xf]
        %v1668 = vld [vmem:[#allocation6 + $0x24] sm:$0xf]
        %v1669 = vld [vmem:[#allocation6 + $0x28] sm:$0xf]
        %v1670 = vld [vmem:[#allocation6 + $0x2c] sm:$0xf]
        %v1671 = vld [vmem:[#allocation6 + $0x30] sm:$0xf]
        %v1672 = vld [vmem:[#allocation6 + $0x34] sm:$0xf]
        %v1673 = vld [vmem:[#allocation6 + $0x38] sm:$0xf]
        %v1674 = vld [vmem:[#allocation6 + $0x3c] sm:$0xf]
        %v1675 = vld [vmem:[#allocation6 + $0x40] sm:$0xf]
        %v1676 = vld [vmem:[#allocation6 + $0x44] sm:$0xf]
        %v1677 = vld [vmem:[#allocation6 + $0x48] sm:$0xf]
        %v1678 = vld [vmem:[#allocation6 + $0x4c] sm:$0xf]
        %v1679 = vld [vmem:[#allocation6 + $0x50] sm:$0xf]
        %v1680 = vld [vmem:[#allocation6 + $0x54] sm:$0xf]
        %v1681 = vld [vmem:[#allocation6 + $0x58] sm:$0xf]
        %v1682 = vld [vmem:[#allocation6 + $0x5c] sm:$0xf]
        %v1683 = vld [vmem:[#allocation6 + $0x60] sm:$0xf]
        %v1684 = vld [vmem:[#allocation6 + $0x64] sm:$0xf]
        %v1685 = vld [vmem:[#allocation6 + $0x68] sm:$0xf]
        %v1686 = vld [vmem:[#allocation6 + $0x6c] sm:$0xf]
        %v1687 = vld [vmem:[#allocation6 + $0x70] sm:$0xf]
        %v1688 = vld [vmem:[#allocation6 + $0x74] sm:$0xf]
        %v1689 = vld [vmem:[#allocation6 + $0x78] sm:$0xf]
        %v1690 = vld [vmem:[#allocation6 + $0x7c] sm:$0xf]
        %v1691 = vld [vmem:[#allocation6 + $0x80] sm:$0xf]
        %v1692 = vld [vmem:[#allocation6 + $0x84] sm:$0xf]
        %v1693 = vld [vmem:[#allocation6 + $0x88] sm:$0xf]
        %v1694 = vld [vmem:[#allocation6 + $0x8c] sm:$0xf]
        %v1695 = vld [vmem:[#allocation6 + $0x90] sm:$0xf]
        %v1696 = vld [vmem:[#allocation6 + $0x94] sm:$0xf]
        %v1697 = vld [vmem:[#allocation6 + $0x98] sm:$0xf]
        %v1698 = vld [vmem:[#allocation6 + $0x9c] sm:$0xf]
        %v1699 = vld [vmem:[#allocation6 + $0xa0] sm:$0xf]
        %v1700 = vld [vmem:[#allocation6 + $0xa4] sm:$0xf]
        %v1701 = vld [vmem:[#allocation6 + $0xa8] sm:$0xf]
        %v1702 = vld [vmem:[#allocation6 + $0xac] sm:$0xf]
        %v1703 = vld [vmem:[#allocation6 + $0xb0] sm:$0xf]
        %v1704 = vld [vmem:[#allocation6 + $0xb4] sm:$0xf]
        %v1705 = vld [vmem:[#allocation6 + $0xb8] sm:$0xf]
        %v1706 = vld [vmem:[#allocation6 + $0xbc] sm:$0xf]
        %v1707 = vld [vmem:[%s756 + $0x4] sm:$0x8]
        %v1708 = vld [vmem:[%s756 + $0x8] sm:$0xf]
        %v1709 = vld [vmem:[%s756 + $0xc] sm:$0xf]
        %v1710 = vld [vmem:[%s756 + $0x18] sm:$0x8]
        %v1711 = vld [vmem:[%s756 + $0x1c] sm:$0xf]
        %v1712 = vld [vmem:[%s756 + $0x20] sm:$0xf]
        %v1713 = vld [vmem:[%s756 + $0x2c] sm:$0x8]
        %v1714 = vld [vmem:[%s756 + $0x30] sm:$0xf]
        %v1715 = vld [vmem:[%s756 + $0x34] sm:$0xf]
        %v1716 = vld [vmem:[%s756 + $0x40] sm:$0x8]
        %v1717 = vld [vmem:[%s756 + $0x44] sm:$0xf]
        %v1718 = vld [vmem:[%s756 + $0x48] sm:$0xf]
        %v1719 = vld [vmem:[%s756 + $0x54] sm:$0x8]
        %v1720 = vld [vmem:[%s756 + $0x58] sm:$0xf]
        %v1721 = vld [vmem:[%s756 + $0x5c] sm:$0xf]
        %v1722 = vld [vmem:[%s756 + $0x68] sm:$0x8]
        %v1723 = vld [vmem:[%s756 + $0x6c] sm:$0xf]
        %v1724 = vld [vmem:[%s756 + $0x70] sm:$0xf]
        %v1725 = vld [vmem:[%s756 + $0x7c] sm:$0x8]
        %v1726 = vld [vmem:[%s756 + $0x80] sm:$0xf]
        %v1727 = vld [vmem:[%s756 + $0x84] sm:$0xf]
        %v1728 = vld [vmem:[%s756 + $0x90] sm:$0x8]
        %v1729 = vld [vmem:[%s756 + $0x94] sm:$0xf]
        %v1730 = vld [vmem:[%s756 + $0x98] sm:$0xf]
        %v1731 = vld [vmem:[%s756 + $0xa4] sm:$0x8]
        %v1732 = vld [vmem:[%s756 + $0xa8] sm:$0xf]
        %v1733 = vld [vmem:[%s756 + $0xac] sm:$0xf]
        %v1734 = vld [vmem:[%s756 + $0xb8] sm:$0x8]
        %v1735 = vld [vmem:[%s756 + $0xbc] sm:$0xf]
        %v1736 = vld [vmem:[%s756 + $0xc0] sm:$0xf]
        %v1737 = vld [vmem:[%s756 + $0xcc] sm:$0x8]
        %v1738 = vld [vmem:[%s756 + $0xd0] sm:$0xf]
        %v1739 = vld [vmem:[%s756 + $0xd4] sm:$0xf]
        %v1740 = vld [vmem:[%s756 + $0xe0] sm:$0x8]
        %v1741 = vld [vmem:[%s756 + $0xe4] sm:$0xf]
        %v1742 = vld [vmem:[%s756 + $0xe8] sm:$0xf]
        %v1743 = vld [vmem:[%s756 + $0xf4] sm:$0x8]
        %v1744 = vld [vmem:[%s756 + $0xf8] sm:$0xf]
        %v1745 = vld [vmem:[%s756 + $0xfc] sm:$0xf]
        %v1746 = vld [vmem:[%s756 + $0x108] sm:$0x8]
        %v1747 = vld [vmem:[%s756 + $0x10c] sm:$0xf]
        %v1748 = vld [vmem:[%s756 + $0x110] sm:$0xf]
        %v1749 = vld [vmem:[%s756 + $0x11c] sm:$0x8]
        %v1750 = vld [vmem:[%s756 + $0x120] sm:$0xf]
        %v1751 = vld [vmem:[%s756 + $0x124] sm:$0xf]
        %v1752 = vld [vmem:[%s756 + $0x130] sm:$0x8]
        %v1753 = vld [vmem:[%s756 + $0x134] sm:$0xf]
        %v1754 = vld [vmem:[%s756 + $0x138] sm:$0xf]
        %v1756 = vshrl.u32 %v1707, 16
        %v1758 = vrot.slane %v1756, 7
        %v1759 = vrot.slane %v1758, 4
        %v1761 = vshrl.u32 %v1708, 16
        %v1763 = vrot.slane %v1761, 7
        %v1764 = vshll.u32 %v1708, 16
        %v1766 = vor.u32 %v1763, %v1764
        %v1767 = vsel %vm839, %v1759, %v1766
        %v1768 = vrot.slane %v1763, 4
        %v1770 = vshrl.u32 %v1709, 16
        %v1772 = vrot.slane %v1770, 7
        %v1773 = vshll.u32 %v1709, 16
        %v1775 = vor.u32 %v1772, %v1773
        %v1776 = vsel %vm839, %v1768, %v1775
        %v1778 = vshrl.u32 %v1710, 16
        %v1780 = vrot.slane %v1778, 7
        %v1781 = vrot.slane %v1780, 4
        %v1783 = vshrl.u32 %v1711, 16
        %v1785 = vrot.slane %v1783, 7
        %v1786 = vshll.u32 %v1711, 16
        %v1788 = vor.u32 %v1785, %v1786
        %v1789 = vsel %vm839, %v1781, %v1788
        %v1790 = vrot.slane %v1785, 4
        %v1792 = vshrl.u32 %v1712, 16
        %v1794 = vrot.slane %v1792, 7
        %v1795 = vshll.u32 %v1712, 16
        %v1797 = vor.u32 %v1794, %v1795
        %v1798 = vsel %vm839, %v1790, %v1797
        %v1800 = vshrl.u32 %v1713, 16
        %v1802 = vrot.slane %v1800, 7
        %v1803 = vrot.slane %v1802, 4
        %v1805 = vshrl.u32 %v1714, 16
        %v1807 = vrot.slane %v1805, 7
        %v1808 = vshll.u32 %v1714, 16
        %v1810 = vor.u32 %v1807, %v1808
        %v1811 = vsel %vm839, %v1803, %v1810
        %v1812 = vrot.slane %v1807, 4
        %v1814 = vshrl.u32 %v1715, 16
        %v1816 = vrot.slane %v1814, 7
        %v1817 = vshll.u32 %v1715, 16
        %v1819 = vor.u32 %v1816, %v1817
        %v1820 = vsel %vm839, %v1812, %v1819
        %v1822 = vshrl.u32 %v1716, 16
        %v1824 = vrot.slane %v1822, 7
        %v1825 = vrot.slane %v1824, 4
        %v1827 = vshrl.u32 %v1717, 16
        %v1829 = vrot.slane %v1827, 7
        %v1830 = vshll.u32 %v1717, 16
        %v1832 = vor.u32 %v1829, %v1830
        %v1833 = vsel %vm839, %v1825, %v1832
        %v1834 = vrot.slane %v1829, 4
        %v1836 = vshrl.u32 %v1718, 16
        %v1838 = vrot.slane %v1836, 7
        %v1839 = vshll.u32 %v1718, 16
        %v1841 = vor.u32 %v1838, %v1839
        %v1842 = vsel %vm839, %v1834, %v1841
        %v1844 = vshrl.u32 %v1719, 16
        %v1846 = vrot.slane %v1844, 7
        %v1847 = vrot.slane %v1846, 4
        %v1849 = vshrl.u32 %v1720, 16
        %v1851 = vrot.slane %v1849, 7
        %v1852 = vshll.u32 %v1720, 16
        %v1854 = vor.u32 %v1851, %v1852
        %v1855 = vsel %vm839, %v1847, %v1854
        %v1856 = vrot.slane %v1851, 4
        %v1858 = vshrl.u32 %v1721, 16
        %v1860 = vrot.slane %v1858, 7
        %v1861 = vshll.u32 %v1721, 16
        %v1863 = vor.u32 %v1860, %v1861
        %v1864 = vsel %vm839, %v1856, %v1863
        %v1866 = vshrl.u32 %v1722, 16
        %v1868 = vrot.slane %v1866, 7
        %v1869 = vrot.slane %v1868, 4
        %v1871 = vshrl.u32 %v1723, 16
        %v1873 = vrot.slane %v1871, 7
        %v1874 = vshll.u32 %v1723, 16
        %v1876 = vor.u32 %v1873, %v1874
        %v1877 = vsel %vm839, %v1869, %v1876
        %v1878 = vrot.slane %v1873, 4
        %v1880 = vshrl.u32 %v1724, 16
        %v1882 = vrot.slane %v1880, 7
        %v1883 = vshll.u32 %v1724, 16
        %v1885 = vor.u32 %v1882, %v1883
        %v1886 = vsel %vm839, %v1878, %v1885
        %v1888 = vshrl.u32 %v1725, 16
        %v1890 = vrot.slane %v1888, 7
        %v1891 = vrot.slane %v1890, 4
        %v1893 = vshrl.u32 %v1726, 16
        %v1895 = vrot.slane %v1893, 7
        %v1896 = vshll.u32 %v1726, 16
        %v1898 = vor.u32 %v1895, %v1896
        %v1899 = vsel %vm839, %v1891, %v1898
        %v1900 = vrot.slane %v1895, 4
        %v1902 = vshrl.u32 %v1727, 16
        %v1904 = vrot.slane %v1902, 7
        %v1905 = vshll.u32 %v1727, 16
        %v1907 = vor.u32 %v1904, %v1905
        %v1908 = vsel %vm839, %v1900, %v1907
        %v1910 = vshrl.u32 %v1728, 16
        %v1912 = vrot.slane %v1910, 7
        %v1913 = vrot.slane %v1912, 4
        %v1915 = vshrl.u32 %v1729, 16
        %v1917 = vrot.slane %v1915, 7
        %v1918 = vshll.u32 %v1729, 16
        %v1920 = vor.u32 %v1917, %v1918
        %v1921 = vsel %vm839, %v1913, %v1920
        %v1922 = vrot.slane %v1917, 4
        %v1924 = vshrl.u32 %v1730, 16
        %v1926 = vrot.slane %v1924, 7
        %v1927 = vshll.u32 %v1730, 16
        %v1929 = vor.u32 %v1926, %v1927
        %v1930 = vsel %vm839, %v1922, %v1929
        %v1932 = vshrl.u32 %v1731, 16
        %v1934 = vrot.slane %v1932, 7
        %v1935 = vrot.slane %v1934, 4
        %v1937 = vshrl.u32 %v1732, 16
        %v1939 = vrot.slane %v1937, 7
        %v1940 = vshll.u32 %v1732, 16
        %v1942 = vor.u32 %v1939, %v1940
        %v1943 = vsel %vm839, %v1935, %v1942
        %v1944 = vrot.slane %v1939, 4
        %v1946 = vshrl.u32 %v1733, 16
        %v1948 = vrot.slane %v1946, 7
        %v1949 = vshll.u32 %v1733, 16
        %v1951 = vor.u32 %v1948, %v1949
        %v1952 = vsel %vm839, %v1944, %v1951
        %v1954 = vshrl.u32 %v1734, 16
        %v1956 = vrot.slane %v1954, 7
        %v1957 = vrot.slane %v1956, 4
        %v1959 = vshrl.u32 %v1735, 16
        %v1961 = vrot.slane %v1959, 7
        %v1962 = vshll.u32 %v1735, 16
        %v1964 = vor.u32 %v1961, %v1962
        %v1965 = vsel %vm839, %v1957, %v1964
        %v1966 = vrot.slane %v1961, 4
        %v1968 = vshrl.u32 %v1736, 16
        %v1970 = vrot.slane %v1968, 7
        %v1971 = vshll.u32 %v1736, 16
        %v1973 = vor.u32 %v1970, %v1971
        %v1974 = vsel %vm839, %v1966, %v1973
        %v1976 = vshrl.u32 %v1737, 16
        %v1978 = vrot.slane %v1976, 7
        %v1979 = vrot.slane %v1978, 4
        %v1981 = vshrl.u32 %v1738, 16
        %v1983 = vrot.slane %v1981, 7
        %v1984 = vshll.u32 %v1738, 16
        %v1986 = vor.u32 %v1983, %v1984
        %v1987 = vsel %vm839, %v1979, %v1986
        %v1988 = vrot.slane %v1983, 4
        %v1990 = vshrl.u32 %v1739, 16
        %v1992 = vrot.slane %v1990, 7
        %v1993 = vshll.u32 %v1739, 16
        %v1995 = vor.u32 %v1992, %v1993
        %v1996 = vsel %vm839, %v1988, %v1995
        %v1998 = vshrl.u32 %v1740, 16
        %v2000 = vrot.slane %v1998, 7
        %v2001 = vrot.slane %v2000, 4
        %v2003 = vshrl.u32 %v1741, 16
        %v2005 = vrot.slane %v2003, 7
        %v2006 = vshll.u32 %v1741, 16
        %v2008 = vor.u32 %v2005, %v2006
        %v2009 = vsel %vm839, %v2001, %v2008
        %v2010 = vrot.slane %v2005, 4
        %v2012 = vshrl.u32 %v1742, 16
        %v2014 = vrot.slane %v2012, 7
        %v2015 = vshll.u32 %v1742, 16
        %v2017 = vor.u32 %v2014, %v2015
        %v2018 = vsel %vm839, %v2010, %v2017
        %v2020 = vshrl.u32 %v1743, 16
        %v2022 = vrot.slane %v2020, 7
        %v2023 = vrot.slane %v2022, 4
        %v2025 = vshrl.u32 %v1744, 16
        %v2027 = vrot.slane %v2025, 7
        %v2028 = vshll.u32 %v1744, 16
        %v2030 = vor.u32 %v2027, %v2028
        %v2031 = vsel %vm839, %v2023, %v2030
        %v2032 = vrot.slane %v2027, 4
        %v2034 = vshrl.u32 %v1745, 16
        %v2036 = vrot.slane %v2034, 7
        %v2037 = vshll.u32 %v1745, 16
        %v2039 = vor.u32 %v2036, %v2037
        %v2040 = vsel %vm839, %v2032, %v2039
        %v2042 = vshrl.u32 %v1746, 16
        %v2044 = vrot.slane %v2042, 7
        %v2045 = vrot.slane %v2044, 4
        %v2047 = vshrl.u32 %v1747, 16
        %v2049 = vrot.slane %v2047, 7
        %v2050 = vshll.u32 %v1747, 16
        %v2052 = vor.u32 %v2049, %v2050
        %v2053 = vsel %vm839, %v2045, %v2052
        %v2054 = vrot.slane %v2049, 4
        %v2056 = vshrl.u32 %v1748, 16
        %v2058 = vrot.slane %v2056, 7
        %v2059 = vshll.u32 %v1748, 16
        %v2061 = vor.u32 %v2058, %v2059
        %v2062 = vsel %vm839, %v2054, %v2061
        %v2064 = vshrl.u32 %v1749, 16
        %v2066 = vrot.slane %v2064, 7
        %v2067 = vrot.slane %v2066, 4
        %v2069 = vshrl.u32 %v1750, 16
        %v2071 = vrot.slane %v2069, 7
        %v2072 = vshll.u32 %v1750, 16
        %v2074 = vor.u32 %v2071, %v2072
        %v2075 = vsel %vm839, %v2067, %v2074
        %v2076 = vrot.slane %v2071, 4
        %v2078 = vshrl.u32 %v1751, 16
        %v2080 = vrot.slane %v2078, 7
        %v2081 = vshll.u32 %v1751, 16
        %v2083 = vor.u32 %v2080, %v2081
        %v2084 = vsel %vm839, %v2076, %v2083
        %v2086 = vshrl.u32 %v1752, 16
        %v2088 = vrot.slane %v2086, 7
        %v2089 = vrot.slane %v2088, 4
        %v2091 = vshrl.u32 %v1753, 16
        %v2093 = vrot.slane %v2091, 7
        %v2094 = vshll.u32 %v1753, 16
        %v2096 = vor.u32 %v2093, %v2094
        %v2097 = vsel %vm839, %v2089, %v2096
        %v2098 = vrot.slane %v2093, 4
        %v2100 = vshrl.u32 %v1754, 16
        %v2102 = vrot.slane %v2100, 7
        %v2103 = vshll.u32 %v1754, 16
        %v2105 = vor.u32 %v2102, %v2103
        %v2106 = vsel %vm839, %v2098, %v2105
        %v2107 = vld [vmem:[%s756 + $0x10] sm:$0x1]
        %v2108 = vld [vmem:[%s756 + $0x24] sm:$0x1]
        %v2109 = vld [vmem:[%s756 + $0x38] sm:$0x1]
        %v2110 = vld [vmem:[%s756 + $0x4c] sm:$0x1]
        %v2111 = vld [vmem:[%s756 + $0x60] sm:$0x1]
        %v2112 = vld [vmem:[%s756 + $0x74] sm:$0x1]
        %v2113 = vld [vmem:[%s756 + $0x88] sm:$0x1]
        %v2114 = vld [vmem:[%s756 + $0x9c] sm:$0x1]
        %v2115 = vld [vmem:[%s756 + $0xb0] sm:$0x1]
        %v2116 = vld [vmem:[%s756 + $0xc4] sm:$0x1]
        %v2117 = vld [vmem:[%s756 + $0xd8] sm:$0x1]
        %v2118 = vld [vmem:[%s756 + $0xec] sm:$0x1]
        %v2119 = vld [vmem:[%s756 + $0x100] sm:$0x1]
        %v2120 = vld [vmem:[%s756 + $0x114] sm:$0x1]
        %v2121 = vld [vmem:[%s756 + $0x128] sm:$0x1]
        %v2122 = vld [vmem:[%s756 + $0x13c] sm:$0x1]
        %v2123 = vrot.slane %v1761, 4
        %v2124 = vrot.slane %v1764, 5
        %v2125 = vor.u32 %v2123, %v2124
        %v2126 = vrot.slane %v2125, 4
        %v2127 = vrot.slane %v1773, 5
        %v2128 = vsel %vm1210, %v2126, %v2127
        %v2129 = vrot.slane %v1770, 4
        %v2130 = vor.u32 %v2129, %v2127
        %v2131 = vrot.slane %v2130, 4
        %v2133 = vshll.u32 %v2107, 16
        %v2135 = vrot.slane %v2133, 5
        %v2136 = vsel %vm1210, %v2131, %v2135
        %v2137 = vrot.slane %v1783, 4
        %v2138 = vrot.slane %v1786, 5
        %v2139 = vor.u32 %v2137, %v2138
        %v2140 = vrot.slane %v2139, 4
        %v2141 = vrot.slane %v1795, 5
        %v2142 = vsel %vm1210, %v2140, %v2141
        %v2143 = vrot.slane %v1792, 4
        %v2144 = vor.u32 %v2143, %v2141
        %v2145 = vrot.slane %v2144, 4
        %v2147 = vshll.u32 %v2108, 16
        %v2149 = vrot.slane %v2147, 5
        %v2150 = vsel %vm1210, %v2145, %v2149
        %v2151 = vrot.slane %v1805, 4
        %v2152 = vrot.slane %v1808, 5
        %v2153 = vor.u32 %v2151, %v2152
        %v2154 = vrot.slane %v2153, 4
        %v2155 = vrot.slane %v1817, 5
        %v2156 = vsel %vm1210, %v2154, %v2155
        %v2157 = vrot.slane %v1814, 4
        %v2158 = vor.u32 %v2157, %v2155
        %v2159 = vrot.slane %v2158, 4
        %v2161 = vshll.u32 %v2109, 16
        %v2163 = vrot.slane %v2161, 5
        %v2164 = vsel %vm1210, %v2159, %v2163
        %v2165 = vrot.slane %v1827, 4
        %v2166 = vrot.slane %v1830, 5
        %v2167 = vor.u32 %v2165, %v2166
        %v2168 = vrot.slane %v2167, 4
        %v2169 = vrot.slane %v1839, 5
        %v2170 = vsel %vm1210, %v2168, %v2169
        %v2171 = vrot.slane %v1836, 4
        %v2172 = vor.u32 %v2171, %v2169
        %v2173 = vrot.slane %v2172, 4
        %v2175 = vshll.u32 %v2110, 16
        %v2177 = vrot.slane %v2175, 5
        %v2178 = vsel %vm1210, %v2173, %v2177
        %v2179 = vrot.slane %v1849, 4
        %v2180 = vrot.slane %v1852, 5
        %v2181 = vor.u32 %v2179, %v2180
        %v2182 = vrot.slane %v2181, 4
        %v2183 = vrot.slane %v1861, 5
        %v2184 = vsel %vm1210, %v2182, %v2183
        %v2185 = vrot.slane %v1858, 4
        %v2186 = vor.u32 %v2185, %v2183
        %v2187 = vrot.slane %v2186, 4
        %v2189 = vshll.u32 %v2111, 16
        %v2191 = vrot.slane %v2189, 5
        %v2192 = vsel %vm1210, %v2187, %v2191
        %v2193 = vrot.slane %v1871, 4
        %v2194 = vrot.slane %v1874, 5
        %v2195 = vor.u32 %v2193, %v2194
        %v2196 = vrot.slane %v2195, 4
        %v2197 = vrot.slane %v1883, 5
        %v2198 = vsel %vm1210, %v2196, %v2197
        %v2199 = vrot.slane %v1880, 4
        %v2200 = vor.u32 %v2199, %v2197
        %v2201 = vrot.slane %v2200, 4
        %v2203 = vshll.u32 %v2112, 16
        %v2205 = vrot.slane %v2203, 5
        %v2206 = vsel %vm1210, %v2201, %v2205
        %v2207 = vrot.slane %v1893, 4
        %v2208 = vrot.slane %v1896, 5
        %v2209 = vor.u32 %v2207, %v2208
        %v2210 = vrot.slane %v2209, 4
        %v2211 = vrot.slane %v1905, 5
        %v2212 = vsel %vm1210, %v2210, %v2211
        %v2213 = vrot.slane %v1902, 4
        %v2214 = vor.u32 %v2213, %v2211
        %v2215 = vrot.slane %v2214, 4
        %v2217 = vshll.u32 %v2113, 16
        %v2219 = vrot.slane %v2217, 5
        %v2220 = vsel %vm1210, %v2215, %v2219
        %v2221 = vrot.slane %v1915, 4
        %v2222 = vrot.slane %v1918, 5
        %v2223 = vor.u32 %v2221, %v2222
        %v2224 = vrot.slane %v2223, 4
        %v2225 = vrot.slane %v1927, 5
        %v2226 = vsel %vm1210, %v2224, %v2225
        %v2227 = vrot.slane %v1924, 4
        %v2228 = vor.u32 %v2227, %v2225
        %v2229 = vrot.slane %v2228, 4
        %v2231 = vshll.u32 %v2114, 16
        %v2233 = vrot.slane %v2231, 5
        %v2234 = vsel %vm1210, %v2229, %v2233
        %v2235 = vrot.slane %v1937, 4
        %v2236 = vrot.slane %v1940, 5
        %v2237 = vor.u32 %v2235, %v2236
        %v2238 = vrot.slane %v2237, 4
        %v2239 = vrot.slane %v1949, 5
        %v2240 = vsel %vm1210, %v2238, %v2239
        %v2241 = vrot.slane %v1946, 4
        %v2242 = vor.u32 %v2241, %v2239
        %v2243 = vrot.slane %v2242, 4
        %v2245 = vshll.u32 %v2115, 16
        %v2247 = vrot.slane %v2245, 5
        %v2248 = vsel %vm1210, %v2243, %v2247
        %v2249 = vrot.slane %v1959, 4
        %v2250 = vrot.slane %v1962, 5
        %v2251 = vor.u32 %v2249, %v2250
        %v2252 = vrot.slane %v2251, 4
        %v2253 = vrot.slane %v1971, 5
        %v2254 = vsel %vm1210, %v2252, %v2253
        %v2255 = vrot.slane %v1968, 4
        %v2256 = vor.u32 %v2255, %v2253
        %v2257 = vrot.slane %v2256, 4
        %v2259 = vshll.u32 %v2116, 16
        %v2261 = vrot.slane %v2259, 5
        %v2262 = vsel %vm1210, %v2257, %v2261
        %v2263 = vrot.slane %v1981, 4
        %v2264 = vrot.slane %v1984, 5
        %v2265 = vor.u32 %v2263, %v2264
        %v2266 = vrot.slane %v2265, 4
        %v2267 = vrot.slane %v1993, 5
        %v2268 = vsel %vm1210, %v2266, %v2267
        %v2269 = vrot.slane %v1990, 4
        %v2270 = vor.u32 %v2269, %v2267
        %v2271 = vrot.slane %v2270, 4
        %v2273 = vshll.u32 %v2117, 16
        %v2275 = vrot.slane %v2273, 5
        %v2276 = vsel %vm1210, %v2271, %v2275
        %v2277 = vrot.slane %v2003, 4
        %v2278 = vrot.slane %v2006, 5
        %v2279 = vor.u32 %v2277, %v2278
        %v2280 = vrot.slane %v2279, 4
        %v2281 = vrot.slane %v2015, 5
        %v2282 = vsel %vm1210, %v2280, %v2281
        %v2283 = vrot.slane %v2012, 4
        %v2284 = vor.u32 %v2283, %v2281
        %v2285 = vrot.slane %v2284, 4
        %v2287 = vshll.u32 %v2118, 16
        %v2289 = vrot.slane %v2287, 5
        %v2290 = vsel %vm1210, %v2285, %v2289
        %v2291 = vrot.slane %v2025, 4
        %v2292 = vrot.slane %v2028, 5
        %v2293 = vor.u32 %v2291, %v2292
        %v2294 = vrot.slane %v2293, 4
        %v2295 = vrot.slane %v2037, 5
        %v2296 = vsel %vm1210, %v2294, %v2295
        %v2297 = vrot.slane %v2034, 4
        %v2298 = vor.u32 %v2297, %v2295
        %v2299 = vrot.slane %v2298, 4
        %v2301 = vshll.u32 %v2119, 16
        %v2303 = vrot.slane %v2301, 5
        %v2304 = vsel %vm1210, %v2299, %v2303
        %v2305 = vrot.slane %v2047, 4
        %v2306 = vrot.slane %v2050, 5
        %v2307 = vor.u32 %v2305, %v2306
        %v2308 = vrot.slane %v2307, 4
        %v2309 = vrot.slane %v2059, 5
        %v2310 = vsel %vm1210, %v2308, %v2309
        %v2311 = vrot.slane %v2056, 4
        %v2312 = vor.u32 %v2311, %v2309
        %v2313 = vrot.slane %v2312, 4
        %v2315 = vshll.u32 %v2120, 16
        %v2317 = vrot.slane %v2315, 5
        %v2318 = vsel %vm1210, %v2313, %v2317
        %v2319 = vrot.slane %v2069, 4
        %v2320 = vrot.slane %v2072, 5
        %v2321 = vor.u32 %v2319, %v2320
        %v2322 = vrot.slane %v2321, 4
        %v2323 = vrot.slane %v2081, 5
        %v2324 = vsel %vm1210, %v2322, %v2323
        %v2325 = vrot.slane %v2078, 4
        %v2326 = vor.u32 %v2325, %v2323
        %v2327 = vrot.slane %v2326, 4
        %v2329 = vshll.u32 %v2121, 16
        %v2331 = vrot.slane %v2329, 5
        %v2332 = vsel %vm1210, %v2327, %v2331
        %v2333 = vrot.slane %v2091, 4
        %v2334 = vrot.slane %v2094, 5
        %v2335 = vor.u32 %v2333, %v2334
        %v2336 = vrot.slane %v2335, 4
        %v2337 = vrot.slane %v2103, 5
        %v2338 = vsel %vm1210, %v2336, %v2337
        %v2339 = vrot.slane %v2100, 4
        %v2340 = vor.u32 %v2339, %v2337
        %v2341 = vrot.slane %v2340, 4
        %v2343 = vshll.u32 %v2122, 16
        %v2345 = vrot.slane %v2343, 5
        %v2346 = vsel %vm1210, %v2341, %v2345
        %v2347 = vunpack.c.l.b16 %v1767
        %v2348 = vunpack.c.l.b16 %v1776
        %v2349 = vunpack.c.l.b16 %v1789
        %v2350 = vunpack.c.l.b16 %v1798
        %v2351 = vunpack.c.l.b16 %v1811
        %v2352 = vunpack.c.l.b16 %v1820
        %v2353 = vunpack.c.l.b16 %v1833
        %v2354 = vunpack.c.l.b16 %v1842
        %v2355 = vunpack.c.l.b16 %v1855
        %v2356 = vunpack.c.l.b16 %v1864
        %v2357 = vunpack.c.l.b16 %v1877
        %v2358 = vunpack.c.l.b16 %v1886
        %v2359 = vunpack.c.l.b16 %v1899
        %v2360 = vunpack.c.l.b16 %v1908
        %v2361 = vunpack.c.l.b16 %v1921
        %v2362 = vunpack.c.l.b16 %v1930
        %v2363 = vunpack.c.l.b16 %v1943
        %v2364 = vunpack.c.l.b16 %v1952
        %v2365 = vunpack.c.l.b16 %v1965
        %v2366 = vunpack.c.l.b16 %v1974
        %v2367 = vunpack.c.l.b16 %v1987
        %v2368 = vunpack.c.l.b16 %v1996
        %v2369 = vunpack.c.l.b16 %v2009
        %v2370 = vunpack.c.l.b16 %v2018
        %v2371 = vunpack.c.l.b16 %v2031
        %v2372 = vunpack.c.l.b16 %v2040
        %v2373 = vunpack.c.l.b16 %v2053
        %v2374 = vunpack.c.l.b16 %v2062
        %v2375 = vunpack.c.l.b16 %v2075
        %v2376 = vunpack.c.l.b16 %v2084
        %v2377 = vunpack.c.l.b16 %v2097
        %v2378 = vunpack.c.l.b16 %v2106
        %v2379 = vpack.c.b16 %v2348, %v2347
        %v2380 = vpack.c.b16 %v2350, %v2349
        %v2381 = vpack.c.b16 %v2352, %v2351
        %v2382 = vpack.c.b16 %v2354, %v2353
        %v2383 = vpack.c.b16 %v2356, %v2355
        %v2384 = vpack.c.b16 %v2358, %v2357
        %v2385 = vpack.c.b16 %v2360, %v2359
        %v2386 = vpack.c.b16 %v2362, %v2361
        %v2387 = vpack.c.b16 %v2364, %v2363
        %v2388 = vpack.c.b16 %v2366, %v2365
        %v2389 = vpack.c.b16 %v2368, %v2367
        %v2390 = vpack.c.b16 %v2370, %v2369
        %v2391 = vpack.c.b16 %v2372, %v2371
        %v2392 = vpack.c.b16 %v2374, %v2373
        %v2393 = vpack.c.b16 %v2376, %v2375
        %v2394 = vpack.c.b16 %v2378, %v2377
        %v2443 = vunpack.c.l.b16 %v1708
        %v2444 = vunpack.c.l.b16 %v1709
        %v2445 = vunpack.c.l.b16 %v1711
        %v2446 = vunpack.c.l.b16 %v1712
        %v2447 = vunpack.c.l.b16 %v1714
        %v2448 = vunpack.c.l.b16 %v1715
        %v2449 = vunpack.c.l.b16 %v1717
        %v2450 = vunpack.c.l.b16 %v1718
        %v2451 = vunpack.c.l.b16 %v1720
        %v2452 = vunpack.c.l.b16 %v1721
        %v2453 = vunpack.c.l.b16 %v1723
        %v2454 = vunpack.c.l.b16 %v1724
        %v2455 = vunpack.c.l.b16 %v1726
        %v2456 = vunpack.c.l.b16 %v1727
        %v2457 = vunpack.c.l.b16 %v1729
        %v2458 = vunpack.c.l.b16 %v1730
        %v2459 = vunpack.c.l.b16 %v1732
        %v2460 = vunpack.c.l.b16 %v1733
        %v2461 = vunpack.c.l.b16 %v1735
        %v2462 = vunpack.c.l.b16 %v1736
        %v2463 = vunpack.c.l.b16 %v1738
        %v2464 = vunpack.c.l.b16 %v1739
        %v2465 = vunpack.c.l.b16 %v1741
        %v2466 = vunpack.c.l.b16 %v1742
        %v2467 = vunpack.c.l.b16 %v1744
        %v2468 = vunpack.c.l.b16 %v1745
        %v2469 = vunpack.c.l.b16 %v1747
        %v2470 = vunpack.c.l.b16 %v1748
        %v2471 = vunpack.c.l.b16 %v1750
        %v2472 = vunpack.c.l.b16 %v1751
        %v2473 = vunpack.c.l.b16 %v1753
        %v2474 = vunpack.c.l.b16 %v1754
        %v2475 = vpack.c.b16 %v2444, %v2443
        %v2476 = vpack.c.b16 %v2446, %v2445
        %v2477 = vpack.c.b16 %v2448, %v2447
        %v2478 = vpack.c.b16 %v2450, %v2449
        %v2479 = vpack.c.b16 %v2452, %v2451
        %v2480 = vpack.c.b16 %v2454, %v2453
        %v2481 = vpack.c.b16 %v2456, %v2455
        %v2482 = vpack.c.b16 %v2458, %v2457
        %v2483 = vpack.c.b16 %v2460, %v2459
        %v2484 = vpack.c.b16 %v2462, %v2461
        %v2485 = vpack.c.b16 %v2464, %v2463
        %v2486 = vpack.c.b16 %v2466, %v2465
        %v2487 = vpack.c.b16 %v2468, %v2467
        %v2488 = vpack.c.b16 %v2470, %v2469
        %v2489 = vpack.c.b16 %v2472, %v2471
        %v2490 = vpack.c.b16 %v2474, %v2473
        %v2507 = vunpack.c.l.b16 %v2128
        %v2508 = vunpack.c.l.b16 %v2136
        %v2509 = vunpack.c.l.b16 %v2142
        %v2510 = vunpack.c.l.b16 %v2150
        %v2511 = vunpack.c.l.b16 %v2156
        %v2512 = vunpack.c.l.b16 %v2164
        %v2513 = vunpack.c.l.b16 %v2170
        %v2514 = vunpack.c.l.b16 %v2178
        %v2515 = vunpack.c.l.b16 %v2184
        %v2516 = vunpack.c.l.b16 %v2192
        %v2517 = vunpack.c.l.b16 %v2198
        %v2518 = vunpack.c.l.b16 %v2206
        %v2519 = vunpack.c.l.b16 %v2212
        %v2520 = vunpack.c.l.b16 %v2220
        %v2521 = vunpack.c.l.b16 %v2226
        %v2522 = vunpack.c.l.b16 %v2234
        %v2523 = vunpack.c.l.b16 %v2240
        %v2524 = vunpack.c.l.b16 %v2248
        %v2525 = vunpack.c.l.b16 %v2254
        %v2526 = vunpack.c.l.b16 %v2262
        %v2527 = vunpack.c.l.b16 %v2268
        %v2528 = vunpack.c.l.b16 %v2276
        %v2529 = vunpack.c.l.b16 %v2282
        %v2530 = vunpack.c.l.b16 %v2290
        %v2531 = vunpack.c.l.b16 %v2296
        %v2532 = vunpack.c.l.b16 %v2304
        %v2533 = vunpack.c.l.b16 %v2310
        %v2534 = vunpack.c.l.b16 %v2318
        %v2535 = vunpack.c.l.b16 %v2324
        %v2536 = vunpack.c.l.b16 %v2332
        %v2537 = vunpack.c.l.b16 %v2338
        %v2538 = vunpack.c.l.b16 %v2346
        %v2539 = vpack.c.b16 %v2508, %v2507
        %v2540 = vpack.c.b16 %v2510, %v2509
        %v2541 = vpack.c.b16 %v2512, %v2511
        %v2542 = vpack.c.b16 %v2514, %v2513
        %v2543 = vpack.c.b16 %v2516, %v2515
        %v2544 = vpack.c.b16 %v2518, %v2517
        %v2545 = vpack.c.b16 %v2520, %v2519
        %v2546 = vpack.c.b16 %v2522, %v2521
        %v2547 = vpack.c.b16 %v2524, %v2523
        %v2548 = vpack.c.b16 %v2526, %v2525
        %v2549 = vpack.c.b16 %v2528, %v2527
        %v2550 = vpack.c.b16 %v2530, %v2529
        %v2551 = vpack.c.b16 %v2532, %v2531
        %v2552 = vpack.c.b16 %v2534, %v2533
        %v2553 = vpack.c.b16 %v2536, %v2535
        %v2554 = vpack.c.b16 %v2538, %v2537
        %v2571 = vld [vmem:[#allocation6 + $0xc0] sm:$0xf]
        %v2572 = vld [vmem:[#allocation6 + $0xc4] sm:$0xf]
        %v2573 = vld [vmem:[#allocation6 + $0xc8] sm:$0xf]
        %v2574 = vld [vmem:[#allocation6 + $0xcc] sm:$0xf]
        %v2575 = vld [vmem:[#allocation6 + $0xd0] sm:$0xf]
        %v2576 = vld [vmem:[#allocation6 + $0xd4] sm:$0xf]
        %v2577 = vld [vmem:[#allocation6 + $0xd8] sm:$0xf]
        %v2578 = vld [vmem:[#allocation6 + $0xdc] sm:$0xf]
        %v2579 = vld [vmem:[#allocation6 + $0xe0] sm:$0xf]
        %v2580 = vld [vmem:[#allocation6 + $0xe4] sm:$0xf]
        %v2581 = vld [vmem:[#allocation6 + $0xe8] sm:$0xf]
        %v2582 = vld [vmem:[#allocation6 + $0xec] sm:$0xf]
        %v2583 = vld [vmem:[#allocation6 + $0xf0] sm:$0xf]
        %v2584 = vld [vmem:[#allocation6 + $0xf4] sm:$0xf]
        %v2585 = vld [vmem:[#allocation6 + $0xf8] sm:$0xf]
        %v2586 = vld [vmem:[#allocation6 + $0xfc] sm:$0xf]
        %v2587 = vld [vmem:[#allocation6 + $0x100] sm:$0xf]
        %v2588 = vld [vmem:[#allocation6 + $0x104] sm:$0xf]
        %v2589 = vld [vmem:[#allocation6 + $0x108] sm:$0xf]
        %v2590 = vld [vmem:[#allocation6 + $0x10c] sm:$0xf]
        %v2591 = vld [vmem:[#allocation6 + $0x110] sm:$0xf]
        %v2592 = vld [vmem:[#allocation6 + $0x114] sm:$0xf]
        %v2593 = vld [vmem:[#allocation6 + $0x118] sm:$0xf]
        %v2594 = vld [vmem:[#allocation6 + $0x11c] sm:$0xf]
        %v2595 = vld [vmem:[#allocation6 + $0x120] sm:$0xf]
        %v2596 = vld [vmem:[#allocation6 + $0x124] sm:$0xf]
        %v2597 = vld [vmem:[#allocation6 + $0x128] sm:$0xf]
        %v2598 = vld [vmem:[#allocation6 + $0x12c] sm:$0xf]
        %v2599 = vld [vmem:[#allocation6 + $0x130] sm:$0xf]
        %v2600 = vld [vmem:[#allocation6 + $0x134] sm:$0xf]
        %v2601 = vld [vmem:[#allocation6 + $0x138] sm:$0xf]
        %v2602 = vld [vmem:[#allocation6 + $0x13c] sm:$0xf]
        %v2603 = vld [vmem:[#allocation6 + $0x140] sm:$0xf]
        %v2604 = vld [vmem:[#allocation6 + $0x144] sm:$0xf]
        %v2605 = vld [vmem:[#allocation6 + $0x148] sm:$0xf]
        %v2606 = vld [vmem:[#allocation6 + $0x14c] sm:$0xf]
        %v2607 = vld [vmem:[#allocation6 + $0x150] sm:$0xf]
        %v2608 = vld [vmem:[#allocation6 + $0x154] sm:$0xf]
        %v2609 = vld [vmem:[#allocation6 + $0x158] sm:$0xf]
        %v2610 = vld [vmem:[#allocation6 + $0x15c] sm:$0xf]
        %v2611 = vld [vmem:[#allocation6 + $0x160] sm:$0xf]
        %v2612 = vld [vmem:[#allocation6 + $0x164] sm:$0xf]
        %v2613 = vld [vmem:[#allocation6 + $0x168] sm:$0xf]
        %v2614 = vld [vmem:[#allocation6 + $0x16c] sm:$0xf]
        %v2615 = vld [vmem:[#allocation6 + $0x170] sm:$0xf]
        %v2616 = vld [vmem:[#allocation6 + $0x174] sm:$0xf]
        %v2617 = vld [vmem:[#allocation6 + $0x178] sm:$0xf]
        %v2618 = vld [vmem:[#allocation6 + $0x17c] sm:$0xf]
        %v2667 = vunpack.c.l.b16 %v2571
        %v2668 = vunpack.c.l.b16 %v2572
        %v2669 = vunpack.c.l.b16 %v2573
        %v2670 = vunpack.c.l.b16 %v2574
        %v2671 = vunpack.c.l.b16 %v2575
        %v2672 = vunpack.c.l.b16 %v2576
        %v2673 = vunpack.c.l.b16 %v2577
        %v2674 = vunpack.c.l.b16 %v2578
        %v2675 = vunpack.c.l.b16 %v2579
        %v2676 = vunpack.c.l.b16 %v2580
        %v2677 = vunpack.c.l.b16 %v2581
        %v2678 = vunpack.c.l.b16 %v2582
        %v2679 = vunpack.c.l.b16 %v2583
        %v2680 = vunpack.c.l.b16 %v2584
        %v2681 = vunpack.c.l.b16 %v2585
        %v2682 = vunpack.c.l.b16 %v2586
        %v2683 = vunpack.c.l.b16 %v2587
        %v2684 = vunpack.c.l.b16 %v2588
        %v2685 = vunpack.c.l.b16 %v2589
        %v2686 = vunpack.c.l.b16 %v2590
        %v2687 = vunpack.c.l.b16 %v2591
        %v2688 = vunpack.c.l.b16 %v2592
        %v2689 = vunpack.c.l.b16 %v2593
        %v2690 = vunpack.c.l.b16 %v2594
        %v2691 = vunpack.c.l.b16 %v2595
        %v2692 = vunpack.c.l.b16 %v2596
        %v2693 = vunpack.c.l.b16 %v2597
        %v2694 = vunpack.c.l.b16 %v2598
        %v2695 = vunpack.c.l.b16 %v2599
        %v2696 = vunpack.c.l.b16 %v2600
        %v2697 = vunpack.c.l.b16 %v2601
        %v2698 = vunpack.c.l.b16 %v2602
        %v2699 = vunpack.c.l.b16 %v2603
        %v2700 = vunpack.c.l.b16 %v2604
        %v2701 = vunpack.c.l.b16 %v2605
        %v2702 = vunpack.c.l.b16 %v2606
        %v2703 = vunpack.c.l.b16 %v2607
        %v2704 = vunpack.c.l.b16 %v2608
        %v2705 = vunpack.c.l.b16 %v2609
        %v2706 = vunpack.c.l.b16 %v2610
        %v2707 = vunpack.c.l.b16 %v2611
        %v2708 = vunpack.c.l.b16 %v2612
        %v2709 = vunpack.c.l.b16 %v2613
        %v2710 = vunpack.c.l.b16 %v2614
        %v2711 = vunpack.c.l.b16 %v2615
        %v2712 = vunpack.c.l.b16 %v2616
        %v2713 = vunpack.c.l.b16 %v2617
        %v2714 = vunpack.c.l.b16 %v2618
        %v2715 = vpack.c.b16 %v2668, %v2667
        %v2716 = vpack.c.b16 %v2670, %v2669
        %v2717 = vpack.c.b16 %v2672, %v2671
        %v2718 = vpack.c.b16 %v2674, %v2673
        %v2719 = vpack.c.b16 %v2676, %v2675
        %v2720 = vpack.c.b16 %v2678, %v2677
        %v2721 = vpack.c.b16 %v2680, %v2679
        %v2722 = vpack.c.b16 %v2682, %v2681
        %v2723 = vpack.c.b16 %v2684, %v2683
        %v2724 = vpack.c.b16 %v2686, %v2685
        %v2725 = vpack.c.b16 %v2688, %v2687
        %v2726 = vpack.c.b16 %v2690, %v2689
        %v2727 = vpack.c.b16 %v2692, %v2691
        %v2728 = vpack.c.b16 %v2694, %v2693
        %v2729 = vpack.c.b16 %v2696, %v2695
        %v2730 = vpack.c.b16 %v2698, %v2697
        %v2731 = vpack.c.b16 %v2700, %v2699
        %v2732 = vpack.c.b16 %v2702, %v2701
        %v2733 = vpack.c.b16 %v2704, %v2703
        %v2734 = vpack.c.b16 %v2706, %v2705
        %v2735 = vpack.c.b16 %v2708, %v2707
        %v2736 = vpack.c.b16 %v2710, %v2709
        %v2737 = vpack.c.b16 %v2712, %v2711
        %v2738 = vpack.c.b16 %v2714, %v2713
        %2763 = vmatprep.subr.bf16.mxu0 0
        %2764 = vmatpush1.bf16.msra.mxu0 %v2715
        %2765 = vmatprep.subr.bf16.mxu0 0
        %2766 = vmatpush1.bf16.msra.mxu0 %v2716
        %2767 = vmatprep.subr.bf16.mxu0 0
        %2768 = vmatpush1.bf16.msra.mxu0 %v2717
        %2769 = vmatprep.subr.bf16.mxu0 0
        %2770 = vmatpush1.bf16.msra.mxu0 %v2718
        %2771 = vmatprep.subr.bf16.mxu0 0
        %2772 = vmatpush1.bf16.msra.mxu0 %v2719
        %2773 = vmatprep.subr.bf16.mxu0 0
        %2774 = vmatpush1.bf16.msra.mxu0 %v2720
        %2775 = vmatprep.subr.bf16.mxu0 0
        %2776 = vmatpush1.bf16.msra.mxu0 %v2721
        %2777 = vmatprep.subr.bf16.mxu0 0
        %2778 = vmatpush1.bf16.msra.mxu0 %v2722
        %2779 = vmatprep.subr.bf16.mxu0 0
        %2780 = vmatpush1.bf16.msra.mxu0 %v2723
        %2781 = vmatprep.subr.bf16.mxu0 0
        %2782 = vmatpush1.bf16.msra.mxu0 %v2724
        %2783 = vmatprep.subr.bf16.mxu0 0
        %2784 = vmatpush1.bf16.msra.mxu0 %v2725
        %2785 = vmatprep.subr.bf16.mxu0 0
        %2786 = vmatpush1.bf16.msra.mxu0 %v2726
        %2787 = vmatprep.subr.bf16.mxu0 0
        %2788 = vmatpush1.bf16.msra.mxu0 %v2727
        %2789 = vmatprep.subr.bf16.mxu0 0
        %2790 = vmatpush1.bf16.msra.mxu0 %v2728
        %2791 = vmatprep.subr.bf16.mxu0 0
        %2792 = vmatpush1.bf16.msra.mxu0 %v2729
        %2793 = vmatprep.subr.bf16.mxu0 0
        %2794 = vmatpush1.bf16.msra.mxu0 %v2730
        %2795 = vmatprep.mubr.bf16.mxu0 %v2475
        %2796 = vmatmul.mubr.bf16.gmra.mrb[0].mxu0 %v2379
        %v2797 = vpop.f32.mrb[0].mxu0
        %v2798 = vadd.f32 0.0, %v2797
        %v2799 = vpop.f32.mrb[0].mxu0
        %v2800 = vpop.f32.mrb[0].mxu0
        %v2801 = vadd.f32 0.0, %v2800
        %v2802 = vpop.f32.mrb[0].mxu0
        %2803 = vmatprep.mubr.bf16.mxu0 %v2476
        %2804 = vmatmul.mubr.bf16.gmra.mrb[0].mxu0 %v2380
        %v2805 = vpop.f32.mrb[0].mxu0
        %v2806 = vadd.f32 0.0, %v2805
        %v2807 = vpop.f32.mrb[0].mxu0
        %v2808 = vpop.f32.mrb[0].mxu0
        %v2809 = vadd.f32 0.0, %v2808
        %v2810 = vpop.f32.mrb[0].mxu0
        %2811 = vmatprep.mubr.bf16.mxu0 %v2477
        %2812 = vmatmul.mubr.bf16.gmra.mrb[0].mxu0 %v2381
        %v2813 = vpop.f32.mrb[0].mxu0
        %v2814 = vadd.f32 0.0, %v2813
        %v2815 = vpop.f32.mrb[0].mxu0
        %v2816 = vpop.f32.mrb[0].mxu0
        %v2817 = vadd.f32 0.0, %v2816
        %v2818 = vpop.f32.mrb[0].mxu0
        %2819 = vmatprep.mubr.bf16.mxu0 %v2478
        %2820 = vmatmul.mubr.bf16.gmra.mrb[0].mxu0 %v2382
        %v2821 = vpop.f32.mrb[0].mxu0
        %v2822 = vadd.f32 0.0, %v2821
        %v2823 = vpop.f32.mrb[0].mxu0
        %v2824 = vpop.f32.mrb[0].mxu0
        %v2825 = vadd.f32 0.0, %v2824
        %v2826 = vpop.f32.mrb[0].mxu0
        %2827 = vmatprep.mubr.bf16.mxu0 %v2479
        %2828 = vmatmul.mubr.bf16.gmra.mrb[0].mxu0 %v2383
        %v2829 = vpop.f32.mrb[0].mxu0
        %v2830 = vadd.f32 0.0, %v2829
        %v2831 = vpop.f32.mrb[0].mxu0
        %v2832 = vpop.f32.mrb[0].mxu0
        %v2833 = vadd.f32 0.0, %v2832
        %v2834 = vpop.f32.mrb[0].mxu0
        %2835 = vmatprep.mubr.bf16.mxu0 %v2480
        %2836 = vmatmul.mubr.bf16.gmra.mrb[0].mxu0 %v2384
        %v2837 = vpop.f32.mrb[0].mxu0
        %v2838 = vadd.f32 0.0, %v2837
        %v2839 = vpop.f32.mrb[0].mxu0
        %v2840 = vpop.f32.mrb[0].mxu0
        %v2841 = vadd.f32 0.0, %v2840
        %v2842 = vpop.f32.mrb[0].mxu0
        %2843 = vmatprep.mubr.bf16.mxu0 %v2481
        %2844 = vmatmul.mubr.bf16.gmra.mrb[0].mxu0 %v2385
        %v2845 = vpop.f32.mrb[0].mxu0
        %v2846 = vadd.f32 0.0, %v2845
        %v2847 = vpop.f32.mrb[0].mxu0
        %v2848 = vpop.f32.mrb[0].mxu0
        %v2849 = vadd.f32 0.0, %v2848
        %v2850 = vpop.f32.mrb[0].mxu0
        %2851 = vmatprep.mubr.bf16.mxu0 %v2482
        %2852 = vmatmul.mubr.bf16.gmra.mrb[0].mxu0 %v2386
        %v2853 = vpop.f32.mrb[0].mxu0
        %v2854 = vadd.f32 0.0, %v2853
        %v2855 = vpop.f32.mrb[0].mxu0
        %v2856 = vpop.f32.mrb[0].mxu0
        %v2857 = vadd.f32 0.0, %v2856
        %v2858 = vpop.f32.mrb[0].mxu0
        %2859 = vmatprep.mubr.bf16.mxu0 %v2483
        %2860 = vmatmul.mubr.bf16.gmra.mrb[0].mxu0 %v2387
        %v2861 = vpop.f32.mrb[0].mxu0
        %v2862 = vadd.f32 0.0, %v2861
        %v2863 = vpop.f32.mrb[0].mxu0
        %v2864 = vpop.f32.mrb[0].mxu0
        %v2865 = vadd.f32 0.0, %v2864
        %v2866 = vpop.f32.mrb[0].mxu0
        %2867 = vmatprep.mubr.bf16.mxu0 %v2484
        %2868 = vmatmul.mubr.bf16.gmra.mrb[0].mxu0 %v2388
        %v2869 = vpop.f32.mrb[0].mxu0
        %v2870 = vadd.f32 0.0, %v2869
        %v2871 = vpop.f32.mrb[0].mxu0
        %v2872 = vpop.f32.mrb[0].mxu0
        %v2873 = vadd.f32 0.0, %v2872
        %v2874 = vpop.f32.mrb[0].mxu0
        %2875 = vmatprep.mubr.bf16.mxu0 %v2485
        %2876 = vmatmul.mubr.bf16.gmra.mrb[0].mxu0 %v2389
        %v2877 = vpop.f32.mrb[0].mxu0
        %v2878 = vadd.f32 0.0, %v2877
        %v2879 = vpop.f32.mrb[0].mxu0
        %v2880 = vpop.f32.mrb[0].mxu0
        %v2881 = vadd.f32 0.0, %v2880
        %v2882 = vpop.f32.mrb[0].mxu0
        %2883 = vmatprep.mubr.bf16.mxu0 %v2486
        %2884 = vmatmul.mubr.bf16.gmra.mrb[0].mxu0 %v2390
        %v2885 = vpop.f32.mrb[0].mxu0
        %v2886 = vadd.f32 0.0, %v2885
        %v2887 = vpop.f32.mrb[0].mxu0
        %v2888 = vpop.f32.mrb[0].mxu0
        %v2889 = vadd.f32 0.0, %v2888
        %v2890 = vpop.f32.mrb[0].mxu0
        %2891 = vmatprep.mubr.bf16.mxu0 %v2487
        %2892 = vmatmul.mubr.bf16.gmra.mrb[0].mxu0 %v2391
        %v2893 = vpop.f32.mrb[0].mxu0
        %v2894 = vadd.f32 0.0, %v2893
        %v2895 = vpop.f32.mrb[0].mxu0
        %v2896 = vpop.f32.mrb[0].mxu0
        %v2897 = vadd.f32 0.0, %v2896
        %v2898 = vpop.f32.mrb[0].mxu0
        %2899 = vmatprep.mubr.bf16.mxu0 %v2488
        %2900 = vmatmul.mubr.bf16.gmra.mrb[0].mxu0 %v2392
        %v2901 = vpop.f32.mrb[0].mxu0
        %v2902 = vadd.f32 0.0, %v2901
        %v2903 = vpop.f32.mrb[0].mxu0
        %v2904 = vpop.f32.mrb[0].mxu0
        %v2905 = vadd.f32 0.0, %v2904
        %v2906 = vpop.f32.mrb[0].mxu0
        %2907 = vmatprep.mubr.bf16.mxu0 %v2489
        %2908 = vmatmul.mubr.bf16.gmra.mrb[0].mxu0 %v2393
        %v2909 = vpop.f32.mrb[0].mxu0
        %v2910 = vadd.f32 0.0, %v2909
        %v2911 = vpop.f32.mrb[0].mxu0
        %v2912 = vpop.f32.mrb[0].mxu0
        %v2913 = vadd.f32 0.0, %v2912
        %v2914 = vpop.f32.mrb[0].mxu0
        %2915 = vmatprep.mubr.bf16.mxu0 %v2490
        %2916 = vmatmul.mubr.bf16.gmra.mrb[0].mxu0 %v2394
        %v2917 = vpop.f32.mrb[0].mxu0
        %v2918 = vadd.f32 0.0, %v2917
        %v2919 = vpop.f32.mrb[0].mxu0
        %v2920 = vpop.f32.mrb[0].mxu0
        %v2921 = vadd.f32 0.0, %v2920
        %v2922 = vpop.f32.mrb[0].mxu0
        %2923 = vdwg.mxu0
        %2924 = vmatprep.subr.bf16.mxu0 0
        %2925 = vmatpush1.bf16.msra.mxu0 %v2731
        %2926 = vmatprep.subr.bf16.mxu0 0
        %2927 = vmatpush1.bf16.msra.mxu0 %v2732
        %2928 = vmatprep.subr.bf16.mxu0 0
        %2929 = vmatpush1.bf16.msra.mxu0 %v2733
        %2930 = vmatprep.subr.bf16.mxu0 0
        %2931 = vmatpush1.bf16.msra.mxu0 %v2734
        %2932 = vmatprep.subr.bf16.mxu0 0
        %2933 = vmatpush1.bf16.msra.mxu0 %v2735
        %2934 = vmatprep.subr.bf16.mxu0 0
        %2935 = vmatpush1.bf16.msra.mxu0 %v2736
        %2936 = vmatprep.subr.bf16.mxu0 0
        %2937 = vmatpush1.bf16.msra.mxu0 %v2737
        %2938 = vmatprep.subr.bf16.mxu0 0
        %2939 = vmatpush1.bf16.msra.mxu0 %v2738
        %2940 = vmatprep.subr.bf16.mxu0 0
        %2941 = vmatpush1.bf16.msra.mxu0 0
        %2942 = vmatprep.subr.bf16.mxu0 0
        %2943 = vmatpush1.bf16.msra.mxu0 0
        %2944 = vmatprep.subr.bf16.mxu0 0
        %2945 = vmatpush1.bf16.msra.mxu0 0
        %2946 = vmatprep.subr.bf16.mxu0 0
        %2947 = vmatpush1.bf16.msra.mxu0 0
        %2948 = vmatprep.subr.bf16.mxu0 0
        %2949 = vmatpush1.bf16.msra.mxu0 0
        %2950 = vmatprep.subr.bf16.mxu0 0
        %2951 = vmatpush1.bf16.msra.mxu0 0
        %2952 = vmatprep.subr.bf16.mxu0 0
        %2953 = vmatpush1.bf16.msra.mxu0 0
        %2954 = vmatprep.subr.bf16.mxu0 0
        %2955 = vmatpush1.bf16.msra.mxu0 0
        %2956 = vmatprep.mubr.bf16.mxu0 0
        %2957 = vmatmul.mubr.bf16.gmra.mrb[0].mxu0 %v2539
        %v2958 = vpop.f32.mrb[0].mxu0
        %v2959 = vadd.f32 %v2798, %v2958
        %v2960 = vpop.f32.mrb[0].mxu0
        %v2961 = vpop.f32.mrb[0].mxu0
        %v2962 = vadd.f32 %v2801, %v2961
        %v2963 = vpop.f32.mrb[0].mxu0
        %2964 = vmatprep.mubr.bf16.mxu0 0
        %2965 = vmatmul.mubr.bf16.gmra.mrb[0].mxu0 %v2540
        %v2966 = vpop.f32.mrb[0].mxu0
        %v2967 = vadd.f32 %v2806, %v2966
        %v2968 = vpop.f32.mrb[0].mxu0
        %v2969 = vpop.f32.mrb[0].mxu0
        %v2970 = vadd.f32 %v2809, %v2969
        %v2971 = vpop.f32.mrb[0].mxu0
        %2972 = vmatprep.mubr.bf16.mxu0 0
        %2973 = vmatmul.mubr.bf16.gmra.mrb[0].mxu0 %v2541
        %v2974 = vpop.f32.mrb[0].mxu0
        %v2975 = vadd.f32 %v2814, %v2974
        %v2976 = vpop.f32.mrb[0].mxu0
        %v2977 = vpop.f32.mrb[0].mxu0
        %v2978 = vadd.f32 %v2817, %v2977
        %v2979 = vpop.f32.mrb[0].mxu0
        %2980 = vmatprep.mubr.bf16.mxu0 0
        %2981 = vmatmul.mubr.bf16.gmra.mrb[0].mxu0 %v2542
        %v2982 = vpop.f32.mrb[0].mxu0
        %v2983 = vadd.f32 %v2822, %v2982
        %v2984 = vpop.f32.mrb[0].mxu0
        %v2985 = vpop.f32.mrb[0].mxu0
        %v2986 = vadd.f32 %v2825, %v2985
        %v2987 = vpop.f32.mrb[0].mxu0
        %2988 = vmatprep.mubr.bf16.mxu0 0
        %2989 = vmatmul.mubr.bf16.gmra.mrb[0].mxu0 %v2543
        %v2990 = vpop.f32.mrb[0].mxu0
        %v2991 = vadd.f32 %v2830, %v2990
        %v2992 = vpop.f32.mrb[0].mxu0
        %v2993 = vpop.f32.mrb[0].mxu0
        %v2994 = vadd.f32 %v2833, %v2993
        %v2995 = vpop.f32.mrb[0].mxu0
        %2996 = vmatprep.mubr.bf16.mxu0 0
        %2997 = vmatmul.mubr.bf16.gmra.mrb[0].mxu0 %v2544
        %v2998 = vpop.f32.mrb[0].mxu0
        %v2999 = vadd.f32 %v2838, %v2998
        %v3000 = vpop.f32.mrb[0].mxu0
        %v3001 = vpop.f32.mrb[0].mxu0
        %v3002 = vadd.f32 %v2841, %v3001
        %v3003 = vpop.f32.mrb[0].mxu0
        %3004 = vmatprep.mubr.bf16.mxu0 0
        %3005 = vmatmul.mubr.bf16.gmra.mrb[0].mxu0 %v2545
        %v3006 = vpop.f32.mrb[0].mxu0
        %v3007 = vadd.f32 %v2846, %v3006
        %v3008 = vpop.f32.mrb[0].mxu0
        %v3009 = vpop.f32.mrb[0].mxu0
        %v3010 = vadd.f32 %v2849, %v3009
        %v3011 = vpop.f32.mrb[0].mxu0
        %3012 = vmatprep.mubr.bf16.mxu0 0
        %3013 = vmatmul.mubr.bf16.gmra.mrb[0].mxu0 %v2546
        %v3014 = vpop.f32.mrb[0].mxu0
        %v3015 = vadd.f32 %v2854, %v3014
        %v3016 = vpop.f32.mrb[0].mxu0
        %v3017 = vpop.f32.mrb[0].mxu0
        %v3018 = vadd.f32 %v2857, %v3017
        %v3019 = vpop.f32.mrb[0].mxu0
        %3020 = vmatprep.mubr.bf16.mxu0 0
        %3021 = vmatmul.mubr.bf16.gmra.mrb[0].mxu0 %v2547
        %v3022 = vpop.f32.mrb[0].mxu0
        %v3023 = vadd.f32 %v2862, %v3022
        %v3024 = vpop.f32.mrb[0].mxu0
        %v3025 = vpop.f32.mrb[0].mxu0
        %v3026 = vadd.f32 %v2865, %v3025
        %v3027 = vpop.f32.mrb[0].mxu0
        %3028 = vmatprep.mubr.bf16.mxu0 0
        %3029 = vmatmul.mubr.bf16.gmra.mrb[0].mxu0 %v2548
        %v3030 = vpop.f32.mrb[0].mxu0
        %v3031 = vadd.f32 %v2870, %v3030
        %v3032 = vpop.f32.mrb[0].mxu0
        %v3033 = vpop.f32.mrb[0].mxu0
        %v3034 = vadd.f32 %v2873, %v3033
        %v3035 = vpop.f32.mrb[0].mxu0
        %3036 = vmatprep.mubr.bf16.mxu0 0
        %3037 = vmatmul.mubr.bf16.gmra.mrb[0].mxu0 %v2549
        %v3038 = vpop.f32.mrb[0].mxu0
        %v3039 = vadd.f32 %v2878, %v3038
        %v3040 = vpop.f32.mrb[0].mxu0
        %v3041 = vpop.f32.mrb[0].mxu0
        %v3042 = vadd.f32 %v2881, %v3041
        %v3043 = vpop.f32.mrb[0].mxu0
        %3044 = vmatprep.mubr.bf16.mxu0 0
        %3045 = vmatmul.mubr.bf16.gmra.mrb[0].mxu0 %v2550
        %v3046 = vpop.f32.mrb[0].mxu0
        %v3047 = vadd.f32 %v2886, %v3046
        %v3048 = vpop.f32.mrb[0].mxu0
        %v3049 = vpop.f32.mrb[0].mxu0
        %v3050 = vadd.f32 %v2889, %v3049
        %v3051 = vpop.f32.mrb[0].mxu0
        %3052 = vmatprep.mubr.bf16.mxu0 0
        %3053 = vmatmul.mubr.bf16.gmra.mrb[0].mxu0 %v2551
        %v3054 = vpop.f32.mrb[0].mxu0
        %v3055 = vadd.f32 %v2894, %v3054
        %v3056 = vpop.f32.mrb[0].mxu0
        %v3057 = vpop.f32.mrb[0].mxu0
        %v3058 = vadd.f32 %v2897, %v3057
        %v3059 = vpop.f32.mrb[0].mxu0
        %3060 = vmatprep.mubr.bf16.mxu0 0
        %3061 = vmatmul.mubr.bf16.gmra.mrb[0].mxu0 %v2552
        %v3062 = vpop.f32.mrb[0].mxu0
        %v3063 = vadd.f32 %v2902, %v3062
        %v3064 = vpop.f32.mrb[0].mxu0
        %v3065 = vpop.f32.mrb[0].mxu0
        %v3066 = vadd.f32 %v2905, %v3065
        %v3067 = vpop.f32.mrb[0].mxu0
        %3068 = vmatprep.mubr.bf16.mxu0 0
        %3069 = vmatmul.mubr.bf16.gmra.mrb[0].mxu0 %v2553
        %v3070 = vpop.f32.mrb[0].mxu0
        %v3071 = vadd.f32 %v2910, %v3070
        %v3072 = vpop.f32.mrb[0].mxu0
        %v3073 = vpop.f32.mrb[0].mxu0
        %v3074 = vadd.f32 %v2913, %v3073
        %v3075 = vpop.f32.mrb[0].mxu0
        %3076 = vmatprep.mubr.bf16.mxu0 0
        %3077 = vmatmul.mubr.bf16.gmra.mrb[0].mxu0 %v2554
        %v3078 = vpop.f32.mrb[0].mxu0
        %v3079 = vadd.f32 %v2918, %v3078
        %v3080 = vpop.f32.mrb[0].mxu0
        %v3081 = vpop.f32.mrb[0].mxu0
        %v3082 = vadd.f32 %v2921, %v3081
        %v3083 = vpop.f32.mrb[0].mxu0
        %3084 = vdwg.mxu0
        %v3133 = vunpack.c.l.b16 %v1659
        %v3134 = vunpack.c.l.b16 %v1660
        %v3135 = vunpack.c.l.b16 %v1661
        %v3136 = vunpack.c.l.b16 %v1662
        %v3137 = vunpack.c.l.b16 %v1663
        %v3138 = vunpack.c.l.b16 %v1664
        %v3139 = vunpack.c.l.b16 %v1665
        %v3140 = vunpack.c.l.b16 %v1666
        %v3141 = vunpack.c.l.b16 %v1667
        %v3142 = vunpack.c.l.b16 %v1668
        %v3143 = vunpack.c.l.b16 %v1669
        %v3144 = vunpack.c.l.b16 %v1670
        %v3145 = vunpack.c.l.b16 %v1671
        %v3146 = vunpack.c.l.b16 %v1672
        %v3147 = vunpack.c.l.b16 %v1673
        %v3148 = vunpack.c.l.b16 %v1674
        %v3149 = vunpack.c.l.b16 %v1675
        %v3150 = vunpack.c.l.b16 %v1676
        %v3151 = vunpack.c.l.b16 %v1677
        %v3152 = vunpack.c.l.b16 %v1678
        %v3153 = vunpack.c.l.b16 %v1679
        %v3154 = vunpack.c.l.b16 %v1680
        %v3155 = vunpack.c.l.b16 %v1681
        %v3156 = vunpack.c.l.b16 %v1682
        %v3157 = vunpack.c.l.b16 %v1683
        %v3158 = vunpack.c.l.b16 %v1684
        %v3159 = vunpack.c.l.b16 %v1685
        %v3160 = vunpack.c.l.b16 %v1686
        %v3161 = vunpack.c.l.b16 %v1687
        %v3162 = vunpack.c.l.b16 %v1688
        %v3163 = vunpack.c.l.b16 %v1689
        %v3164 = vunpack.c.l.b16 %v1690
        %v3165 = vunpack.c.l.b16 %v1691
        %v3166 = vunpack.c.l.b16 %v1692
        %v3167 = vunpack.c.l.b16 %v1693
        %v3168 = vunpack.c.l.b16 %v1694
        %v3169 = vunpack.c.l.b16 %v1695
        %v3170 = vunpack.c.l.b16 %v1696
        %v3171 = vunpack.c.l.b16 %v1697
        %v3172 = vunpack.c.l.b16 %v1698
        %v3173 = vunpack.c.l.b16 %v1699
        %v3174 = vunpack.c.l.b16 %v1700
        %v3175 = vunpack.c.l.b16 %v1701
        %v3176 = vunpack.c.l.b16 %v1702
        %v3177 = vunpack.c.l.b16 %v1703
        %v3178 = vunpack.c.l.b16 %v1704
        %v3179 = vunpack.c.l.b16 %v1705
        %v3180 = vunpack.c.l.b16 %v1706
        %v3181 = vpack.c.b16 %v3134, %v3133
        %v3182 = vpack.c.b16 %v3136, %v3135
        %v3183 = vpack.c.b16 %v3138, %v3137
        %v3184 = vpack.c.b16 %v3140, %v3139
        %v3185 = vpack.c.b16 %v3142, %v3141
        %v3186 = vpack.c.b16 %v3144, %v3143
        %v3187 = vpack.c.b16 %v3146, %v3145
        %v3188 = vpack.c.b16 %v3148, %v3147
        %v3189 = vpack.c.b16 %v3150, %v3149
        %v3190 = vpack.c.b16 %v3152, %v3151
        %v3191 = vpack.c.b16 %v3154, %v3153
        %v3192 = vpack.c.b16 %v3156, %v3155
        %v3193 = vpack.c.b16 %v3158, %v3157
        %v3194 = vpack.c.b16 %v3160, %v3159
        %v3195 = vpack.c.b16 %v3162, %v3161
        %v3196 = vpack.c.b16 %v3164, %v3163
        %v3197 = vpack.c.b16 %v3166, %v3165
        %v3198 = vpack.c.b16 %v3168, %v3167
        %v3199 = vpack.c.b16 %v3170, %v3169
        %v3200 = vpack.c.b16 %v3172, %v3171
        %v3201 = vpack.c.b16 %v3174, %v3173
        %v3202 = vpack.c.b16 %v3176, %v3175
        %v3203 = vpack.c.b16 %v3178, %v3177
        %v3204 = vpack.c.b16 %v3180, %v3179
        %3229 = vmatprep.subr.bf16.mxu0 0
        %3230 = vmatpush1.bf16.msra.mxu0 %v3181
        %3231 = vmatprep.subr.bf16.mxu0 0
        %3232 = vmatpush1.bf16.msra.mxu0 %v3182
        %3233 = vmatprep.subr.bf16.mxu0 0
        %3234 = vmatpush1.bf16.msra.mxu0 %v3183
        %3235 = vmatprep.subr.bf16.mxu0 0
        %3236 = vmatpush1.bf16.msra.mxu0 %v3184
        %3237 = vmatprep.subr.bf16.mxu0 0
        %3238 = vmatpush1.bf16.msra.mxu0 %v3185
        %3239 = vmatprep.subr.bf16.mxu0 0
        %3240 = vmatpush1.bf16.msra.mxu0 %v3186
        %3241 = vmatprep.subr.bf16.mxu0 0
        %3242 = vmatpush1.bf16.msra.mxu0 %v3187
        %3243 = vmatprep.subr.bf16.mxu0 0
        %3244 = vmatpush1.bf16.msra.mxu0 %v3188
        %3245 = vmatprep.subr.bf16.mxu0 0
        %3246 = vmatpush1.bf16.msra.mxu0 %v3189
        %3247 = vmatprep.subr.bf16.mxu0 0
        %3248 = vmatpush1.bf16.msra.mxu0 %v3190
        %3249 = vmatprep.subr.bf16.mxu0 0
        %3250 = vmatpush1.bf16.msra.mxu0 %v3191
        %3251 = vmatprep.subr.bf16.mxu0 0
        %3252 = vmatpush1.bf16.msra.mxu0 %v3192
        %3253 = vmatprep.subr.bf16.mxu0 0
        %3254 = vmatpush1.bf16.msra.mxu0 %v3193
        %3255 = vmatprep.subr.bf16.mxu0 0
        %3256 = vmatpush1.bf16.msra.mxu0 %v3194
        %3257 = vmatprep.subr.bf16.mxu0 0
        %3258 = vmatpush1.bf16.msra.mxu0 %v3195
        %3259 = vmatprep.subr.bf16.mxu0 0
        %3260 = vmatpush1.bf16.msra.mxu0 %v3196
        %3261 = vmatprep.mubr.bf16.mxu0 %v1563
        %3262 = vmatmul.mubr.bf16.gmra.mrb[0].mxu0 %v1467
        %v3263 = vpop.f32.mrb[0].mxu0
        %v3264 = vadd.f32 %v2959, %v3263
        %v3265 = vpop.f32.mrb[0].mxu0
        %v3266 = vpop.f32.mrb[0].mxu0
        %v3267 = vadd.f32 %v2962, %v3266
        %v3268 = vpop.f32.mrb[0].mxu0
        %3269 = vmatprep.mubr.bf16.mxu0 %v1564
        %3270 = vmatmul.mubr.bf16.gmra.mrb[0].mxu0 %v1468
        %v3271 = vpop.f32.mrb[0].mxu0
        %v3272 = vadd.f32 %v2967, %v3271
        %v3273 = vpop.f32.mrb[0].mxu0
        %v3274 = vpop.f32.mrb[0].mxu0
        %v3275 = vadd.f32 %v2970, %v3274
        %v3276 = vpop.f32.mrb[0].mxu0
        %3277 = vmatprep.mubr.bf16.mxu0 %v1565
        %3278 = vmatmul.mubr.bf16.gmra.mrb[0].mxu0 %v1469
        %v3279 = vpop.f32.mrb[0].mxu0
        %v3280 = vadd.f32 %v2975, %v3279
        %v3281 = vpop.f32.mrb[0].mxu0
        %v3282 = vpop.f32.mrb[0].mxu0
        %v3283 = vadd.f32 %v2978, %v3282
        %v3284 = vpop.f32.mrb[0].mxu0
        %3285 = vmatprep.mubr.bf16.mxu0 %v1566
        %3286 = vmatmul.mubr.bf16.gmra.mrb[0].mxu0 %v1470
        %v3287 = vpop.f32.mrb[0].mxu0
        %v3288 = vadd.f32 %v2983, %v3287
        %v3289 = vpop.f32.mrb[0].mxu0
        %v3290 = vpop.f32.mrb[0].mxu0
        %v3291 = vadd.f32 %v2986, %v3290
        %v3292 = vpop.f32.mrb[0].mxu0
        %3293 = vmatprep.mubr.bf16.mxu0 %v1567
        %3294 = vmatmul.mubr.bf16.gmra.mrb[0].mxu0 %v1471
        %v3295 = vpop.f32.mrb[0].mxu0
        %v3296 = vadd.f32 %v2991, %v3295
        %v3297 = vpop.f32.mrb[0].mxu0
        %v3298 = vpop.f32.mrb[0].mxu0
        %v3299 = vadd.f32 %v2994, %v3298
        %v3300 = vpop.f32.mrb[0].mxu0
        %3301 = vmatprep.mubr.bf16.mxu0 %v1568
        %3302 = vmatmul.mubr.bf16.gmra.mrb[0].mxu0 %v1472
        %v3303 = vpop.f32.mrb[0].mxu0
        %v3304 = vadd.f32 %v2999, %v3303
        %v3305 = vpop.f32.mrb[0].mxu0
        %v3306 = vpop.f32.mrb[0].mxu0
        %v3307 = vadd.f32 %v3002, %v3306
        %v3308 = vpop.f32.mrb[0].mxu0
        %3309 = vmatprep.mubr.bf16.mxu0 %v1569
        %3310 = vmatmul.mubr.bf16.gmra.mrb[0].mxu0 %v1473
        %v3311 = vpop.f32.mrb[0].mxu0
        %v3312 = vadd.f32 %v3007, %v3311
        %v3313 = vpop.f32.mrb[0].mxu0
        %v3314 = vpop.f32.mrb[0].mxu0
        %v3315 = vadd.f32 %v3010, %v3314
        %v3316 = vpop.f32.mrb[0].mxu0
        %3317 = vmatprep.mubr.bf16.mxu0 %v1570
        %3318 = vmatmul.mubr.bf16.gmra.mrb[0].mxu0 %v1474
        %v3319 = vpop.f32.mrb[0].mxu0
        %v3320 = vadd.f32 %v3015, %v3319
        %v3321 = vpop.f32.mrb[0].mxu0
        %v3322 = vpop.f32.mrb[0].mxu0
        %v3323 = vadd.f32 %v3018, %v3322
        %v3324 = vpop.f32.mrb[0].mxu0
        %3325 = vmatprep.mubr.bf16.mxu0 %v1571
        %3326 = vmatmul.mubr.bf16.gmra.mrb[0].mxu0 %v1475
        %v3327 = vpop.f32.mrb[0].mxu0
        %v3328 = vadd.f32 %v3023, %v3327
        %v3329 = vpop.f32.mrb[0].mxu0
        %v3330 = vpop.f32.mrb[0].mxu0
        %v3331 = vadd.f32 %v3026, %v3330
        %v3332 = vpop.f32.mrb[0].mxu0
        %3333 = vmatprep.mubr.bf16.mxu0 %v1572
        %3334 = vmatmul.mubr.bf16.gmra.mrb[0].mxu0 %v1476
        %v3335 = vpop.f32.mrb[0].mxu0
        %v3336 = vadd.f32 %v3031, %v3335
        %v3337 = vpop.f32.mrb[0].mxu0
        %v3338 = vpop.f32.mrb[0].mxu0
        %v3339 = vadd.f32 %v3034, %v3338
        %v3340 = vpop.f32.mrb[0].mxu0
        %3341 = vmatprep.mubr.bf16.mxu0 %v1573
        %3342 = vmatmul.mubr.bf16.gmra.mrb[0].mxu0 %v1477
        %v3343 = vpop.f32.mrb[0].mxu0
        %v3344 = vadd.f32 %v3039, %v3343
        %v3345 = vpop.f32.mrb[0].mxu0
        %v3346 = vpop.f32.mrb[0].mxu0
        %v3347 = vadd.f32 %v3042, %v3346
        %v3348 = vpop.f32.mrb[0].mxu0
        %3349 = vmatprep.mubr.bf16.mxu0 %v1574
        %3350 = vmatmul.mubr.bf16.gmra.mrb[0].mxu0 %v1478
        %v3351 = vpop.f32.mrb[0].mxu0
        %v3352 = vadd.f32 %v3047, %v3351
        %v3353 = vpop.f32.mrb[0].mxu0
        %v3354 = vpop.f32.mrb[0].mxu0
        %v3355 = vadd.f32 %v3050, %v3354
        %v3356 = vpop.f32.mrb[0].mxu0
        %3357 = vmatprep.mubr.bf16.mxu0 %v1575
        %3358 = vmatmul.mubr.bf16.gmra.mrb[0].mxu0 %v1479
        %v3359 = vpop.f32.mrb[0].mxu0
        %v3360 = vadd.f32 %v3055, %v3359
        %v3361 = vpop.f32.mrb[0].mxu0
        %v3362 = vpop.f32.mrb[0].mxu0
        %v3363 = vadd.f32 %v3058, %v3362
        %v3364 = vpop.f32.mrb[0].mxu0
        %3365 = vmatprep.mubr.bf16.mxu0 %v1576
        %3366 = vmatmul.mubr.bf16.gmra.mrb[0].mxu0 %v1480
        %v3367 = vpop.f32.mrb[0].mxu0
        %v3368 = vadd.f32 %v3063, %v3367
        %v3369 = vpop.f32.mrb[0].mxu0
        %v3370 = vpop.f32.mrb[0].mxu0
        %v3371 = vadd.f32 %v3066, %v3370
        %v3372 = vpop.f32.mrb[0].mxu0
        %3373 = vmatprep.mubr.bf16.mxu0 %v1577
        %3374 = vmatmul.mubr.bf16.gmra.mrb[0].mxu0 %v1481
        %v3375 = vpop.f32.mrb[0].mxu0
        %v3376 = vadd.f32 %v3071, %v3375
        %v3377 = vpop.f32.mrb[0].mxu0
        %v3378 = vpop.f32.mrb[0].mxu0
        %v3379 = vadd.f32 %v3074, %v3378
        %v3380 = vpop.f32.mrb[0].mxu0
        %3381 = vmatprep.mubr.bf16.mxu0 %v1578
        %3382 = vmatmul.mubr.bf16.gmra.mrb[0].mxu0 %v1482
        %v3383 = vpop.f32.mrb[0].mxu0
        %v3384 = vadd.f32 %v3079, %v3383
        %v3385 = vpop.f32.mrb[0].mxu0
        %v3386 = vpop.f32.mrb[0].mxu0
        %v3387 = vadd.f32 %v3082, %v3386
        %v3388 = vpop.f32.mrb[0].mxu0
        %3389 = vdwg.mxu0
        %3390 = vmatprep.subr.bf16.mxu0 0
        %3391 = vmatpush1.bf16.msra.mxu0 %v3197
        %3392 = vmatprep.subr.bf16.mxu0 0
        %3393 = vmatpush1.bf16.msra.mxu0 %v3198
        %3394 = vmatprep.subr.bf16.mxu0 0
        %3395 = vmatpush1.bf16.msra.mxu0 %v3199
        %3396 = vmatprep.subr.bf16.mxu0 0
        %3397 = vmatpush1.bf16.msra.mxu0 %v3200
        %3398 = vmatprep.subr.bf16.mxu0 0
        %3399 = vmatpush1.bf16.msra.mxu0 %v3201
        %3400 = vmatprep.subr.bf16.mxu0 0
        %3401 = vmatpush1.bf16.msra.mxu0 %v3202
        %3402 = vmatprep.subr.bf16.mxu0 0
        %3403 = vmatpush1.bf16.msra.mxu0 %v3203
        %3404 = vmatprep.subr.bf16.mxu0 0
        %3405 = vmatpush1.bf16.msra.mxu0 %v3204
        %3406 = vmatprep.subr.bf16.mxu0 0
        %3407 = vmatpush1.bf16.msra.mxu0 0
        %3408 = vmatprep.subr.bf16.mxu0 0
        %3409 = vmatpush1.bf16.msra.mxu0 0
        %3410 = vmatprep.subr.bf16.mxu0 0
        %3411 = vmatpush1.bf16.msra.mxu0 0
        %3412 = vmatprep.subr.bf16.mxu0 0
        %3413 = vmatpush1.bf16.msra.mxu0 0
        %3414 = vmatprep.subr.bf16.mxu0 0
        %3415 = vmatpush1.bf16.msra.mxu0 0
        %3416 = vmatprep.subr.bf16.mxu0 0
        %3417 = vmatpush1.bf16.msra.mxu0 0
        %3418 = vmatprep.subr.bf16.mxu0 0
        %3419 = vmatpush1.bf16.msra.mxu0 0
        %3420 = vmatprep.subr.bf16.mxu0 0
        %3421 = vmatpush1.bf16.msra.mxu0 0
        %3422 = vmatprep.mubr.bf16.mxu0 0
        %3423 = vmatmul.mubr.bf16.gmra.mrb[0].mxu0 %v1627
        %v3424 = vpop.f32.mrb[0].mxu0
        %v3425 = vadd.f32 %v3264, %v3424
        %v3426 = vpop.f32.mrb[0].mxu0
        %v3427 = vpop.f32.mrb[0].mxu0
        %v3428 = vadd.f32 %v3267, %v3427
        %v3429 = vpop.f32.mrb[0].mxu0
        %3430 = vmatprep.mubr.bf16.mxu0 0
        %3431 = vmatmul.mubr.bf16.gmra.mrb[0].mxu0 %v1628
        %v3432 = vpop.f32.mrb[0].mxu0
        %v3433 = vadd.f32 %v3272, %v3432
        %v3434 = vpop.f32.mrb[0].mxu0
        %v3435 = vpop.f32.mrb[0].mxu0
        %v3436 = vadd.f32 %v3275, %v3435
        %v3437 = vpop.f32.mrb[0].mxu0
        %3438 = vmatprep.mubr.bf16.mxu0 0
        %3439 = vmatmul.mubr.bf16.gmra.mrb[0].mxu0 %v1629
        %v3440 = vpop.f32.mrb[0].mxu0
        %v3441 = vadd.f32 %v3280, %v3440
        %v3442 = vpop.f32.mrb[0].mxu0
        %v3443 = vpop.f32.mrb[0].mxu0
        %v3444 = vadd.f32 %v3283, %v3443
        %v3445 = vpop.f32.mrb[0].mxu0
        %3446 = vmatprep.mubr.bf16.mxu0 0
        %3447 = vmatmul.mubr.bf16.gmra.mrb[0].mxu0 %v1630
        %v3448 = vpop.f32.mrb[0].mxu0
        %v3449 = vadd.f32 %v3288, %v3448
        %v3450 = vpop.f32.mrb[0].mxu0
        %v3451 = vpop.f32.mrb[0].mxu0
        %v3452 = vadd.f32 %v3291, %v3451
        %v3453 = vpop.f32.mrb[0].mxu0
        %3454 = vmatprep.mubr.bf16.mxu0 0
        %3455 = vmatmul.mubr.bf16.gmra.mrb[0].mxu0 %v1631
        %v3456 = vpop.f32.mrb[0].mxu0
        %v3457 = vadd.f32 %v3296, %v3456
        %v3458 = vpop.f32.mrb[0].mxu0
        %v3459 = vpop.f32.mrb[0].mxu0
        %v3460 = vadd.f32 %v3299, %v3459
        %v3461 = vpop.f32.mrb[0].mxu0
        %3462 = vmatprep.mubr.bf16.mxu0 0
        %3463 = vmatmul.mubr.bf16.gmra.mrb[0].mxu0 %v1632
        %v3464 = vpop.f32.mrb[0].mxu0
        %v3465 = vadd.f32 %v3304, %v3464
        %v3466 = vpop.f32.mrb[0].mxu0
        %v3467 = vpop.f32.mrb[0].mxu0
        %v3468 = vadd.f32 %v3307, %v3467
        %v3469 = vpop.f32.mrb[0].mxu0
        %3470 = vmatprep.mubr.bf16.mxu0 0
        %3471 = vmatmul.mubr.bf16.gmra.mrb[0].mxu0 %v1633
        %v3472 = vpop.f32.mrb[0].mxu0
        %v3473 = vadd.f32 %v3312, %v3472
        %v3474 = vpop.f32.mrb[0].mxu0
        %v3475 = vpop.f32.mrb[0].mxu0
        %v3476 = vadd.f32 %v3315, %v3475
        %v3477 = vpop.f32.mrb[0].mxu0
        %3478 = vmatprep.mubr.bf16.mxu0 0
        %3479 = vmatmul.mubr.bf16.gmra.mrb[0].mxu0 %v1634
        %v3480 = vpop.f32.mrb[0].mxu0
        %v3481 = vadd.f32 %v3320, %v3480
        %v3482 = vpop.f32.mrb[0].mxu0
        %v3483 = vpop.f32.mrb[0].mxu0
        %v3484 = vadd.f32 %v3323, %v3483
        %v3485 = vpop.f32.mrb[0].mxu0
        %3486 = vmatprep.mubr.bf16.mxu0 0
        %3487 = vmatmul.mubr.bf16.gmra.mrb[0].mxu0 %v1635
        %v3488 = vpop.f32.mrb[0].mxu0
        %v3489 = vadd.f32 %v3328, %v3488
        %v3490 = vpop.f32.mrb[0].mxu0
        %v3491 = vpop.f32.mrb[0].mxu0
        %v3492 = vadd.f32 %v3331, %v3491
        %v3493 = vpop.f32.mrb[0].mxu0
        %3494 = vmatprep.mubr.bf16.mxu0 0
        %3495 = vmatmul.mubr.bf16.gmra.mrb[0].mxu0 %v1636
        %v3496 = vpop.f32.mrb[0].mxu0
        %v3497 = vadd.f32 %v3336, %v3496
        %v3498 = vpop.f32.mrb[0].mxu0
        %v3499 = vpop.f32.mrb[0].mxu0
        %v3500 = vadd.f32 %v3339, %v3499
        %v3501 = vpop.f32.mrb[0].mxu0
        %3502 = vmatprep.mubr.bf16.mxu0 0
        %3503 = vmatmul.mubr.bf16.gmra.mrb[0].mxu0 %v1637
        %v3504 = vpop.f32.mrb[0].mxu0
        %v3505 = vadd.f32 %v3344, %v3504
        %v3506 = vpop.f32.mrb[0].mxu0
        %v3507 = vpop.f32.mrb[0].mxu0
        %v3508 = vadd.f32 %v3347, %v3507
        %v3509 = vpop.f32.mrb[0].mxu0
        %3510 = vmatprep.mubr.bf16.mxu0 0
        %3511 = vmatmul.mubr.bf16.gmra.mrb[0].mxu0 %v1638
        %v3512 = vpop.f32.mrb[0].mxu0
        %v3513 = vadd.f32 %v3352, %v3512
        %v3514 = vpop.f32.mrb[0].mxu0
        %v3515 = vpop.f32.mrb[0].mxu0
        %v3516 = vadd.f32 %v3355, %v3515
        %v3517 = vpop.f32.mrb[0].mxu0
        %3518 = vmatprep.mubr.bf16.mxu0 0
        %3519 = vmatmul.mubr.bf16.gmra.mrb[0].mxu0 %v1639
        %v3520 = vpop.f32.mrb[0].mxu0
        %v3521 = vadd.f32 %v3360, %v3520
        %v3522 = vpop.f32.mrb[0].mxu0
        %v3523 = vpop.f32.mrb[0].mxu0
        %v3524 = vadd.f32 %v3363, %v3523
        %v3525 = vpop.f32.mrb[0].mxu0
        %3526 = vmatprep.mubr.bf16.mxu0 0
        %3527 = vmatmul.mubr.bf16.gmra.mrb[0].mxu0 %v1640
        %v3528 = vpop.f32.mrb[0].mxu0
        %v3529 = vadd.f32 %v3368, %v3528
        %v3530 = vpop.f32.mrb[0].mxu0
        %v3531 = vpop.f32.mrb[0].mxu0
        %v3532 = vadd.f32 %v3371, %v3531
        %v3533 = vpop.f32.mrb[0].mxu0
        %3534 = vmatprep.mubr.bf16.mxu0 0
        %3535 = vmatmul.mubr.bf16.gmra.mrb[0].mxu0 %v1641
        %v3536 = vpop.f32.mrb[0].mxu0
        %v3537 = vadd.f32 %v3376, %v3536
        %v3538 = vpop.f32.mrb[0].mxu0
        %v3539 = vpop.f32.mrb[0].mxu0
        %v3540 = vadd.f32 %v3379, %v3539
        %v3541 = vpop.f32.mrb[0].mxu0
        %3542 = vmatprep.mubr.bf16.mxu0 0
        %3543 = vmatmul.mubr.bf16.gmra.mrb[0].mxu0 %v1642
        %v3544 = vpop.f32.mrb[0].mxu0
        %v3545 = vadd.f32 %v3384, %v3544
        %v3546 = vpop.f32.mrb[0].mxu0
        %v3547 = vpop.f32.mrb[0].mxu0
        %v3548 = vadd.f32 %v3387, %v3547
        %v3549 = vpop.f32.mrb[0].mxu0
        %3550 = vdwg.mxu0
        %s3551 = scalar_lea.vmem [#allocation2], 40
        %v3552 = vld [vmem:[%s3551 + $0x4] sm:$0x8]
        %v3553 = vld [vmem:[%s3551 + $0x8] sm:$0xf]
        %v3554 = vld [vmem:[%s3551 + $0xc] sm:$0xf]
        %v3555 = vld [vmem:[%s3551 + $0x18] sm:$0x8]
        %v3556 = vld [vmem:[%s3551 + $0x1c] sm:$0xf]
        %v3557 = vld [vmem:[%s3551 + $0x20] sm:$0xf]
        %v3558 = vld [vmem:[%s3551 + $0x2c] sm:$0x8]
        %v3559 = vld [vmem:[%s3551 + $0x30] sm:$0xf]
        %v3560 = vld [vmem:[%s3551 + $0x34] sm:$0xf]
        %v3561 = vld [vmem:[%s3551 + $0x40] sm:$0x8]
        %v3562 = vld [vmem:[%s3551 + $0x44] sm:$0xf]
        %v3563 = vld [vmem:[%s3551 + $0x48] sm:$0xf]
        %v3564 = vld [vmem:[%s3551 + $0x54] sm:$0x8]
        %v3565 = vld [vmem:[%s3551 + $0x58] sm:$0xf]
        %v3566 = vld [vmem:[%s3551 + $0x5c] sm:$0xf]
        %v3567 = vld [vmem:[%s3551 + $0x68] sm:$0x8]
        %v3568 = vld [vmem:[%s3551 + $0x6c] sm:$0xf]
        %v3569 = vld [vmem:[%s3551 + $0x70] sm:$0xf]
        %v3570 = vld [vmem:[%s3551 + $0x7c] sm:$0x8]
        %v3571 = vld [vmem:[%s3551 + $0x80] sm:$0xf]
        %v3572 = vld [vmem:[%s3551 + $0x84] sm:$0xf]
        %v3573 = vld [vmem:[%s3551 + $0x90] sm:$0x8]
        %v3574 = vld [vmem:[%s3551 + $0x94] sm:$0xf]
        %v3575 = vld [vmem:[%s3551 + $0x98] sm:$0xf]
        %v3576 = vld [vmem:[%s3551 + $0xa4] sm:$0x8]
        %v3577 = vld [vmem:[%s3551 + $0xa8] sm:$0xf]
        %v3578 = vld [vmem:[%s3551 + $0xac] sm:$0xf]
        %v3579 = vld [vmem:[%s3551 + $0xb8] sm:$0x8]
        %v3580 = vld [vmem:[%s3551 + $0xbc] sm:$0xf]
        %v3581 = vld [vmem:[%s3551 + $0xc0] sm:$0xf]
        %v3582 = vld [vmem:[%s3551 + $0xcc] sm:$0x8]
        %v3583 = vld [vmem:[%s3551 + $0xd0] sm:$0xf]
        %v3584 = vld [vmem:[%s3551 + $0xd4] sm:$0xf]
        %v3585 = vld [vmem:[%s3551 + $0xe0] sm:$0x8]
        %v3586 = vld [vmem:[%s3551 + $0xe4] sm:$0xf]
        %v3587 = vld [vmem:[%s3551 + $0xe8] sm:$0xf]
        %v3588 = vld [vmem:[%s3551 + $0xf4] sm:$0x8]
        %v3589 = vld [vmem:[%s3551 + $0xf8] sm:$0xf]
        %v3590 = vld [vmem:[%s3551 + $0xfc] sm:$0xf]
        %v3591 = vld [vmem:[%s3551 + $0x108] sm:$0x8]
        %v3592 = vld [vmem:[%s3551 + $0x10c] sm:$0xf]
        %v3593 = vld [vmem:[%s3551 + $0x110] sm:$0xf]
        %v3594 = vld [vmem:[%s3551 + $0x11c] sm:$0x8]
        %v3595 = vld [vmem:[%s3551 + $0x120] sm:$0xf]
        %v3596 = vld [vmem:[%s3551 + $0x124] sm:$0xf]
        %v3597 = vld [vmem:[%s3551 + $0x130] sm:$0x8]
        %v3598 = vld [vmem:[%s3551 + $0x134] sm:$0xf]
        %v3599 = vld [vmem:[%s3551 + $0x138] sm:$0xf]
        %v3601 = vshrl.u32 %v3552, 16
        %v3603 = vrot.slane %v3601, 7
        %v3604 = vrot.slane %v3603, 4
        %v3606 = vshrl.u32 %v3553, 16
        %v3608 = vrot.slane %v3606, 7
        %v3609 = vshll.u32 %v3553, 16
        %v3611 = vor.u32 %v3608, %v3609
        %v3612 = vsel %vm839, %v3604, %v3611
        %v3613 = vrot.slane %v3608, 4
        %v3615 = vshrl.u32 %v3554, 16
        %v3617 = vrot.slane %v3615, 7
        %v3618 = vshll.u32 %v3554, 16
        %v3620 = vor.u32 %v3617, %v3618
        %v3621 = vsel %vm839, %v3613, %v3620
        %v3623 = vshrl.u32 %v3555, 16
        %v3625 = vrot.slane %v3623, 7
        %v3626 = vrot.slane %v3625, 4
        %v3628 = vshrl.u32 %v3556, 16
        %v3630 = vrot.slane %v3628, 7
        %v3631 = vshll.u32 %v3556, 16
        %v3633 = vor.u32 %v3630, %v3631
        %v3634 = vsel %vm839, %v3626, %v3633
        %v3635 = vrot.slane %v3630, 4
        %v3637 = vshrl.u32 %v3557, 16
        %v3639 = vrot.slane %v3637, 7
        %v3640 = vshll.u32 %v3557, 16
        %v3642 = vor.u32 %v3639, %v3640
        %v3643 = vsel %vm839, %v3635, %v3642
        %v3645 = vshrl.u32 %v3558, 16
        %v3647 = vrot.slane %v3645, 7
        %v3648 = vrot.slane %v3647, 4
        %v3650 = vshrl.u32 %v3559, 16
        %v3652 = vrot.slane %v3650, 7
        %v3653 = vshll.u32 %v3559, 16
        %v3655 = vor.u32 %v3652, %v3653
        %v3656 = vsel %vm839, %v3648, %v3655
        %v3657 = vrot.slane %v3652, 4
        %v3659 = vshrl.u32 %v3560, 16
        %v3661 = vrot.slane %v3659, 7
        %v3662 = vshll.u32 %v3560, 16
        %v3664 = vor.u32 %v3661, %v3662
        %v3665 = vsel %vm839, %v3657, %v3664
        %v3667 = vshrl.u32 %v3561, 16
        %v3669 = vrot.slane %v3667, 7
        %v3670 = vrot.slane %v3669, 4
        %v3672 = vshrl.u32 %v3562, 16
        %v3674 = vrot.slane %v3672, 7
        %v3675 = vshll.u32 %v3562, 16
        %v3677 = vor.u32 %v3674, %v3675
        %v3678 = vsel %vm839, %v3670, %v3677
        %v3679 = vrot.slane %v3674, 4
        %v3681 = vshrl.u32 %v3563, 16
        %v3683 = vrot.slane %v3681, 7
        %v3684 = vshll.u32 %v3563, 16
        %v3686 = vor.u32 %v3683, %v3684
        %v3687 = vsel %vm839, %v3679, %v3686
        %v3689 = vshrl.u32 %v3564, 16
        %v3691 = vrot.slane %v3689, 7
        %v3692 = vrot.slane %v3691, 4
        %v3694 = vshrl.u32 %v3565, 16
        %v3696 = vrot.slane %v3694, 7
        %v3697 = vshll.u32 %v3565, 16
        %v3699 = vor.u32 %v3696, %v3697
        %v3700 = vsel %vm839, %v3692, %v3699
        %v3701 = vrot.slane %v3696, 4
        %v3703 = vshrl.u32 %v3566, 16
        %v3705 = vrot.slane %v3703, 7
        %v3706 = vshll.u32 %v3566, 16
        %v3708 = vor.u32 %v3705, %v3706
        %v3709 = vsel %vm839, %v3701, %v3708
        %v3711 = vshrl.u32 %v3567, 16
        %v3713 = vrot.slane %v3711, 7
        %v3714 = vrot.slane %v3713, 4
        %v3716 = vshrl.u32 %v3568, 16
        %v3718 = vrot.slane %v3716, 7
        %v3719 = vshll.u32 %v3568, 16
        %v3721 = vor.u32 %v3718, %v3719
        %v3722 = vsel %vm839, %v3714, %v3721
        %v3723 = vrot.slane %v3718, 4
        %v3725 = vshrl.u32 %v3569, 16
        %v3727 = vrot.slane %v3725, 7
        %v3728 = vshll.u32 %v3569, 16
        %v3730 = vor.u32 %v3727, %v3728
        %v3731 = vsel %vm839, %v3723, %v3730
        %v3733 = vshrl.u32 %v3570, 16
        %v3735 = vrot.slane %v3733, 7
        %v3736 = vrot.slane %v3735, 4
        %v3738 = vshrl.u32 %v3571, 16
        %v3740 = vrot.slane %v3738, 7
        %v3741 = vshll.u32 %v3571, 16
        %v3743 = vor.u32 %v3740, %v3741
        %v3744 = vsel %vm839, %v3736, %v3743
        %v3745 = vrot.slane %v3740, 4
        %v3747 = vshrl.u32 %v3572, 16
        %v3749 = vrot.slane %v3747, 7
        %v3750 = vshll.u32 %v3572, 16
        %v3752 = vor.u32 %v3749, %v3750
        %v3753 = vsel %vm839, %v3745, %v3752
        %v3755 = vshrl.u32 %v3573, 16
        %v3757 = vrot.slane %v3755, 7
        %v3758 = vrot.slane %v3757, 4
        %v3760 = vshrl.u32 %v3574, 16
        %v3762 = vrot.slane %v3760, 7
        %v3763 = vshll.u32 %v3574, 16
        %v3765 = vor.u32 %v3762, %v3763
        %v3766 = vsel %vm839, %v3758, %v3765
        %v3767 = vrot.slane %v3762, 4
        %v3769 = vshrl.u32 %v3575, 16
        %v3771 = vrot.slane %v3769, 7
        %v3772 = vshll.u32 %v3575, 16
        %v3774 = vor.u32 %v3771, %v3772
        %v3775 = vsel %vm839, %v3767, %v3774
        %v3777 = vshrl.u32 %v3576, 16
        %v3779 = vrot.slane %v3777, 7
        %v3780 = vrot.slane %v3779, 4
        %v3782 = vshrl.u32 %v3577, 16
        %v3784 = vrot.slane %v3782, 7
        %v3785 = vshll.u32 %v3577, 16
        %v3787 = vor.u32 %v3784, %v3785
        %v3788 = vsel %vm839, %v3780, %v3787
        %v3789 = vrot.slane %v3784, 4
        %v3791 = vshrl.u32 %v3578, 16
        %v3793 = vrot.slane %v3791, 7
        %v3794 = vshll.u32 %v3578, 16
        %v3796 = vor.u32 %v3793, %v3794
        %v3797 = vsel %vm839, %v3789, %v3796
        %v3799 = vshrl.u32 %v3579, 16
        %v3801 = vrot.slane %v3799, 7
        %v3802 = vrot.slane %v3801, 4
        %v3804 = vshrl.u32 %v3580, 16
        %v3806 = vrot.slane %v3804, 7
        %v3807 = vshll.u32 %v3580, 16
        %v3809 = vor.u32 %v3806, %v3807
        %v3810 = vsel %vm839, %v3802, %v3809
        %v3811 = vrot.slane %v3806, 4
        %v3813 = vshrl.u32 %v3581, 16
        %v3815 = vrot.slane %v3813, 7
        %v3816 = vshll.u32 %v3581, 16
        %v3818 = vor.u32 %v3815, %v3816
        %v3819 = vsel %vm839, %v3811, %v3818
        %v3821 = vshrl.u32 %v3582, 16
        %v3823 = vrot.slane %v3821, 7
        %v3824 = vrot.slane %v3823, 4
        %v3826 = vshrl.u32 %v3583, 16
        %v3828 = vrot.slane %v3826, 7
        %v3829 = vshll.u32 %v3583, 16
        %v3831 = vor.u32 %v3828, %v3829
        %v3832 = vsel %vm839, %v3824, %v3831
        %v3833 = vrot.slane %v3828, 4
        %v3835 = vshrl.u32 %v3584, 16
        %v3837 = vrot.slane %v3835, 7
        %v3838 = vshll.u32 %v3584, 16
        %v3840 = vor.u32 %v3837, %v3838
        %v3841 = vsel %vm839, %v3833, %v3840
        %v3843 = vshrl.u32 %v3585, 16
        %v3845 = vrot.slane %v3843, 7
        %v3846 = vrot.slane %v3845, 4
        %v3848 = vshrl.u32 %v3586, 16
        %v3850 = vrot.slane %v3848, 7
        %v3851 = vshll.u32 %v3586, 16
        %v3853 = vor.u32 %v3850, %v3851
        %v3854 = vsel %vm839, %v3846, %v3853
        %v3855 = vrot.slane %v3850, 4
        %v3857 = vshrl.u32 %v3587, 16
        %v3859 = vrot.slane %v3857, 7
        %v3860 = vshll.u32 %v3587, 16
        %v3862 = vor.u32 %v3859, %v3860
        %v3863 = vsel %vm839, %v3855, %v3862
        %v3865 = vshrl.u32 %v3588, 16
        %v3867 = vrot.slane %v3865, 7
        %v3868 = vrot.slane %v3867, 4
        %v3870 = vshrl.u32 %v3589, 16
        %v3872 = vrot.slane %v3870, 7
        %v3873 = vshll.u32 %v3589, 16
        %v3875 = vor.u32 %v3872, %v3873
        %v3876 = vsel %vm839, %v3868, %v3875
        %v3877 = vrot.slane %v3872, 4
        %v3879 = vshrl.u32 %v3590, 16
        %v3881 = vrot.slane %v3879, 7
        %v3882 = vshll.u32 %v3590, 16
        %v3884 = vor.u32 %v3881, %v3882
        %v3885 = vsel %vm839, %v3877, %v3884
        %v3887 = vshrl.u32 %v3591, 16
        %v3889 = vrot.slane %v3887, 7
        %v3890 = vrot.slane %v3889, 4
        %v3892 = vshrl.u32 %v3592, 16
        %v3894 = vrot.slane %v3892, 7
        %v3895 = vshll.u32 %v3592, 16
        %v3897 = vor.u32 %v3894, %v3895
        %v3898 = vsel %vm839, %v3890, %v3897
        %v3899 = vrot.slane %v3894, 4
        %v3901 = vshrl.u32 %v3593, 16
        %v3903 = vrot.slane %v3901, 7
        %v3904 = vshll.u32 %v3593, 16
        %v3906 = vor.u32 %v3903, %v3904
        %v3907 = vsel %vm839, %v3899, %v3906
        %v3909 = vshrl.u32 %v3594, 16
        %v3911 = vrot.slane %v3909, 7
        %v3912 = vrot.slane %v3911, 4
        %v3914 = vshrl.u32 %v3595, 16
        %v3916 = vrot.slane %v3914, 7
        %v3917 = vshll.u32 %v3595, 16
        %v3919 = vor.u32 %v3916, %v3917
        %v3920 = vsel %vm839, %v3912, %v3919
        %v3921 = vrot.slane %v3916, 4
        %v3923 = vshrl.u32 %v3596, 16
        %v3925 = vrot.slane %v3923, 7
        %v3926 = vshll.u32 %v3596, 16
        %v3928 = vor.u32 %v3925, %v3926
        %v3929 = vsel %vm839, %v3921, %v3928
        %v3931 = vshrl.u32 %v3597, 16
        %v3933 = vrot.slane %v3931, 7
        %v3934 = vrot.slane %v3933, 4
        %v3936 = vshrl.u32 %v3598, 16
        %v3938 = vrot.slane %v3936, 7
        %v3939 = vshll.u32 %v3598, 16
        %v3941 = vor.u32 %v3938, %v3939
        %v3942 = vsel %vm839, %v3934, %v3941
        %v3943 = vrot.slane %v3938, 4
        %v3945 = vshrl.u32 %v3599, 16
        %v3947 = vrot.slane %v3945, 7
        %v3948 = vshll.u32 %v3599, 16
        %v3950 = vor.u32 %v3947, %v3948
        %v3951 = vsel %vm839, %v3943, %v3950
        %v3952 = vld [vmem:[%s3551 + $0x10] sm:$0x1]
        %v3953 = vld [vmem:[%s3551 + $0x24] sm:$0x1]
        %v3954 = vld [vmem:[%s3551 + $0x38] sm:$0x1]
        %v3955 = vld [vmem:[%s3551 + $0x4c] sm:$0x1]
        %v3956 = vld [vmem:[%s3551 + $0x60] sm:$0x1]
        %v3957 = vld [vmem:[%s3551 + $0x74] sm:$0x1]
        %v3958 = vld [vmem:[%s3551 + $0x88] sm:$0x1]
        %v3959 = vld [vmem:[%s3551 + $0x9c] sm:$0x1]
        %v3960 = vld [vmem:[%s3551 + $0xb0] sm:$0x1]
        %v3961 = vld [vmem:[%s3551 + $0xc4] sm:$0x1]
        %v3962 = vld [vmem:[%s3551 + $0xd8] sm:$0x1]
        %v3963 = vld [vmem:[%s3551 + $0xec] sm:$0x1]
        %v3964 = vld [vmem:[%s3551 + $0x100] sm:$0x1]
        %v3965 = vld [vmem:[%s3551 + $0x114] sm:$0x1]
        %v3966 = vld [vmem:[%s3551 + $0x128] sm:$0x1]
        %v3967 = vld [vmem:[%s3551 + $0x13c] sm:$0x1]
        %v3968 = vrot.slane %v3606, 4
        %v3969 = vrot.slane %v3609, 5
        %v3970 = vor.u32 %v3968, %v3969
        %v3971 = vrot.slane %v3970, 4
        %v3972 = vrot.slane %v3618, 5
        %v3973 = vsel %vm1210, %v3971, %v3972
        %v3974 = vrot.slane %v3615, 4
        %v3975 = vor.u32 %v3974, %v3972
        %v3976 = vrot.slane %v3975, 4
        %v3978 = vshll.u32 %v3952, 16
        %v3980 = vrot.slane %v3978, 5
        %v3981 = vsel %vm1210, %v3976, %v3980
        %v3982 = vrot.slane %v3628, 4
        %v3983 = vrot.slane %v3631, 5
        %v3984 = vor.u32 %v3982, %v3983
        %v3985 = vrot.slane %v3984, 4
        %v3986 = vrot.slane %v3640, 5
        %v3987 = vsel %vm1210, %v3985, %v3986
        %v3988 = vrot.slane %v3637, 4
        %v3989 = vor.u32 %v3988, %v3986
        %v3990 = vrot.slane %v3989, 4
        %v3992 = vshll.u32 %v3953, 16
        %v3994 = vrot.slane %v3992, 5
        %v3995 = vsel %vm1210, %v3990, %v3994
        %v3996 = vrot.slane %v3650, 4
        %v3997 = vrot.slane %v3653, 5
        %v3998 = vor.u32 %v3996, %v3997
        %v3999 = vrot.slane %v3998, 4
        %v4000 = vrot.slane %v3662, 5
        %v4001 = vsel %vm1210, %v3999, %v4000
        %v4002 = vrot.slane %v3659, 4
        %v4003 = vor.u32 %v4002, %v4000
        %v4004 = vrot.slane %v4003, 4
        %v4006 = vshll.u32 %v3954, 16
        %v4008 = vrot.slane %v4006, 5
        %v4009 = vsel %vm1210, %v4004, %v4008
        %v4010 = vrot.slane %v3672, 4
        %v4011 = vrot.slane %v3675, 5
        %v4012 = vor.u32 %v4010, %v4011
        %v4013 = vrot.slane %v4012, 4
        %v4014 = vrot.slane %v3684, 5
        %v4015 = vsel %vm1210, %v4013, %v4014
        %v4016 = vrot.slane %v3681, 4
        %v4017 = vor.u32 %v4016, %v4014
        %v4018 = vrot.slane %v4017, 4
        %v4020 = vshll.u32 %v3955, 16
        %v4022 = vrot.slane %v4020, 5
        %v4023 = vsel %vm1210, %v4018, %v4022
        %v4024 = vrot.slane %v3694, 4
        %v4025 = vrot.slane %v3697, 5
        %v4026 = vor.u32 %v4024, %v4025
        %v4027 = vrot.slane %v4026, 4
        %v4028 = vrot.slane %v3706, 5
        %v4029 = vsel %vm1210, %v4027, %v4028
        %v4030 = vrot.slane %v3703, 4
        %v4031 = vor.u32 %v4030, %v4028
        %v4032 = vrot.slane %v4031, 4
        %v4034 = vshll.u32 %v3956, 16
        %v4036 = vrot.slane %v4034, 5
        %v4037 = vsel %vm1210, %v4032, %v4036
        %v4038 = vrot.slane %v3716, 4
        %v4039 = vrot.slane %v3719, 5
        %v4040 = vor.u32 %v4038, %v4039
        %v4041 = vrot.slane %v4040, 4
        %v4042 = vrot.slane %v3728, 5
        %v4043 = vsel %vm1210, %v4041, %v4042
        %v4044 = vrot.slane %v3725, 4
        %v4045 = vor.u32 %v4044, %v4042
        %v4046 = vrot.slane %v4045, 4
        %v4048 = vshll.u32 %v3957, 16
        %v4050 = vrot.slane %v4048, 5
        %v4051 = vsel %vm1210, %v4046, %v4050
        %v4052 = vrot.slane %v3738, 4
        %v4053 = vrot.slane %v3741, 5
        %v4054 = vor.u32 %v4052, %v4053
        %v4055 = vrot.slane %v4054, 4
        %v4056 = vrot.slane %v3750, 5
        %v4057 = vsel %vm1210, %v4055, %v4056
        %v4058 = vrot.slane %v3747, 4
        %v4059 = vor.u32 %v4058, %v4056
        %v4060 = vrot.slane %v4059, 4
        %v4062 = vshll.u32 %v3958, 16
        %v4064 = vrot.slane %v4062, 5
        %v4065 = vsel %vm1210, %v4060, %v4064
        %v4066 = vrot.slane %v3760, 4
        %v4067 = vrot.slane %v3763, 5
        %v4068 = vor.u32 %v4066, %v4067
        %v4069 = vrot.slane %v4068, 4
        %v4070 = vrot.slane %v3772, 5
        %v4071 = vsel %vm1210, %v4069, %v4070
        %v4072 = vrot.slane %v3769, 4
        %v4073 = vor.u32 %v4072, %v4070
        %v4074 = vrot.slane %v4073, 4
        %v4076 = vshll.u32 %v3959, 16
        %v4078 = vrot.slane %v4076, 5
        %v4079 = vsel %vm1210, %v4074, %v4078
        %v4080 = vrot.slane %v3782, 4
        %v4081 = vrot.slane %v3785, 5
        %v4082 = vor.u32 %v4080, %v4081
        %v4083 = vrot.slane %v4082, 4
        %v4084 = vrot.slane %v3794, 5
        %v4085 = vsel %vm1210, %v4083, %v4084
        %v4086 = vrot.slane %v3791, 4
        %v4087 = vor.u32 %v4086, %v4084
        %v4088 = vrot.slane %v4087, 4
        %v4090 = vshll.u32 %v3960, 16
        %v4092 = vrot.slane %v4090, 5
        %v4093 = vsel %vm1210, %v4088, %v4092
        %v4094 = vrot.slane %v3804, 4
        %v4095 = vrot.slane %v3807, 5
        %v4096 = vor.u32 %v4094, %v4095
        %v4097 = vrot.slane %v4096, 4
        %v4098 = vrot.slane %v3816, 5
        %v4099 = vsel %vm1210, %v4097, %v4098
        %v4100 = vrot.slane %v3813, 4
        %v4101 = vor.u32 %v4100, %v4098
        %v4102 = vrot.slane %v4101, 4
        %v4104 = vshll.u32 %v3961, 16
        %v4106 = vrot.slane %v4104, 5
        %v4107 = vsel %vm1210, %v4102, %v4106
        %v4108 = vrot.slane %v3826, 4
        %v4109 = vrot.slane %v3829, 5
        %v4110 = vor.u32 %v4108, %v4109
        %v4111 = vrot.slane %v4110, 4
        %v4112 = vrot.slane %v3838, 5
        %v4113 = vsel %vm1210, %v4111, %v4112
        %v4114 = vrot.slane %v3835, 4
        %v4115 = vor.u32 %v4114, %v4112
        %v4116 = vrot.slane %v4115, 4
        %v4118 = vshll.u32 %v3962, 16
        %v4120 = vrot.slane %v4118, 5
        %v4121 = vsel %vm1210, %v4116, %v4120
        %v4122 = vrot.slane %v3848, 4
        %v4123 = vrot.slane %v3851, 5
        %v4124 = vor.u32 %v4122, %v4123
        %v4125 = vrot.slane %v4124, 4
        %v4126 = vrot.slane %v3860, 5
        %v4127 = vsel %vm1210, %v4125, %v4126
        %v4128 = vrot.slane %v3857, 4
        %v4129 = vor.u32 %v4128, %v4126
        %v4130 = vrot.slane %v4129, 4
        %v4132 = vshll.u32 %v3963, 16
        %v4134 = vrot.slane %v4132, 5
        %v4135 = vsel %vm1210, %v4130, %v4134
        %v4136 = vrot.slane %v3870, 4
        %v4137 = vrot.slane %v3873, 5
        %v4138 = vor.u32 %v4136, %v4137
        %v4139 = vrot.slane %v4138, 4
        %v4140 = vrot.slane %v3882, 5
        %v4141 = vsel %vm1210, %v4139, %v4140
        %v4142 = vrot.slane %v3879, 4
        %v4143 = vor.u32 %v4142, %v4140
        %v4144 = vrot.slane %v4143, 4
        %v4146 = vshll.u32 %v3964, 16
        %v4148 = vrot.slane %v4146, 5
        %v4149 = vsel %vm1210, %v4144, %v4148
        %v4150 = vrot.slane %v3892, 4
        %v4151 = vrot.slane %v3895, 5
        %v4152 = vor.u32 %v4150, %v4151
        %v4153 = vrot.slane %v4152, 4
        %v4154 = vrot.slane %v3904, 5
        %v4155 = vsel %vm1210, %v4153, %v4154
        %v4156 = vrot.slane %v3901, 4
        %v4157 = vor.u32 %v4156, %v4154
        %v4158 = vrot.slane %v4157, 4
        %v4160 = vshll.u32 %v3965, 16
        %v4162 = vrot.slane %v4160, 5
        %v4163 = vsel %vm1210, %v4158, %v4162
        %v4164 = vrot.slane %v3914, 4
        %v4165 = vrot.slane %v3917, 5
        %v4166 = vor.u32 %v4164, %v4165
        %v4167 = vrot.slane %v4166, 4
        %v4168 = vrot.slane %v3926, 5
        %v4169 = vsel %vm1210, %v4167, %v4168
        %v4170 = vrot.slane %v3923, 4
        %v4171 = vor.u32 %v4170, %v4168
        %v4172 = vrot.slane %v4171, 4
        %v4174 = vshll.u32 %v3966, 16
        %v4176 = vrot.slane %v4174, 5
        %v4177 = vsel %vm1210, %v4172, %v4176
        %v4178 = vrot.slane %v3936, 4
        %v4179 = vrot.slane %v3939, 5
        %v4180 = vor.u32 %v4178, %v4179
        %v4181 = vrot.slane %v4180, 4
        %v4182 = vrot.slane %v3948, 5
        %v4183 = vsel %vm1210, %v4181, %v4182
        %v4184 = vrot.slane %v3945, 4
        %v4185 = vor.u32 %v4184, %v4182
        %v4186 = vrot.slane %v4185, 4
        %v4188 = vshll.u32 %v3967, 16
        %v4190 = vrot.slane %v4188, 5
        %v4191 = vsel %vm1210, %v4186, %v4190
        %v4192 = vunpack.c.l.b16 %v3612
        %v4193 = vunpack.c.l.b16 %v3621
        %v4194 = vunpack.c.l.b16 %v3634
        %v4195 = vunpack.c.l.b16 %v3643
        %v4196 = vunpack.c.l.b16 %v3656
        %v4197 = vunpack.c.l.b16 %v3665
        %v4198 = vunpack.c.l.b16 %v3678
        %v4199 = vunpack.c.l.b16 %v3687
        %v4200 = vunpack.c.l.b16 %v3700
        %v4201 = vunpack.c.l.b16 %v3709
        %v4202 = vunpack.c.l.b16 %v3722
        %v4203 = vunpack.c.l.b16 %v3731
        %v4204 = vunpack.c.l.b16 %v3744
        %v4205 = vunpack.c.l.b16 %v3753
        %v4206 = vunpack.c.l.b16 %v3766
        %v4207 = vunpack.c.l.b16 %v3775
        %v4208 = vunpack.c.l.b16 %v3788
        %v4209 = vunpack.c.l.b16 %v3797
        %v4210 = vunpack.c.l.b16 %v3810
        %v4211 = vunpack.c.l.b16 %v3819
        %v4212 = vunpack.c.l.b16 %v3832
        %v4213 = vunpack.c.l.b16 %v3841
        %v4214 = vunpack.c.l.b16 %v3854
        %v4215 = vunpack.c.l.b16 %v3863
        %v4216 = vunpack.c.l.b16 %v3876
        %v4217 = vunpack.c.l.b16 %v3885
        %v4218 = vunpack.c.l.b16 %v3898
        %v4219 = vunpack.c.l.b16 %v3907
        %v4220 = vunpack.c.l.b16 %v3920
        %v4221 = vunpack.c.l.b16 %v3929
        %v4222 = vunpack.c.l.b16 %v3942
        %v4223 = vunpack.c.l.b16 %v3951
        %v4224 = vpack.c.b16 %v4193, %v4192
        %v4225 = vpack.c.b16 %v4195, %v4194
        %v4226 = vpack.c.b16 %v4197, %v4196
        %v4227 = vpack.c.b16 %v4199, %v4198
        %v4228 = vpack.c.b16 %v4201, %v4200
        %v4229 = vpack.c.b16 %v4203, %v4202
        %v4230 = vpack.c.b16 %v4205, %v4204
        %v4231 = vpack.c.b16 %v4207, %v4206
        %v4232 = vpack.c.b16 %v4209, %v4208
        %v4233 = vpack.c.b16 %v4211, %v4210
        %v4234 = vpack.c.b16 %v4213, %v4212
        %v4235 = vpack.c.b16 %v4215, %v4214
        %v4236 = vpack.c.b16 %v4217, %v4216
        %v4237 = vpack.c.b16 %v4219, %v4218
        %v4238 = vpack.c.b16 %v4221, %v4220
        %v4239 = vpack.c.b16 %v4223, %v4222
        %v4288 = vunpack.c.l.b16 %v3553
        %v4289 = vunpack.c.l.b16 %v3554
        %v4290 = vunpack.c.l.b16 %v3556
        %v4291 = vunpack.c.l.b16 %v3557
        %v4292 = vunpack.c.l.b16 %v3559
        %v4293 = vunpack.c.l.b16 %v3560
        %v4294 = vunpack.c.l.b16 %v3562
        %v4295 = vunpack.c.l.b16 %v3563
        %v4296 = vunpack.c.l.b16 %v3565
        %v4297 = vunpack.c.l.b16 %v3566
        %v4298 = vunpack.c.l.b16 %v3568
        %v4299 = vunpack.c.l.b16 %v3569
        %v4300 = vunpack.c.l.b16 %v3571
        %v4301 = vunpack.c.l.b16 %v3572
        %v4302 = vunpack.c.l.b16 %v3574
        %v4303 = vunpack.c.l.b16 %v3575
        %v4304 = vunpack.c.l.b16 %v3577
        %v4305 = vunpack.c.l.b16 %v3578
        %v4306 = vunpack.c.l.b16 %v3580
        %v4307 = vunpack.c.l.b16 %v3581
        %v4308 = vunpack.c.l.b16 %v3583
        %v4309 = vunpack.c.l.b16 %v3584
        %v4310 = vunpack.c.l.b16 %v3586
        %v4311 = vunpack.c.l.b16 %v3587
        %v4312 = vunpack.c.l.b16 %v3589
        %v4313 = vunpack.c.l.b16 %v3590
        %v4314 = vunpack.c.l.b16 %v3592
        %v4315 = vunpack.c.l.b16 %v3593
        %v4316 = vunpack.c.l.b16 %v3595
        %v4317 = vunpack.c.l.b16 %v3596
        %v4318 = vunpack.c.l.b16 %v3598
        %v4319 = vunpack.c.l.b16 %v3599
        %v4320 = vpack.c.b16 %v4289, %v4288
        %v4321 = vpack.c.b16 %v4291, %v4290
        %v4322 = vpack.c.b16 %v4293, %v4292
        %v4323 = vpack.c.b16 %v4295, %v4294
        %v4324 = vpack.c.b16 %v4297, %v4296
        %v4325 = vpack.c.b16 %v4299, %v4298
        %v4326 = vpack.c.b16 %v4301, %v4300
        %v4327 = vpack.c.b16 %v4303, %v4302
        %v4328 = vpack.c.b16 %v4305, %v4304
        %v4329 = vpack.c.b16 %v4307, %v4306
        %v4330 = vpack.c.b16 %v4309, %v4308
        %v4331 = vpack.c.b16 %v4311, %v4310
        %v4332 = vpack.c.b16 %v4313, %v4312
        %v4333 = vpack.c.b16 %v4315, %v4314
        %v4334 = vpack.c.b16 %v4317, %v4316
        %v4335 = vpack.c.b16 %v4319, %v4318
        %v4352 = vunpack.c.l.b16 %v3973
        %v4353 = vunpack.c.l.b16 %v3981
        %v4354 = vunpack.c.l.b16 %v3987
        %v4355 = vunpack.c.l.b16 %v3995
        %v4356 = vunpack.c.l.b16 %v4001
        %v4357 = vunpack.c.l.b16 %v4009
        %v4358 = vunpack.c.l.b16 %v4015
        %v4359 = vunpack.c.l.b16 %v4023
        %v4360 = vunpack.c.l.b16 %v4029
        %v4361 = vunpack.c.l.b16 %v4037
        %v4362 = vunpack.c.l.b16 %v4043
        %v4363 = vunpack.c.l.b16 %v4051
        %v4364 = vunpack.c.l.b16 %v4057
        %v4365 = vunpack.c.l.b16 %v4065
        %v4366 = vunpack.c.l.b16 %v4071
        %v4367 = vunpack.c.l.b16 %v4079
        %v4368 = vunpack.c.l.b16 %v4085
        %v4369 = vunpack.c.l.b16 %v4093
        %v4370 = vunpack.c.l.b16 %v4099
        %v4371 = vunpack.c.l.b16 %v4107
        %v4372 = vunpack.c.l.b16 %v4113
        %v4373 = vunpack.c.l.b16 %v4121
        %v4374 = vunpack.c.l.b16 %v4127
        %v4375 = vunpack.c.l.b16 %v4135
        %v4376 = vunpack.c.l.b16 %v4141
        %v4377 = vunpack.c.l.b16 %v4149
        %v4378 = vunpack.c.l.b16 %v4155
        %v4379 = vunpack.c.l.b16 %v4163
        %v4380 = vunpack.c.l.b16 %v4169
        %v4381 = vunpack.c.l.b16 %v4177
        %v4382 = vunpack.c.l.b16 %v4183
        %v4383 = vunpack.c.l.b16 %v4191
        %v4384 = vpack.c.b16 %v4353, %v4352
        %v4385 = vpack.c.b16 %v4355, %v4354
        %v4386 = vpack.c.b16 %v4357, %v4356
        %v4387 = vpack.c.b16 %v4359, %v4358
        %v4388 = vpack.c.b16 %v4361, %v4360
        %v4389 = vpack.c.b16 %v4363, %v4362
        %v4390 = vpack.c.b16 %v4365, %v4364
        %v4391 = vpack.c.b16 %v4367, %v4366
        %v4392 = vpack.c.b16 %v4369, %v4368
        %v4393 = vpack.c.b16 %v4371, %v4370
        %v4394 = vpack.c.b16 %v4373, %v4372
        %v4395 = vpack.c.b16 %v4375, %v4374
        %v4396 = vpack.c.b16 %v4377, %v4376
        %v4397 = vpack.c.b16 %v4379, %v4378
        %v4398 = vpack.c.b16 %v4381, %v4380
        %v4399 = vpack.c.b16 %v4383, %v4382
        %v4416 = vld [vmem:[#allocation6 + $0x180] sm:$0xf]
        %v4417 = vld [vmem:[#allocation6 + $0x184] sm:$0xf]
        %v4418 = vld [vmem:[#allocation6 + $0x188] sm:$0xf]
        %v4419 = vld [vmem:[#allocation6 + $0x18c] sm:$0xf]
        %v4420 = vld [vmem:[#allocation6 + $0x190] sm:$0xf]
        %v4421 = vld [vmem:[#allocation6 + $0x194] sm:$0xf]
        %v4422 = vld [vmem:[#allocation6 + $0x198] sm:$0xf]
        %v4423 = vld [vmem:[#allocation6 + $0x19c] sm:$0xf]
        %v4424 = vld [vmem:[#allocation6 + $0x1a0] sm:$0xf]
        %v4425 = vld [vmem:[#allocation6 + $0x1a4] sm:$0xf]
        %v4426 = vld [vmem:[#allocation6 + $0x1a8] sm:$0xf]
        %v4427 = vld [vmem:[#allocation6 + $0x1ac] sm:$0xf]
        %v4428 = vld [vmem:[#allocation6 + $0x1b0] sm:$0xf]
        %v4429 = vld [vmem:[#allocation6 + $0x1b4] sm:$0xf]
        %v4430 = vld [vmem:[#allocation6 + $0x1b8] sm:$0xf]
        %v4431 = vld [vmem:[#allocation6 + $0x1bc] sm:$0xf]
        %v4432 = vld [vmem:[#allocation6 + $0x1c0] sm:$0xf]
        %v4433 = vld [vmem:[#allocation6 + $0x1c4] sm:$0xf]
        %v4434 = vld [vmem:[#allocation6 + $0x1c8] sm:$0xf]
        %v4435 = vld [vmem:[#allocation6 + $0x1cc] sm:$0xf]
        %v4436 = vld [vmem:[#allocation6 + $0x1d0] sm:$0xf]
        %v4437 = vld [vmem:[#allocation6 + $0x1d4] sm:$0xf]
        %v4438 = vld [vmem:[#allocation6 + $0x1d8] sm:$0xf]
        %v4439 = vld [vmem:[#allocation6 + $0x1dc] sm:$0xf]
        %v4440 = vld [vmem:[#allocation6 + $0x1e0] sm:$0xf]
        %v4441 = vld [vmem:[#allocation6 + $0x1e4] sm:$0xf]
        %v4442 = vld [vmem:[#allocation6 + $0x1e8] sm:$0xf]
        %v4443 = vld [vmem:[#allocation6 + $0x1ec] sm:$0xf]
        %v4444 = vld [vmem:[#allocation6 + $0x1f0] sm:$0xf]
        %v4445 = vld [vmem:[#allocation6 + $0x1f4] sm:$0xf]
        %v4446 = vld [vmem:[#allocation6 + $0x1f8] sm:$0xf]
        %v4447 = vld [vmem:[#allocation6 + $0x1fc] sm:$0xf]
        %v4448 = vld [vmem:[#allocation6 + $0x200] sm:$0xf]
        %v4449 = vld [vmem:[#allocation6 + $0x204] sm:$0xf]
        %v4450 = vld [vmem:[#allocation6 + $0x208] sm:$0xf]
        %v4451 = vld [vmem:[#allocation6 + $0x20c] sm:$0xf]
        %v4452 = vld [vmem:[#allocation6 + $0x210] sm:$0xf]
        %v4453 = vld [vmem:[#allocation6 + $0x214] sm:$0xf]
        %v4454 = vld [vmem:[#allocation6 + $0x218] sm:$0xf]
        %v4455 = vld [vmem:[#allocation6 + $0x21c] sm:$0xf]
        %v4456 = vld [vmem:[#allocation6 + $0x220] sm:$0xf]
        %v4457 = vld [vmem:[#allocation6 + $0x224] sm:$0xf]
        %v4458 = vld [vmem:[#allocation6 + $0x228] sm:$0xf]
        %v4459 = vld [vmem:[#allocation6 + $0x22c] sm:$0xf]
        %v4460 = vld [vmem:[#allocation6 + $0x230] sm:$0xf]
        %v4461 = vld [vmem:[#allocation6 + $0x234] sm:$0xf]
        %v4462 = vld [vmem:[#allocation6 + $0x238] sm:$0xf]
        %v4463 = vld [vmem:[#allocation6 + $0x23c] sm:$0xf]
        %v4512 = vunpack.c.l.b16 %v4416
        %v4513 = vunpack.c.l.b16 %v4417
        %v4514 = vunpack.c.l.b16 %v4418
        %v4515 = vunpack.c.l.b16 %v4419
        %v4516 = vunpack.c.l.b16 %v4420
        %v4517 = vunpack.c.l.b16 %v4421
        %v4518 = vunpack.c.l.b16 %v4422
        %v4519 = vunpack.c.l.b16 %v4423
        %v4520 = vunpack.c.l.b16 %v4424
        %v4521 = vunpack.c.l.b16 %v4425
        %v4522 = vunpack.c.l.b16 %v4426
        %v4523 = vunpack.c.l.b16 %v4427
        %v4524 = vunpack.c.l.b16 %v4428
        %v4525 = vunpack.c.l.b16 %v4429
        %v4526 = vunpack.c.l.b16 %v4430
        %v4527 = vunpack.c.l.b16 %v4431
        %v4528 = vunpack.c.l.b16 %v4432
        %v4529 = vunpack.c.l.b16 %v4433
        %v4530 = vunpack.c.l.b16 %v4434
        %v4531 = vunpack.c.l.b16 %v4435
        %v4532 = vunpack.c.l.b16 %v4436
        %v4533 = vunpack.c.l.b16 %v4437
        %v4534 = vunpack.c.l.b16 %v4438
        %v4535 = vunpack.c.l.b16 %v4439
        %v4536 = vunpack.c.l.b16 %v4440
        %v4537 = vunpack.c.l.b16 %v4441
        %v4538 = vunpack.c.l.b16 %v4442
        %v4539 = vunpack.c.l.b16 %v4443
        %v4540 = vunpack.c.l.b16 %v4444
        %v4541 = vunpack.c.l.b16 %v4445
        %v4542 = vunpack.c.l.b16 %v4446
        %v4543 = vunpack.c.l.b16 %v4447
        %v4544 = vunpack.c.l.b16 %v4448
        %v4545 = vunpack.c.l.b16 %v4449
        %v4546 = vunpack.c.l.b16 %v4450
        %v4547 = vunpack.c.l.b16 %v4451
        %v4548 = vunpack.c.l.b16 %v4452
        %v4549 = vunpack.c.l.b16 %v4453
        %v4550 = vunpack.c.l.b16 %v4454
        %v4551 = vunpack.c.l.b16 %v4455
        %v4552 = vunpack.c.l.b16 %v4456
        %v4553 = vunpack.c.l.b16 %v4457
        %v4554 = vunpack.c.l.b16 %v4458
        %v4555 = vunpack.c.l.b16 %v4459
        %v4556 = vunpack.c.l.b16 %v4460
        %v4557 = vunpack.c.l.b16 %v4461
        %v4558 = vunpack.c.l.b16 %v4462
        %v4559 = vunpack.c.l.b16 %v4463
        %v4560 = vpack.c.b16 %v4513, %v4512
        %v4561 = vpack.c.b16 %v4515, %v4514
        %v4562 = vpack.c.b16 %v4517, %v4516
        %v4563 = vpack.c.b16 %v4519, %v4518
        %v4564 = vpack.c.b16 %v4521, %v4520
        %v4565 = vpack.c.b16 %v4523, %v4522
        %v4566 = vpack.c.b16 %v4525, %v4524
        %v4567 = vpack.c.b16 %v4527, %v4526
        %v4568 = vpack.c.b16 %v4529, %v4528
        %v4569 = vpack.c.b16 %v4531, %v4530
        %v4570 = vpack.c.b16 %v4533, %v4532
        %v4571 = vpack.c.b16 %v4535, %v4534
        %v4572 = vpack.c.b16 %v4537, %v4536
        %v4573 = vpack.c.b16 %v4539, %v4538
        %v4574 = vpack.c.b16 %v4541, %v4540
        %v4575 = vpack.c.b16 %v4543, %v4542
        %v4576 = vpack.c.b16 %v4545, %v4544
        %v4577 = vpack.c.b16 %v4547, %v4546
        %v4578 = vpack.c.b16 %v4549, %v4548
        %v4579 = vpack.c.b16 %v4551, %v4550
        %v4580 = vpack.c.b16 %v4553, %v4552
        %v4581 = vpack.c.b16 %v4555, %v4554
        %v4582 = vpack.c.b16 %v4557, %v4556
        %v4583 = vpack.c.b16 %v4559, %v4558
        %4608 = vmatprep.subr.bf16.mxu0 0
        %4609 = vmatpush1.bf16.msra.mxu0 %v4560
        %4610 = vmatprep.subr.bf16.mxu0 0
        %4611 = vmatpush1.bf16.msra.mxu0 %v4561
        %4612 = vmatprep.subr.bf16.mxu0 0
        %4613 = vmatpush1.bf16.msra.mxu0 %v4562
        %4614 = vmatprep.subr.bf16.mxu0 0
        %4615 = vmatpush1.bf16.msra.mxu0 %v4563
        %4616 = vmatprep.subr.bf16.mxu0 0
        %4617 = vmatpush1.bf16.msra.mxu0 %v4564
        %4618 = vmatprep.subr.bf16.mxu0 0
        %4619 = vmatpush1.bf16.msra.mxu0 %v4565
        %4620 = vmatprep.subr.bf16.mxu0 0
        %4621 = vmatpush1.bf16.msra.mxu0 %v4566
        %4622 = vmatprep.subr.bf16.mxu0 0
        %4623 = vmatpush1.bf16.msra.mxu0 %v4567
        %4624 = vmatprep.subr.bf16.mxu0 0
        %4625 = vmatpush1.bf16.msra.mxu0 %v4568
        %4626 = vmatprep.subr.bf16.mxu0 0
        %4627 = vmatpush1.bf16.msra.mxu0 %v4569
        %4628 = vmatprep.subr.bf16.mxu0 0
        %4629 = vmatpush1.bf16.msra.mxu0 %v4570
        %4630 = vmatprep.subr.bf16.mxu0 0
        %4631 = vmatpush1.bf16.msra.mxu0 %v4571
        %4632 = vmatprep.subr.bf16.mxu0 0
        %4633 = vmatpush1.bf16.msra.mxu0 %v4572
        %4634 = vmatprep.subr.bf16.mxu0 0
        %4635 = vmatpush1.bf16.msra.mxu0 %v4573
        %4636 = vmatprep.subr.bf16.mxu0 0
        %4637 = vmatpush1.bf16.msra.mxu0 %v4574
        %4638 = vmatprep.subr.bf16.mxu0 0
        %4639 = vmatpush1.bf16.msra.mxu0 %v4575
        %4640 = vmatprep.mubr.bf16.mxu0 %v4320
        %4641 = vmatmul.mubr.bf16.gmra.mrb[0].mxu0 %v4224
        %v4642 = vpop.f32.mrb[0].mxu0
        %v4643 = vadd.f32 0.0, %v4642
        %v4644 = vpop.f32.mrb[0].mxu0
        %v4645 = vpop.f32.mrb[0].mxu0
        %v4646 = vadd.f32 0.0, %v4645
        %v4647 = vpop.f32.mrb[0].mxu0
        %4648 = vmatprep.mubr.bf16.mxu0 %v4321
        %4649 = vmatmul.mubr.bf16.gmra.mrb[0].mxu0 %v4225
        %v4650 = vpop.f32.mrb[0].mxu0
        %v4651 = vadd.f32 0.0, %v4650
        %v4652 = vpop.f32.mrb[0].mxu0
        %v4653 = vpop.f32.mrb[0].mxu0
        %v4654 = vadd.f32 0.0, %v4653
        %v4655 = vpop.f32.mrb[0].mxu0
        %4656 = vmatprep.mubr.bf16.mxu0 %v4322
        %4657 = vmatmul.mubr.bf16.gmra.mrb[0].mxu0 %v4226
        %v4658 = vpop.f32.mrb[0].mxu0
        %v4659 = vadd.f32 0.0, %v4658
        %v4660 = vpop.f32.mrb[0].mxu0
        %v4661 = vpop.f32.mrb[0].mxu0
        %v4662 = vadd.f32 0.0, %v4661
        %v4663 = vpop.f32.mrb[0].mxu0
        %4664 = vmatprep.mubr.bf16.mxu0 %v4323
        %4665 = vmatmul.mubr.bf16.gmra.mrb[0].mxu0 %v4227
        %v4666 = vpop.f32.mrb[0].mxu0
        %v4667 = vadd.f32 0.0, %v4666
        %v4668 = vpop.f32.mrb[0].mxu0
        %v4669 = vpop.f32.mrb[0].mxu0
        %v4670 = vadd.f32 0.0, %v4669
        %v4671 = vpop.f32.mrb[0].mxu0
        %4672 = vmatprep.mubr.bf16.mxu0 %v4324
        %4673 = vmatmul.mubr.bf16.gmra.mrb[0].mxu0 %v4228
        %v4674 = vpop.f32.mrb[0].mxu0
        %v4675 = vadd.f32 0.0, %v4674
        %v4676 = vpop.f32.mrb[0].mxu0
        %v4677 = vpop.f32.mrb[0].mxu0
        %v4678 = vadd.f32 0.0, %v4677
        %v4679 = vpop.f32.mrb[0].mxu0
        %4680 = vmatprep.mubr.bf16.mxu0 %v4325
        %4681 = vmatmul.mubr.bf16.gmra.mrb[0].mxu0 %v4229
        %v4682 = vpop.f32.mrb[0].mxu0
        %v4683 = vadd.f32 0.0, %v4682
        %v4684 = vpop.f32.mrb[0].mxu0
        %v4685 = vpop.f32.mrb[0].mxu0
        %v4686 = vadd.f32 0.0, %v4685
        %v4687 = vpop.f32.mrb[0].mxu0
        %4688 = vmatprep.mubr.bf16.mxu0 %v4326
        %4689 = vmatmul.mubr.bf16.gmra.mrb[0].mxu0 %v4230
        %v4690 = vpop.f32.mrb[0].mxu0
        %v4691 = vadd.f32 0.0, %v4690
        %v4692 = vpop.f32.mrb[0].mxu0
        %v4693 = vpop.f32.mrb[0].mxu0
        %v4694 = vadd.f32 0.0, %v4693
        %v4695 = vpop.f32.mrb[0].mxu0
        %4696 = vmatprep.mubr.bf16.mxu0 %v4327
        %4697 = vmatmul.mubr.bf16.gmra.mrb[0].mxu0 %v4231
        %v4698 = vpop.f32.mrb[0].mxu0
        %v4699 = vadd.f32 0.0, %v4698
        %v4700 = vpop.f32.mrb[0].mxu0
        %v4701 = vpop.f32.mrb[0].mxu0
        %v4702 = vadd.f32 0.0, %v4701
        %v4703 = vpop.f32.mrb[0].mxu0
        %4704 = vmatprep.mubr.bf16.mxu0 %v4328
        %4705 = vmatmul.mubr.bf16.gmra.mrb[0].mxu0 %v4232
        %v4706 = vpop.f32.mrb[0].mxu0
        %v4707 = vadd.f32 0.0, %v4706
        %v4708 = vpop.f32.mrb[0].mxu0
        %v4709 = vpop.f32.mrb[0].mxu0
        %v4710 = vadd.f32 0.0, %v4709
        %v4711 = vpop.f32.mrb[0].mxu0
        %4712 = vmatprep.mubr.bf16.mxu0 %v4329
        %4713 = vmatmul.mubr.bf16.gmra.mrb[0].mxu0 %v4233
        %v4714 = vpop.f32.mrb[0].mxu0
        %v4715 = vadd.f32 0.0, %v4714
        %v4716 = vpop.f32.mrb[0].mxu0
        %v4717 = vpop.f32.mrb[0].mxu0
        %v4718 = vadd.f32 0.0, %v4717
        %v4719 = vpop.f32.mrb[0].mxu0
        %4720 = vmatprep.mubr.bf16.mxu0 %v4330
        %4721 = vmatmul.mubr.bf16.gmra.mrb[0].mxu0 %v4234
        %v4722 = vpop.f32.mrb[0].mxu0
        %v4723 = vadd.f32 0.0, %v4722
        %v4724 = vpop.f32.mrb[0].mxu0
        %v4725 = vpop.f32.mrb[0].mxu0
        %v4726 = vadd.f32 0.0, %v4725
        %v4727 = vpop.f32.mrb[0].mxu0
        %4728 = vmatprep.mubr.bf16.mxu0 %v4331
        %4729 = vmatmul.mubr.bf16.gmra.mrb[0].mxu0 %v4235
        %v4730 = vpop.f32.mrb[0].mxu0
        %v4731 = vadd.f32 0.0, %v4730
        %v4732 = vpop.f32.mrb[0].mxu0
        %v4733 = vpop.f32.mrb[0].mxu0
        %v4734 = vadd.f32 0.0, %v4733
        %v4735 = vpop.f32.mrb[0].mxu0
        %4736 = vmatprep.mubr.bf16.mxu0 %v4332
        %4737 = vmatmul.mubr.bf16.gmra.mrb[0].mxu0 %v4236
        %v4738 = vpop.f32.mrb[0].mxu0
        %v4739 = vadd.f32 0.0, %v4738
        %v4740 = vpop.f32.mrb[0].mxu0
        %v4741 = vpop.f32.mrb[0].mxu0
        %v4742 = vadd.f32 0.0, %v4741
        %v4743 = vpop.f32.mrb[0].mxu0
        %4744 = vmatprep.mubr.bf16.mxu0 %v4333
        %4745 = vmatmul.mubr.bf16.gmra.mrb[0].mxu0 %v4237
        %v4746 = vpop.f32.mrb[0].mxu0
        %v4747 = vadd.f32 0.0, %v4746
        %v4748 = vpop.f32.mrb[0].mxu0
        %v4749 = vpop.f32.mrb[0].mxu0
        %v4750 = vadd.f32 0.0, %v4749
        %v4751 = vpop.f32.mrb[0].mxu0
        %4752 = vmatprep.mubr.bf16.mxu0 %v4334
        %4753 = vmatmul.mubr.bf16.gmra.mrb[0].mxu0 %v4238
        %v4754 = vpop.f32.mrb[0].mxu0
        %v4755 = vadd.f32 0.0, %v4754
        %v4756 = vpop.f32.mrb[0].mxu0
        %v4757 = vpop.f32.mrb[0].mxu0
        %v4758 = vadd.f32 0.0, %v4757
        %v4759 = vpop.f32.mrb[0].mxu0
        %4760 = vmatprep.mubr.bf16.mxu0 %v4335
        %4761 = vmatmul.mubr.bf16.gmra.mrb[0].mxu0 %v4239
        %v4762 = vpop.f32.mrb[0].mxu0
        %v4763 = vadd.f32 0.0, %v4762
        %v4764 = vpop.f32.mrb[0].mxu0
        %v4765 = vpop.f32.mrb[0].mxu0
        %v4766 = vadd.f32 0.0, %v4765
        %v4767 = vpop.f32.mrb[0].mxu0
        %4768 = vdwg.mxu0
        %4769 = vmatprep.subr.bf16.mxu0 0
        %4770 = vmatpush1.bf16.msra.mxu0 %v4576
        %4771 = vmatprep.subr.bf16.mxu0 0
        %4772 = vmatpush1.bf16.msra.mxu0 %v4577
        %4773 = vmatprep.subr.bf16.mxu0 0
        %4774 = vmatpush1.bf16.msra.mxu0 %v4578
        %4775 = vmatprep.subr.bf16.mxu0 0
        %4776 = vmatpush1.bf16.msra.mxu0 %v4579
        %4777 = vmatprep.subr.bf16.mxu0 0
        %4778 = vmatpush1.bf16.msra.mxu0 %v4580
        %4779 = vmatprep.subr.bf16.mxu0 0
        %4780 = vmatpush1.bf16.msra.mxu0 %v4581
        %4781 = vmatprep.subr.bf16.mxu0 0
        %4782 = vmatpush1.bf16.msra.mxu0 %v4582
        %4783 = vmatprep.subr.bf16.mxu0 0
        %4784 = vmatpush1.bf16.msra.mxu0 %v4583
        %4785 = vmatprep.subr.bf16.mxu0 0
        %4786 = vmatpush1.bf16.msra.mxu0 0
        %4787 = vmatprep.subr.bf16.mxu0 0
        %4788 = vmatpush1.bf16.msra.mxu0 0
        %4789 = vmatprep.subr.bf16.mxu0 0
        %4790 = vmatpush1.bf16.msra.mxu0 0
        %4791 = vmatprep.subr.bf16.mxu0 0
        %4792 = vmatpush1.bf16.msra.mxu0 0
        %4793 = vmatprep.subr.bf16.mxu0 0
        %4794 = vmatpush1.bf16.msra.mxu0 0
        %4795 = vmatprep.subr.bf16.mxu0 0
        %4796 = vmatpush1.bf16.msra.mxu0 0
        %4797 = vmatprep.subr.bf16.mxu0 0
        %4798 = vmatpush1.bf16.msra.mxu0 0
        %4799 = vmatprep.subr.bf16.mxu0 0
        %4800 = vmatpush1.bf16.msra.mxu0 0
        %4801 = vmatprep.mubr.bf16.mxu0 0
        %4802 = vmatmul.mubr.bf16.gmra.mrb[0].mxu0 %v4384
        %v4803 = vpop.f32.mrb[0].mxu0
        %v4804 = vadd.f32 %v4643, %v4803
        %v4805 = vpop.f32.mrb[0].mxu0
        %v4806 = vpop.f32.mrb[0].mxu0
        %v4807 = vadd.f32 %v4646, %v4806
        %v4808 = vpop.f32.mrb[0].mxu0
        %4809 = vmatprep.mubr.bf16.mxu0 0
        %4810 = vmatmul.mubr.bf16.gmra.mrb[0].mxu0 %v4385
        %v4811 = vpop.f32.mrb[0].mxu0
        %v4812 = vadd.f32 %v4651, %v4811
        %v4813 = vpop.f32.mrb[0].mxu0
        %v4814 = vpop.f32.mrb[0].mxu0
        %v4815 = vadd.f32 %v4654, %v4814
        %v4816 = vpop.f32.mrb[0].mxu0
        %4817 = vmatprep.mubr.bf16.mxu0 0
        %4818 = vmatmul.mubr.bf16.gmra.mrb[0].mxu0 %v4386
        %v4819 = vpop.f32.mrb[0].mxu0
        %v4820 = vadd.f32 %v4659, %v4819
        %v4821 = vpop.f32.mrb[0].mxu0
        %v4822 = vpop.f32.mrb[0].mxu0
        %v4823 = vadd.f32 %v4662, %v4822
        %v4824 = vpop.f32.mrb[0].mxu0
        %4825 = vmatprep.mubr.bf16.mxu0 0
        %4826 = vmatmul.mubr.bf16.gmra.mrb[0].mxu0 %v4387
        %v4827 = vpop.f32.mrb[0].mxu0
        %v4828 = vadd.f32 %v4667, %v4827
        %v4829 = vpop.f32.mrb[0].mxu0
        %v4830 = vpop.f32.mrb[0].mxu0
        %v4831 = vadd.f32 %v4670, %v4830
        %v4832 = vpop.f32.mrb[0].mxu0
        %4833 = vmatprep.mubr.bf16.mxu0 0
        %4834 = vmatmul.mubr.bf16.gmra.mrb[0].mxu0 %v4388
        %v4835 = vpop.f32.mrb[0].mxu0
        %v4836 = vadd.f32 %v4675, %v4835
        %v4837 = vpop.f32.mrb[0].mxu0
        %v4838 = vpop.f32.mrb[0].mxu0
        %v4839 = vadd.f32 %v4678, %v4838
        %v4840 = vpop.f32.mrb[0].mxu0
        %4841 = vmatprep.mubr.bf16.mxu0 0
        %4842 = vmatmul.mubr.bf16.gmra.mrb[0].mxu0 %v4389
        %v4843 = vpop.f32.mrb[0].mxu0
        %v4844 = vadd.f32 %v4683, %v4843
        %v4845 = vpop.f32.mrb[0].mxu0
        %v4846 = vpop.f32.mrb[0].mxu0
        %v4847 = vadd.f32 %v4686, %v4846
        %v4848 = vpop.f32.mrb[0].mxu0
        %4849 = vmatprep.mubr.bf16.mxu0 0
        %4850 = vmatmul.mubr.bf16.gmra.mrb[0].mxu0 %v4390
        %v4851 = vpop.f32.mrb[0].mxu0
        %v4852 = vadd.f32 %v4691, %v4851
        %v4853 = vpop.f32.mrb[0].mxu0
        %v4854 = vpop.f32.mrb[0].mxu0
        %v4855 = vadd.f32 %v4694, %v4854
        %v4856 = vpop.f32.mrb[0].mxu0
        %4857 = vmatprep.mubr.bf16.mxu0 0
        %4858 = vmatmul.mubr.bf16.gmra.mrb[0].mxu0 %v4391
        %v4859 = vpop.f32.mrb[0].mxu0
        %v4860 = vadd.f32 %v4699, %v4859
        %v4861 = vpop.f32.mrb[0].mxu0
        %v4862 = vpop.f32.mrb[0].mxu0
        %v4863 = vadd.f32 %v4702, %v4862
        %v4864 = vpop.f32.mrb[0].mxu0
        %4865 = vmatprep.mubr.bf16.mxu0 0
        %4866 = vmatmul.mubr.bf16.gmra.mrb[0].mxu0 %v4392
        %v4867 = vpop.f32.mrb[0].mxu0
        %v4868 = vadd.f32 %v4707, %v4867
        %v4869 = vpop.f32.mrb[0].mxu0
        %v4870 = vpop.f32.mrb[0].mxu0
        %v4871 = vadd.f32 %v4710, %v4870
        %v4872 = vpop.f32.mrb[0].mxu0
        %4873 = vmatprep.mubr.bf16.mxu0 0
        %4874 = vmatmul.mubr.bf16.gmra.mrb[0].mxu0 %v4393
        %v4875 = vpop.f32.mrb[0].mxu0
        %v4876 = vadd.f32 %v4715, %v4875
        %v4877 = vpop.f32.mrb[0].mxu0
        %v4878 = vpop.f32.mrb[0].mxu0
        %v4879 = vadd.f32 %v4718, %v4878
        %v4880 = vpop.f32.mrb[0].mxu0
        %4881 = vmatprep.mubr.bf16.mxu0 0
        %4882 = vmatmul.mubr.bf16.gmra.mrb[0].mxu0 %v4394
        %v4883 = vpop.f32.mrb[0].mxu0
        %v4884 = vadd.f32 %v4723, %v4883
        %v4885 = vpop.f32.mrb[0].mxu0
        %v4886 = vpop.f32.mrb[0].mxu0
        %v4887 = vadd.f32 %v4726, %v4886
        %v4888 = vpop.f32.mrb[0].mxu0
        %4889 = vmatprep.mubr.bf16.mxu0 0
        %4890 = vmatmul.mubr.bf16.gmra.mrb[0].mxu0 %v4395
        %v4891 = vpop.f32.mrb[0].mxu0
        %v4892 = vadd.f32 %v4731, %v4891
        %v4893 = vpop.f32.mrb[0].mxu0
        %v4894 = vpop.f32.mrb[0].mxu0
        %v4895 = vadd.f32 %v4734, %v4894
        %v4896 = vpop.f32.mrb[0].mxu0
        %4897 = vmatprep.mubr.bf16.mxu0 0
        %4898 = vmatmul.mubr.bf16.gmra.mrb[0].mxu0 %v4396
        %v4899 = vpop.f32.mrb[0].mxu0
        %v4900 = vadd.f32 %v4739, %v4899
        %v4901 = vpop.f32.mrb[0].mxu0
        %v4902 = vpop.f32.mrb[0].mxu0
        %v4903 = vadd.f32 %v4742, %v4902
        %v4904 = vpop.f32.mrb[0].mxu0
        %4905 = vmatprep.mubr.bf16.mxu0 0
        %4906 = vmatmul.mubr.bf16.gmra.mrb[0].mxu0 %v4397
        %v4907 = vpop.f32.mrb[0].mxu0
        %v4908 = vadd.f32 %v4747, %v4907
        %v4909 = vpop.f32.mrb[0].mxu0
        %v4910 = vpop.f32.mrb[0].mxu0
        %v4911 = vadd.f32 %v4750, %v4910
        %v4912 = vpop.f32.mrb[0].mxu0
        %4913 = vmatprep.mubr.bf16.mxu0 0
        %4914 = vmatmul.mubr.bf16.gmra.mrb[0].mxu0 %v4398
        %v4915 = vpop.f32.mrb[0].mxu0
        %v4916 = vadd.f32 %v4755, %v4915
        %v4917 = vpop.f32.mrb[0].mxu0
        %v4918 = vpop.f32.mrb[0].mxu0
        %v4919 = vadd.f32 %v4758, %v4918
        %v4920 = vpop.f32.mrb[0].mxu0
        %4921 = vmatprep.mubr.bf16.mxu0 0
        %4922 = vmatmul.mubr.bf16.gmra.mrb[0].mxu0 %v4399
        %v4923 = vpop.f32.mrb[0].mxu0
        %v4924 = vadd.f32 %v4763, %v4923
        %v4925 = vpop.f32.mrb[0].mxu0
        %v4926 = vpop.f32.mrb[0].mxu0
        %v4927 = vadd.f32 %v4766, %v4926
        %v4928 = vpop.f32.mrb[0].mxu0
        %4929 = vdwg.mxu0
        %v4930 = vadd.f32 %v3425, %v4804
        %v4931 = vadd.f32 %v3428, %v4807
        %v4932 = vadd.f32 %v3433, %v4812
        %v4933 = vadd.f32 %v3436, %v4815
        %v4934 = vadd.f32 %v3441, %v4820
        %v4935 = vadd.f32 %v3444, %v4823
        %v4936 = vadd.f32 %v3449, %v4828
        %v4937 = vadd.f32 %v3452, %v4831
        %v4938 = vadd.f32 %v3457, %v4836
        %v4939 = vadd.f32 %v3460, %v4839
        %v4940 = vadd.f32 %v3465, %v4844
        %v4941 = vadd.f32 %v3468, %v4847
        %v4942 = vadd.f32 %v3473, %v4852
        %v4943 = vadd.f32 %v3476, %v4855
        %v4944 = vadd.f32 %v3481, %v4860
        %v4945 = vadd.f32 %v3484, %v4863
        %v4946 = vadd.f32 %v3489, %v4868
        %v4947 = vadd.f32 %v3492, %v4871
        %v4948 = vadd.f32 %v3497, %v4876
        %v4949 = vadd.f32 %v3500, %v4879
        %v4950 = vadd.f32 %v3505, %v4884
        %v4951 = vadd.f32 %v3508, %v4887
        %v4952 = vadd.f32 %v3513, %v4892
        %v4953 = vadd.f32 %v3516, %v4895
        %v4954 = vadd.f32 %v3521, %v4900
        %v4955 = vadd.f32 %v3524, %v4903
        %v4956 = vadd.f32 %v3529, %v4908
        %v4957 = vadd.f32 %v3532, %v4911
        %v4958 = vadd.f32 %v3537, %v4916
        %v4959 = vadd.f32 %v3540, %v4919
        %v4960 = vadd.f32 %v3545, %v4924
        %v4961 = vadd.f32 %v3548, %v4927
        %v4963 = vlaneseq
        %v4964 = vshrl.u32 %v4963, 7
        %v4965 = vsub.s32 0, %v4964
        %v4966 = vrot.slane %v789, %v4965
        %v4968 = vadd.f32 %v4930, %v4966
        %v4969 = vadd.f32 %v4931, %v4966
        %v4970 = vadd.f32 %v4932, %v4966
        %v4971 = vadd.f32 %v4933, %v4966
        %v4972 = vadd.f32 %v4934, %v4966
        %v4973 = vadd.f32 %v4935, %v4966
        %v4974 = vadd.f32 %v4936, %v4966
        %v4975 = vadd.f32 %v4937, %v4966
        %v4976 = vadd.f32 %v4938, %v4966
        %v4977 = vadd.f32 %v4939, %v4966
        %v4978 = vadd.f32 %v4940, %v4966
        %v4979 = vadd.f32 %v4941, %v4966
        %v4980 = vadd.f32 %v4942, %v4966
        %v4981 = vadd.f32 %v4943, %v4966
        %v4982 = vadd.f32 %v4944, %v4966
        %v4983 = vadd.f32 %v4945, %v4966
        %v4984 = vadd.f32 %v4946, %v4966
        %v4985 = vadd.f32 %v4947, %v4966
        %v4986 = vadd.f32 %v4948, %v4966
        %v4987 = vadd.f32 %v4949, %v4966
        %v4988 = vadd.f32 %v4950, %v4966
        %v4989 = vadd.f32 %v4951, %v4966
        %v4990 = vadd.f32 %v4952, %v4966
        %v4991 = vadd.f32 %v4953, %v4966
        %v4992 = vadd.f32 %v4954, %v4966
        %v4993 = vadd.f32 %v4955, %v4966
        %v4994 = vadd.f32 %v4956, %v4966
        %v4995 = vadd.f32 %v4957, %v4966
        %v4996 = vadd.f32 %v4958, %v4966
        %v4997 = vadd.f32 %v4959, %v4966
        %v4998 = vadd.f32 %v4960, %v4966
        %v4999 = vadd.f32 %v4961, %v4966
        %vm5000 = vcmp.gt.f32.partialorder %v4968, 0.0
        %vm5001 = vcmp.gt.f32.partialorder %v4969, 0.0
        %vm5002 = vcmp.gt.f32.partialorder %v4970, 0.0
        %vm5003 = vcmp.gt.f32.partialorder %v4971, 0.0
        %vm5004 = vcmp.gt.f32.partialorder %v4972, 0.0
        %vm5005 = vcmp.gt.f32.partialorder %v4973, 0.0
        %vm5006 = vcmp.gt.f32.partialorder %v4974, 0.0
        %vm5007 = vcmp.gt.f32.partialorder %v4975, 0.0
        %vm5008 = vcmp.gt.f32.partialorder %v4976, 0.0
        %vm5009 = vcmp.gt.f32.partialorder %v4977, 0.0
        %vm5010 = vcmp.gt.f32.partialorder %v4978, 0.0
        %vm5011 = vcmp.gt.f32.partialorder %v4979, 0.0
        %vm5012 = vcmp.gt.f32.partialorder %v4980, 0.0
        %vm5013 = vcmp.gt.f32.partialorder %v4981, 0.0
        %vm5014 = vcmp.gt.f32.partialorder %v4982, 0.0
        %vm5015 = vcmp.gt.f32.partialorder %v4983, 0.0
        %vm5016 = vcmp.gt.f32.partialorder %v4984, 0.0
        %vm5017 = vcmp.gt.f32.partialorder %v4985, 0.0
        %vm5018 = vcmp.gt.f32.partialorder %v4986, 0.0
        %vm5019 = vcmp.gt.f32.partialorder %v4987, 0.0
        %vm5020 = vcmp.gt.f32.partialorder %v4988, 0.0
        %vm5021 = vcmp.gt.f32.partialorder %v4989, 0.0
        %vm5022 = vcmp.gt.f32.partialorder %v4990, 0.0
        %vm5023 = vcmp.gt.f32.partialorder %v4991, 0.0
        %vm5024 = vcmp.gt.f32.partialorder %v4992, 0.0
        %vm5025 = vcmp.gt.f32.partialorder %v4993, 0.0
        %vm5026 = vcmp.gt.f32.partialorder %v4994, 0.0
        %vm5027 = vcmp.gt.f32.partialorder %v4995, 0.0
        %vm5028 = vcmp.gt.f32.partialorder %v4996, 0.0
        %vm5029 = vcmp.gt.f32.partialorder %v4997, 0.0
        %vm5030 = vcmp.gt.f32.partialorder %v4998, 0.0
        %vm5031 = vcmp.gt.f32.partialorder %v4999, 0.0
        %v5032 = vmin.f32 %v4968, 0.0
        %v5033 = vmin.f32 %v4969, 0.0
        %v5034 = vmin.f32 %v4970, 0.0
        %v5035 = vmin.f32 %v4971, 0.0
        %v5036 = vmin.f32 %v4972, 0.0
        %v5037 = vmin.f32 %v4973, 0.0
        %v5038 = vmin.f32 %v4974, 0.0
        %v5039 = vmin.f32 %v4975, 0.0
        %v5040 = vmin.f32 %v4976, 0.0
        %v5041 = vmin.f32 %v4977, 0.0
        %v5042 = vmin.f32 %v4978, 0.0
        %v5043 = vmin.f32 %v4979, 0.0
        %v5044 = vmin.f32 %v4980, 0.0
        %v5045 = vmin.f32 %v4981, 0.0
        %v5046 = vmin.f32 %v4982, 0.0
        %v5047 = vmin.f32 %v4983, 0.0
        %v5048 = vmin.f32 %v4984, 0.0
        %v5049 = vmin.f32 %v4985, 0.0
        %v5050 = vmin.f32 %v4986, 0.0
        %v5051 = vmin.f32 %v4987, 0.0
        %v5052 = vmin.f32 %v4988, 0.0
        %v5053 = vmin.f32 %v4989, 0.0
        %v5054 = vmin.f32 %v4990, 0.0
        %v5055 = vmin.f32 %v4991, 0.0
        %v5056 = vmin.f32 %v4992, 0.0
        %v5057 = vmin.f32 %v4993, 0.0
        %v5058 = vmin.f32 %v4994, 0.0
        %v5059 = vmin.f32 %v4995, 0.0
        %v5060 = vmin.f32 %v4996, 0.0
        %v5061 = vmin.f32 %v4997, 0.0
        %v5062 = vmin.f32 %v4998, 0.0
        %v5063 = vmin.f32 %v4999, 0.0
        %v5064 = vmul.f32 %v5032, 1.442695
        %v5065 = vpow.pop %v5064
        %v5066 = vmul.f32 %v5033, 1.442695
        %v5067 = vpow.pop %v5066
        %v5068 = vmul.f32 %v5034, 1.442695
        %v5069 = vpow.pop %v5068
        %v5070 = vmul.f32 %v5035, 1.442695
        %v5071 = vpow.pop %v5070
        %v5072 = vmul.f32 %v5036, 1.442695
        %v5073 = vpow.pop %v5072
        %v5074 = vmul.f32 %v5037, 1.442695
        %v5075 = vpow.pop %v5074
        %v5076 = vmul.f32 %v5038, 1.442695
        %v5077 = vpow.pop %v5076
        %v5078 = vmul.f32 %v5039, 1.442695
        %v5079 = vpow.pop %v5078
        %v5080 = vmul.f32 %v5040, 1.442695
        %v5081 = vpow.pop %v5080
        %v5082 = vmul.f32 %v5041, 1.442695
        %v5083 = vpow.pop %v5082
        %v5084 = vmul.f32 %v5042, 1.442695
        %v5085 = vpow.pop %v5084
        %v5086 = vmul.f32 %v5043, 1.442695
        %v5087 = vpow.pop %v5086
        %v5088 = vmul.f32 %v5044, 1.442695
        %v5089 = vpow.pop %v5088
        %v5090 = vmul.f32 %v5045, 1.442695
        %v5091 = vpow.pop %v5090
        %v5092 = vmul.f32 %v5046, 1.442695
        %v5093 = vpow.pop %v5092
        %v5094 = vmul.f32 %v5047, 1.442695
        %v5095 = vpow.pop %v5094
        %v5096 = vmul.f32 %v5048, 1.442695
        %v5097 = vpow.pop %v5096
        %v5098 = vmul.f32 %v5049, 1.442695
        %v5099 = vpow.pop %v5098
        %v5100 = vmul.f32 %v5050, 1.442695
        %v5101 = vpow.pop %v5100
        %v5102 = vmul.f32 %v5051, 1.442695
        %v5103 = vpow.pop %v5102
        %v5104 = vmul.f32 %v5052, 1.442695
        %v5105 = vpow.pop %v5104
        %v5106 = vmul.f32 %v5053, 1.442695
        %v5107 = vpow.pop %v5106
        %v5108 = vmul.f32 %v5054, 1.442695
        %v5109 = vpow.pop %v5108
        %v5110 = vmul.f32 %v5055, 1.442695
        %v5111 = vpow.pop %v5110
        %v5112 = vmul.f32 %v5056, 1.442695
        %v5113 = vpow.pop %v5112
        %v5114 = vmul.f32 %v5057, 1.442695
        %v5115 = vpow.pop %v5114
        %v5116 = vmul.f32 %v5058, 1.442695
        %v5117 = vpow.pop %v5116
        %v5118 = vmul.f32 %v5059, 1.442695
        %v5119 = vpow.pop %v5118
        %v5120 = vmul.f32 %v5060, 1.442695
        %v5121 = vpow.pop %v5120
        %v5122 = vmul.f32 %v5061, 1.442695
        %v5123 = vpow.pop %v5122
        %v5124 = vmul.f32 %v5062, 1.442695
        %v5125 = vpow.pop %v5124
        %v5126 = vmul.f32 %v5063, 1.442695
        %v5127 = vpow.pop %v5126
        %v5128 = vsub.f32 %v5065, 1.0
        %v5129 = vsub.f32 %v5067, 1.0
        %v5130 = vsub.f32 %v5069, 1.0
        %v5131 = vsub.f32 %v5071, 1.0
        %v5132 = vsub.f32 %v5073, 1.0
        %v5133 = vsub.f32 %v5075, 1.0
        %v5134 = vsub.f32 %v5077, 1.0
        %v5135 = vsub.f32 %v5079, 1.0
        %v5136 = vsub.f32 %v5081, 1.0
        %v5137 = vsub.f32 %v5083, 1.0
        %v5138 = vsub.f32 %v5085, 1.0
        %v5139 = vsub.f32 %v5087, 1.0
        %v5140 = vsub.f32 %v5089, 1.0
        %v5141 = vsub.f32 %v5091, 1.0
        %v5142 = vsub.f32 %v5093, 1.0
        %v5143 = vsub.f32 %v5095, 1.0
        %v5144 = vsub.f32 %v5097, 1.0
        %v5145 = vsub.f32 %v5099, 1.0
        %v5146 = vsub.f32 %v5101, 1.0
        %v5147 = vsub.f32 %v5103, 1.0
        %v5148 = vsub.f32 %v5105, 1.0
        %v5149 = vsub.f32 %v5107, 1.0
        %v5150 = vsub.f32 %v5109, 1.0
        %v5151 = vsub.f32 %v5111, 1.0
        %v5152 = vsub.f32 %v5113, 1.0
        %v5153 = vsub.f32 %v5115, 1.0
        %v5154 = vsub.f32 %v5117, 1.0
        %v5155 = vsub.f32 %v5119, 1.0
        %v5156 = vsub.f32 %v5121, 1.0
        %v5157 = vsub.f32 %v5123, 1.0
        %v5158 = vsub.f32 %v5125, 1.0
        %v5159 = vsub.f32 %v5127, 1.0
        %v5160 = vsel %vm5000, %v4968, %v5128
        %v5161 = vsel %vm5001, %v4969, %v5129
        %v5162 = vsel %vm5002, %v4970, %v5130
        %v5163 = vsel %vm5003, %v4971, %v5131
        %v5164 = vsel %vm5004, %v4972, %v5132
        %v5165 = vsel %vm5005, %v4973, %v5133
        %v5166 = vsel %vm5006, %v4974, %v5134
        %v5167 = vsel %vm5007, %v4975, %v5135
        %v5168 = vsel %vm5008, %v4976, %v5136
        %v5169 = vsel %vm5009, %v4977, %v5137
        %v5170 = vsel %vm5010, %v4978, %v5138
        %v5171 = vsel %vm5011, %v4979, %v5139
        %v5172 = vsel %vm5012, %v4980, %v5140
        %v5173 = vsel %vm5013, %v4981, %v5141
        %v5174 = vsel %vm5014, %v4982, %v5142
        %v5175 = vsel %vm5015, %v4983, %v5143
        %v5176 = vsel %vm5016, %v4984, %v5144
        %v5177 = vsel %vm5017, %v4985, %v5145
        %v5178 = vsel %vm5018, %v4986, %v5146
        %v5179 = vsel %vm5019, %v4987, %v5147
        %v5180 = vsel %vm5020, %v4988, %v5148
        %v5181 = vsel %vm5021, %v4989, %v5149
        %v5182 = vsel %vm5022, %v4990, %v5150
        %v5183 = vsel %vm5023, %v4991, %v5151
        %v5184 = vsel %vm5024, %v4992, %v5152
        %v5185 = vsel %vm5025, %v4993, %v5153
        %v5186 = vsel %vm5026, %v4994, %v5154
        %v5187 = vsel %vm5027, %v4995, %v5155
        %v5188 = vsel %vm5028, %v4996, %v5156
        %v5189 = vsel %vm5029, %v4997, %v5157
        %v5190 = vsel %vm5030, %v4998, %v5158
        %v5191 = vsel %vm5031, %v4999, %v5159
        %v5192 = vpack.c.bf16 %v5161, %v5160
        %v5193 = vpack.c.bf16 %v5163, %v5162
        %v5194 = vpack.c.bf16 %v5165, %v5164
        %v5195 = vpack.c.bf16 %v5167, %v5166
        %v5196 = vpack.c.bf16 %v5169, %v5168
        %v5197 = vpack.c.bf16 %v5171, %v5170
        %v5198 = vpack.c.bf16 %v5173, %v5172
        %v5199 = vpack.c.bf16 %v5175, %v5174
        %v5200 = vpack.c.bf16 %v5177, %v5176
        %v5201 = vpack.c.bf16 %v5179, %v5178
        %v5202 = vpack.c.bf16 %v5181, %v5180
        %v5203 = vpack.c.bf16 %v5183, %v5182
        %v5204 = vpack.c.bf16 %v5185, %v5184
        %v5205 = vpack.c.bf16 %v5187, %v5186
        %v5206 = vpack.c.bf16 %v5189, %v5188
        %v5207 = vpack.c.bf16 %v5191, %v5190
        %v5224 = vunpack.c.l.b16 %v5192
        %v5225 = vunpack.c.h.b16 %v5192
        %v5226 = vunpack.c.l.b16 %v5193
        %v5227 = vunpack.c.h.b16 %v5193
        %v5228 = vunpack.c.l.b16 %v5194
        %v5229 = vunpack.c.h.b16 %v5194
        %v5230 = vunpack.c.l.b16 %v5195
        %v5231 = vunpack.c.h.b16 %v5195
        %v5232 = vunpack.c.l.b16 %v5196
        %v5233 = vunpack.c.h.b16 %v5196
        %v5234 = vunpack.c.l.b16 %v5197
        %v5235 = vunpack.c.h.b16 %v5197
        %v5236 = vunpack.c.l.b16 %v5198
        %v5237 = vunpack.c.h.b16 %v5198
        %v5238 = vunpack.c.l.b16 %v5199
        %v5239 = vunpack.c.h.b16 %v5199
        %v5240 = vunpack.c.l.b16 %v5200
        %v5241 = vunpack.c.h.b16 %v5200
        %v5242 = vunpack.c.l.b16 %v5201
        %v5243 = vunpack.c.h.b16 %v5201
        %v5244 = vunpack.c.l.b16 %v5202
        %v5245 = vunpack.c.h.b16 %v5202
        %v5246 = vunpack.c.l.b16 %v5203
        %v5247 = vunpack.c.h.b16 %v5203
        %v5248 = vunpack.c.l.b16 %v5204
        %v5249 = vunpack.c.h.b16 %v5204
        %v5250 = vunpack.c.l.b16 %v5205
        %v5251 = vunpack.c.h.b16 %v5205
        %v5252 = vunpack.c.l.b16 %v5206
        %v5253 = vunpack.c.h.b16 %v5206
        %v5254 = vunpack.c.l.b16 %v5207
        %v5255 = vunpack.c.h.b16 %v5207
        %v5256 = vpack.c.b16 %v5224, %v5224
        %v5257 = vpack.c.b16 %v5225, %v5225
        %v5258 = vpack.c.b16 %v5226, %v5226
        %v5259 = vpack.c.b16 %v5227, %v5227
        %v5260 = vpack.c.b16 %v5228, %v5228
        %v5261 = vpack.c.b16 %v5229, %v5229
        %v5262 = vpack.c.b16 %v5230, %v5230
        %v5263 = vpack.c.b16 %v5231, %v5231
        %v5264 = vpack.c.b16 %v5232, %v5232
        %v5265 = vpack.c.b16 %v5233, %v5233
        %v5266 = vpack.c.b16 %v5234, %v5234
        %v5267 = vpack.c.b16 %v5235, %v5235
        %v5268 = vpack.c.b16 %v5236, %v5236
        %v5269 = vpack.c.b16 %v5237, %v5237
        %v5270 = vpack.c.b16 %v5238, %v5238
        %v5271 = vpack.c.b16 %v5239, %v5239
        %v5272 = vpack.c.b16 %v5240, %v5240
        %v5273 = vpack.c.b16 %v5241, %v5241
        %v5274 = vpack.c.b16 %v5242, %v5242
        %v5275 = vpack.c.b16 %v5243, %v5243
        %v5276 = vpack.c.b16 %v5244, %v5244
        %v5277 = vpack.c.b16 %v5245, %v5245
        %v5278 = vpack.c.b16 %v5246, %v5246
        %v5279 = vpack.c.b16 %v5247, %v5247
        %v5280 = vpack.c.b16 %v5248, %v5248
        %v5281 = vpack.c.b16 %v5249, %v5249
        %v5282 = vpack.c.b16 %v5250, %v5250
        %v5283 = vpack.c.b16 %v5251, %v5251
        %v5284 = vpack.c.b16 %v5252, %v5252
        %v5285 = vpack.c.b16 %v5253, %v5253
        %v5286 = vpack.c.b16 %v5254, %v5254
        %v5287 = vpack.c.b16 %v5255, %v5255
        %5320 = vst [vmem:[%s756 + $0x8] sm:$0xf] %v5256
        %5321 = vst [vmem:[%s756 + $0xc] sm:$0xf] %v5257
        %5322 = vst [vmem:[%s756 + $0x1c] sm:$0xf] %v5258
        %5323 = vst [vmem:[%s756 + $0x20] sm:$0xf] %v5259
        %5324 = vst [vmem:[%s756 + $0x30] sm:$0xf] %v5260
        %5325 = vst [vmem:[%s756 + $0x34] sm:$0xf] %v5261
        %5326 = vst [vmem:[%s756 + $0x44] sm:$0xf] %v5262
        %5327 = vst [vmem:[%s756 + $0x48] sm:$0xf] %v5263
        %5328 = vst [vmem:[%s756 + $0x58] sm:$0xf] %v5264
        %5329 = vst [vmem:[%s756 + $0x5c] sm:$0xf] %v5265
        %5330 = vst [vmem:[%s756 + $0x6c] sm:$0xf] %v5266
        %5331 = vst [vmem:[%s756 + $0x70] sm:$0xf] %v5267
        %5332 = vst [vmem:[%s756 + $0x80] sm:$0xf] %v5268
        %5333 = vst [vmem:[%s756 + $0x84] sm:$0xf] %v5269
        %5334 = vst [vmem:[%s756 + $0x94] sm:$0xf] %v5270
        %5335 = vst [vmem:[%s756 + $0x98] sm:$0xf] %v5271
        %5336 = vst [vmem:[%s756 + $0xa8] sm:$0xf] %v5272
        %5337 = vst [vmem:[%s756 + $0xac] sm:$0xf] %v5273
        %5338 = vst [vmem:[%s756 + $0xbc] sm:$0xf] %v5274
        %5339 = vst [vmem:[%s756 + $0xc0] sm:$0xf] %v5275
        %5340 = vst [vmem:[%s756 + $0xd0] sm:$0xf] %v5276
        %5341 = vst [vmem:[%s756 + $0xd4] sm:$0xf] %v5277
        %5342 = vst [vmem:[%s756 + $0xe4] sm:$0xf] %v5278
        %5343 = vst [vmem:[%s756 + $0xe8] sm:$0xf] %v5279
        %5344 = vst [vmem:[%s756 + $0xf8] sm:$0xf] %v5280
        %5345 = vst [vmem:[%s756 + $0xfc] sm:$0xf] %v5281
        %5346 = vst [vmem:[%s756 + $0x10c] sm:$0xf] %v5282
        %5347 = vst [vmem:[%s756 + $0x110] sm:$0xf] %v5283
        %5348 = vst [vmem:[%s756 + $0x120] sm:$0xf] %v5284
        %5349 = vst [vmem:[%s756 + $0x124] sm:$0xf] %v5285
        %5350 = vst [vmem:[%s756 + $0x134] sm:$0xf] %v5286
        %5351 = vst [vmem:[%s756 + $0x138] sm:$0xf] %v5287
        %v5352 = vld [vmem:[%s4] sm:$0x1]
        %v5353 = vld [vmem:[#allocation2 + $0x4] sm:$0x8]
        %v5354 = vld [vmem:[#allocation2 + $0x8] sm:$0xf]
        %v5355 = vld [vmem:[#allocation2 + $0xc] sm:$0xf]
        %v5356 = vld [vmem:[#allocation2 + $0x18] sm:$0x8]
        %v5357 = vld [vmem:[#allocation2 + $0x1c] sm:$0xf]
        %v5358 = vld [vmem:[#allocation2 + $0x20] sm:$0xf]
        %v5359 = vld [vmem:[#allocation2 + $0x2c] sm:$0x8]
        %v5360 = vld [vmem:[#allocation2 + $0x30] sm:$0xf]
        %v5361 = vld [vmem:[#allocation2 + $0x34] sm:$0xf]
        %v5362 = vld [vmem:[#allocation2 + $0x40] sm:$0x8]
        %v5363 = vld [vmem:[#allocation2 + $0x44] sm:$0xf]
        %v5364 = vld [vmem:[#allocation2 + $0x48] sm:$0xf]
        %v5365 = vld [vmem:[#allocation2 + $0x54] sm:$0x8]
        %v5366 = vld [vmem:[#allocation2 + $0x58] sm:$0xf]
        %v5367 = vld [vmem:[#allocation2 + $0x5c] sm:$0xf]
        %v5368 = vld [vmem:[#allocation2 + $0x68] sm:$0x8]
        %v5369 = vld [vmem:[#allocation2 + $0x6c] sm:$0xf]
        %v5370 = vld [vmem:[#allocation2 + $0x70] sm:$0xf]
        %v5371 = vld [vmem:[#allocation2 + $0x7c] sm:$0x8]
        %v5372 = vld [vmem:[#allocation2 + $0x80] sm:$0xf]
        %v5373 = vld [vmem:[#allocation2 + $0x84] sm:$0xf]
        %v5374 = vld [vmem:[#allocation2 + $0x90] sm:$0x8]
        %v5375 = vld [vmem:[#allocation2 + $0x94] sm:$0xf]
        %v5376 = vld [vmem:[#allocation2 + $0x98] sm:$0xf]
        %v5377 = vld [vmem:[#allocation2 + $0xa4] sm:$0x8]
        %v5378 = vld [vmem:[#allocation2 + $0xa8] sm:$0xf]
        %v5379 = vld [vmem:[#allocation2 + $0xac] sm:$0xf]
        %v5380 = vld [vmem:[#allocation2 + $0xb8] sm:$0x8]
        %v5381 = vld [vmem:[#allocation2 + $0xbc] sm:$0xf]
        %v5382 = vld [vmem:[#allocation2 + $0xc0] sm:$0xf]
        %v5383 = vld [vmem:[#allocation2 + $0xcc] sm:$0x8]
        %v5384 = vld [vmem:[#allocation2 + $0xd0] sm:$0xf]
        %v5385 = vld [vmem:[#allocation2 + $0xd4] sm:$0xf]
        %v5386 = vld [vmem:[#allocation2 + $0xe0] sm:$0x8]
        %v5387 = vld [vmem:[#allocation2 + $0xe4] sm:$0xf]
        %v5388 = vld [vmem:[#allocation2 + $0xe8] sm:$0xf]
        %v5389 = vld [vmem:[#allocation2 + $0xf4] sm:$0x8]
        %v5390 = vld [vmem:[#allocation2 + $0xf8] sm:$0xf]
        %v5391 = vld [vmem:[#allocation2 + $0xfc] sm:$0xf]
        %v5392 = vld [vmem:[#allocation2 + $0x108] sm:$0x8]
        %v5393 = vld [vmem:[#allocation2 + $0x10c] sm:$0xf]
        %v5394 = vld [vmem:[#allocation2 + $0x110] sm:$0xf]
        %v5395 = vld [vmem:[#allocation2 + $0x11c] sm:$0x8]
        %v5396 = vld [vmem:[#allocation2 + $0x120] sm:$0xf]
        %v5397 = vld [vmem:[#allocation2 + $0x124] sm:$0xf]
        %v5398 = vld [vmem:[#allocation2 + $0x130] sm:$0x8]
        %v5399 = vld [vmem:[#allocation2 + $0x134] sm:$0xf]
        %v5400 = vld [vmem:[#allocation2 + $0x138] sm:$0xf]
        %v5402 = vshrl.u32 %v5353, 16
        %v5404 = vrot.slane %v5402, 7
        %v5405 = vrot.slane %v5404, 4
        %v5407 = vshrl.u32 %v5354, 16
        %v5409 = vrot.slane %v5407, 7
        %v5410 = vshll.u32 %v5354, 16
        %v5412 = vor.u32 %v5409, %v5410
        %v5413 = vsel %vm839, %v5405, %v5412
        %v5414 = vrot.slane %v5409, 4
        %v5416 = vshrl.u32 %v5355, 16
        %v5418 = vrot.slane %v5416, 7
        %v5419 = vshll.u32 %v5355, 16
        %v5421 = vor.u32 %v5418, %v5419
        %v5422 = vsel %vm839, %v5414, %v5421
        %v5424 = vshrl.u32 %v5356, 16
        %v5426 = vrot.slane %v5424, 7
        %v5427 = vrot.slane %v5426, 4
        %v5429 = vshrl.u32 %v5357, 16
        %v5431 = vrot.slane %v5429, 7
        %v5432 = vshll.u32 %v5357, 16
        %v5434 = vor.u32 %v5431, %v5432
        %v5435 = vsel %vm839, %v5427, %v5434
        %v5436 = vrot.slane %v5431, 4
        %v5438 = vshrl.u32 %v5358, 16
        %v5440 = vrot.slane %v5438, 7
        %v5441 = vshll.u32 %v5358, 16
        %v5443 = vor.u32 %v5440, %v5441
        %v5444 = vsel %vm839, %v5436, %v5443
        %v5446 = vshrl.u32 %v5359, 16
        %v5448 = vrot.slane %v5446, 7
        %v5449 = vrot.slane %v5448, 4
        %v5451 = vshrl.u32 %v5360, 16
        %v5453 = vrot.slane %v5451, 7
        %v5454 = vshll.u32 %v5360, 16
        %v5456 = vor.u32 %v5453, %v5454
        %v5457 = vsel %vm839, %v5449, %v5456
        %v5458 = vrot.slane %v5453, 4
        %v5460 = vshrl.u32 %v5361, 16
        %v5462 = vrot.slane %v5460, 7
        %v5463 = vshll.u32 %v5361, 16
        %v5465 = vor.u32 %v5462, %v5463
        %v5466 = vsel %vm839, %v5458, %v5465
        %v5468 = vshrl.u32 %v5362, 16
        %v5470 = vrot.slane %v5468, 7
        %v5471 = vrot.slane %v5470, 4
        %v5473 = vshrl.u32 %v5363, 16
        %v5475 = vrot.slane %v5473, 7
        %v5476 = vshll.u32 %v5363, 16
        %v5478 = vor.u32 %v5475, %v5476
        %v5479 = vsel %vm839, %v5471, %v5478
        %v5480 = vrot.slane %v5475, 4
        %v5482 = vshrl.u32 %v5364, 16
        %v5484 = vrot.slane %v5482, 7
        %v5485 = vshll.u32 %v5364, 16
        %v5487 = vor.u32 %v5484, %v5485
        %v5488 = vsel %vm839, %v5480, %v5487
        %v5490 = vshrl.u32 %v5365, 16
        %v5492 = vrot.slane %v5490, 7
        %v5493 = vrot.slane %v5492, 4
        %v5495 = vshrl.u32 %v5366, 16
        %v5497 = vrot.slane %v5495, 7
        %v5498 = vshll.u32 %v5366, 16
        %v5500 = vor.u32 %v5497, %v5498
        %v5501 = vsel %vm839, %v5493, %v5500
        %v5502 = vrot.slane %v5497, 4
        %v5504 = vshrl.u32 %v5367, 16
        %v5506 = vrot.slane %v5504, 7
        %v5507 = vshll.u32 %v5367, 16
        %v5509 = vor.u32 %v5506, %v5507
        %v5510 = vsel %vm839, %v5502, %v5509
        %v5512 = vshrl.u32 %v5368, 16
        %v5514 = vrot.slane %v5512, 7
        %v5515 = vrot.slane %v5514, 4
        %v5517 = vshrl.u32 %v5369, 16
        %v5519 = vrot.slane %v5517, 7
        %v5520 = vshll.u32 %v5369, 16
        %v5522 = vor.u32 %v5519, %v5520
        %v5523 = vsel %vm839, %v5515, %v5522
        %v5524 = vrot.slane %v5519, 4
        %v5526 = vshrl.u32 %v5370, 16
        %v5528 = vrot.slane %v5526, 7
        %v5529 = vshll.u32 %v5370, 16
        %v5531 = vor.u32 %v5528, %v5529
        %v5532 = vsel %vm839, %v5524, %v5531
        %v5534 = vshrl.u32 %v5371, 16
        %v5536 = vrot.slane %v5534, 7
        %v5537 = vrot.slane %v5536, 4
        %v5539 = vshrl.u32 %v5372, 16
        %v5541 = vrot.slane %v5539, 7
        %v5542 = vshll.u32 %v5372, 16
        %v5544 = vor.u32 %v5541, %v5542
        %v5545 = vsel %vm839, %v5537, %v5544
        %v5546 = vrot.slane %v5541, 4
        %v5548 = vshrl.u32 %v5373, 16
        %v5550 = vrot.slane %v5548, 7
        %v5551 = vshll.u32 %v5373, 16
        %v5553 = vor.u32 %v5550, %v5551
        %v5554 = vsel %vm839, %v5546, %v5553
        %v5556 = vshrl.u32 %v5374, 16
        %v5558 = vrot.slane %v5556, 7
        %v5559 = vrot.slane %v5558, 4
        %v5561 = vshrl.u32 %v5375, 16
        %v5563 = vrot.slane %v5561, 7
        %v5564 = vshll.u32 %v5375, 16
        %v5566 = vor.u32 %v5563, %v5564
        %v5567 = vsel %vm839, %v5559, %v5566
        %v5568 = vrot.slane %v5563, 4
        %v5570 = vshrl.u32 %v5376, 16
        %v5572 = vrot.slane %v5570, 7
        %v5573 = vshll.u32 %v5376, 16
        %v5575 = vor.u32 %v5572, %v5573
        %v5576 = vsel %vm839, %v5568, %v5575
        %v5578 = vshrl.u32 %v5377, 16
        %v5580 = vrot.slane %v5578, 7
        %v5581 = vrot.slane %v5580, 4
        %v5583 = vshrl.u32 %v5378, 16
        %v5585 = vrot.slane %v5583, 7
        %v5586 = vshll.u32 %v5378, 16
        %v5588 = vor.u32 %v5585, %v5586
        %v5589 = vsel %vm839, %v5581, %v5588
        %v5590 = vrot.slane %v5585, 4
        %v5592 = vshrl.u32 %v5379, 16
        %v5594 = vrot.slane %v5592, 7
        %v5595 = vshll.u32 %v5379, 16
        %v5597 = vor.u32 %v5594, %v5595
        %v5598 = vsel %vm839, %v5590, %v5597
        %v5600 = vshrl.u32 %v5380, 16
        %v5602 = vrot.slane %v5600, 7
        %v5603 = vrot.slane %v5602, 4
        %v5605 = vshrl.u32 %v5381, 16
        %v5607 = vrot.slane %v5605, 7
        %v5608 = vshll.u32 %v5381, 16
        %v5610 = vor.u32 %v5607, %v5608
        %v5611 = vsel %vm839, %v5603, %v5610
        %v5612 = vrot.slane %v5607, 4
        %v5614 = vshrl.u32 %v5382, 16
        %v5616 = vrot.slane %v5614, 7
        %v5617 = vshll.u32 %v5382, 16
        %v5619 = vor.u32 %v5616, %v5617
        %v5620 = vsel %vm839, %v5612, %v5619
        %v5622 = vshrl.u32 %v5383, 16
        %v5624 = vrot.slane %v5622, 7
        %v5625 = vrot.slane %v5624, 4
        %v5627 = vshrl.u32 %v5384, 16
        %v5629 = vrot.slane %v5627, 7
        %v5630 = vshll.u32 %v5384, 16
        %v5632 = vor.u32 %v5629, %v5630
        %v5633 = vsel %vm839, %v5625, %v5632
        %v5634 = vrot.slane %v5629, 4
        %v5636 = vshrl.u32 %v5385, 16
        %v5638 = vrot.slane %v5636, 7
        %v5639 = vshll.u32 %v5385, 16
        %v5641 = vor.u32 %v5638, %v5639
        %v5642 = vsel %vm839, %v5634, %v5641
        %v5644 = vshrl.u32 %v5386, 16
        %v5646 = vrot.slane %v5644, 7
        %v5647 = vrot.slane %v5646, 4
        %v5649 = vshrl.u32 %v5387, 16
        %v5651 = vrot.slane %v5649, 7
        %v5652 = vshll.u32 %v5387, 16
        %v5654 = vor.u32 %v5651, %v5652
        %v5655 = vsel %vm839, %v5647, %v5654
        %v5656 = vrot.slane %v5651, 4
        %v5658 = vshrl.u32 %v5388, 16
        %v5660 = vrot.slane %v5658, 7
        %v5661 = vshll.u32 %v5388, 16
        %v5663 = vor.u32 %v5660, %v5661
        %v5664 = vsel %vm839, %v5656, %v5663
        %v5666 = vshrl.u32 %v5389, 16
        %v5668 = vrot.slane %v5666, 7
        %v5669 = vrot.slane %v5668, 4
        %v5671 = vshrl.u32 %v5390, 16
        %v5673 = vrot.slane %v5671, 7
        %v5674 = vshll.u32 %v5390, 16
        %v5676 = vor.u32 %v5673, %v5674
        %v5677 = vsel %vm839, %v5669, %v5676
        %v5678 = vrot.slane %v5673, 4
        %v5680 = vshrl.u32 %v5391, 16
        %v5682 = vrot.slane %v5680, 7
        %v5683 = vshll.u32 %v5391, 16
        %v5685 = vor.u32 %v5682, %v5683
        %v5686 = vsel %vm839, %v5678, %v5685
        %v5688 = vshrl.u32 %v5392, 16
        %v5690 = vrot.slane %v5688, 7
        %v5691 = vrot.slane %v5690, 4
        %v5693 = vshrl.u32 %v5393, 16
        %v5695 = vrot.slane %v5693, 7
        %v5696 = vshll.u32 %v5393, 16
        %v5698 = vor.u32 %v5695, %v5696
        %v5699 = vsel %vm839, %v5691, %v5698
        %v5700 = vrot.slane %v5695, 4
        %v5702 = vshrl.u32 %v5394, 16
        %v5704 = vrot.slane %v5702, 7
        %v5705 = vshll.u32 %v5394, 16
        %v5707 = vor.u32 %v5704, %v5705
        %v5708 = vsel %vm839, %v5700, %v5707
        %v5710 = vshrl.u32 %v5395, 16
        %v5712 = vrot.slane %v5710, 7
        %v5713 = vrot.slane %v5712, 4
        %v5715 = vshrl.u32 %v5396, 16
        %v5717 = vrot.slane %v5715, 7
        %v5718 = vshll.u32 %v5396, 16
        %v5720 = vor.u32 %v5717, %v5718
        %v5721 = vsel %vm839, %v5713, %v5720
        %v5722 = vrot.slane %v5717, 4
        %v5724 = vshrl.u32 %v5397, 16
        %v5726 = vrot.slane %v5724, 7
        %v5727 = vshll.u32 %v5397, 16
        %v5729 = vor.u32 %v5726, %v5727
        %v5730 = vsel %vm839, %v5722, %v5729
        %v5732 = vshrl.u32 %v5398, 16
        %v5734 = vrot.slane %v5732, 7
        %v5735 = vrot.slane %v5734, 4
        %v5737 = vshrl.u32 %v5399, 16
        %v5739 = vrot.slane %v5737, 7
        %v5740 = vshll.u32 %v5399, 16
        %v5742 = vor.u32 %v5739, %v5740
        %v5743 = vsel %vm839, %v5735, %v5742
        %v5744 = vrot.slane %v5739, 4
        %v5746 = vshrl.u32 %v5400, 16
        %v5748 = vrot.slane %v5746, 7
        %v5749 = vshll.u32 %v5400, 16
        %v5751 = vor.u32 %v5748, %v5749
        %v5752 = vsel %vm839, %v5744, %v5751
        %v5753 = vld [vmem:[#allocation2 + $0x10] sm:$0x1]
        %v5754 = vld [vmem:[#allocation2 + $0x24] sm:$0x1]
        %v5755 = vld [vmem:[#allocation2 + $0x38] sm:$0x1]
        %v5756 = vld [vmem:[#allocation2 + $0x4c] sm:$0x1]
        %v5757 = vld [vmem:[#allocation2 + $0x60] sm:$0x1]
        %v5758 = vld [vmem:[#allocation2 + $0x74] sm:$0x1]
        %v5759 = vld [vmem:[#allocation2 + $0x88] sm:$0x1]
        %v5760 = vld [vmem:[#allocation2 + $0x9c] sm:$0x1]
        %v5761 = vld [vmem:[#allocation2 + $0xb0] sm:$0x1]
        %v5762 = vld [vmem:[#allocation2 + $0xc4] sm:$0x1]
        %v5763 = vld [vmem:[#allocation2 + $0xd8] sm:$0x1]
        %v5764 = vld [vmem:[#allocation2 + $0xec] sm:$0x1]
        %v5765 = vld [vmem:[#allocation2 + $0x100] sm:$0x1]
        %v5766 = vld [vmem:[#allocation2 + $0x114] sm:$0x1]
        %v5767 = vld [vmem:[#allocation2 + $0x128] sm:$0x1]
        %v5768 = vld [vmem:[#allocation2 + $0x13c] sm:$0x1]
        %v5769 = vrot.slane %v5407, 4
        %v5770 = vrot.slane %v5410, 5
        %v5771 = vor.u32 %v5769, %v5770
        %v5772 = vrot.slane %v5771, 4
        %v5773 = vrot.slane %v5419, 5
        %v5774 = vsel %vm1210, %v5772, %v5773
        %v5775 = vrot.slane %v5416, 4
        %v5776 = vor.u32 %v5775, %v5773
        %v5777 = vrot.slane %v5776, 4
        %v5779 = vshll.u32 %v5753, 16
        %v5781 = vrot.slane %v5779, 5
        %v5782 = vsel %vm1210, %v5777, %v5781
        %v5783 = vrot.slane %v5429, 4
        %v5784 = vrot.slane %v5432, 5
        %v5785 = vor.u32 %v5783, %v5784
        %v5786 = vrot.slane %v5785, 4
        %v5787 = vrot.slane %v5441, 5
        %v5788 = vsel %vm1210, %v5786, %v5787
        %v5789 = vrot.slane %v5438, 4
        %v5790 = vor.u32 %v5789, %v5787
        %v5791 = vrot.slane %v5790, 4
        %v5793 = vshll.u32 %v5754, 16
        %v5795 = vrot.slane %v5793, 5
        %v5796 = vsel %vm1210, %v5791, %v5795
        %v5797 = vrot.slane %v5451, 4
        %v5798 = vrot.slane %v5454, 5
        %v5799 = vor.u32 %v5797, %v5798
        %v5800 = vrot.slane %v5799, 4
        %v5801 = vrot.slane %v5463, 5
        %v5802 = vsel %vm1210, %v5800, %v5801
        %v5803 = vrot.slane %v5460, 4
        %v5804 = vor.u32 %v5803, %v5801
        %v5805 = vrot.slane %v5804, 4
        %v5807 = vshll.u32 %v5755, 16
        %v5809 = vrot.slane %v5807, 5
        %v5810 = vsel %vm1210, %v5805, %v5809
        %v5811 = vrot.slane %v5473, 4
        %v5812 = vrot.slane %v5476, 5
        %v5813 = vor.u32 %v5811, %v5812
        %v5814 = vrot.slane %v5813, 4
        %v5815 = vrot.slane %v5485, 5
        %v5816 = vsel %vm1210, %v5814, %v5815
        %v5817 = vrot.slane %v5482, 4
        %v5818 = vor.u32 %v5817, %v5815
        %v5819 = vrot.slane %v5818, 4
        %v5821 = vshll.u32 %v5756, 16
        %v5823 = vrot.slane %v5821, 5
        %v5824 = vsel %vm1210, %v5819, %v5823
        %v5825 = vrot.slane %v5495, 4
        %v5826 = vrot.slane %v5498, 5
        %v5827 = vor.u32 %v5825, %v5826
        %v5828 = vrot.slane %v5827, 4
        %v5829 = vrot.slane %v5507, 5
        %v5830 = vsel %vm1210, %v5828, %v5829
        %v5831 = vrot.slane %v5504, 4
        %v5832 = vor.u32 %v5831, %v5829
        %v5833 = vrot.slane %v5832, 4
        %v5835 = vshll.u32 %v5757, 16
        %v5837 = vrot.slane %v5835, 5
        %v5838 = vsel %vm1210, %v5833, %v5837
        %v5839 = vrot.slane %v5517, 4
        %v5840 = vrot.slane %v5520, 5
        %v5841 = vor.u32 %v5839, %v5840
        %v5842 = vrot.slane %v5841, 4
        %v5843 = vrot.slane %v5529, 5
        %v5844 = vsel %vm1210, %v5842, %v5843
        %v5845 = vrot.slane %v5526, 4
        %v5846 = vor.u32 %v5845, %v5843
        %v5847 = vrot.slane %v5846, 4
        %v5849 = vshll.u32 %v5758, 16
        %v5851 = vrot.slane %v5849, 5
        %v5852 = vsel %vm1210, %v5847, %v5851
        %v5853 = vrot.slane %v5539, 4
        %v5854 = vrot.slane %v5542, 5
        %v5855 = vor.u32 %v5853, %v5854
        %v5856 = vrot.slane %v5855, 4
        %v5857 = vrot.slane %v5551, 5
        %v5858 = vsel %vm1210, %v5856, %v5857
        %v5859 = vrot.slane %v5548, 4
        %v5860 = vor.u32 %v5859, %v5857
        %v5861 = vrot.slane %v5860, 4
        %v5863 = vshll.u32 %v5759, 16
        %v5865 = vrot.slane %v5863, 5
        %v5866 = vsel %vm1210, %v5861, %v5865
        %v5867 = vrot.slane %v5561, 4
        %v5868 = vrot.slane %v5564, 5
        %v5869 = vor.u32 %v5867, %v5868
        %v5870 = vrot.slane %v5869, 4
        %v5871 = vrot.slane %v5573, 5
        %v5872 = vsel %vm1210, %v5870, %v5871
        %v5873 = vrot.slane %v5570, 4
        %v5874 = vor.u32 %v5873, %v5871
        %v5875 = vrot.slane %v5874, 4
        %v5877 = vshll.u32 %v5760, 16
        %v5879 = vrot.slane %v5877, 5
        %v5880 = vsel %vm1210, %v5875, %v5879
        %v5881 = vrot.slane %v5583, 4
        %v5882 = vrot.slane %v5586, 5
        %v5883 = vor.u32 %v5881, %v5882
        %v5884 = vrot.slane %v5883, 4
        %v5885 = vrot.slane %v5595, 5
        %v5886 = vsel %vm1210, %v5884, %v5885
        %v5887 = vrot.slane %v5592, 4
        %v5888 = vor.u32 %v5887, %v5885
        %v5889 = vrot.slane %v5888, 4
        %v5891 = vshll.u32 %v5761, 16
        %v5893 = vrot.slane %v5891, 5
        %v5894 = vsel %vm1210, %v5889, %v5893
        %v5895 = vrot.slane %v5605, 4
        %v5896 = vrot.slane %v5608, 5
        %v5897 = vor.u32 %v5895, %v5896
        %v5898 = vrot.slane %v5897, 4
        %v5899 = vrot.slane %v5617, 5
        %v5900 = vsel %vm1210, %v5898, %v5899
        %v5901 = vrot.slane %v5614, 4
        %v5902 = vor.u32 %v5901, %v5899
        %v5903 = vrot.slane %v5902, 4
        %v5905 = vshll.u32 %v5762, 16
        %v5907 = vrot.slane %v5905, 5
        %v5908 = vsel %vm1210, %v5903, %v5907
        %v5909 = vrot.slane %v5627, 4
        %v5910 = vrot.slane %v5630, 5
        %v5911 = vor.u32 %v5909, %v5910
        %v5912 = vrot.slane %v5911, 4
        %v5913 = vrot.slane %v5639, 5
        %v5914 = vsel %vm1210, %v5912, %v5913
        %v5915 = vrot.slane %v5636, 4
        %v5916 = vor.u32 %v5915, %v5913
        %v5917 = vrot.slane %v5916, 4
        %v5919 = vshll.u32 %v5763, 16
        %v5921 = vrot.slane %v5919, 5
        %v5922 = vsel %vm1210, %v5917, %v5921
        %v5923 = vrot.slane %v5649, 4
        %v5924 = vrot.slane %v5652, 5
        %v5925 = vor.u32 %v5923, %v5924
        %v5926 = vrot.slane %v5925, 4
        %v5927 = vrot.slane %v5661, 5
        %v5928 = vsel %vm1210, %v5926, %v5927
        %v5929 = vrot.slane %v5658, 4
        %v5930 = vor.u32 %v5929, %v5927
        %v5931 = vrot.slane %v5930, 4
        %v5933 = vshll.u32 %v5764, 16
        %v5935 = vrot.slane %v5933, 5
        %v5936 = vsel %vm1210, %v5931, %v5935
        %v5937 = vrot.slane %v5671, 4
        %v5938 = vrot.slane %v5674, 5
        %v5939 = vor.u32 %v5937, %v5938
        %v5940 = vrot.slane %v5939, 4
        %v5941 = vrot.slane %v5683, 5
        %v5942 = vsel %vm1210, %v5940, %v5941
        %v5943 = vrot.slane %v5680, 4
        %v5944 = vor.u32 %v5943, %v5941
        %v5945 = vrot.slane %v5944, 4
        %v5947 = vshll.u32 %v5765, 16
        %v5949 = vrot.slane %v5947, 5
        %v5950 = vsel %vm1210, %v5945, %v5949
        %v5951 = vrot.slane %v5693, 4
        %v5952 = vrot.slane %v5696, 5
        %v5953 = vor.u32 %v5951, %v5952
        %v5954 = vrot.slane %v5953, 4
        %v5955 = vrot.slane %v5705, 5
        %v5956 = vsel %vm1210, %v5954, %v5955
        %v5957 = vrot.slane %v5702, 4
        %v5958 = vor.u32 %v5957, %v5955
        %v5959 = vrot.slane %v5958, 4
        %v5961 = vshll.u32 %v5766, 16
        %v5963 = vrot.slane %v5961, 5
        %v5964 = vsel %vm1210, %v5959, %v5963
        %v5965 = vrot.slane %v5715, 4
        %v5966 = vrot.slane %v5718, 5
        %v5967 = vor.u32 %v5965, %v5966
        %v5968 = vrot.slane %v5967, 4
        %v5969 = vrot.slane %v5727, 5
        %v5970 = vsel %vm1210, %v5968, %v5969
        %v5971 = vrot.slane %v5724, 4
        %v5972 = vor.u32 %v5971, %v5969
        %v5973 = vrot.slane %v5972, 4
        %v5975 = vshll.u32 %v5767, 16
        %v5977 = vrot.slane %v5975, 5
        %v5978 = vsel %vm1210, %v5973, %v5977
        %v5979 = vrot.slane %v5737, 4
        %v5980 = vrot.slane %v5740, 5
        %v5981 = vor.u32 %v5979, %v5980
        %v5982 = vrot.slane %v5981, 4
        %v5983 = vrot.slane %v5749, 5
        %v5984 = vsel %vm1210, %v5982, %v5983
        %v5985 = vrot.slane %v5746, 4
        %v5986 = vor.u32 %v5985, %v5983
        %v5987 = vrot.slane %v5986, 4
        %v5989 = vshll.u32 %v5768, 16
        %v5991 = vrot.slane %v5989, 5
        %v5992 = vsel %vm1210, %v5987, %v5991
        %v5993 = vunpack.c.l.b16 %v5413
        %v5994 = vunpack.c.l.b16 %v5422
        %v5995 = vunpack.c.l.b16 %v5435
        %v5996 = vunpack.c.l.b16 %v5444
        %v5997 = vunpack.c.l.b16 %v5457
        %v5998 = vunpack.c.l.b16 %v5466
        %v5999 = vunpack.c.l.b16 %v5479
        %v6000 = vunpack.c.l.b16 %v5488
        %v6001 = vunpack.c.l.b16 %v5501
        %v6002 = vunpack.c.l.b16 %v5510
        %v6003 = vunpack.c.l.b16 %v5523
        %v6004 = vunpack.c.l.b16 %v5532
        %v6005 = vunpack.c.l.b16 %v5545
        %v6006 = vunpack.c.l.b16 %v5554
        %v6007 = vunpack.c.l.b16 %v5567
        %v6008 = vunpack.c.l.b16 %v5576
        %v6009 = vunpack.c.l.b16 %v5589
        %v6010 = vunpack.c.l.b16 %v5598
        %v6011 = vunpack.c.l.b16 %v5611
        %v6012 = vunpack.c.l.b16 %v5620
        %v6013 = vunpack.c.l.b16 %v5633
        %v6014 = vunpack.c.l.b16 %v5642
        %v6015 = vunpack.c.l.b16 %v5655
        %v6016 = vunpack.c.l.b16 %v5664
        %v6017 = vunpack.c.l.b16 %v5677
        %v6018 = vunpack.c.l.b16 %v5686
        %v6019 = vunpack.c.l.b16 %v5699
        %v6020 = vunpack.c.l.b16 %v5708
        %v6021 = vunpack.c.l.b16 %v5721
        %v6022 = vunpack.c.l.b16 %v5730
        %v6023 = vunpack.c.l.b16 %v5743
        %v6024 = vunpack.c.l.b16 %v5752
        %v6025 = vpack.c.b16 %v5994, %v5993
        %v6026 = vpack.c.b16 %v5996, %v5995
        %v6027 = vpack.c.b16 %v5998, %v5997
        %v6028 = vpack.c.b16 %v6000, %v5999
        %v6029 = vpack.c.b16 %v6002, %v6001
        %v6030 = vpack.c.b16 %v6004, %v6003
        %v6031 = vpack.c.b16 %v6006, %v6005
        %v6032 = vpack.c.b16 %v6008, %v6007
        %v6033 = vpack.c.b16 %v6010, %v6009
        %v6034 = vpack.c.b16 %v6012, %v6011
        %v6035 = vpack.c.b16 %v6014, %v6013
        %v6036 = vpack.c.b16 %v6016, %v6015
        %v6037 = vpack.c.b16 %v6018, %v6017
        %v6038 = vpack.c.b16 %v6020, %v6019
        %v6039 = vpack.c.b16 %v6022, %v6021
        %v6040 = vpack.c.b16 %v6024, %v6023
        %v6089 = vunpack.c.l.b16 %v5354
        %v6090 = vunpack.c.l.b16 %v5355
        %v6091 = vunpack.c.l.b16 %v5357
        %v6092 = vunpack.c.l.b16 %v5358
        %v6093 = vunpack.c.l.b16 %v5360
        %v6094 = vunpack.c.l.b16 %v5361
        %v6095 = vunpack.c.l.b16 %v5363
        %v6096 = vunpack.c.l.b16 %v5364
        %v6097 = vunpack.c.l.b16 %v5366
        %v6098 = vunpack.c.l.b16 %v5367
        %v6099 = vunpack.c.l.b16 %v5369
        %v6100 = vunpack.c.l.b16 %v5370
        %v6101 = vunpack.c.l.b16 %v5372
        %v6102 = vunpack.c.l.b16 %v5373
        %v6103 = vunpack.c.l.b16 %v5375
        %v6104 = vunpack.c.l.b16 %v5376
        %v6105 = vunpack.c.l.b16 %v5378
        %v6106 = vunpack.c.l.b16 %v5379
        %v6107 = vunpack.c.l.b16 %v5381
        %v6108 = vunpack.c.l.b16 %v5382
        %v6109 = vunpack.c.l.b16 %v5384
        %v6110 = vunpack.c.l.b16 %v5385
        %v6111 = vunpack.c.l.b16 %v5387
        %v6112 = vunpack.c.l.b16 %v5388
        %v6113 = vunpack.c.l.b16 %v5390
        %v6114 = vunpack.c.l.b16 %v5391
        %v6115 = vunpack.c.l.b16 %v5393
        %v6116 = vunpack.c.l.b16 %v5394
        %v6117 = vunpack.c.l.b16 %v5396
        %v6118 = vunpack.c.l.b16 %v5397
        %v6119 = vunpack.c.l.b16 %v5399
        %v6120 = vunpack.c.l.b16 %v5400
        %v6121 = vpack.c.b16 %v6090, %v6089
        %v6122 = vpack.c.b16 %v6092, %v6091
        %v6123 = vpack.c.b16 %v6094, %v6093
        %v6124 = vpack.c.b16 %v6096, %v6095
        %v6125 = vpack.c.b16 %v6098, %v6097
        %v6126 = vpack.c.b16 %v6100, %v6099
        %v6127 = vpack.c.b16 %v6102, %v6101
        %v6128 = vpack.c.b16 %v6104, %v6103
        %v6129 = vpack.c.b16 %v6106, %v6105
        %v6130 = vpack.c.b16 %v6108, %v6107
        %v6131 = vpack.c.b16 %v6110, %v6109
        %v6132 = vpack.c.b16 %v6112, %v6111
        %v6133 = vpack.c.b16 %v6114, %v6113
        %v6134 = vpack.c.b16 %v6116, %v6115
        %v6135 = vpack.c.b16 %v6118, %v6117
        %v6136 = vpack.c.b16 %v6120, %v6119
        %v6153 = vunpack.c.l.b16 %v5774
        %v6154 = vunpack.c.l.b16 %v5782
        %v6155 = vunpack.c.l.b16 %v5788
        %v6156 = vunpack.c.l.b16 %v5796
        %v6157 = vunpack.c.l.b16 %v5802
        %v6158 = vunpack.c.l.b16 %v5810
        %v6159 = vunpack.c.l.b16 %v5816
        %v6160 = vunpack.c.l.b16 %v5824
        %v6161 = vunpack.c.l.b16 %v5830
        %v6162 = vunpack.c.l.b16 %v5838
        %v6163 = vunpack.c.l.b16 %v5844
        %v6164 = vunpack.c.l.b16 %v5852
        %v6165 = vunpack.c.l.b16 %v5858
        %v6166 = vunpack.c.l.b16 %v5866
        %v6167 = vunpack.c.l.b16 %v5872
        %v6168 = vunpack.c.l.b16 %v5880
        %v6169 = vunpack.c.l.b16 %v5886
        %v6170 = vunpack.c.l.b16 %v5894
        %v6171 = vunpack.c.l.b16 %v5900
        %v6172 = vunpack.c.l.b16 %v5908
        %v6173 = vunpack.c.l.b16 %v5914
        %v6174 = vunpack.c.l.b16 %v5922
        %v6175 = vunpack.c.l.b16 %v5928
        %v6176 = vunpack.c.l.b16 %v5936
        %v6177 = vunpack.c.l.b16 %v5942
        %v6178 = vunpack.c.l.b16 %v5950
        %v6179 = vunpack.c.l.b16 %v5956
        %v6180 = vunpack.c.l.b16 %v5964
        %v6181 = vunpack.c.l.b16 %v5970
        %v6182 = vunpack.c.l.b16 %v5978
        %v6183 = vunpack.c.l.b16 %v5984
        %v6184 = vunpack.c.l.b16 %v5992
        %v6185 = vpack.c.b16 %v6154, %v6153
        %v6186 = vpack.c.b16 %v6156, %v6155
        %v6187 = vpack.c.b16 %v6158, %v6157
        %v6188 = vpack.c.b16 %v6160, %v6159
        %v6189 = vpack.c.b16 %v6162, %v6161
        %v6190 = vpack.c.b16 %v6164, %v6163
        %v6191 = vpack.c.b16 %v6166, %v6165
        %v6192 = vpack.c.b16 %v6168, %v6167
        %v6193 = vpack.c.b16 %v6170, %v6169
        %v6194 = vpack.c.b16 %v6172, %v6171
        %v6195 = vpack.c.b16 %v6174, %v6173
        %v6196 = vpack.c.b16 %v6176, %v6175
        %v6197 = vpack.c.b16 %v6178, %v6177
        %v6198 = vpack.c.b16 %v6180, %v6179
        %v6199 = vpack.c.b16 %v6182, %v6181
        %v6200 = vpack.c.b16 %v6184, %v6183
        %v6217 = vld [vmem:[#allocation8] sm:$0xf]
        %v6218 = vld [vmem:[#allocation8 + $0x4] sm:$0xf]
        %v6219 = vld [vmem:[#allocation8 + $0x8] sm:$0xf]
        %v6220 = vld [vmem:[#allocation8 + $0xc] sm:$0xf]
        %v6221 = vld [vmem:[#allocation8 + $0x10] sm:$0xf]
        %v6222 = vld [vmem:[#allocation8 + $0x14] sm:$0xf]
        %v6223 = vld [vmem:[#allocation8 + $0x18] sm:$0xf]
        %v6224 = vld [vmem:[#allocation8 + $0x1c] sm:$0xf]
        %v6225 = vld [vmem:[#allocation8 + $0x20] sm:$0xf]
        %v6226 = vld [vmem:[#allocation8 + $0x24] sm:$0xf]
        %v6227 = vld [vmem:[#allocation8 + $0x28] sm:$0xf]
        %v6228 = vld [vmem:[#allocation8 + $0x2c] sm:$0xf]
        %v6229 = vld [vmem:[#allocation8 + $0x30] sm:$0xf]
        %v6230 = vld [vmem:[#allocation8 + $0x34] sm:$0xf]
        %v6231 = vld [vmem:[#allocation8 + $0x38] sm:$0xf]
        %v6232 = vld [vmem:[#allocation8 + $0x3c] sm:$0xf]
        %v6233 = vld [vmem:[#allocation8 + $0x40] sm:$0xf]
        %v6234 = vld [vmem:[#allocation8 + $0x44] sm:$0xf]
        %v6235 = vld [vmem:[#allocation8 + $0x48] sm:$0xf]
        %v6236 = vld [vmem:[#allocation8 + $0x4c] sm:$0xf]
        %v6237 = vld [vmem:[#allocation8 + $0x50] sm:$0xf]
        %v6238 = vld [vmem:[#allocation8 + $0x54] sm:$0xf]
        %v6239 = vld [vmem:[#allocation8 + $0x58] sm:$0xf]
        %v6240 = vld [vmem:[#allocation8 + $0x5c] sm:$0xf]
        %v6241 = vld [vmem:[#allocation8 + $0x60] sm:$0xf]
        %v6242 = vld [vmem:[#allocation8 + $0x64] sm:$0xf]
        %v6243 = vld [vmem:[#allocation8 + $0x68] sm:$0xf]
        %v6244 = vld [vmem:[#allocation8 + $0x6c] sm:$0xf]
        %v6245 = vld [vmem:[#allocation8 + $0x70] sm:$0xf]
        %v6246 = vld [vmem:[#allocation8 + $0x74] sm:$0xf]
        %v6247 = vld [vmem:[#allocation8 + $0x78] sm:$0xf]
        %v6248 = vld [vmem:[#allocation8 + $0x7c] sm:$0xf]
        %v6249 = vld [vmem:[#allocation8 + $0x80] sm:$0xf]
        %v6250 = vld [vmem:[#allocation8 + $0x84] sm:$0xf]
        %v6251 = vld [vmem:[#allocation8 + $0x88] sm:$0xf]
        %v6252 = vld [vmem:[#allocation8 + $0x8c] sm:$0xf]
        %v6253 = vld [vmem:[#allocation8 + $0x90] sm:$0xf]
        %v6254 = vld [vmem:[#allocation8 + $0x94] sm:$0xf]
        %v6255 = vld [vmem:[#allocation8 + $0x98] sm:$0xf]
        %v6256 = vld [vmem:[#allocation8 + $0x9c] sm:$0xf]
        %v6257 = vld [vmem:[#allocation8 + $0xa0] sm:$0xf]
        %v6258 = vld [vmem:[#allocation8 + $0xa4] sm:$0xf]
        %v6259 = vld [vmem:[#allocation8 + $0xa8] sm:$0xf]
        %v6260 = vld [vmem:[#allocation8 + $0xac] sm:$0xf]
        %v6261 = vld [vmem:[#allocation8 + $0xb0] sm:$0xf]
        %v6262 = vld [vmem:[#allocation8 + $0xb4] sm:$0xf]
        %v6263 = vld [vmem:[#allocation8 + $0xb8] sm:$0xf]
        %v6264 = vld [vmem:[#allocation8 + $0xbc] sm:$0xf]
        %v6265 = vld [vmem:[%s756 + $0x4] sm:$0x8]
        %v6266 = vld [vmem:[%s756 + $0x8] sm:$0xf]
        %v6267 = vld [vmem:[%s756 + $0xc] sm:$0xf]
        %v6268 = vld [vmem:[%s756 + $0x18] sm:$0x8]
        %v6269 = vld [vmem:[%s756 + $0x1c] sm:$0xf]
        %v6270 = vld [vmem:[%s756 + $0x20] sm:$0xf]
        %v6271 = vld [vmem:[%s756 + $0x2c] sm:$0x8]
        %v6272 = vld [vmem:[%s756 + $0x30] sm:$0xf]
        %v6273 = vld [vmem:[%s756 + $0x34] sm:$0xf]
        %v6274 = vld [vmem:[%s756 + $0x40] sm:$0x8]
        %v6275 = vld [vmem:[%s756 + $0x44] sm:$0xf]
        %v6276 = vld [vmem:[%s756 + $0x48] sm:$0xf]
        %v6277 = vld [vmem:[%s756 + $0x54] sm:$0x8]
        %v6278 = vld [vmem:[%s756 + $0x58] sm:$0xf]
        %v6279 = vld [vmem:[%s756 + $0x5c] sm:$0xf]
        %v6280 = vld [vmem:[%s756 + $0x68] sm:$0x8]
        %v6281 = vld [vmem:[%s756 + $0x6c] sm:$0xf]
        %v6282 = vld [vmem:[%s756 + $0x70] sm:$0xf]
        %v6283 = vld [vmem:[%s756 + $0x7c] sm:$0x8]
        %v6284 = vld [vmem:[%s756 + $0x80] sm:$0xf]
        %v6285 = vld [vmem:[%s756 + $0x84] sm:$0xf]
        %v6286 = vld [vmem:[%s756 + $0x90] sm:$0x8]
        %v6287 = vld [vmem:[%s756 + $0x94] sm:$0xf]
        %v6288 = vld [vmem:[%s756 + $0x98] sm:$0xf]
        %v6289 = vld [vmem:[%s756 + $0xa4] sm:$0x8]
        %v6290 = vld [vmem:[%s756 + $0xa8] sm:$0xf]
        %v6291 = vld [vmem:[%s756 + $0xac] sm:$0xf]
        %v6292 = vld [vmem:[%s756 + $0xb8] sm:$0x8]
        %v6293 = vld [vmem:[%s756 + $0xbc] sm:$0xf]
        %v6294 = vld [vmem:[%s756 + $0xc0] sm:$0xf]
        %v6295 = vld [vmem:[%s756 + $0xcc] sm:$0x8]
        %v6296 = vld [vmem:[%s756 + $0xd0] sm:$0xf]
        %v6297 = vld [vmem:[%s756 + $0xd4] sm:$0xf]
        %v6298 = vld [vmem:[%s756 + $0xe0] sm:$0x8]
        %v6299 = vld [vmem:[%s756 + $0xe4] sm:$0xf]
        %v6300 = vld [vmem:[%s756 + $0xe8] sm:$0xf]
        %v6301 = vld [vmem:[%s756 + $0xf4] sm:$0x8]
        %v6302 = vld [vmem:[%s756 + $0xf8] sm:$0xf]
        %v6303 = vld [vmem:[%s756 + $0xfc] sm:$0xf]
        %v6304 = vld [vmem:[%s756 + $0x108] sm:$0x8]
        %v6305 = vld [vmem:[%s756 + $0x10c] sm:$0xf]
        %v6306 = vld [vmem:[%s756 + $0x110] sm:$0xf]
        %v6307 = vld [vmem:[%s756 + $0x11c] sm:$0x8]
        %v6308 = vld [vmem:[%s756 + $0x120] sm:$0xf]
        %v6309 = vld [vmem:[%s756 + $0x124] sm:$0xf]
        %v6310 = vld [vmem:[%s756 + $0x130] sm:$0x8]
        %v6311 = vld [vmem:[%s756 + $0x134] sm:$0xf]
        %v6312 = vld [vmem:[%s756 + $0x138] sm:$0xf]
        %v6314 = vshrl.u32 %v6265, 16
        %v6316 = vrot.slane %v6314, 7
        %v6317 = vrot.slane %v6316, 4
        %v6319 = vshrl.u32 %v6266, 16
        %v6321 = vrot.slane %v6319, 7
        %v6322 = vshll.u32 %v6266, 16
        %v6324 = vor.u32 %v6321, %v6322
        %v6325 = vsel %vm839, %v6317, %v6324
        %v6326 = vrot.slane %v6321, 4
        %v6328 = vshrl.u32 %v6267, 16
        %v6330 = vrot.slane %v6328, 7
        %v6331 = vshll.u32 %v6267, 16
        %v6333 = vor.u32 %v6330, %v6331
        %v6334 = vsel %vm839, %v6326, %v6333
        %v6336 = vshrl.u32 %v6268, 16
        %v6338 = vrot.slane %v6336, 7
        %v6339 = vrot.slane %v6338, 4
        %v6341 = vshrl.u32 %v6269, 16
        %v6343 = vrot.slane %v6341, 7
        %v6344 = vshll.u32 %v6269, 16
        %v6346 = vor.u32 %v6343, %v6344
        %v6347 = vsel %vm839, %v6339, %v6346
        %v6348 = vrot.slane %v6343, 4
        %v6350 = vshrl.u32 %v6270, 16
        %v6352 = vrot.slane %v6350, 7
        %v6353 = vshll.u32 %v6270, 16
        %v6355 = vor.u32 %v6352, %v6353
        %v6356 = vsel %vm839, %v6348, %v6355
        %v6358 = vshrl.u32 %v6271, 16
        %v6360 = vrot.slane %v6358, 7
        %v6361 = vrot.slane %v6360, 4
        %v6363 = vshrl.u32 %v6272, 16
        %v6365 = vrot.slane %v6363, 7
        %v6366 = vshll.u32 %v6272, 16
        %v6368 = vor.u32 %v6365, %v6366
        %v6369 = vsel %vm839, %v6361, %v6368
        %v6370 = vrot.slane %v6365, 4
        %v6372 = vshrl.u32 %v6273, 16
        %v6374 = vrot.slane %v6372, 7
        %v6375 = vshll.u32 %v6273, 16
        %v6377 = vor.u32 %v6374, %v6375
        %v6378 = vsel %vm839, %v6370, %v6377
        %v6380 = vshrl.u32 %v6274, 16
        %v6382 = vrot.slane %v6380, 7
        %v6383 = vrot.slane %v6382, 4
        %v6385 = vshrl.u32 %v6275, 16
        %v6387 = vrot.slane %v6385, 7
        %v6388 = vshll.u32 %v6275, 16
        %v6390 = vor.u32 %v6387, %v6388
        %v6391 = vsel %vm839, %v6383, %v6390
        %v6392 = vrot.slane %v6387, 4
        %v6394 = vshrl.u32 %v6276, 16
        %v6396 = vrot.slane %v6394, 7
        %v6397 = vshll.u32 %v6276, 16
        %v6399 = vor.u32 %v6396, %v6397
        %v6400 = vsel %vm839, %v6392, %v6399
        %v6402 = vshrl.u32 %v6277, 16
        %v6404 = vrot.slane %v6402, 7
        %v6405 = vrot.slane %v6404, 4
        %v6407 = vshrl.u32 %v6278, 16
        %v6409 = vrot.slane %v6407, 7
        %v6410 = vshll.u32 %v6278, 16
        %v6412 = vor.u32 %v6409, %v6410
        %v6413 = vsel %vm839, %v6405, %v6412
        %v6414 = vrot.slane %v6409, 4
        %v6416 = vshrl.u32 %v6279, 16
        %v6418 = vrot.slane %v6416, 7
        %v6419 = vshll.u32 %v6279, 16
        %v6421 = vor.u32 %v6418, %v6419
        %v6422 = vsel %vm839, %v6414, %v6421
        %v6424 = vshrl.u32 %v6280, 16
        %v6426 = vrot.slane %v6424, 7
        %v6427 = vrot.slane %v6426, 4
        %v6429 = vshrl.u32 %v6281, 16
        %v6431 = vrot.slane %v6429, 7
        %v6432 = vshll.u32 %v6281, 16
        %v6434 = vor.u32 %v6431, %v6432
        %v6435 = vsel %vm839, %v6427, %v6434
        %v6436 = vrot.slane %v6431, 4
        %v6438 = vshrl.u32 %v6282, 16
        %v6440 = vrot.slane %v6438, 7
        %v6441 = vshll.u32 %v6282, 16
        %v6443 = vor.u32 %v6440, %v6441
        %v6444 = vsel %vm839, %v6436, %v6443
        %v6446 = vshrl.u32 %v6283, 16
        %v6448 = vrot.slane %v6446, 7
        %v6449 = vrot.slane %v6448, 4
        %v6451 = vshrl.u32 %v6284, 16
        %v6453 = vrot.slane %v6451, 7
        %v6454 = vshll.u32 %v6284, 16
        %v6456 = vor.u32 %v6453, %v6454
        %v6457 = vsel %vm839, %v6449, %v6456
        %v6458 = vrot.slane %v6453, 4
        %v6460 = vshrl.u32 %v6285, 16
        %v6462 = vrot.slane %v6460, 7
        %v6463 = vshll.u32 %v6285, 16
        %v6465 = vor.u32 %v6462, %v6463
        %v6466 = vsel %vm839, %v6458, %v6465
        %v6468 = vshrl.u32 %v6286, 16
        %v6470 = vrot.slane %v6468, 7
        %v6471 = vrot.slane %v6470, 4
        %v6473 = vshrl.u32 %v6287, 16
        %v6475 = vrot.slane %v6473, 7
        %v6476 = vshll.u32 %v6287, 16
        %v6478 = vor.u32 %v6475, %v6476
        %v6479 = vsel %vm839, %v6471, %v6478
        %v6480 = vrot.slane %v6475, 4
        %v6482 = vshrl.u32 %v6288, 16
        %v6484 = vrot.slane %v6482, 7
        %v6485 = vshll.u32 %v6288, 16
        %v6487 = vor.u32 %v6484, %v6485
        %v6488 = vsel %vm839, %v6480, %v6487
        %v6490 = vshrl.u32 %v6289, 16
        %v6492 = vrot.slane %v6490, 7
        %v6493 = vrot.slane %v6492, 4
        %v6495 = vshrl.u32 %v6290, 16
        %v6497 = vrot.slane %v6495, 7
        %v6498 = vshll.u32 %v6290, 16
        %v6500 = vor.u32 %v6497, %v6498
        %v6501 = vsel %vm839, %v6493, %v6500
        %v6502 = vrot.slane %v6497, 4
        %v6504 = vshrl.u32 %v6291, 16
        %v6506 = vrot.slane %v6504, 7
        %v6507 = vshll.u32 %v6291, 16
        %v6509 = vor.u32 %v6506, %v6507
        %v6510 = vsel %vm839, %v6502, %v6509
        %v6512 = vshrl.u32 %v6292, 16
        %v6514 = vrot.slane %v6512, 7
        %v6515 = vrot.slane %v6514, 4
        %v6517 = vshrl.u32 %v6293, 16
        %v6519 = vrot.slane %v6517, 7
        %v6520 = vshll.u32 %v6293, 16
        %v6522 = vor.u32 %v6519, %v6520
        %v6523 = vsel %vm839, %v6515, %v6522
        %v6524 = vrot.slane %v6519, 4
        %v6526 = vshrl.u32 %v6294, 16
        %v6528 = vrot.slane %v6526, 7
        %v6529 = vshll.u32 %v6294, 16
        %v6531 = vor.u32 %v6528, %v6529
        %v6532 = vsel %vm839, %v6524, %v6531
        %v6534 = vshrl.u32 %v6295, 16
        %v6536 = vrot.slane %v6534, 7
        %v6537 = vrot.slane %v6536, 4
        %v6539 = vshrl.u32 %v6296, 16
        %v6541 = vrot.slane %v6539, 7
        %v6542 = vshll.u32 %v6296, 16
        %v6544 = vor.u32 %v6541, %v6542
        %v6545 = vsel %vm839, %v6537, %v6544
        %v6546 = vrot.slane %v6541, 4
        %v6548 = vshrl.u32 %v6297, 16
        %v6550 = vrot.slane %v6548, 7
        %v6551 = vshll.u32 %v6297, 16
        %v6553 = vor.u32 %v6550, %v6551
        %v6554 = vsel %vm839, %v6546, %v6553
        %v6556 = vshrl.u32 %v6298, 16
        %v6558 = vrot.slane %v6556, 7
        %v6559 = vrot.slane %v6558, 4
        %v6561 = vshrl.u32 %v6299, 16
        %v6563 = vrot.slane %v6561, 7
        %v6564 = vshll.u32 %v6299, 16
        %v6566 = vor.u32 %v6563, %v6564
        %v6567 = vsel %vm839, %v6559, %v6566
        %v6568 = vrot.slane %v6563, 4
        %v6570 = vshrl.u32 %v6300, 16
        %v6572 = vrot.slane %v6570, 7
        %v6573 = vshll.u32 %v6300, 16
        %v6575 = vor.u32 %v6572, %v6573
        %v6576 = vsel %vm839, %v6568, %v6575
        %v6578 = vshrl.u32 %v6301, 16
        %v6580 = vrot.slane %v6578, 7
        %v6581 = vrot.slane %v6580, 4
        %v6583 = vshrl.u32 %v6302, 16
        %v6585 = vrot.slane %v6583, 7
        %v6586 = vshll.u32 %v6302, 16
        %v6588 = vor.u32 %v6585, %v6586
        %v6589 = vsel %vm839, %v6581, %v6588
        %v6590 = vrot.slane %v6585, 4
        %v6592 = vshrl.u32 %v6303, 16
        %v6594 = vrot.slane %v6592, 7
        %v6595 = vshll.u32 %v6303, 16
        %v6597 = vor.u32 %v6594, %v6595
        %v6598 = vsel %vm839, %v6590, %v6597
        %v6600 = vshrl.u32 %v6304, 16
        %v6602 = vrot.slane %v6600, 7
        %v6603 = vrot.slane %v6602, 4
        %v6605 = vshrl.u32 %v6305, 16
        %v6607 = vrot.slane %v6605, 7
        %v6608 = vshll.u32 %v6305, 16
        %v6610 = vor.u32 %v6607, %v6608
        %v6611 = vsel %vm839, %v6603, %v6610
        %v6612 = vrot.slane %v6607, 4
        %v6614 = vshrl.u32 %v6306, 16
        %v6616 = vrot.slane %v6614, 7
        %v6617 = vshll.u32 %v6306, 16
        %v6619 = vor.u32 %v6616, %v6617
        %v6620 = vsel %vm839, %v6612, %v6619
        %v6622 = vshrl.u32 %v6307, 16
        %v6624 = vrot.slane %v6622, 7
        %v6625 = vrot.slane %v6624, 4
        %v6627 = vshrl.u32 %v6308, 16
        %v6629 = vrot.slane %v6627, 7
        %v6630 = vshll.u32 %v6308, 16
        %v6632 = vor.u32 %v6629, %v6630
        %v6633 = vsel %vm839, %v6625, %v6632
        %v6634 = vrot.slane %v6629, 4
        %v6636 = vshrl.u32 %v6309, 16
        %v6638 = vrot.slane %v6636, 7
        %v6639 = vshll.u32 %v6309, 16
        %v6641 = vor.u32 %v6638, %v6639
        %v6642 = vsel %vm839, %v6634, %v6641
        %v6644 = vshrl.u32 %v6310, 16
        %v6646 = vrot.slane %v6644, 7
        %v6647 = vrot.slane %v6646, 4
        %v6649 = vshrl.u32 %v6311, 16
        %v6651 = vrot.slane %v6649, 7
        %v6652 = vshll.u32 %v6311, 16
        %v6654 = vor.u32 %v6651, %v6652
        %v6655 = vsel %vm839, %v6647, %v6654
        %v6656 = vrot.slane %v6651, 4
        %v6658 = vshrl.u32 %v6312, 16
        %v6660 = vrot.slane %v6658, 7
        %v6661 = vshll.u32 %v6312, 16
        %v6663 = vor.u32 %v6660, %v6661
        %v6664 = vsel %vm839, %v6656, %v6663
        %v6665 = vld [vmem:[%s756 + $0x10] sm:$0x1]
        %v6666 = vld [vmem:[%s756 + $0x24] sm:$0x1]
        %v6667 = vld [vmem:[%s756 + $0x38] sm:$0x1]
        %v6668 = vld [vmem:[%s756 + $0x4c] sm:$0x1]
        %v6669 = vld [vmem:[%s756 + $0x60] sm:$0x1]
        %v6670 = vld [vmem:[%s756 + $0x74] sm:$0x1]
        %v6671 = vld [vmem:[%s756 + $0x88] sm:$0x1]
        %v6672 = vld [vmem:[%s756 + $0x9c] sm:$0x1]
        %v6673 = vld [vmem:[%s756 + $0xb0] sm:$0x1]
        %v6674 = vld [vmem:[%s756 + $0xc4] sm:$0x1]
        %v6675 = vld [vmem:[%s756 + $0xd8] sm:$0x1]
        %v6676 = vld [vmem:[%s756 + $0xec] sm:$0x1]
        %v6677 = vld [vmem:[%s756 + $0x100] sm:$0x1]
        %v6678 = vld [vmem:[%s756 + $0x114] sm:$0x1]
        %v6679 = vld [vmem:[%s756 + $0x128] sm:$0x1]
        %v6680 = vld [vmem:[%s756 + $0x13c] sm:$0x1]
        %v6681 = vrot.slane %v6319, 4
        %v6682 = vrot.slane %v6322, 5
        %v6683 = vor.u32 %v6681, %v6682
        %v6684 = vrot.slane %v6683, 4
        %v6685 = vrot.slane %v6331, 5
        %v6686 = vsel %vm1210, %v6684, %v6685
        %v6687 = vrot.slane %v6328, 4
        %v6688 = vor.u32 %v6687, %v6685
        %v6689 = vrot.slane %v6688, 4
        %v6691 = vshll.u32 %v6665, 16
        %v6693 = vrot.slane %v6691, 5
        %v6694 = vsel %vm1210, %v6689, %v6693
        %v6695 = vrot.slane %v6341, 4
        %v6696 = vrot.slane %v6344, 5
        %v6697 = vor.u32 %v6695, %v6696
        %v6698 = vrot.slane %v6697, 4
        %v6699 = vrot.slane %v6353, 5
        %v6700 = vsel %vm1210, %v6698, %v6699
        %v6701 = vrot.slane %v6350, 4
        %v6702 = vor.u32 %v6701, %v6699
        %v6703 = vrot.slane %v6702, 4
        %v6705 = vshll.u32 %v6666, 16
        %v6707 = vrot.slane %v6705, 5
        %v6708 = vsel %vm1210, %v6703, %v6707
        %v6709 = vrot.slane %v6363, 4
        %v6710 = vrot.slane %v6366, 5
        %v6711 = vor.u32 %v6709, %v6710
        %v6712 = vrot.slane %v6711, 4
        %v6713 = vrot.slane %v6375, 5
        %v6714 = vsel %vm1210, %v6712, %v6713
        %v6715 = vrot.slane %v6372, 4
        %v6716 = vor.u32 %v6715, %v6713
        %v6717 = vrot.slane %v6716, 4
        %v6719 = vshll.u32 %v6667, 16
        %v6721 = vrot.slane %v6719, 5
        %v6722 = vsel %vm1210, %v6717, %v6721
        %v6723 = vrot.slane %v6385, 4
        %v6724 = vrot.slane %v6388, 5
        %v6725 = vor.u32 %v6723, %v6724
        %v6726 = vrot.slane %v6725, 4
        %v6727 = vrot.slane %v6397, 5
        %v6728 = vsel %vm1210, %v6726, %v6727
        %v6729 = vrot.slane %v6394, 4
        %v6730 = vor.u32 %v6729, %v6727
        %v6731 = vrot.slane %v6730, 4
        %v6733 = vshll.u32 %v6668, 16
        %v6735 = vrot.slane %v6733, 5
        %v6736 = vsel %vm1210, %v6731, %v6735
        %v6737 = vrot.slane %v6407, 4
        %v6738 = vrot.slane %v6410, 5
        %v6739 = vor.u32 %v6737, %v6738
        %v6740 = vrot.slane %v6739, 4
        %v6741 = vrot.slane %v6419, 5
        %v6742 = vsel %vm1210, %v6740, %v6741
        %v6743 = vrot.slane %v6416, 4
        %v6744 = vor.u32 %v6743, %v6741
        %v6745 = vrot.slane %v6744, 4
        %v6747 = vshll.u32 %v6669, 16
        %v6749 = vrot.slane %v6747, 5
        %v6750 = vsel %vm1210, %v6745, %v6749
        %v6751 = vrot.slane %v6429, 4
        %v6752 = vrot.slane %v6432, 5
        %v6753 = vor.u32 %v6751, %v6752
        %v6754 = vrot.slane %v6753, 4
        %v6755 = vrot.slane %v6441, 5
        %v6756 = vsel %vm1210, %v6754, %v6755
        %v6757 = vrot.slane %v6438, 4
        %v6758 = vor.u32 %v6757, %v6755
        %v6759 = vrot.slane %v6758, 4
        %v6761 = vshll.u32 %v6670, 16
        %v6763 = vrot.slane %v6761, 5
        %v6764 = vsel %vm1210, %v6759, %v6763
        %v6765 = vrot.slane %v6451, 4
        %v6766 = vrot.slane %v6454, 5
        %v6767 = vor.u32 %v6765, %v6766
        %v6768 = vrot.slane %v6767, 4
        %v6769 = vrot.slane %v6463, 5
        %v6770 = vsel %vm1210, %v6768, %v6769
        %v6771 = vrot.slane %v6460, 4
        %v6772 = vor.u32 %v6771, %v6769
        %v6773 = vrot.slane %v6772, 4
        %v6775 = vshll.u32 %v6671, 16
        %v6777 = vrot.slane %v6775, 5
        %v6778 = vsel %vm1210, %v6773, %v6777
        %v6779 = vrot.slane %v6473, 4
        %v6780 = vrot.slane %v6476, 5
        %v6781 = vor.u32 %v6779, %v6780
        %v6782 = vrot.slane %v6781, 4
        %v6783 = vrot.slane %v6485, 5
        %v6784 = vsel %vm1210, %v6782, %v6783
        %v6785 = vrot.slane %v6482, 4
        %v6786 = vor.u32 %v6785, %v6783
        %v6787 = vrot.slane %v6786, 4
        %v6789 = vshll.u32 %v6672, 16
        %v6791 = vrot.slane %v6789, 5
        %v6792 = vsel %vm1210, %v6787, %v6791
        %v6793 = vrot.slane %v6495, 4
        %v6794 = vrot.slane %v6498, 5
        %v6795 = vor.u32 %v6793, %v6794
        %v6796 = vrot.slane %v6795, 4
        %v6797 = vrot.slane %v6507, 5
        %v6798 = vsel %vm1210, %v6796, %v6797
        %v6799 = vrot.slane %v6504, 4
        %v6800 = vor.u32 %v6799, %v6797
        %v6801 = vrot.slane %v6800, 4
        %v6803 = vshll.u32 %v6673, 16
        %v6805 = vrot.slane %v6803, 5
        %v6806 = vsel %vm1210, %v6801, %v6805
        %v6807 = vrot.slane %v6517, 4
        %v6808 = vrot.slane %v6520, 5
        %v6809 = vor.u32 %v6807, %v6808
        %v6810 = vrot.slane %v6809, 4
        %v6811 = vrot.slane %v6529, 5
        %v6812 = vsel %vm1210, %v6810, %v6811
        %v6813 = vrot.slane %v6526, 4
        %v6814 = vor.u32 %v6813, %v6811
        %v6815 = vrot.slane %v6814, 4
        %v6817 = vshll.u32 %v6674, 16
        %v6819 = vrot.slane %v6817, 5
        %v6820 = vsel %vm1210, %v6815, %v6819
        %v6821 = vrot.slane %v6539, 4
        %v6822 = vrot.slane %v6542, 5
        %v6823 = vor.u32 %v6821, %v6822
        %v6824 = vrot.slane %v6823, 4
        %v6825 = vrot.slane %v6551, 5
        %v6826 = vsel %vm1210, %v6824, %v6825
        %v6827 = vrot.slane %v6548, 4
        %v6828 = vor.u32 %v6827, %v6825
        %v6829 = vrot.slane %v6828, 4
        %v6831 = vshll.u32 %v6675, 16
        %v6833 = vrot.slane %v6831, 5
        %v6834 = vsel %vm1210, %v6829, %v6833
        %v6835 = vrot.slane %v6561, 4
        %v6836 = vrot.slane %v6564, 5
        %v6837 = vor.u32 %v6835, %v6836
        %v6838 = vrot.slane %v6837, 4
        %v6839 = vrot.slane %v6573, 5
        %v6840 = vsel %vm1210, %v6838, %v6839
        %v6841 = vrot.slane %v6570, 4
        %v6842 = vor.u32 %v6841, %v6839
        %v6843 = vrot.slane %v6842, 4
        %v6845 = vshll.u32 %v6676, 16
        %v6847 = vrot.slane %v6845, 5
        %v6848 = vsel %vm1210, %v6843, %v6847
        %v6849 = vrot.slane %v6583, 4
        %v6850 = vrot.slane %v6586, 5
        %v6851 = vor.u32 %v6849, %v6850
        %v6852 = vrot.slane %v6851, 4
        %v6853 = vrot.slane %v6595, 5
        %v6854 = vsel %vm1210, %v6852, %v6853
        %v6855 = vrot.slane %v6592, 4
        %v6856 = vor.u32 %v6855, %v6853
        %v6857 = vrot.slane %v6856, 4
        %v6859 = vshll.u32 %v6677, 16
        %v6861 = vrot.slane %v6859, 5
        %v6862 = vsel %vm1210, %v6857, %v6861
        %v6863 = vrot.slane %v6605, 4
        %v6864 = vrot.slane %v6608, 5
        %v6865 = vor.u32 %v6863, %v6864
        %v6866 = vrot.slane %v6865, 4
        %v6867 = vrot.slane %v6617, 5
        %v6868 = vsel %vm1210, %v6866, %v6867
        %v6869 = vrot.slane %v6614, 4
        %v6870 = vor.u32 %v6869, %v6867
        %v6871 = vrot.slane %v6870, 4
        %v6873 = vshll.u32 %v6678, 16
        %v6875 = vrot.slane %v6873, 5
        %v6876 = vsel %vm1210, %v6871, %v6875
        %v6877 = vrot.slane %v6627, 4
        %v6878 = vrot.slane %v6630, 5
        %v6879 = vor.u32 %v6877, %v6878
        %v6880 = vrot.slane %v6879, 4
        %v6881 = vrot.slane %v6639, 5
        %v6882 = vsel %vm1210, %v6880, %v6881
        %v6883 = vrot.slane %v6636, 4
        %v6884 = vor.u32 %v6883, %v6881
        %v6885 = vrot.slane %v6884, 4
        %v6887 = vshll.u32 %v6679, 16
        %v6889 = vrot.slane %v6887, 5
        %v6890 = vsel %vm1210, %v6885, %v6889
        %v6891 = vrot.slane %v6649, 4
        %v6892 = vrot.slane %v6652, 5
        %v6893 = vor.u32 %v6891, %v6892
        %v6894 = vrot.slane %v6893, 4
        %v6895 = vrot.slane %v6661, 5
        %v6896 = vsel %vm1210, %v6894, %v6895
        %v6897 = vrot.slane %v6658, 4
        %v6898 = vor.u32 %v6897, %v6895
        %v6899 = vrot.slane %v6898, 4
        %v6901 = vshll.u32 %v6680, 16
        %v6903 = vrot.slane %v6901, 5
        %v6904 = vsel %vm1210, %v6899, %v6903
        %v6905 = vunpack.c.l.b16 %v6325
        %v6906 = vunpack.c.l.b16 %v6334
        %v6907 = vunpack.c.l.b16 %v6347
        %v6908 = vunpack.c.l.b16 %v6356
        %v6909 = vunpack.c.l.b16 %v6369
        %v6910 = vunpack.c.l.b16 %v6378
        %v6911 = vunpack.c.l.b16 %v6391
        %v6912 = vunpack.c.l.b16 %v6400
        %v6913 = vunpack.c.l.b16 %v6413
        %v6914 = vunpack.c.l.b16 %v6422
        %v6915 = vunpack.c.l.b16 %v6435
        %v6916 = vunpack.c.l.b16 %v6444
        %v6917 = vunpack.c.l.b16 %v6457
        %v6918 = vunpack.c.l.b16 %v6466
        %v6919 = vunpack.c.l.b16 %v6479
        %v6920 = vunpack.c.l.b16 %v6488
        %v6921 = vunpack.c.l.b16 %v6501
        %v6922 = vunpack.c.l.b16 %v6510
        %v6923 = vunpack.c.l.b16 %v6523
        %v6924 = vunpack.c.l.b16 %v6532
        %v6925 = vunpack.c.l.b16 %v6545
        %v6926 = vunpack.c.l.b16 %v6554
        %v6927 = vunpack.c.l.b16 %v6567
        %v6928 = vunpack.c.l.b16 %v6576
        %v6929 = vunpack.c.l.b16 %v6589
        %v6930 = vunpack.c.l.b16 %v6598
        %v6931 = vunpack.c.l.b16 %v6611
        %v6932 = vunpack.c.l.b16 %v6620
        %v6933 = vunpack.c.l.b16 %v6633
        %v6934 = vunpack.c.l.b16 %v6642
        %v6935 = vunpack.c.l.b16 %v6655
        %v6936 = vunpack.c.l.b16 %v6664
        %v6937 = vpack.c.b16 %v6906, %v6905
        %v6938 = vpack.c.b16 %v6908, %v6907
        %v6939 = vpack.c.b16 %v6910, %v6909
        %v6940 = vpack.c.b16 %v6912, %v6911
        %v6941 = vpack.c.b16 %v6914, %v6913
        %v6942 = vpack.c.b16 %v6916, %v6915
        %v6943 = vpack.c.b16 %v6918, %v6917
        %v6944 = vpack.c.b16 %v6920, %v6919
        %v6945 = vpack.c.b16 %v6922, %v6921
        %v6946 = vpack.c.b16 %v6924, %v6923
        %v6947 = vpack.c.b16 %v6926, %v6925
        %v6948 = vpack.c.b16 %v6928, %v6927
        %v6949 = vpack.c.b16 %v6930, %v6929
        %v6950 = vpack.c.b16 %v6932, %v6931
        %v6951 = vpack.c.b16 %v6934, %v6933
        %v6952 = vpack.c.b16 %v6936, %v6935
        %v7001 = vunpack.c.l.b16 %v6266
        %v7002 = vunpack.c.l.b16 %v6267
        %v7003 = vunpack.c.l.b16 %v6269
        %v7004 = vunpack.c.l.b16 %v6270
        %v7005 = vunpack.c.l.b16 %v6272
        %v7006 = vunpack.c.l.b16 %v6273
        %v7007 = vunpack.c.l.b16 %v6275
        %v7008 = vunpack.c.l.b16 %v6276
        %v7009 = vunpack.c.l.b16 %v6278
        %v7010 = vunpack.c.l.b16 %v6279
        %v7011 = vunpack.c.l.b16 %v6281
        %v7012 = vunpack.c.l.b16 %v6282
        %v7013 = vunpack.c.l.b16 %v6284
        %v7014 = vunpack.c.l.b16 %v6285
        %v7015 = vunpack.c.l.b16 %v6287
        %v7016 = vunpack.c.l.b16 %v6288
        %v7017 = vunpack.c.l.b16 %v6290
        %v7018 = vunpack.c.l.b16 %v6291
        %v7019 = vunpack.c.l.b16 %v6293
        %v7020 = vunpack.c.l.b16 %v6294
        %v7021 = vunpack.c.l.b16 %v6296
        %v7022 = vunpack.c.l.b16 %v6297
        %v7023 = vunpack.c.l.b16 %v6299
        %v7024 = vunpack.c.l.b16 %v6300
        %v7025 = vunpack.c.l.b16 %v6302
        %v7026 = vunpack.c.l.b16 %v6303
        %v7027 = vunpack.c.l.b16 %v6305
        %v7028 = vunpack.c.l.b16 %v6306
        %v7029 = vunpack.c.l.b16 %v6308
        %v7030 = vunpack.c.l.b16 %v6309
        %v7031 = vunpack.c.l.b16 %v6311
        %v7032 = vunpack.c.l.b16 %v6312
        %v7033 = vpack.c.b16 %v7002, %v7001
        %v7034 = vpack.c.b16 %v7004, %v7003
        %v7035 = vpack.c.b16 %v7006, %v7005
        %v7036 = vpack.c.b16 %v7008, %v7007
        %v7037 = vpack.c.b16 %v7010, %v7009
        %v7038 = vpack.c.b16 %v7012, %v7011
        %v7039 = vpack.c.b16 %v7014, %v7013
        %v7040 = vpack.c.b16 %v7016, %v7015
        %v7041 = vpack.c.b16 %v7018, %v7017
        %v7042 = vpack.c.b16 %v7020, %v7019
        %v7043 = vpack.c.b16 %v7022, %v7021
        %v7044 = vpack.c.b16 %v7024, %v7023
        %v7045 = vpack.c.b16 %v7026, %v7025
        %v7046 = vpack.c.b16 %v7028, %v7027
        %v7047 = vpack.c.b16 %v7030, %v7029
        %v7048 = vpack.c.b16 %v7032, %v7031
        %v7065 = vunpack.c.l.b16 %v6686
        %v7066 = vunpack.c.l.b16 %v6694
        %v7067 = vunpack.c.l.b16 %v6700
        %v7068 = vunpack.c.l.b16 %v6708
        %v7069 = vunpack.c.l.b16 %v6714
        %v7070 = vunpack.c.l.b16 %v6722
        %v7071 = vunpack.c.l.b16 %v6728
        %v7072 = vunpack.c.l.b16 %v6736
        %v7073 = vunpack.c.l.b16 %v6742
        %v7074 = vunpack.c.l.b16 %v6750
        %v7075 = vunpack.c.l.b16 %v6756
        %v7076 = vunpack.c.l.b16 %v6764
        %v7077 = vunpack.c.l.b16 %v6770
        %v7078 = vunpack.c.l.b16 %v6778
        %v7079 = vunpack.c.l.b16 %v6784
        %v7080 = vunpack.c.l.b16 %v6792
        %v7081 = vunpack.c.l.b16 %v6798
        %v7082 = vunpack.c.l.b16 %v6806
        %v7083 = vunpack.c.l.b16 %v6812
        %v7084 = vunpack.c.l.b16 %v6820
        %v7085 = vunpack.c.l.b16 %v6826
        %v7086 = vunpack.c.l.b16 %v6834
        %v7087 = vunpack.c.l.b16 %v6840
        %v7088 = vunpack.c.l.b16 %v6848
        %v7089 = vunpack.c.l.b16 %v6854
        %v7090 = vunpack.c.l.b16 %v6862
        %v7091 = vunpack.c.l.b16 %v6868
        %v7092 = vunpack.c.l.b16 %v6876
        %v7093 = vunpack.c.l.b16 %v6882
        %v7094 = vunpack.c.l.b16 %v6890
        %v7095 = vunpack.c.l.b16 %v6896
        %v7096 = vunpack.c.l.b16 %v6904
        %v7097 = vpack.c.b16 %v7066, %v7065
        %v7098 = vpack.c.b16 %v7068, %v7067
        %v7099 = vpack.c.b16 %v7070, %v7069
        %v7100 = vpack.c.b16 %v7072, %v7071
        %v7101 = vpack.c.b16 %v7074, %v7073
        %v7102 = vpack.c.b16 %v7076, %v7075
        %v7103 = vpack.c.b16 %v7078, %v7077
        %v7104 = vpack.c.b16 %v7080, %v7079
        %v7105 = vpack.c.b16 %v7082, %v7081
        %v7106 = vpack.c.b16 %v7084, %v7083
        %v7107 = vpack.c.b16 %v7086, %v7085
        %v7108 = vpack.c.b16 %v7088, %v7087
        %v7109 = vpack.c.b16 %v7090, %v7089
        %v7110 = vpack.c.b16 %v7092, %v7091
        %v7111 = vpack.c.b16 %v7094, %v7093
        %v7112 = vpack.c.b16 %v7096, %v7095
        %v7129 = vld [vmem:[#allocation8 + $0xc0] sm:$0xf]
        %v7130 = vld [vmem:[#allocation8 + $0xc4] sm:$0xf]
        %v7131 = vld [vmem:[#allocation8 + $0xc8] sm:$0xf]
        %v7132 = vld [vmem:[#allocation8 + $0xcc] sm:$0xf]
        %v7133 = vld [vmem:[#allocation8 + $0xd0] sm:$0xf]
        %v7134 = vld [vmem:[#allocation8 + $0xd4] sm:$0xf]
        %v7135 = vld [vmem:[#allocation8 + $0xd8] sm:$0xf]
        %v7136 = vld [vmem:[#allocation8 + $0xdc] sm:$0xf]
        %v7137 = vld [vmem:[#allocation8 + $0xe0] sm:$0xf]
        %v7138 = vld [vmem:[#allocation8 + $0xe4] sm:$0xf]
        %v7139 = vld [vmem:[#allocation8 + $0xe8] sm:$0xf]
        %v7140 = vld [vmem:[#allocation8 + $0xec] sm:$0xf]
        %v7141 = vld [vmem:[#allocation8 + $0xf0] sm:$0xf]
        %v7142 = vld [vmem:[#allocation8 + $0xf4] sm:$0xf]
        %v7143 = vld [vmem:[#allocation8 + $0xf8] sm:$0xf]
        %v7144 = vld [vmem:[#allocation8 + $0xfc] sm:$0xf]
        %v7145 = vld [vmem:[#allocation8 + $0x100] sm:$0xf]
        %v7146 = vld [vmem:[#allocation8 + $0x104] sm:$0xf]
        %v7147 = vld [vmem:[#allocation8 + $0x108] sm:$0xf]
        %v7148 = vld [vmem:[#allocation8 + $0x10c] sm:$0xf]
        %v7149 = vld [vmem:[#allocation8 + $0x110] sm:$0xf]
        %v7150 = vld [vmem:[#allocation8 + $0x114] sm:$0xf]
        %v7151 = vld [vmem:[#allocation8 + $0x118] sm:$0xf]
        %v7152 = vld [vmem:[#allocation8 + $0x11c] sm:$0xf]
        %v7153 = vld [vmem:[#allocation8 + $0x120] sm:$0xf]
        %v7154 = vld [vmem:[#allocation8 + $0x124] sm:$0xf]
        %v7155 = vld [vmem:[#allocation8 + $0x128] sm:$0xf]
        %v7156 = vld [vmem:[#allocation8 + $0x12c] sm:$0xf]
        %v7157 = vld [vmem:[#allocation8 + $0x130] sm:$0xf]
        %v7158 = vld [vmem:[#allocation8 + $0x134] sm:$0xf]
        %v7159 = vld [vmem:[#allocation8 + $0x138] sm:$0xf]
        %v7160 = vld [vmem:[#allocation8 + $0x13c] sm:$0xf]
        %v7161 = vld [vmem:[#allocation8 + $0x140] sm:$0xf]
        %v7162 = vld [vmem:[#allocation8 + $0x144] sm:$0xf]
        %v7163 = vld [vmem:[#allocation8 + $0x148] sm:$0xf]
        %v7164 = vld [vmem:[#allocation8 + $0x14c] sm:$0xf]
        %v7165 = vld [vmem:[#allocation8 + $0x150] sm:$0xf]
        %v7166 = vld [vmem:[#allocation8 + $0x154] sm:$0xf]
        %v7167 = vld [vmem:[#allocation8 + $0x158] sm:$0xf]
        %v7168 = vld [vmem:[#allocation8 + $0x15c] sm:$0xf]
        %v7169 = vld [vmem:[#allocation8 + $0x160] sm:$0xf]
        %v7170 = vld [vmem:[#allocation8 + $0x164] sm:$0xf]
        %v7171 = vld [vmem:[#allocation8 + $0x168] sm:$0xf]
        %v7172 = vld [vmem:[#allocation8 + $0x16c] sm:$0xf]
        %v7173 = vld [vmem:[#allocation8 + $0x170] sm:$0xf]
        %v7174 = vld [vmem:[#allocation8 + $0x174] sm:$0xf]
        %v7175 = vld [vmem:[#allocation8 + $0x178] sm:$0xf]
        %v7176 = vld [vmem:[#allocation8 + $0x17c] sm:$0xf]
        %v7225 = vunpack.c.l.b16 %v7129
        %v7226 = vunpack.c.l.b16 %v7130
        %v7227 = vunpack.c.l.b16 %v7131
        %v7228 = vunpack.c.l.b16 %v7132
        %v7229 = vunpack.c.l.b16 %v7133
        %v7230 = vunpack.c.l.b16 %v7134
        %v7231 = vunpack.c.l.b16 %v7135
        %v7232 = vunpack.c.l.b16 %v7136
        %v7233 = vunpack.c.l.b16 %v7137
        %v7234 = vunpack.c.l.b16 %v7138
        %v7235 = vunpack.c.l.b16 %v7139
        %v7236 = vunpack.c.l.b16 %v7140
        %v7237 = vunpack.c.l.b16 %v7141
        %v7238 = vunpack.c.l.b16 %v7142
        %v7239 = vunpack.c.l.b16 %v7143
        %v7240 = vunpack.c.l.b16 %v7144
        %v7241 = vunpack.c.l.b16 %v7145
        %v7242 = vunpack.c.l.b16 %v7146
        %v7243 = vunpack.c.l.b16 %v7147
        %v7244 = vunpack.c.l.b16 %v7148
        %v7245 = vunpack.c.l.b16 %v7149
        %v7246 = vunpack.c.l.b16 %v7150
        %v7247 = vunpack.c.l.b16 %v7151
        %v7248 = vunpack.c.l.b16 %v7152
        %v7249 = vunpack.c.l.b16 %v7153
        %v7250 = vunpack.c.l.b16 %v7154
        %v7251 = vunpack.c.l.b16 %v7155
        %v7252 = vunpack.c.l.b16 %v7156
        %v7253 = vunpack.c.l.b16 %v7157
        %v7254 = vunpack.c.l.b16 %v7158
        %v7255 = vunpack.c.l.b16 %v7159
        %v7256 = vunpack.c.l.b16 %v7160
        %v7257 = vunpack.c.l.b16 %v7161
        %v7258 = vunpack.c.l.b16 %v7162
        %v7259 = vunpack.c.l.b16 %v7163
        %v7260 = vunpack.c.l.b16 %v7164
        %v7261 = vunpack.c.l.b16 %v7165
        %v7262 = vunpack.c.l.b16 %v7166
        %v7263 = vunpack.c.l.b16 %v7167
        %v7264 = vunpack.c.l.b16 %v7168
        %v7265 = vunpack.c.l.b16 %v7169
        %v7266 = vunpack.c.l.b16 %v7170
        %v7267 = vunpack.c.l.b16 %v7171
        %v7268 = vunpack.c.l.b16 %v7172
        %v7269 = vunpack.c.l.b16 %v7173
        %v7270 = vunpack.c.l.b16 %v7174
        %v7271 = vunpack.c.l.b16 %v7175
        %v7272 = vunpack.c.l.b16 %v7176
        %v7273 = vpack.c.b16 %v7226, %v7225
        %v7274 = vpack.c.b16 %v7228, %v7227
        %v7275 = vpack.c.b16 %v7230, %v7229
        %v7276 = vpack.c.b16 %v7232, %v7231
        %v7277 = vpack.c.b16 %v7234, %v7233
        %v7278 = vpack.c.b16 %v7236, %v7235
        %v7279 = vpack.c.b16 %v7238, %v7237
        %v7280 = vpack.c.b16 %v7240, %v7239
        %v7281 = vpack.c.b16 %v7242, %v7241
        %v7282 = vpack.c.b16 %v7244, %v7243
        %v7283 = vpack.c.b16 %v7246, %v7245
        %v7284 = vpack.c.b16 %v7248, %v7247
        %v7285 = vpack.c.b16 %v7250, %v7249
        %v7286 = vpack.c.b16 %v7252, %v7251
        %v7287 = vpack.c.b16 %v7254, %v7253
        %v7288 = vpack.c.b16 %v7256, %v7255
        %v7289 = vpack.c.b16 %v7258, %v7257
        %v7290 = vpack.c.b16 %v7260, %v7259
        %v7291 = vpack.c.b16 %v7262, %v7261
        %v7292 = vpack.c.b16 %v7264, %v7263
        %v7293 = vpack.c.b16 %v7266, %v7265
        %v7294 = vpack.c.b16 %v7268, %v7267
        %v7295 = vpack.c.b16 %v7270, %v7269
        %v7296 = vpack.c.b16 %v7272, %v7271
        %7321 = vmatprep.subr.bf16.mxu0 0
        %7322 = vmatpush1.bf16.msra.mxu0 %v7273
        %7323 = vmatprep.subr.bf16.mxu0 0
        %7324 = vmatpush1.bf16.msra.mxu0 %v7274
        %7325 = vmatprep.subr.bf16.mxu0 0
        %7326 = vmatpush1.bf16.msra.mxu0 %v7275
        %7327 = vmatprep.subr.bf16.mxu0 0
        %7328 = vmatpush1.bf16.msra.mxu0 %v7276
        %7329 = vmatprep.subr.bf16.mxu0 0
        %7330 = vmatpush1.bf16.msra.mxu0 %v7277
        %7331 = vmatprep.subr.bf16.mxu0 0
        %7332 = vmatpush1.bf16.msra.mxu0 %v7278
        %7333 = vmatprep.subr.bf16.mxu0 0
        %7334 = vmatpush1.bf16.msra.mxu0 %v7279
        %7335 = vmatprep.subr.bf16.mxu0 0
        %7336 = vmatpush1.bf16.msra.mxu0 %v7280
        %7337 = vmatprep.subr.bf16.mxu0 0
        %7338 = vmatpush1.bf16.msra.mxu0 %v7281
        %7339 = vmatprep.subr.bf16.mxu0 0
        %7340 = vmatpush1.bf16.msra.mxu0 %v7282
        %7341 = vmatprep.subr.bf16.mxu0 0
        %7342 = vmatpush1.bf16.msra.mxu0 %v7283
        %7343 = vmatprep.subr.bf16.mxu0 0
        %7344 = vmatpush1.bf16.msra.mxu0 %v7284
        %7345 = vmatprep.subr.bf16.mxu0 0
        %7346 = vmatpush1.bf16.msra.mxu0 %v7285
        %7347 = vmatprep.subr.bf16.mxu0 0
        %7348 = vmatpush1.bf16.msra.mxu0 %v7286
        %7349 = vmatprep.subr.bf16.mxu0 0
        %7350 = vmatpush1.bf16.msra.mxu0 %v7287
        %7351 = vmatprep.subr.bf16.mxu0 0
        %7352 = vmatpush1.bf16.msra.mxu0 %v7288
        %7353 = vmatprep.mubr.bf16.mxu0 %v7033
        %7354 = vmatmul.mubr.bf16.gmra.mrb[0].mxu0 %v6937
        %v7355 = vpop.f32.mrb[0].mxu0
        %v7356 = vadd.f32 0.0, %v7355
        %v7357 = vpop.f32.mrb[0].mxu0
        %v7358 = vpop.f32.mrb[0].mxu0
        %v7359 = vadd.f32 0.0, %v7358
        %v7360 = vpop.f32.mrb[0].mxu0
        %7361 = vmatprep.mubr.bf16.mxu0 %v7034
        %7362 = vmatmul.mubr.bf16.gmra.mrb[0].mxu0 %v6938
        %v7363 = vpop.f32.mrb[0].mxu0
        %v7364 = vadd.f32 0.0, %v7363
        %v7365 = vpop.f32.mrb[0].mxu0
        %v7366 = vpop.f32.mrb[0].mxu0
        %v7367 = vadd.f32 0.0, %v7366
        %v7368 = vpop.f32.mrb[0].mxu0
        %7369 = vmatprep.mubr.bf16.mxu0 %v7035
        %7370 = vmatmul.mubr.bf16.gmra.mrb[0].mxu0 %v6939
        %v7371 = vpop.f32.mrb[0].mxu0
        %v7372 = vadd.f32 0.0, %v7371
        %v7373 = vpop.f32.mrb[0].mxu0
        %v7374 = vpop.f32.mrb[0].mxu0
        %v7375 = vadd.f32 0.0, %v7374
        %v7376 = vpop.f32.mrb[0].mxu0
        %7377 = vmatprep.mubr.bf16.mxu0 %v7036
        %7378 = vmatmul.mubr.bf16.gmra.mrb[0].mxu0 %v6940
        %v7379 = vpop.f32.mrb[0].mxu0
        %v7380 = vadd.f32 0.0, %v7379
        %v7381 = vpop.f32.mrb[0].mxu0
        %v7382 = vpop.f32.mrb[0].mxu0
        %v7383 = vadd.f32 0.0, %v7382
        %v7384 = vpop.f32.mrb[0].mxu0
        %7385 = vmatprep.mubr.bf16.mxu0 %v7037
        %7386 = vmatmul.mubr.bf16.gmra.mrb[0].mxu0 %v6941
        %v7387 = vpop.f32.mrb[0].mxu0
        %v7388 = vadd.f32 0.0, %v7387
        %v7389 = vpop.f32.mrb[0].mxu0
        %v7390 = vpop.f32.mrb[0].mxu0
        %v7391 = vadd.f32 0.0, %v7390
        %v7392 = vpop.f32.mrb[0].mxu0
        %7393 = vmatprep.mubr.bf16.mxu0 %v7038
        %7394 = vmatmul.mubr.bf16.gmra.mrb[0].mxu0 %v6942
        %v7395 = vpop.f32.mrb[0].mxu0
        %v7396 = vadd.f32 0.0, %v7395
        %v7397 = vpop.f32.mrb[0].mxu0
        %v7398 = vpop.f32.mrb[0].mxu0
        %v7399 = vadd.f32 0.0, %v7398
        %v7400 = vpop.f32.mrb[0].mxu0
        %7401 = vmatprep.mubr.bf16.mxu0 %v7039
        %7402 = vmatmul.mubr.bf16.gmra.mrb[0].mxu0 %v6943
        %v7403 = vpop.f32.mrb[0].mxu0
        %v7404 = vadd.f32 0.0, %v7403
        %v7405 = vpop.f32.mrb[0].mxu0
        %v7406 = vpop.f32.mrb[0].mxu0
        %v7407 = vadd.f32 0.0, %v7406
        %v7408 = vpop.f32.mrb[0].mxu0
        %7409 = vmatprep.mubr.bf16.mxu0 %v7040
        %7410 = vmatmul.mubr.bf16.gmra.mrb[0].mxu0 %v6944
        %v7411 = vpop.f32.mrb[0].mxu0
        %v7412 = vadd.f32 0.0, %v7411
        %v7413 = vpop.f32.mrb[0].mxu0
        %v7414 = vpop.f32.mrb[0].mxu0
        %v7415 = vadd.f32 0.0, %v7414
        %v7416 = vpop.f32.mrb[0].mxu0
        %7417 = vmatprep.mubr.bf16.mxu0 %v7041
        %7418 = vmatmul.mubr.bf16.gmra.mrb[0].mxu0 %v6945
        %v7419 = vpop.f32.mrb[0].mxu0
        %v7420 = vadd.f32 0.0, %v7419
        %v7421 = vpop.f32.mrb[0].mxu0
        %v7422 = vpop.f32.mrb[0].mxu0
        %v7423 = vadd.f32 0.0, %v7422
        %v7424 = vpop.f32.mrb[0].mxu0
        %7425 = vmatprep.mubr.bf16.mxu0 %v7042
        %7426 = vmatmul.mubr.bf16.gmra.mrb[0].mxu0 %v6946
        %v7427 = vpop.f32.mrb[0].mxu0
        %v7428 = vadd.f32 0.0, %v7427
        %v7429 = vpop.f32.mrb[0].mxu0
        %v7430 = vpop.f32.mrb[0].mxu0
        %v7431 = vadd.f32 0.0, %v7430
        %v7432 = vpop.f32.mrb[0].mxu0
        %7433 = vmatprep.mubr.bf16.mxu0 %v7043
        %7434 = vmatmul.mubr.bf16.gmra.mrb[0].mxu0 %v6947
        %v7435 = vpop.f32.mrb[0].mxu0
        %v7436 = vadd.f32 0.0, %v7435
        %v7437 = vpop.f32.mrb[0].mxu0
        %v7438 = vpop.f32.mrb[0].mxu0
        %v7439 = vadd.f32 0.0, %v7438
        %v7440 = vpop.f32.mrb[0].mxu0
        %7441 = vmatprep.mubr.bf16.mxu0 %v7044
        %7442 = vmatmul.mubr.bf16.gmra.mrb[0].mxu0 %v6948
        %v7443 = vpop.f32.mrb[0].mxu0
        %v7444 = vadd.f32 0.0, %v7443
        %v7445 = vpop.f32.mrb[0].mxu0
        %v7446 = vpop.f32.mrb[0].mxu0
        %v7447 = vadd.f32 0.0, %v7446
        %v7448 = vpop.f32.mrb[0].mxu0
        %7449 = vmatprep.mubr.bf16.mxu0 %v7045
        %7450 = vmatmul.mubr.bf16.gmra.mrb[0].mxu0 %v6949
        %v7451 = vpop.f32.mrb[0].mxu0
        %v7452 = vadd.f32 0.0, %v7451
        %v7453 = vpop.f32.mrb[0].mxu0
        %v7454 = vpop.f32.mrb[0].mxu0
        %v7455 = vadd.f32 0.0, %v7454
        %v7456 = vpop.f32.mrb[0].mxu0
        %7457 = vmatprep.mubr.bf16.mxu0 %v7046
        %7458 = vmatmul.mubr.bf16.gmra.mrb[0].mxu0 %v6950
        %v7459 = vpop.f32.mrb[0].mxu0
        %v7460 = vadd.f32 0.0, %v7459
        %v7461 = vpop.f32.mrb[0].mxu0
        %v7462 = vpop.f32.mrb[0].mxu0
        %v7463 = vadd.f32 0.0, %v7462
        %v7464 = vpop.f32.mrb[0].mxu0
        %7465 = vmatprep.mubr.bf16.mxu0 %v7047
        %7466 = vmatmul.mubr.bf16.gmra.mrb[0].mxu0 %v6951
        %v7467 = vpop.f32.mrb[0].mxu0
        %v7468 = vadd.f32 0.0, %v7467
        %v7469 = vpop.f32.mrb[0].mxu0
        %v7470 = vpop.f32.mrb[0].mxu0
        %v7471 = vadd.f32 0.0, %v7470
        %v7472 = vpop.f32.mrb[0].mxu0
        %7473 = vmatprep.mubr.bf16.mxu0 %v7048
        %7474 = vmatmul.mubr.bf16.gmra.mrb[0].mxu0 %v6952
        %v7475 = vpop.f32.mrb[0].mxu0
        %v7476 = vadd.f32 0.0, %v7475
        %v7477 = vpop.f32.mrb[0].mxu0
        %v7478 = vpop.f32.mrb[0].mxu0
        %v7479 = vadd.f32 0.0, %v7478
        %v7480 = vpop.f32.mrb[0].mxu0
        %7481 = vdwg.mxu0
        %7482 = vmatprep.subr.bf16.mxu0 0
        %7483 = vmatpush1.bf16.msra.mxu0 %v7289
        %7484 = vmatprep.subr.bf16.mxu0 0
        %7485 = vmatpush1.bf16.msra.mxu0 %v7290
        %7486 = vmatprep.subr.bf16.mxu0 0
        %7487 = vmatpush1.bf16.msra.mxu0 %v7291
        %7488 = vmatprep.subr.bf16.mxu0 0
        %7489 = vmatpush1.bf16.msra.mxu0 %v7292
        %7490 = vmatprep.subr.bf16.mxu0 0
        %7491 = vmatpush1.bf16.msra.mxu0 %v7293
        %7492 = vmatprep.subr.bf16.mxu0 0
        %7493 = vmatpush1.bf16.msra.mxu0 %v7294
        %7494 = vmatprep.subr.bf16.mxu0 0
        %7495 = vmatpush1.bf16.msra.mxu0 %v7295
        %7496 = vmatprep.subr.bf16.mxu0 0
        %7497 = vmatpush1.bf16.msra.mxu0 %v7296
        %7498 = vmatprep.subr.bf16.mxu0 0
        %7499 = vmatpush1.bf16.msra.mxu0 0
        %7500 = vmatprep.subr.bf16.mxu0 0
        %7501 = vmatpush1.bf16.msra.mxu0 0
        %7502 = vmatprep.subr.bf16.mxu0 0
        %7503 = vmatpush1.bf16.msra.mxu0 0
        %7504 = vmatprep.subr.bf16.mxu0 0
        %7505 = vmatpush1.bf16.msra.mxu0 0
        %7506 = vmatprep.subr.bf16.mxu0 0
        %7507 = vmatpush1.bf16.msra.mxu0 0
        %7508 = vmatprep.subr.bf16.mxu0 0
        %7509 = vmatpush1.bf16.msra.mxu0 0
        %7510 = vmatprep.subr.bf16.mxu0 0
        %7511 = vmatpush1.bf16.msra.mxu0 0
        %7512 = vmatprep.subr.bf16.mxu0 0
        %7513 = vmatpush1.bf16.msra.mxu0 0
        %7514 = vmatprep.mubr.bf16.mxu0 0
        %7515 = vmatmul.mubr.bf16.gmra.mrb[0].mxu0 %v7097
        %v7516 = vpop.f32.mrb[0].mxu0
        %v7517 = vadd.f32 %v7356, %v7516
        %v7518 = vpop.f32.mrb[0].mxu0
        %v7519 = vpop.f32.mrb[0].mxu0
        %v7520 = vadd.f32 %v7359, %v7519
        %v7521 = vpop.f32.mrb[0].mxu0
        %7522 = vmatprep.mubr.bf16.mxu0 0
        %7523 = vmatmul.mubr.bf16.gmra.mrb[0].mxu0 %v7098
        %v7524 = vpop.f32.mrb[0].mxu0
        %v7525 = vadd.f32 %v7364, %v7524
        %v7526 = vpop.f32.mrb[0].mxu0
        %v7527 = vpop.f32.mrb[0].mxu0
        %v7528 = vadd.f32 %v7367, %v7527
        %v7529 = vpop.f32.mrb[0].mxu0
        %7530 = vmatprep.mubr.bf16.mxu0 0
        %7531 = vmatmul.mubr.bf16.gmra.mrb[0].mxu0 %v7099
        %v7532 = vpop.f32.mrb[0].mxu0
        %v7533 = vadd.f32 %v7372, %v7532
        %v7534 = vpop.f32.mrb[0].mxu0
        %v7535 = vpop.f32.mrb[0].mxu0
        %v7536 = vadd.f32 %v7375, %v7535
        %v7537 = vpop.f32.mrb[0].mxu0
        %7538 = vmatprep.mubr.bf16.mxu0 0
        %7539 = vmatmul.mubr.bf16.gmra.mrb[0].mxu0 %v7100
        %v7540 = vpop.f32.mrb[0].mxu0
        %v7541 = vadd.f32 %v7380, %v7540
        %v7542 = vpop.f32.mrb[0].mxu0
        %v7543 = vpop.f32.mrb[0].mxu0
        %v7544 = vadd.f32 %v7383, %v7543
        %v7545 = vpop.f32.mrb[0].mxu0
        %7546 = vmatprep.mubr.bf16.mxu0 0
        %7547 = vmatmul.mubr.bf16.gmra.mrb[0].mxu0 %v7101
        %v7548 = vpop.f32.mrb[0].mxu0
        %v7549 = vadd.f32 %v7388, %v7548
        %v7550 = vpop.f32.mrb[0].mxu0
        %v7551 = vpop.f32.mrb[0].mxu0
        %v7552 = vadd.f32 %v7391, %v7551
        %v7553 = vpop.f32.mrb[0].mxu0
        %7554 = vmatprep.mubr.bf16.mxu0 0
        %7555 = vmatmul.mubr.bf16.gmra.mrb[0].mxu0 %v7102
        %v7556 = vpop.f32.mrb[0].mxu0
        %v7557 = vadd.f32 %v7396, %v7556
        %v7558 = vpop.f32.mrb[0].mxu0
        %v7559 = vpop.f32.mrb[0].mxu0
        %v7560 = vadd.f32 %v7399, %v7559
        %v7561 = vpop.f32.mrb[0].mxu0
        %7562 = vmatprep.mubr.bf16.mxu0 0
        %7563 = vmatmul.mubr.bf16.gmra.mrb[0].mxu0 %v7103
        %v7564 = vpop.f32.mrb[0].mxu0
        %v7565 = vadd.f32 %v7404, %v7564
        %v7566 = vpop.f32.mrb[0].mxu0
        %v7567 = vpop.f32.mrb[0].mxu0
        %v7568 = vadd.f32 %v7407, %v7567
        %v7569 = vpop.f32.mrb[0].mxu0
        %7570 = vmatprep.mubr.bf16.mxu0 0
        %7571 = vmatmul.mubr.bf16.gmra.mrb[0].mxu0 %v7104
        %v7572 = vpop.f32.mrb[0].mxu0
        %v7573 = vadd.f32 %v7412, %v7572
        %v7574 = vpop.f32.mrb[0].mxu0
        %v7575 = vpop.f32.mrb[0].mxu0
        %v7576 = vadd.f32 %v7415, %v7575
        %v7577 = vpop.f32.mrb[0].mxu0
        %7578 = vmatprep.mubr.bf16.mxu0 0
        %7579 = vmatmul.mubr.bf16.gmra.mrb[0].mxu0 %v7105
        %v7580 = vpop.f32.mrb[0].mxu0
        %v7581 = vadd.f32 %v7420, %v7580
        %v7582 = vpop.f32.mrb[0].mxu0
        %v7583 = vpop.f32.mrb[0].mxu0
        %v7584 = vadd.f32 %v7423, %v7583
        %v7585 = vpop.f32.mrb[0].mxu0
        %7586 = vmatprep.mubr.bf16.mxu0 0
        %7587 = vmatmul.mubr.bf16.gmra.mrb[0].mxu0 %v7106
        %v7588 = vpop.f32.mrb[0].mxu0
        %v7589 = vadd.f32 %v7428, %v7588
        %v7590 = vpop.f32.mrb[0].mxu0
        %v7591 = vpop.f32.mrb[0].mxu0
        %v7592 = vadd.f32 %v7431, %v7591
        %v7593 = vpop.f32.mrb[0].mxu0
        %7594 = vmatprep.mubr.bf16.mxu0 0
        %7595 = vmatmul.mubr.bf16.gmra.mrb[0].mxu0 %v7107
        %v7596 = vpop.f32.mrb[0].mxu0
        %v7597 = vadd.f32 %v7436, %v7596
        %v7598 = vpop.f32.mrb[0].mxu0
        %v7599 = vpop.f32.mrb[0].mxu0
        %v7600 = vadd.f32 %v7439, %v7599
        %v7601 = vpop.f32.mrb[0].mxu0
        %7602 = vmatprep.mubr.bf16.mxu0 0
        %7603 = vmatmul.mubr.bf16.gmra.mrb[0].mxu0 %v7108
        %v7604 = vpop.f32.mrb[0].mxu0
        %v7605 = vadd.f32 %v7444, %v7604
        %v7606 = vpop.f32.mrb[0].mxu0
        %v7607 = vpop.f32.mrb[0].mxu0
        %v7608 = vadd.f32 %v7447, %v7607
        %v7609 = vpop.f32.mrb[0].mxu0
        %7610 = vmatprep.mubr.bf16.mxu0 0
        %7611 = vmatmul.mubr.bf16.gmra.mrb[0].mxu0 %v7109
        %v7612 = vpop.f32.mrb[0].mxu0
        %v7613 = vadd.f32 %v7452, %v7612
        %v7614 = vpop.f32.mrb[0].mxu0
        %v7615 = vpop.f32.mrb[0].mxu0
        %v7616 = vadd.f32 %v7455, %v7615
        %v7617 = vpop.f32.mrb[0].mxu0
        %7618 = vmatprep.mubr.bf16.mxu0 0
        %7619 = vmatmul.mubr.bf16.gmra.mrb[0].mxu0 %v7110
        %v7620 = vpop.f32.mrb[0].mxu0
        %v7621 = vadd.f32 %v7460, %v7620
        %v7622 = vpop.f32.mrb[0].mxu0
        %v7623 = vpop.f32.mrb[0].mxu0
        %v7624 = vadd.f32 %v7463, %v7623
        %v7625 = vpop.f32.mrb[0].mxu0
        %7626 = vmatprep.mubr.bf16.mxu0 0
        %7627 = vmatmul.mubr.bf16.gmra.mrb[0].mxu0 %v7111
        %v7628 = vpop.f32.mrb[0].mxu0
        %v7629 = vadd.f32 %v7468, %v7628
        %v7630 = vpop.f32.mrb[0].mxu0
        %v7631 = vpop.f32.mrb[0].mxu0
        %v7632 = vadd.f32 %v7471, %v7631
        %v7633 = vpop.f32.mrb[0].mxu0
        %7634 = vmatprep.mubr.bf16.mxu0 0
        %7635 = vmatmul.mubr.bf16.gmra.mrb[0].mxu0 %v7112
        %v7636 = vpop.f32.mrb[0].mxu0
        %v7637 = vadd.f32 %v7476, %v7636
        %v7638 = vpop.f32.mrb[0].mxu0
        %v7639 = vpop.f32.mrb[0].mxu0
        %v7640 = vadd.f32 %v7479, %v7639
        %v7641 = vpop.f32.mrb[0].mxu0
        %7642 = vdwg.mxu0
        %v7691 = vunpack.c.l.b16 %v6217
        %v7692 = vunpack.c.l.b16 %v6218
        %v7693 = vunpack.c.l.b16 %v6219
        %v7694 = vunpack.c.l.b16 %v6220
        %v7695 = vunpack.c.l.b16 %v6221
        %v7696 = vunpack.c.l.b16 %v6222
        %v7697 = vunpack.c.l.b16 %v6223
        %v7698 = vunpack.c.l.b16 %v6224
        %v7699 = vunpack.c.l.b16 %v6225
        %v7700 = vunpack.c.l.b16 %v6226
        %v7701 = vunpack.c.l.b16 %v6227
        %v7702 = vunpack.c.l.b16 %v6228
        %v7703 = vunpack.c.l.b16 %v6229
        %v7704 = vunpack.c.l.b16 %v6230
        %v7705 = vunpack.c.l.b16 %v6231
        %v7706 = vunpack.c.l.b16 %v6232
        %v7707 = vunpack.c.l.b16 %v6233
        %v7708 = vunpack.c.l.b16 %v6234
        %v7709 = vunpack.c.l.b16 %v6235
        %v7710 = vunpack.c.l.b16 %v6236
        %v7711 = vunpack.c.l.b16 %v6237
        %v7712 = vunpack.c.l.b16 %v6238
        %v7713 = vunpack.c.l.b16 %v6239
        %v7714 = vunpack.c.l.b16 %v6240
        %v7715 = vunpack.c.l.b16 %v6241
        %v7716 = vunpack.c.l.b16 %v6242
        %v7717 = vunpack.c.l.b16 %v6243
        %v7718 = vunpack.c.l.b16 %v6244
        %v7719 = vunpack.c.l.b16 %v6245
        %v7720 = vunpack.c.l.b16 %v6246
        %v7721 = vunpack.c.l.b16 %v6247
        %v7722 = vunpack.c.l.b16 %v6248
        %v7723 = vunpack.c.l.b16 %v6249
        %v7724 = vunpack.c.l.b16 %v6250
        %v7725 = vunpack.c.l.b16 %v6251
        %v7726 = vunpack.c.l.b16 %v6252
        %v7727 = vunpack.c.l.b16 %v6253
        %v7728 = vunpack.c.l.b16 %v6254
        %v7729 = vunpack.c.l.b16 %v6255
        %v7730 = vunpack.c.l.b16 %v6256
        %v7731 = vunpack.c.l.b16 %v6257
        %v7732 = vunpack.c.l.b16 %v6258
        %v7733 = vunpack.c.l.b16 %v6259
        %v7734 = vunpack.c.l.b16 %v6260
        %v7735 = vunpack.c.l.b16 %v6261
        %v7736 = vunpack.c.l.b16 %v6262
        %v7737 = vunpack.c.l.b16 %v6263
        %v7738 = vunpack.c.l.b16 %v6264
        %v7739 = vpack.c.b16 %v7692, %v7691
        %v7740 = vpack.c.b16 %v7694, %v7693
        %v7741 = vpack.c.b16 %v7696, %v7695
        %v7742 = vpack.c.b16 %v7698, %v7697
        %v7743 = vpack.c.b16 %v7700, %v7699
        %v7744 = vpack.c.b16 %v7702, %v7701
        %v7745 = vpack.c.b16 %v7704, %v7703
        %v7746 = vpack.c.b16 %v7706, %v7705
        %v7747 = vpack.c.b16 %v7708, %v7707
        %v7748 = vpack.c.b16 %v7710, %v7709
        %v7749 = vpack.c.b16 %v7712, %v7711
        %v7750 = vpack.c.b16 %v7714, %v7713
        %v7751 = vpack.c.b16 %v7716, %v7715
        %v7752 = vpack.c.b16 %v7718, %v7717
        %v7753 = vpack.c.b16 %v7720, %v7719
        %v7754 = vpack.c.b16 %v7722, %v7721
        %v7755 = vpack.c.b16 %v7724, %v7723
        %v7756 = vpack.c.b16 %v7726, %v7725
        %v7757 = vpack.c.b16 %v7728, %v7727
        %v7758 = vpack.c.b16 %v7730, %v7729
        %v7759 = vpack.c.b16 %v7732, %v7731
        %v7760 = vpack.c.b16 %v7734, %v7733
        %v7761 = vpack.c.b16 %v7736, %v7735
        %v7762 = vpack.c.b16 %v7738, %v7737
        %7787 = vmatprep.subr.bf16.mxu0 0
        %7788 = vmatpush1.bf16.msra.mxu0 %v7739
        %7789 = vmatprep.subr.bf16.mxu0 0
        %7790 = vmatpush1.bf16.msra.mxu0 %v7740
        %7791 = vmatprep.subr.bf16.mxu0 0
        %7792 = vmatpush1.bf16.msra.mxu0 %v7741
        %7793 = vmatprep.subr.bf16.mxu0 0
        %7794 = vmatpush1.bf16.msra.mxu0 %v7742
        %7795 = vmatprep.subr.bf16.mxu0 0
        %7796 = vmatpush1.bf16.msra.mxu0 %v7743
        %7797 = vmatprep.subr.bf16.mxu0 0
        %7798 = vmatpush1.bf16.msra.mxu0 %v7744
        %7799 = vmatprep.subr.bf16.mxu0 0
        %7800 = vmatpush1.bf16.msra.mxu0 %v7745
        %7801 = vmatprep.subr.bf16.mxu0 0
        %7802 = vmatpush1.bf16.msra.mxu0 %v7746
        %7803 = vmatprep.subr.bf16.mxu0 0
        %7804 = vmatpush1.bf16.msra.mxu0 %v7747
        %7805 = vmatprep.subr.bf16.mxu0 0
        %7806 = vmatpush1.bf16.msra.mxu0 %v7748
        %7807 = vmatprep.subr.bf16.mxu0 0
        %7808 = vmatpush1.bf16.msra.mxu0 %v7749
        %7809 = vmatprep.subr.bf16.mxu0 0
        %7810 = vmatpush1.bf16.msra.mxu0 %v7750
        %7811 = vmatprep.subr.bf16.mxu0 0
        %7812 = vmatpush1.bf16.msra.mxu0 %v7751
        %7813 = vmatprep.subr.bf16.mxu0 0
        %7814 = vmatpush1.bf16.msra.mxu0 %v7752
        %7815 = vmatprep.subr.bf16.mxu0 0
        %7816 = vmatpush1.bf16.msra.mxu0 %v7753
        %7817 = vmatprep.subr.bf16.mxu0 0
        %7818 = vmatpush1.bf16.msra.mxu0 %v7754
        %7819 = vmatprep.mubr.bf16.mxu0 %v6121
        %7820 = vmatmul.mubr.bf16.gmra.mrb[0].mxu0 %v6025
        %v7821 = vpop.f32.mrb[0].mxu0
        %v7822 = vadd.f32 %v7517, %v7821
        %v7823 = vpop.f32.mrb[0].mxu0
        %v7824 = vpop.f32.mrb[0].mxu0
        %v7825 = vadd.f32 %v7520, %v7824
        %v7826 = vpop.f32.mrb[0].mxu0
        %7827 = vmatprep.mubr.bf16.mxu0 %v6122
        %7828 = vmatmul.mubr.bf16.gmra.mrb[0].mxu0 %v6026
        %v7829 = vpop.f32.mrb[0].mxu0
        %v7830 = vadd.f32 %v7525, %v7829
        %v7831 = vpop.f32.mrb[0].mxu0
        %v7832 = vpop.f32.mrb[0].mxu0
        %v7833 = vadd.f32 %v7528, %v7832
        %v7834 = vpop.f32.mrb[0].mxu0
        %7835 = vmatprep.mubr.bf16.mxu0 %v6123
        %7836 = vmatmul.mubr.bf16.gmra.mrb[0].mxu0 %v6027
        %v7837 = vpop.f32.mrb[0].mxu0
        %v7838 = vadd.f32 %v7533, %v7837
        %v7839 = vpop.f32.mrb[0].mxu0
        %v7840 = vpop.f32.mrb[0].mxu0
        %v7841 = vadd.f32 %v7536, %v7840
        %v7842 = vpop.f32.mrb[0].mxu0
        %7843 = vmatprep.mubr.bf16.mxu0 %v6124
        %7844 = vmatmul.mubr.bf16.gmra.mrb[0].mxu0 %v6028
        %v7845 = vpop.f32.mrb[0].mxu0
        %v7846 = vadd.f32 %v7541, %v7845
        %v7847 = vpop.f32.mrb[0].mxu0
        %v7848 = vpop.f32.mrb[0].mxu0
        %v7849 = vadd.f32 %v7544, %v7848
        %v7850 = vpop.f32.mrb[0].mxu0
        %7851 = vmatprep.mubr.bf16.mxu0 %v6125
        %7852 = vmatmul.mubr.bf16.gmra.mrb[0].mxu0 %v6029
        %v7853 = vpop.f32.mrb[0].mxu0
        %v7854 = vadd.f32 %v7549, %v7853
        %v7855 = vpop.f32.mrb[0].mxu0
        %v7856 = vpop.f32.mrb[0].mxu0
        %v7857 = vadd.f32 %v7552, %v7856
        %v7858 = vpop.f32.mrb[0].mxu0
        %7859 = vmatprep.mubr.bf16.mxu0 %v6126
        %7860 = vmatmul.mubr.bf16.gmra.mrb[0].mxu0 %v6030
        %v7861 = vpop.f32.mrb[0].mxu0
        %v7862 = vadd.f32 %v7557, %v7861
        %v7863 = vpop.f32.mrb[0].mxu0
        %v7864 = vpop.f32.mrb[0].mxu0
        %v7865 = vadd.f32 %v7560, %v7864
        %v7866 = vpop.f32.mrb[0].mxu0
        %7867 = vmatprep.mubr.bf16.mxu0 %v6127
        %7868 = vmatmul.mubr.bf16.gmra.mrb[0].mxu0 %v6031
        %v7869 = vpop.f32.mrb[0].mxu0
        %v7870 = vadd.f32 %v7565, %v7869
        %v7871 = vpop.f32.mrb[0].mxu0
        %v7872 = vpop.f32.mrb[0].mxu0
        %v7873 = vadd.f32 %v7568, %v7872
        %v7874 = vpop.f32.mrb[0].mxu0
        %7875 = vmatprep.mubr.bf16.mxu0 %v6128
        %7876 = vmatmul.mubr.bf16.gmra.mrb[0].mxu0 %v6032
        %v7877 = vpop.f32.mrb[0].mxu0
        %v7878 = vadd.f32 %v7573, %v7877
        %v7879 = vpop.f32.mrb[0].mxu0
        %v7880 = vpop.f32.mrb[0].mxu0
        %v7881 = vadd.f32 %v7576, %v7880
        %v7882 = vpop.f32.mrb[0].mxu0
        %7883 = vmatprep.mubr.bf16.mxu0 %v6129
        %7884 = vmatmul.mubr.bf16.gmra.mrb[0].mxu0 %v6033
        %v7885 = vpop.f32.mrb[0].mxu0
        %v7886 = vadd.f32 %v7581, %v7885
        %v7887 = vpop.f32.mrb[0].mxu0
        %v7888 = vpop.f32.mrb[0].mxu0
        %v7889 = vadd.f32 %v7584, %v7888
        %v7890 = vpop.f32.mrb[0].mxu0
        %7891 = vmatprep.mubr.bf16.mxu0 %v6130
        %7892 = vmatmul.mubr.bf16.gmra.mrb[0].mxu0 %v6034
        %v7893 = vpop.f32.mrb[0].mxu0
        %v7894 = vadd.f32 %v7589, %v7893
        %v7895 = vpop.f32.mrb[0].mxu0
        %v7896 = vpop.f32.mrb[0].mxu0
        %v7897 = vadd.f32 %v7592, %v7896
        %v7898 = vpop.f32.mrb[0].mxu0
        %7899 = vmatprep.mubr.bf16.mxu0 %v6131
        %7900 = vmatmul.mubr.bf16.gmra.mrb[0].mxu0 %v6035
        %v7901 = vpop.f32.mrb[0].mxu0
        %v7902 = vadd.f32 %v7597, %v7901
        %v7903 = vpop.f32.mrb[0].mxu0
        %v7904 = vpop.f32.mrb[0].mxu0
        %v7905 = vadd.f32 %v7600, %v7904
        %v7906 = vpop.f32.mrb[0].mxu0
        %7907 = vmatprep.mubr.bf16.mxu0 %v6132
        %7908 = vmatmul.mubr.bf16.gmra.mrb[0].mxu0 %v6036
        %v7909 = vpop.f32.mrb[0].mxu0
        %v7910 = vadd.f32 %v7605, %v7909
        %v7911 = vpop.f32.mrb[0].mxu0
        %v7912 = vpop.f32.mrb[0].mxu0
        %v7913 = vadd.f32 %v7608, %v7912
        %v7914 = vpop.f32.mrb[0].mxu0
        %7915 = vmatprep.mubr.bf16.mxu0 %v6133
        %7916 = vmatmul.mubr.bf16.gmra.mrb[0].mxu0 %v6037
        %v7917 = vpop.f32.mrb[0].mxu0
        %v7918 = vadd.f32 %v7613, %v7917
        %v7919 = vpop.f32.mrb[0].mxu0
        %v7920 = vpop.f32.mrb[0].mxu0
        %v7921 = vadd.f32 %v7616, %v7920
        %v7922 = vpop.f32.mrb[0].mxu0
        %7923 = vmatprep.mubr.bf16.mxu0 %v6134
        %7924 = vmatmul.mubr.bf16.gmra.mrb[0].mxu0 %v6038
        %v7925 = vpop.f32.mrb[0].mxu0
        %v7926 = vadd.f32 %v7621, %v7925
        %v7927 = vpop.f32.mrb[0].mxu0
        %v7928 = vpop.f32.mrb[0].mxu0
        %v7929 = vadd.f32 %v7624, %v7928
        %v7930 = vpop.f32.mrb[0].mxu0
        %7931 = vmatprep.mubr.bf16.mxu0 %v6135
        %7932 = vmatmul.mubr.bf16.gmra.mrb[0].mxu0 %v6039
        %v7933 = vpop.f32.mrb[0].mxu0
        %v7934 = vadd.f32 %v7629, %v7933
        %v7935 = vpop.f32.mrb[0].mxu0
        %v7936 = vpop.f32.mrb[0].mxu0
        %v7937 = vadd.f32 %v7632, %v7936
        %v7938 = vpop.f32.mrb[0].mxu0
        %7939 = vmatprep.mubr.bf16.mxu0 %v6136
        %7940 = vmatmul.mubr.bf16.gmra.mrb[0].mxu0 %v6040
        %v7941 = vpop.f32.mrb[0].mxu0
        %v7942 = vadd.f32 %v7637, %v7941
        %v7943 = vpop.f32.mrb[0].mxu0
        %v7944 = vpop.f32.mrb[0].mxu0
        %v7945 = vadd.f32 %v7640, %v7944
        %v7946 = vpop.f32.mrb[0].mxu0
        %7947 = vdwg.mxu0
        %7948 = vmatprep.subr.bf16.mxu0 0
        %7949 = vmatpush1.bf16.msra.mxu0 %v7755
        %7950 = vmatprep.subr.bf16.mxu0 0
        %7951 = vmatpush1.bf16.msra.mxu0 %v7756
        %7952 = vmatprep.subr.bf16.mxu0 0
        %7953 = vmatpush1.bf16.msra.mxu0 %v7757
        %7954 = vmatprep.subr.bf16.mxu0 0
        %7955 = vmatpush1.bf16.msra.mxu0 %v7758
        %7956 = vmatprep.subr.bf16.mxu0 0
        %7957 = vmatpush1.bf16.msra.mxu0 %v7759
        %7958 = vmatprep.subr.bf16.mxu0 0
        %7959 = vmatpush1.bf16.msra.mxu0 %v7760
        %7960 = vmatprep.subr.bf16.mxu0 0
        %7961 = vmatpush1.bf16.msra.mxu0 %v7761
        %7962 = vmatprep.subr.bf16.mxu0 0
        %7963 = vmatpush1.bf16.msra.mxu0 %v7762
        %7964 = vmatprep.subr.bf16.mxu0 0
        %7965 = vmatpush1.bf16.msra.mxu0 0
        %7966 = vmatprep.subr.bf16.mxu0 0
        %7967 = vmatpush1.bf16.msra.mxu0 0
        %7968 = vmatprep.subr.bf16.mxu0 0
        %7969 = vmatpush1.bf16.msra.mxu0 0
        %7970 = vmatprep.subr.bf16.mxu0 0
        %7971 = vmatpush1.bf16.msra.mxu0 0
        %7972 = vmatprep.subr.bf16.mxu0 0
        %7973 = vmatpush1.bf16.msra.mxu0 0
        %7974 = vmatprep.subr.bf16.mxu0 0
        %7975 = vmatpush1.bf16.msra.mxu0 0
        %7976 = vmatprep.subr.bf16.mxu0 0
        %7977 = vmatpush1.bf16.msra.mxu0 0
        %7978 = vmatprep.subr.bf16.mxu0 0
        %7979 = vmatpush1.bf16.msra.mxu0 0
        %7980 = vmatprep.mubr.bf16.mxu0 0
        %7981 = vmatmul.mubr.bf16.gmra.mrb[0].mxu0 %v6185
        %v7982 = vpop.f32.mrb[0].mxu0
        %v7983 = vadd.f32 %v7822, %v7982
        %v7984 = vpop.f32.mrb[0].mxu0
        %v7985 = vpop.f32.mrb[0].mxu0
        %v7986 = vadd.f32 %v7825, %v7985
        %v7987 = vpop.f32.mrb[0].mxu0
        %7988 = vmatprep.mubr.bf16.mxu0 0
        %7989 = vmatmul.mubr.bf16.gmra.mrb[0].mxu0 %v6186
        %v7990 = vpop.f32.mrb[0].mxu0
        %v7991 = vadd.f32 %v7830, %v7990
        %v7992 = vpop.f32.mrb[0].mxu0
        %v7993 = vpop.f32.mrb[0].mxu0
        %v7994 = vadd.f32 %v7833, %v7993
        %v7995 = vpop.f32.mrb[0].mxu0
        %7996 = vmatprep.mubr.bf16.mxu0 0
        %7997 = vmatmul.mubr.bf16.gmra.mrb[0].mxu0 %v6187
        %v7998 = vpop.f32.mrb[0].mxu0
        %v7999 = vadd.f32 %v7838, %v7998
        %v8000 = vpop.f32.mrb[0].mxu0
        %v8001 = vpop.f32.mrb[0].mxu0
        %v8002 = vadd.f32 %v7841, %v8001
        %v8003 = vpop.f32.mrb[0].mxu0
        %8004 = vmatprep.mubr.bf16.mxu0 0
        %8005 = vmatmul.mubr.bf16.gmra.mrb[0].mxu0 %v6188
        %v8006 = vpop.f32.mrb[0].mxu0
        %v8007 = vadd.f32 %v7846, %v8006
        %v8008 = vpop.f32.mrb[0].mxu0
        %v8009 = vpop.f32.mrb[0].mxu0
        %v8010 = vadd.f32 %v7849, %v8009
        %v8011 = vpop.f32.mrb[0].mxu0
        %8012 = vmatprep.mubr.bf16.mxu0 0
        %8013 = vmatmul.mubr.bf16.gmra.mrb[0].mxu0 %v6189
        %v8014 = vpop.f32.mrb[0].mxu0
        %v8015 = vadd.f32 %v7854, %v8014
        %v8016 = vpop.f32.mrb[0].mxu0
        %v8017 = vpop.f32.mrb[0].mxu0
        %v8018 = vadd.f32 %v7857, %v8017
        %v8019 = vpop.f32.mrb[0].mxu0
        %8020 = vmatprep.mubr.bf16.mxu0 0
        %8021 = vmatmul.mubr.bf16.gmra.mrb[0].mxu0 %v6190
        %v8022 = vpop.f32.mrb[0].mxu0
        %v8023 = vadd.f32 %v7862, %v8022
        %v8024 = vpop.f32.mrb[0].mxu0
        %v8025 = vpop.f32.mrb[0].mxu0
        %v8026 = vadd.f32 %v7865, %v8025
        %v8027 = vpop.f32.mrb[0].mxu0
        %8028 = vmatprep.mubr.bf16.mxu0 0
        %8029 = vmatmul.mubr.bf16.gmra.mrb[0].mxu0 %v6191
        %v8030 = vpop.f32.mrb[0].mxu0
        %v8031 = vadd.f32 %v7870, %v8030
        %v8032 = vpop.f32.mrb[0].mxu0
        %v8033 = vpop.f32.mrb[0].mxu0
        %v8034 = vadd.f32 %v7873, %v8033
        %v8035 = vpop.f32.mrb[0].mxu0
        %8036 = vmatprep.mubr.bf16.mxu0 0
        %8037 = vmatmul.mubr.bf16.gmra.mrb[0].mxu0 %v6192
        %v8038 = vpop.f32.mrb[0].mxu0
        %v8039 = vadd.f32 %v7878, %v8038
        %v8040 = vpop.f32.mrb[0].mxu0
        %v8041 = vpop.f32.mrb[0].mxu0
        %v8042 = vadd.f32 %v7881, %v8041
        %v8043 = vpop.f32.mrb[0].mxu0
        %8044 = vmatprep.mubr.bf16.mxu0 0
        %8045 = vmatmul.mubr.bf16.gmra.mrb[0].mxu0 %v6193
        %v8046 = vpop.f32.mrb[0].mxu0
        %v8047 = vadd.f32 %v7886, %v8046
        %v8048 = vpop.f32.mrb[0].mxu0
        %v8049 = vpop.f32.mrb[0].mxu0
        %v8050 = vadd.f32 %v7889, %v8049
        %v8051 = vpop.f32.mrb[0].mxu0
        %8052 = vmatprep.mubr.bf16.mxu0 0
        %8053 = vmatmul.mubr.bf16.gmra.mrb[0].mxu0 %v6194
        %v8054 = vpop.f32.mrb[0].mxu0
        %v8055 = vadd.f32 %v7894, %v8054
        %v8056 = vpop.f32.mrb[0].mxu0
        %v8057 = vpop.f32.mrb[0].mxu0
        %v8058 = vadd.f32 %v7897, %v8057
        %v8059 = vpop.f32.mrb[0].mxu0
        %8060 = vmatprep.mubr.bf16.mxu0 0
        %8061 = vmatmul.mubr.bf16.gmra.mrb[0].mxu0 %v6195
        %v8062 = vpop.f32.mrb[0].mxu0
        %v8063 = vadd.f32 %v7902, %v8062
        %v8064 = vpop.f32.mrb[0].mxu0
        %v8065 = vpop.f32.mrb[0].mxu0
        %v8066 = vadd.f32 %v7905, %v8065
        %v8067 = vpop.f32.mrb[0].mxu0
        %8068 = vmatprep.mubr.bf16.mxu0 0
        %8069 = vmatmul.mubr.bf16.gmra.mrb[0].mxu0 %v6196
        %v8070 = vpop.f32.mrb[0].mxu0
        %v8071 = vadd.f32 %v7910, %v8070
        %v8072 = vpop.f32.mrb[0].mxu0
        %v8073 = vpop.f32.mrb[0].mxu0
        %v8074 = vadd.f32 %v7913, %v8073
        %v8075 = vpop.f32.mrb[0].mxu0
        %8076 = vmatprep.mubr.bf16.mxu0 0
        %8077 = vmatmul.mubr.bf16.gmra.mrb[0].mxu0 %v6197
        %v8078 = vpop.f32.mrb[0].mxu0
        %v8079 = vadd.f32 %v7918, %v8078
        %v8080 = vpop.f32.mrb[0].mxu0
        %v8081 = vpop.f32.mrb[0].mxu0
        %v8082 = vadd.f32 %v7921, %v8081
        %v8083 = vpop.f32.mrb[0].mxu0
        %8084 = vmatprep.mubr.bf16.mxu0 0
        %8085 = vmatmul.mubr.bf16.gmra.mrb[0].mxu0 %v6198
        %v8086 = vpop.f32.mrb[0].mxu0
        %v8087 = vadd.f32 %v7926, %v8086
        %v8088 = vpop.f32.mrb[0].mxu0
        %v8089 = vpop.f32.mrb[0].mxu0
        %v8090 = vadd.f32 %v7929, %v8089
        %v8091 = vpop.f32.mrb[0].mxu0
        %8092 = vmatprep.mubr.bf16.mxu0 0
        %8093 = vmatmul.mubr.bf16.gmra.mrb[0].mxu0 %v6199
        %v8094 = vpop.f32.mrb[0].mxu0
        %v8095 = vadd.f32 %v7934, %v8094
        %v8096 = vpop.f32.mrb[0].mxu0
        %v8097 = vpop.f32.mrb[0].mxu0
        %v8098 = vadd.f32 %v7937, %v8097
        %v8099 = vpop.f32.mrb[0].mxu0
        %8100 = vmatprep.mubr.bf16.mxu0 0
        %8101 = vmatmul.mubr.bf16.gmra.mrb[0].mxu0 %v6200
        %v8102 = vpop.f32.mrb[0].mxu0
        %v8103 = vadd.f32 %v7942, %v8102
        %v8104 = vpop.f32.mrb[0].mxu0
        %v8105 = vpop.f32.mrb[0].mxu0
        %v8106 = vadd.f32 %v7945, %v8105
        %v8107 = vpop.f32.mrb[0].mxu0
        %8108 = vdwg.mxu0
        %v8109 = vld [vmem:[%s3551 + $0x4] sm:$0x8]
        %v8110 = vld [vmem:[%s3551 + $0x8] sm:$0xf]
        %v8111 = vld [vmem:[%s3551 + $0xc] sm:$0xf]
        %v8112 = vld [vmem:[%s3551 + $0x18] sm:$0x8]
        %v8113 = vld [vmem:[%s3551 + $0x1c] sm:$0xf]
        %v8114 = vld [vmem:[%s3551 + $0x20] sm:$0xf]
        %v8115 = vld [vmem:[%s3551 + $0x2c] sm:$0x8]
        %v8116 = vld [vmem:[%s3551 + $0x30] sm:$0xf]
        %v8117 = vld [vmem:[%s3551 + $0x34] sm:$0xf]
        %v8118 = vld [vmem:[%s3551 + $0x40] sm:$0x8]
        %v8119 = vld [vmem:[%s3551 + $0x44] sm:$0xf]
        %v8120 = vld [vmem:[%s3551 + $0x48] sm:$0xf]
        %v8121 = vld [vmem:[%s3551 + $0x54] sm:$0x8]
        %v8122 = vld [vmem:[%s3551 + $0x58] sm:$0xf]
        %v8123 = vld [vmem:[%s3551 + $0x5c] sm:$0xf]
        %v8124 = vld [vmem:[%s3551 + $0x68] sm:$0x8]
        %v8125 = vld [vmem:[%s3551 + $0x6c] sm:$0xf]
        %v8126 = vld [vmem:[%s3551 + $0x70] sm:$0xf]
        %v8127 = vld [vmem:[%s3551 + $0x7c] sm:$0x8]
        %v8128 = vld [vmem:[%s3551 + $0x80] sm:$0xf]
        %v8129 = vld [vmem:[%s3551 + $0x84] sm:$0xf]
        %v8130 = vld [vmem:[%s3551 + $0x90] sm:$0x8]
        %v8131 = vld [vmem:[%s3551 + $0x94] sm:$0xf]
        %v8132 = vld [vmem:[%s3551 + $0x98] sm:$0xf]
        %v8133 = vld [vmem:[%s3551 + $0xa4] sm:$0x8]
        %v8134 = vld [vmem:[%s3551 + $0xa8] sm:$0xf]
        %v8135 = vld [vmem:[%s3551 + $0xac] sm:$0xf]
        %v8136 = vld [vmem:[%s3551 + $0xb8] sm:$0x8]
        %v8137 = vld [vmem:[%s3551 + $0xbc] sm:$0xf]
        %v8138 = vld [vmem:[%s3551 + $0xc0] sm:$0xf]
        %v8139 = vld [vmem:[%s3551 + $0xcc] sm:$0x8]
        %v8140 = vld [vmem:[%s3551 + $0xd0] sm:$0xf]
        %v8141 = vld [vmem:[%s3551 + $0xd4] sm:$0xf]
        %v8142 = vld [vmem:[%s3551 + $0xe0] sm:$0x8]
        %v8143 = vld [vmem:[%s3551 + $0xe4] sm:$0xf]
        %v8144 = vld [vmem:[%s3551 + $0xe8] sm:$0xf]
        %v8145 = vld [vmem:[%s3551 + $0xf4] sm:$0x8]
        %v8146 = vld [vmem:[%s3551 + $0xf8] sm:$0xf]
        %v8147 = vld [vmem:[%s3551 + $0xfc] sm:$0xf]
        %v8148 = vld [vmem:[%s3551 + $0x108] sm:$0x8]
        %v8149 = vld [vmem:[%s3551 + $0x10c] sm:$0xf]
        %v8150 = vld [vmem:[%s3551 + $0x110] sm:$0xf]
        %v8151 = vld [vmem:[%s3551 + $0x11c] sm:$0x8]
        %v8152 = vld [vmem:[%s3551 + $0x120] sm:$0xf]
        %v8153 = vld [vmem:[%s3551 + $0x124] sm:$0xf]
        %v8154 = vld [vmem:[%s3551 + $0x130] sm:$0x8]
        %v8155 = vld [vmem:[%s3551 + $0x134] sm:$0xf]
        %v8156 = vld [vmem:[%s3551 + $0x138] sm:$0xf]
        %v8158 = vshrl.u32 %v8109, 16
        %v8160 = vrot.slane %v8158, 7
        %v8161 = vrot.slane %v8160, 4
        %v8163 = vshrl.u32 %v8110, 16
        %v8165 = vrot.slane %v8163, 7
        %v8166 = vshll.u32 %v8110, 16
        %v8168 = vor.u32 %v8165, %v8166
        %v8169 = vsel %vm839, %v8161, %v8168
        %v8170 = vrot.slane %v8165, 4
        %v8172 = vshrl.u32 %v8111, 16
        %v8174 = vrot.slane %v8172, 7
        %v8175 = vshll.u32 %v8111, 16
        %v8177 = vor.u32 %v8174, %v8175
        %v8178 = vsel %vm839, %v8170, %v8177
        %v8180 = vshrl.u32 %v8112, 16
        %v8182 = vrot.slane %v8180, 7
        %v8183 = vrot.slane %v8182, 4
        %v8185 = vshrl.u32 %v8113, 16
        %v8187 = vrot.slane %v8185, 7
        %v8188 = vshll.u32 %v8113, 16
        %v8190 = vor.u32 %v8187, %v8188
        %v8191 = vsel %vm839, %v8183, %v8190
        %v8192 = vrot.slane %v8187, 4
        %v8194 = vshrl.u32 %v8114, 16
        %v8196 = vrot.slane %v8194, 7
        %v8197 = vshll.u32 %v8114, 16
        %v8199 = vor.u32 %v8196, %v8197
        %v8200 = vsel %vm839, %v8192, %v8199
        %v8202 = vshrl.u32 %v8115, 16
        %v8204 = vrot.slane %v8202, 7
        %v8205 = vrot.slane %v8204, 4
        %v8207 = vshrl.u32 %v8116, 16
        %v8209 = vrot.slane %v8207, 7
        %v8210 = vshll.u32 %v8116, 16
        %v8212 = vor.u32 %v8209, %v8210
        %v8213 = vsel %vm839, %v8205, %v8212
        %v8214 = vrot.slane %v8209, 4
        %v8216 = vshrl.u32 %v8117, 16
        %v8218 = vrot.slane %v8216, 7
        %v8219 = vshll.u32 %v8117, 16
        %v8221 = vor.u32 %v8218, %v8219
        %v8222 = vsel %vm839, %v8214, %v8221
        %v8224 = vshrl.u32 %v8118, 16
        %v8226 = vrot.slane %v8224, 7
        %v8227 = vrot.slane %v8226, 4
        %v8229 = vshrl.u32 %v8119, 16
        %v8231 = vrot.slane %v8229, 7
        %v8232 = vshll.u32 %v8119, 16
        %v8234 = vor.u32 %v8231, %v8232
        %v8235 = vsel %vm839, %v8227, %v8234
        %v8236 = vrot.slane %v8231, 4
        %v8238 = vshrl.u32 %v8120, 16
        %v8240 = vrot.slane %v8238, 7
        %v8241 = vshll.u32 %v8120, 16
        %v8243 = vor.u32 %v8240, %v8241
        %v8244 = vsel %vm839, %v8236, %v8243
        %v8246 = vshrl.u32 %v8121, 16
        %v8248 = vrot.slane %v8246, 7
        %v8249 = vrot.slane %v8248, 4
        %v8251 = vshrl.u32 %v8122, 16
        %v8253 = vrot.slane %v8251, 7
        %v8254 = vshll.u32 %v8122, 16
        %v8256 = vor.u32 %v8253, %v8254
        %v8257 = vsel %vm839, %v8249, %v8256
        %v8258 = vrot.slane %v8253, 4
        %v8260 = vshrl.u32 %v8123, 16
        %v8262 = vrot.slane %v8260, 7
        %v8263 = vshll.u32 %v8123, 16
        %v8265 = vor.u32 %v8262, %v8263
        %v8266 = vsel %vm839, %v8258, %v8265
        %v8268 = vshrl.u32 %v8124, 16
        %v8270 = vrot.slane %v8268, 7
        %v8271 = vrot.slane %v8270, 4
        %v8273 = vshrl.u32 %v8125, 16
        %v8275 = vrot.slane %v8273, 7
        %v8276 = vshll.u32 %v8125, 16
        %v8278 = vor.u32 %v8275, %v8276
        %v8279 = vsel %vm839, %v8271, %v8278
        %v8280 = vrot.slane %v8275, 4
        %v8282 = vshrl.u32 %v8126, 16
        %v8284 = vrot.slane %v8282, 7
        %v8285 = vshll.u32 %v8126, 16
        %v8287 = vor.u32 %v8284, %v8285
        %v8288 = vsel %vm839, %v8280, %v8287
        %v8290 = vshrl.u32 %v8127, 16
        %v8292 = vrot.slane %v8290, 7
        %v8293 = vrot.slane %v8292, 4
        %v8295 = vshrl.u32 %v8128, 16
        %v8297 = vrot.slane %v8295, 7
        %v8298 = vshll.u32 %v8128, 16
        %v8300 = vor.u32 %v8297, %v8298
        %v8301 = vsel %vm839, %v8293, %v8300
        %v8302 = vrot.slane %v8297, 4
        %v8304 = vshrl.u32 %v8129, 16
        %v8306 = vrot.slane %v8304, 7
        %v8307 = vshll.u32 %v8129, 16
        %v8309 = vor.u32 %v8306, %v8307
        %v8310 = vsel %vm839, %v8302, %v8309
        %v8312 = vshrl.u32 %v8130, 16
        %v8314 = vrot.slane %v8312, 7
        %v8315 = vrot.slane %v8314, 4
        %v8317 = vshrl.u32 %v8131, 16
        %v8319 = vrot.slane %v8317, 7
        %v8320 = vshll.u32 %v8131, 16
        %v8322 = vor.u32 %v8319, %v8320
        %v8323 = vsel %vm839, %v8315, %v8322
        %v8324 = vrot.slane %v8319, 4
        %v8326 = vshrl.u32 %v8132, 16
        %v8328 = vrot.slane %v8326, 7
        %v8329 = vshll.u32 %v8132, 16
        %v8331 = vor.u32 %v8328, %v8329
        %v8332 = vsel %vm839, %v8324, %v8331
        %v8334 = vshrl.u32 %v8133, 16
        %v8336 = vrot.slane %v8334, 7
        %v8337 = vrot.slane %v8336, 4
        %v8339 = vshrl.u32 %v8134, 16
        %v8341 = vrot.slane %v8339, 7
        %v8342 = vshll.u32 %v8134, 16
        %v8344 = vor.u32 %v8341, %v8342
        %v8345 = vsel %vm839, %v8337, %v8344
        %v8346 = vrot.slane %v8341, 4
        %v8348 = vshrl.u32 %v8135, 16
        %v8350 = vrot.slane %v8348, 7
        %v8351 = vshll.u32 %v8135, 16
        %v8353 = vor.u32 %v8350, %v8351
        %v8354 = vsel %vm839, %v8346, %v8353
        %v8356 = vshrl.u32 %v8136, 16
        %v8358 = vrot.slane %v8356, 7
        %v8359 = vrot.slane %v8358, 4
        %v8361 = vshrl.u32 %v8137, 16
        %v8363 = vrot.slane %v8361, 7
        %v8364 = vshll.u32 %v8137, 16
        %v8366 = vor.u32 %v8363, %v8364
        %v8367 = vsel %vm839, %v8359, %v8366
        %v8368 = vrot.slane %v8363, 4
        %v8370 = vshrl.u32 %v8138, 16
        %v8372 = vrot.slane %v8370, 7
        %v8373 = vshll.u32 %v8138, 16
        %v8375 = vor.u32 %v8372, %v8373
        %v8376 = vsel %vm839, %v8368, %v8375
        %v8378 = vshrl.u32 %v8139, 16
        %v8380 = vrot.slane %v8378, 7
        %v8381 = vrot.slane %v8380, 4
        %v8383 = vshrl.u32 %v8140, 16
        %v8385 = vrot.slane %v8383, 7
        %v8386 = vshll.u32 %v8140, 16
        %v8388 = vor.u32 %v8385, %v8386
        %v8389 = vsel %vm839, %v8381, %v8388
        %v8390 = vrot.slane %v8385, 4
        %v8392 = vshrl.u32 %v8141, 16
        %v8394 = vrot.slane %v8392, 7
        %v8395 = vshll.u32 %v8141, 16
        %v8397 = vor.u32 %v8394, %v8395
        %v8398 = vsel %vm839, %v8390, %v8397
        %v8400 = vshrl.u32 %v8142, 16
        %v8402 = vrot.slane %v8400, 7
        %v8403 = vrot.slane %v8402, 4
        %v8405 = vshrl.u32 %v8143, 16
        %v8407 = vrot.slane %v8405, 7
        %v8408 = vshll.u32 %v8143, 16
        %v8410 = vor.u32 %v8407, %v8408
        %v8411 = vsel %vm839, %v8403, %v8410
        %v8412 = vrot.slane %v8407, 4
        %v8414 = vshrl.u32 %v8144, 16
        %v8416 = vrot.slane %v8414, 7
        %v8417 = vshll.u32 %v8144, 16
        %v8419 = vor.u32 %v8416, %v8417
        %v8420 = vsel %vm839, %v8412, %v8419
        %v8422 = vshrl.u32 %v8145, 16
        %v8424 = vrot.slane %v8422, 7
        %v8425 = vrot.slane %v8424, 4
        %v8427 = vshrl.u32 %v8146, 16
        %v8429 = vrot.slane %v8427, 7
        %v8430 = vshll.u32 %v8146, 16
        %v8432 = vor.u32 %v8429, %v8430
        %v8433 = vsel %vm839, %v8425, %v8432
        %v8434 = vrot.slane %v8429, 4
        %v8436 = vshrl.u32 %v8147, 16
        %v8438 = vrot.slane %v8436, 7
        %v8439 = vshll.u32 %v8147, 16
        %v8441 = vor.u32 %v8438, %v8439
        %v8442 = vsel %vm839, %v8434, %v8441
        %v8444 = vshrl.u32 %v8148, 16
        %v8446 = vrot.slane %v8444, 7
        %v8447 = vrot.slane %v8446, 4
        %v8449 = vshrl.u32 %v8149, 16
        %v8451 = vrot.slane %v8449, 7
        %v8452 = vshll.u32 %v8149, 16
        %v8454 = vor.u32 %v8451, %v8452
        %v8455 = vsel %vm839, %v8447, %v8454
        %v8456 = vrot.slane %v8451, 4
        %v8458 = vshrl.u32 %v8150, 16
        %v8460 = vrot.slane %v8458, 7
        %v8461 = vshll.u32 %v8150, 16
        %v8463 = vor.u32 %v8460, %v8461
        %v8464 = vsel %vm839, %v8456, %v8463
        %v8466 = vshrl.u32 %v8151, 16
        %v8468 = vrot.slane %v8466, 7
        %v8469 = vrot.slane %v8468, 4
        %v8471 = vshrl.u32 %v8152, 16
        %v8473 = vrot.slane %v8471, 7
        %v8474 = vshll.u32 %v8152, 16
        %v8476 = vor.u32 %v8473, %v8474
        %v8477 = vsel %vm839, %v8469, %v8476
        %v8478 = vrot.slane %v8473, 4
        %v8480 = vshrl.u32 %v8153, 16
        %v8482 = vrot.slane %v8480, 7
        %v8483 = vshll.u32 %v8153, 16
        %v8485 = vor.u32 %v8482, %v8483
        %v8486 = vsel %vm839, %v8478, %v8485
        %v8488 = vshrl.u32 %v8154, 16
        %v8490 = vrot.slane %v8488, 7
        %v8491 = vrot.slane %v8490, 4
        %v8493 = vshrl.u32 %v8155, 16
        %v8495 = vrot.slane %v8493, 7
        %v8496 = vshll.u32 %v8155, 16
        %v8498 = vor.u32 %v8495, %v8496
        %v8499 = vsel %vm839, %v8491, %v8498
        %v8500 = vrot.slane %v8495, 4
        %v8502 = vshrl.u32 %v8156, 16
        %v8504 = vrot.slane %v8502, 7
        %v8505 = vshll.u32 %v8156, 16
        %v8507 = vor.u32 %v8504, %v8505
        %v8508 = vsel %vm839, %v8500, %v8507
        %v8509 = vld [vmem:[%s3551 + $0x10] sm:$0x1]
        %v8510 = vld [vmem:[%s3551 + $0x24] sm:$0x1]
        %v8511 = vld [vmem:[%s3551 + $0x38] sm:$0x1]
        %v8512 = vld [vmem:[%s3551 + $0x4c] sm:$0x1]
        %v8513 = vld [vmem:[%s3551 + $0x60] sm:$0x1]
        %v8514 = vld [vmem:[%s3551 + $0x74] sm:$0x1]
        %v8515 = vld [vmem:[%s3551 + $0x88] sm:$0x1]
        %v8516 = vld [vmem:[%s3551 + $0x9c] sm:$0x1]
        %v8517 = vld [vmem:[%s3551 + $0xb0] sm:$0x1]
        %v8518 = vld [vmem:[%s3551 + $0xc4] sm:$0x1]
        %v8519 = vld [vmem:[%s3551 + $0xd8] sm:$0x1]
        %v8520 = vld [vmem:[%s3551 + $0xec] sm:$0x1]
        %v8521 = vld [vmem:[%s3551 + $0x100] sm:$0x1]
        %v8522 = vld [vmem:[%s3551 + $0x114] sm:$0x1]
        %v8523 = vld [vmem:[%s3551 + $0x128] sm:$0x1]
        %v8524 = vld [vmem:[%s3551 + $0x13c] sm:$0x1]
        %v8525 = vrot.slane %v8163, 4
        %v8526 = vrot.slane %v8166, 5
        %v8527 = vor.u32 %v8525, %v8526
        %v8528 = vrot.slane %v8527, 4
        %v8529 = vrot.slane %v8175, 5
        %v8530 = vsel %vm1210, %v8528, %v8529
        %v8531 = vrot.slane %v8172, 4
        %v8532 = vor.u32 %v8531, %v8529
        %v8533 = vrot.slane %v8532, 4
        %v8535 = vshll.u32 %v8509, 16
        %v8537 = vrot.slane %v8535, 5
        %v8538 = vsel %vm1210, %v8533, %v8537
        %v8539 = vrot.slane %v8185, 4
        %v8540 = vrot.slane %v8188, 5
        %v8541 = vor.u32 %v8539, %v8540
        %v8542 = vrot.slane %v8541, 4
        %v8543 = vrot.slane %v8197, 5
        %v8544 = vsel %vm1210, %v8542, %v8543
        %v8545 = vrot.slane %v8194, 4
        %v8546 = vor.u32 %v8545, %v8543
        %v8547 = vrot.slane %v8546, 4
        %v8549 = vshll.u32 %v8510, 16
        %v8551 = vrot.slane %v8549, 5
        %v8552 = vsel %vm1210, %v8547, %v8551
        %v8553 = vrot.slane %v8207, 4
        %v8554 = vrot.slane %v8210, 5
        %v8555 = vor.u32 %v8553, %v8554
        %v8556 = vrot.slane %v8555, 4
        %v8557 = vrot.slane %v8219, 5
        %v8558 = vsel %vm1210, %v8556, %v8557
        %v8559 = vrot.slane %v8216, 4
        %v8560 = vor.u32 %v8559, %v8557
        %v8561 = vrot.slane %v8560, 4
        %v8563 = vshll.u32 %v8511, 16
        %v8565 = vrot.slane %v8563, 5
        %v8566 = vsel %vm1210, %v8561, %v8565
        %v8567 = vrot.slane %v8229, 4
        %v8568 = vrot.slane %v8232, 5
        %v8569 = vor.u32 %v8567, %v8568
        %v8570 = vrot.slane %v8569, 4
        %v8571 = vrot.slane %v8241, 5
        %v8572 = vsel %vm1210, %v8570, %v8571
        %v8573 = vrot.slane %v8238, 4
        %v8574 = vor.u32 %v8573, %v8571
        %v8575 = vrot.slane %v8574, 4
        %v8577 = vshll.u32 %v8512, 16
        %v8579 = vrot.slane %v8577, 5
        %v8580 = vsel %vm1210, %v8575, %v8579
        %v8581 = vrot.slane %v8251, 4
        %v8582 = vrot.slane %v8254, 5
        %v8583 = vor.u32 %v8581, %v8582
        %v8584 = vrot.slane %v8583, 4
        %v8585 = vrot.slane %v8263, 5
        %v8586 = vsel %vm1210, %v8584, %v8585
        %v8587 = vrot.slane %v8260, 4
        %v8588 = vor.u32 %v8587, %v8585
        %v8589 = vrot.slane %v8588, 4
        %v8591 = vshll.u32 %v8513, 16
        %v8593 = vrot.slane %v8591, 5
        %v8594 = vsel %vm1210, %v8589, %v8593
        %v8595 = vrot.slane %v8273, 4
        %v8596 = vrot.slane %v8276, 5
        %v8597 = vor.u32 %v8595, %v8596
        %v8598 = vrot.slane %v8597, 4
        %v8599 = vrot.slane %v8285, 5
        %v8600 = vsel %vm1210, %v8598, %v8599
        %v8601 = vrot.slane %v8282, 4
        %v8602 = vor.u32 %v8601, %v8599
        %v8603 = vrot.slane %v8602, 4
        %v8605 = vshll.u32 %v8514, 16
        %v8607 = vrot.slane %v8605, 5
        %v8608 = vsel %vm1210, %v8603, %v8607
        %v8609 = vrot.slane %v8295, 4
        %v8610 = vrot.slane %v8298, 5
        %v8611 = vor.u32 %v8609, %v8610
        %v8612 = vrot.slane %v8611, 4
        %v8613 = vrot.slane %v8307, 5
        %v8614 = vsel %vm1210, %v8612, %v8613
        %v8615 = vrot.slane %v8304, 4
        %v8616 = vor.u32 %v8615, %v8613
        %v8617 = vrot.slane %v8616, 4
        %v8619 = vshll.u32 %v8515, 16
        %v8621 = vrot.slane %v8619, 5
        %v8622 = vsel %vm1210, %v8617, %v8621
        %v8623 = vrot.slane %v8317, 4
        %v8624 = vrot.slane %v8320, 5
        %v8625 = vor.u32 %v8623, %v8624
        %v8626 = vrot.slane %v8625, 4
        %v8627 = vrot.slane %v8329, 5
        %v8628 = vsel %vm1210, %v8626, %v8627
        %v8629 = vrot.slane %v8326, 4
        %v8630 = vor.u32 %v8629, %v8627
        %v8631 = vrot.slane %v8630, 4
        %v8633 = vshll.u32 %v8516, 16
        %v8635 = vrot.slane %v8633, 5
        %v8636 = vsel %vm1210, %v8631, %v8635
        %v8637 = vrot.slane %v8339, 4
        %v8638 = vrot.slane %v8342, 5
        %v8639 = vor.u32 %v8637, %v8638
        %v8640 = vrot.slane %v8639, 4
        %v8641 = vrot.slane %v8351, 5
        %v8642 = vsel %vm1210, %v8640, %v8641
        %v8643 = vrot.slane %v8348, 4
        %v8644 = vor.u32 %v8643, %v8641
        %v8645 = vrot.slane %v8644, 4
        %v8647 = vshll.u32 %v8517, 16
        %v8649 = vrot.slane %v8647, 5
        %v8650 = vsel %vm1210, %v8645, %v8649
        %v8651 = vrot.slane %v8361, 4
        %v8652 = vrot.slane %v8364, 5
        %v8653 = vor.u32 %v8651, %v8652
        %v8654 = vrot.slane %v8653, 4
        %v8655 = vrot.slane %v8373, 5
        %v8656 = vsel %vm1210, %v8654, %v8655
        %v8657 = vrot.slane %v8370, 4
        %v8658 = vor.u32 %v8657, %v8655
        %v8659 = vrot.slane %v8658, 4
        %v8661 = vshll.u32 %v8518, 16
        %v8663 = vrot.slane %v8661, 5
        %v8664 = vsel %vm1210, %v8659, %v8663
        %v8665 = vrot.slane %v8383, 4
        %v8666 = vrot.slane %v8386, 5
        %v8667 = vor.u32 %v8665, %v8666
        %v8668 = vrot.slane %v8667, 4
        %v8669 = vrot.slane %v8395, 5
        %v8670 = vsel %vm1210, %v8668, %v8669
        %v8671 = vrot.slane %v8392, 4
        %v8672 = vor.u32 %v8671, %v8669
        %v8673 = vrot.slane %v8672, 4
        %v8675 = vshll.u32 %v8519, 16
        %v8677 = vrot.slane %v8675, 5
        %v8678 = vsel %vm1210, %v8673, %v8677
        %v8679 = vrot.slane %v8405, 4
        %v8680 = vrot.slane %v8408, 5
        %v8681 = vor.u32 %v8679, %v8680
        %v8682 = vrot.slane %v8681, 4
        %v8683 = vrot.slane %v8417, 5
        %v8684 = vsel %vm1210, %v8682, %v8683
        %v8685 = vrot.slane %v8414, 4
        %v8686 = vor.u32 %v8685, %v8683
        %v8687 = vrot.slane %v8686, 4
        %v8689 = vshll.u32 %v8520, 16
        %v8691 = vrot.slane %v8689, 5
        %v8692 = vsel %vm1210, %v8687, %v8691
        %v8693 = vrot.slane %v8427, 4
        %v8694 = vrot.slane %v8430, 5
        %v8695 = vor.u32 %v8693, %v8694
        %v8696 = vrot.slane %v8695, 4
        %v8697 = vrot.slane %v8439, 5
        %v8698 = vsel %vm1210, %v8696, %v8697
        %v8699 = vrot.slane %v8436, 4
        %v8700 = vor.u32 %v8699, %v8697
        %v8701 = vrot.slane %v8700, 4
        %v8703 = vshll.u32 %v8521, 16
        %v8705 = vrot.slane %v8703, 5
        %v8706 = vsel %vm1210, %v8701, %v8705
        %v8707 = vrot.slane %v8449, 4
        %v8708 = vrot.slane %v8452, 5
        %v8709 = vor.u32 %v8707, %v8708
        %v8710 = vrot.slane %v8709, 4
        %v8711 = vrot.slane %v8461, 5
        %v8712 = vsel %vm1210, %v8710, %v8711
        %v8713 = vrot.slane %v8458, 4
        %v8714 = vor.u32 %v8713, %v8711
        %v8715 = vrot.slane %v8714, 4
        %v8717 = vshll.u32 %v8522, 16
        %v8719 = vrot.slane %v8717, 5
        %v8720 = vsel %vm1210, %v8715, %v8719
        %v8721 = vrot.slane %v8471, 4
        %v8722 = vrot.slane %v8474, 5
        %v8723 = vor.u32 %v8721, %v8722
        %v8724 = vrot.slane %v8723, 4
        %v8725 = vrot.slane %v8483, 5
        %v8726 = vsel %vm1210, %v8724, %v8725
        %v8727 = vrot.slane %v8480, 4
        %v8728 = vor.u32 %v8727, %v8725
        %v8729 = vrot.slane %v8728, 4
        %v8731 = vshll.u32 %v8523, 16
        %v8733 = vrot.slane %v8731, 5
        %v8734 = vsel %vm1210, %v8729, %v8733
        %v8735 = vrot.slane %v8493, 4
        %v8736 = vrot.slane %v8496, 5
        %v8737 = vor.u32 %v8735, %v8736
        %v8738 = vrot.slane %v8737, 4
        %v8739 = vrot.slane %v8505, 5
        %v8740 = vsel %vm1210, %v8738, %v8739
        %v8741 = vrot.slane %v8502, 4
        %v8742 = vor.u32 %v8741, %v8739
        %v8743 = vrot.slane %v8742, 4
        %v8745 = vshll.u32 %v8524, 16
        %v8747 = vrot.slane %v8745, 5
        %v8748 = vsel %vm1210, %v8743, %v8747
        %v8749 = vunpack.c.l.b16 %v8169
        %v8750 = vunpack.c.l.b16 %v8178
        %v8751 = vunpack.c.l.b16 %v8191
        %v8752 = vunpack.c.l.b16 %v8200
        %v8753 = vunpack.c.l.b16 %v8213
        %v8754 = vunpack.c.l.b16 %v8222
        %v8755 = vunpack.c.l.b16 %v8235
        %v8756 = vunpack.c.l.b16 %v8244
        %v8757 = vunpack.c.l.b16 %v8257
        %v8758 = vunpack.c.l.b16 %v8266
        %v8759 = vunpack.c.l.b16 %v8279
        %v8760 = vunpack.c.l.b16 %v8288
        %v8761 = vunpack.c.l.b16 %v8301
        %v8762 = vunpack.c.l.b16 %v8310
        %v8763 = vunpack.c.l.b16 %v8323
        %v8764 = vunpack.c.l.b16 %v8332
        %v8765 = vunpack.c.l.b16 %v8345
        %v8766 = vunpack.c.l.b16 %v8354
        %v8767 = vunpack.c.l.b16 %v8367
        %v8768 = vunpack.c.l.b16 %v8376
        %v8769 = vunpack.c.l.b16 %v8389
        %v8770 = vunpack.c.l.b16 %v8398
        %v8771 = vunpack.c.l.b16 %v8411
        %v8772 = vunpack.c.l.b16 %v8420
        %v8773 = vunpack.c.l.b16 %v8433
        %v8774 = vunpack.c.l.b16 %v8442
        %v8775 = vunpack.c.l.b16 %v8455
        %v8776 = vunpack.c.l.b16 %v8464
        %v8777 = vunpack.c.l.b16 %v8477
        %v8778 = vunpack.c.l.b16 %v8486
        %v8779 = vunpack.c.l.b16 %v8499
        %v8780 = vunpack.c.l.b16 %v8508
        %v8781 = vpack.c.b16 %v8750, %v8749
        %v8782 = vpack.c.b16 %v8752, %v8751
        %v8783 = vpack.c.b16 %v8754, %v8753
        %v8784 = vpack.c.b16 %v8756, %v8755
        %v8785 = vpack.c.b16 %v8758, %v8757
        %v8786 = vpack.c.b16 %v8760, %v8759
        %v8787 = vpack.c.b16 %v8762, %v8761
        %v8788 = vpack.c.b16 %v8764, %v8763
        %v8789 = vpack.c.b16 %v8766, %v8765
        %v8790 = vpack.c.b16 %v8768, %v8767
        %v8791 = vpack.c.b16 %v8770, %v8769
        %v8792 = vpack.c.b16 %v8772, %v8771
        %v8793 = vpack.c.b16 %v8774, %v8773
        %v8794 = vpack.c.b16 %v8776, %v8775
        %v8795 = vpack.c.b16 %v8778, %v8777
        %v8796 = vpack.c.b16 %v8780, %v8779
        %v8845 = vunpack.c.l.b16 %v8110
        %v8846 = vunpack.c.l.b16 %v8111
        %v8847 = vunpack.c.l.b16 %v8113
        %v8848 = vunpack.c.l.b16 %v8114
        %v8849 = vunpack.c.l.b16 %v8116
        %v8850 = vunpack.c.l.b16 %v8117
        %v8851 = vunpack.c.l.b16 %v8119
        %v8852 = vunpack.c.l.b16 %v8120
        %v8853 = vunpack.c.l.b16 %v8122
        %v8854 = vunpack.c.l.b16 %v8123
        %v8855 = vunpack.c.l.b16 %v8125
        %v8856 = vunpack.c.l.b16 %v8126
        %v8857 = vunpack.c.l.b16 %v8128
        %v8858 = vunpack.c.l.b16 %v8129
        %v8859 = vunpack.c.l.b16 %v8131
        %v8860 = vunpack.c.l.b16 %v8132
        %v8861 = vunpack.c.l.b16 %v8134
        %v8862 = vunpack.c.l.b16 %v8135
        %v8863 = vunpack.c.l.b16 %v8137
        %v8864 = vunpack.c.l.b16 %v8138
        %v8865 = vunpack.c.l.b16 %v8140
        %v8866 = vunpack.c.l.b16 %v8141
        %v8867 = vunpack.c.l.b16 %v8143
        %v8868 = vunpack.c.l.b16 %v8144
        %v8869 = vunpack.c.l.b16 %v8146
        %v8870 = vunpack.c.l.b16 %v8147
        %v8871 = vunpack.c.l.b16 %v8149
        %v8872 = vunpack.c.l.b16 %v8150
        %v8873 = vunpack.c.l.b16 %v8152
        %v8874 = vunpack.c.l.b16 %v8153
        %v8875 = vunpack.c.l.b16 %v8155
        %v8876 = vunpack.c.l.b16 %v8156
        %v8877 = vpack.c.b16 %v8846, %v8845
        %v8878 = vpack.c.b16 %v8848, %v8847
        %v8879 = vpack.c.b16 %v8850, %v8849
        %v8880 = vpack.c.b16 %v8852, %v8851
        %v8881 = vpack.c.b16 %v8854, %v8853
        %v8882 = vpack.c.b16 %v8856, %v8855
        %v8883 = vpack.c.b16 %v8858, %v8857
        %v8884 = vpack.c.b16 %v8860, %v8859
        %v8885 = vpack.c.b16 %v8862, %v8861
        %v8886 = vpack.c.b16 %v8864, %v8863
        %v8887 = vpack.c.b16 %v8866, %v8865
        %v8888 = vpack.c.b16 %v8868, %v8867
        %v8889 = vpack.c.b16 %v8870, %v8869
        %v8890 = vpack.c.b16 %v8872, %v8871
        %v8891 = vpack.c.b16 %v8874, %v8873
        %v8892 = vpack.c.b16 %v8876, %v8875
        %v8909 = vunpack.c.l.b16 %v8530
        %v8910 = vunpack.c.l.b16 %v8538
        %v8911 = vunpack.c.l.b16 %v8544
        %v8912 = vunpack.c.l.b16 %v8552
        %v8913 = vunpack.c.l.b16 %v8558
        %v8914 = vunpack.c.l.b16 %v8566
        %v8915 = vunpack.c.l.b16 %v8572
        %v8916 = vunpack.c.l.b16 %v8580
        %v8917 = vunpack.c.l.b16 %v8586
        %v8918 = vunpack.c.l.b16 %v8594
        %v8919 = vunpack.c.l.b16 %v8600
        %v8920 = vunpack.c.l.b16 %v8608
        %v8921 = vunpack.c.l.b16 %v8614
        %v8922 = vunpack.c.l.b16 %v8622
        %v8923 = vunpack.c.l.b16 %v8628
        %v8924 = vunpack.c.l.b16 %v8636
        %v8925 = vunpack.c.l.b16 %v8642
        %v8926 = vunpack.c.l.b16 %v8650
        %v8927 = vunpack.c.l.b16 %v8656
        %v8928 = vunpack.c.l.b16 %v8664
        %v8929 = vunpack.c.l.b16 %v8670
        %v8930 = vunpack.c.l.b16 %v8678
        %v8931 = vunpack.c.l.b16 %v8684
        %v8932 = vunpack.c.l.b16 %v8692
        %v8933 = vunpack.c.l.b16 %v8698
        %v8934 = vunpack.c.l.b16 %v8706
        %v8935 = vunpack.c.l.b16 %v8712
        %v8936 = vunpack.c.l.b16 %v8720
        %v8937 = vunpack.c.l.b16 %v8726
        %v8938 = vunpack.c.l.b16 %v8734
        %v8939 = vunpack.c.l.b16 %v8740
        %v8940 = vunpack.c.l.b16 %v8748
        %v8941 = vpack.c.b16 %v8910, %v8909
        %v8942 = vpack.c.b16 %v8912, %v8911
        %v8943 = vpack.c.b16 %v8914, %v8913
        %v8944 = vpack.c.b16 %v8916, %v8915
        %v8945 = vpack.c.b16 %v8918, %v8917
        %v8946 = vpack.c.b16 %v8920, %v8919
        %v8947 = vpack.c.b16 %v8922, %v8921
        %v8948 = vpack.c.b16 %v8924, %v8923
        %v8949 = vpack.c.b16 %v8926, %v8925
        %v8950 = vpack.c.b16 %v8928, %v8927
        %v8951 = vpack.c.b16 %v8930, %v8929
        %v8952 = vpack.c.b16 %v8932, %v8931
        %v8953 = vpack.c.b16 %v8934, %v8933
        %v8954 = vpack.c.b16 %v8936, %v8935
        %v8955 = vpack.c.b16 %v8938, %v8937
        %v8956 = vpack.c.b16 %v8940, %v8939
        %v8973 = vld [vmem:[#allocation8 + $0x180] sm:$0xf]
        %v8974 = vld [vmem:[#allocation8 + $0x184] sm:$0xf]
        %v8975 = vld [vmem:[#allocation8 + $0x188] sm:$0xf]
        %v8976 = vld [vmem:[#allocation8 + $0x18c] sm:$0xf]
        %v8977 = vld [vmem:[#allocation8 + $0x190] sm:$0xf]
        %v8978 = vld [vmem:[#allocation8 + $0x194] sm:$0xf]
        %v8979 = vld [vmem:[#allocation8 + $0x198] sm:$0xf]
        %v8980 = vld [vmem:[#allocation8 + $0x19c] sm:$0xf]
        %v8981 = vld [vmem:[#allocation8 + $0x1a0] sm:$0xf]
        %v8982 = vld [vmem:[#allocation8 + $0x1a4] sm:$0xf]
        %v8983 = vld [vmem:[#allocation8 + $0x1a8] sm:$0xf]
        %v8984 = vld [vmem:[#allocation8 + $0x1ac] sm:$0xf]
        %v8985 = vld [vmem:[#allocation8 + $0x1b0] sm:$0xf]
        %v8986 = vld [vmem:[#allocation8 + $0x1b4] sm:$0xf]
        %v8987 = vld [vmem:[#allocation8 + $0x1b8] sm:$0xf]
        %v8988 = vld [vmem:[#allocation8 + $0x1bc] sm:$0xf]
        %v8989 = vld [vmem:[#allocation8 + $0x1c0] sm:$0xf]
        %v8990 = vld [vmem:[#allocation8 + $0x1c4] sm:$0xf]
        %v8991 = vld [vmem:[#allocation8 + $0x1c8] sm:$0xf]
        %v8992 = vld [vmem:[#allocation8 + $0x1cc] sm:$0xf]
        %v8993 = vld [vmem:[#allocation8 + $0x1d0] sm:$0xf]
        %v8994 = vld [vmem:[#allocation8 + $0x1d4] sm:$0xf]
        %v8995 = vld [vmem:[#allocation8 + $0x1d8] sm:$0xf]
        %v8996 = vld [vmem:[#allocation8 + $0x1dc] sm:$0xf]
        %v8997 = vld [vmem:[#allocation8 + $0x1e0] sm:$0xf]
        %v8998 = vld [vmem:[#allocation8 + $0x1e4] sm:$0xf]
        %v8999 = vld [vmem:[#allocation8 + $0x1e8] sm:$0xf]
        %v9000 = vld [vmem:[#allocation8 + $0x1ec] sm:$0xf]
        %v9001 = vld [vmem:[#allocation8 + $0x1f0] sm:$0xf]
        %v9002 = vld [vmem:[#allocation8 + $0x1f4] sm:$0xf]
        %v9003 = vld [vmem:[#allocation8 + $0x1f8] sm:$0xf]
        %v9004 = vld [vmem:[#allocation8 + $0x1fc] sm:$0xf]
        %v9005 = vld [vmem:[#allocation8 + $0x200] sm:$0xf]
        %v9006 = vld [vmem:[#allocation8 + $0x204] sm:$0xf]
        %v9007 = vld [vmem:[#allocation8 + $0x208] sm:$0xf]
        %v9008 = vld [vmem:[#allocation8 + $0x20c] sm:$0xf]
        %v9009 = vld [vmem:[#allocation8 + $0x210] sm:$0xf]
        %v9010 = vld [vmem:[#allocation8 + $0x214] sm:$0xf]
        %v9011 = vld [vmem:[#allocation8 + $0x218] sm:$0xf]
        %v9012 = vld [vmem:[#allocation8 + $0x21c] sm:$0xf]
        %v9013 = vld [vmem:[#allocation8 + $0x220] sm:$0xf]
        %v9014 = vld [vmem:[#allocation8 + $0x224] sm:$0xf]
        %v9015 = vld [vmem:[#allocation8 + $0x228] sm:$0xf]
        %v9016 = vld [vmem:[#allocation8 + $0x22c] sm:$0xf]
        %v9017 = vld [vmem:[#allocation8 + $0x230] sm:$0xf]
        %v9018 = vld [vmem:[#allocation8 + $0x234] sm:$0xf]
        %v9019 = vld [vmem:[#allocation8 + $0x238] sm:$0xf]
        %v9020 = vld [vmem:[#allocation8 + $0x23c] sm:$0xf]
        %v9069 = vunpack.c.l.b16 %v8973
        %v9070 = vunpack.c.l.b16 %v8974
        %v9071 = vunpack.c.l.b16 %v8975
        %v9072 = vunpack.c.l.b16 %v8976
        %v9073 = vunpack.c.l.b16 %v8977
        %v9074 = vunpack.c.l.b16 %v8978
        %v9075 = vunpack.c.l.b16 %v8979
        %v9076 = vunpack.c.l.b16 %v8980
        %v9077 = vunpack.c.l.b16 %v8981
        %v9078 = vunpack.c.l.b16 %v8982
        %v9079 = vunpack.c.l.b16 %v8983
        %v9080 = vunpack.c.l.b16 %v8984
        %v9081 = vunpack.c.l.b16 %v8985
        %v9082 = vunpack.c.l.b16 %v8986
        %v9083 = vunpack.c.l.b16 %v8987
        %v9084 = vunpack.c.l.b16 %v8988
        %v9085 = vunpack.c.l.b16 %v8989
        %v9086 = vunpack.c.l.b16 %v8990
        %v9087 = vunpack.c.l.b16 %v8991
        %v9088 = vunpack.c.l.b16 %v8992
        %v9089 = vunpack.c.l.b16 %v8993
        %v9090 = vunpack.c.l.b16 %v8994
        %v9091 = vunpack.c.l.b16 %v8995
        %v9092 = vunpack.c.l.b16 %v8996
        %v9093 = vunpack.c.l.b16 %v8997
        %v9094 = vunpack.c.l.b16 %v8998
        %v9095 = vunpack.c.l.b16 %v8999
        %v9096 = vunpack.c.l.b16 %v9000
        %v9097 = vunpack.c.l.b16 %v9001
        %v9098 = vunpack.c.l.b16 %v9002
        %v9099 = vunpack.c.l.b16 %v9003
        %v9100 = vunpack.c.l.b16 %v9004
        %v9101 = vunpack.c.l.b16 %v9005
        %v9102 = vunpack.c.l.b16 %v9006
        %v9103 = vunpack.c.l.b16 %v9007
        %v9104 = vunpack.c.l.b16 %v9008
        %v9105 = vunpack.c.l.b16 %v9009
        %v9106 = vunpack.c.l.b16 %v9010
        %v9107 = vunpack.c.l.b16 %v9011
        %v9108 = vunpack.c.l.b16 %v9012
        %v9109 = vunpack.c.l.b16 %v9013
        %v9110 = vunpack.c.l.b16 %v9014
        %v9111 = vunpack.c.l.b16 %v9015
        %v9112 = vunpack.c.l.b16 %v9016
        %v9113 = vunpack.c.l.b16 %v9017
        %v9114 = vunpack.c.l.b16 %v9018
        %v9115 = vunpack.c.l.b16 %v9019
        %v9116 = vunpack.c.l.b16 %v9020
        %v9117 = vpack.c.b16 %v9070, %v9069
        %v9118 = vpack.c.b16 %v9072, %v9071
        %v9119 = vpack.c.b16 %v9074, %v9073
        %v9120 = vpack.c.b16 %v9076, %v9075
        %v9121 = vpack.c.b16 %v9078, %v9077
        %v9122 = vpack.c.b16 %v9080, %v9079
        %v9123 = vpack.c.b16 %v9082, %v9081
        %v9124 = vpack.c.b16 %v9084, %v9083
        %v9125 = vpack.c.b16 %v9086, %v9085
        %v9126 = vpack.c.b16 %v9088, %v9087
        %v9127 = vpack.c.b16 %v9090, %v9089
        %v9128 = vpack.c.b16 %v9092, %v9091
        %v9129 = vpack.c.b16 %v9094, %v9093
        %v9130 = vpack.c.b16 %v9096, %v9095
        %v9131 = vpack.c.b16 %v9098, %v9097
        %v9132 = vpack.c.b16 %v9100, %v9099
        %v9133 = vpack.c.b16 %v9102, %v9101
        %v9134 = vpack.c.b16 %v9104, %v9103
        %v9135 = vpack.c.b16 %v9106, %v9105
        %v9136 = vpack.c.b16 %v9108, %v9107
        %v9137 = vpack.c.b16 %v9110, %v9109
        %v9138 = vpack.c.b16 %v9112, %v9111
        %v9139 = vpack.c.b16 %v9114, %v9113
        %v9140 = vpack.c.b16 %v9116, %v9115
        %9165 = vmatprep.subr.bf16.mxu0 0
        %9166 = vmatpush1.bf16.msra.mxu0 %v9117
        %9167 = vmatprep.subr.bf16.mxu0 0
        %9168 = vmatpush1.bf16.msra.mxu0 %v9118
        %9169 = vmatprep.subr.bf16.mxu0 0
        %9170 = vmatpush1.bf16.msra.mxu0 %v9119
        %9171 = vmatprep.subr.bf16.mxu0 0
        %9172 = vmatpush1.bf16.msra.mxu0 %v9120
        %9173 = vmatprep.subr.bf16.mxu0 0
        %9174 = vmatpush1.bf16.msra.mxu0 %v9121
        %9175 = vmatprep.subr.bf16.mxu0 0
        %9176 = vmatpush1.bf16.msra.mxu0 %v9122
        %9177 = vmatprep.subr.bf16.mxu0 0
        %9178 = vmatpush1.bf16.msra.mxu0 %v9123
        %9179 = vmatprep.subr.bf16.mxu0 0
        %9180 = vmatpush1.bf16.msra.mxu0 %v9124
        %9181 = vmatprep.subr.bf16.mxu0 0
        %9182 = vmatpush1.bf16.msra.mxu0 %v9125
        %9183 = vmatprep.subr.bf16.mxu0 0
        %9184 = vmatpush1.bf16.msra.mxu0 %v9126
        %9185 = vmatprep.subr.bf16.mxu0 0
        %9186 = vmatpush1.bf16.msra.mxu0 %v9127
        %9187 = vmatprep.subr.bf16.mxu0 0
        %9188 = vmatpush1.bf16.msra.mxu0 %v9128
        %9189 = vmatprep.subr.bf16.mxu0 0
        %9190 = vmatpush1.bf16.msra.mxu0 %v9129
        %9191 = vmatprep.subr.bf16.mxu0 0
        %9192 = vmatpush1.bf16.msra.mxu0 %v9130
        %9193 = vmatprep.subr.bf16.mxu0 0
        %9194 = vmatpush1.bf16.msra.mxu0 %v9131
        %9195 = vmatprep.subr.bf16.mxu0 0
        %9196 = vmatpush1.bf16.msra.mxu0 %v9132
        %9197 = vmatprep.mubr.bf16.mxu0 %v8877
        %9198 = vmatmul.mubr.bf16.gmra.mrb[0].mxu0 %v8781
        %v9199 = vpop.f32.mrb[0].mxu0
        %v9200 = vadd.f32 0.0, %v9199
        %v9201 = vpop.f32.mrb[0].mxu0
        %v9202 = vpop.f32.mrb[0].mxu0
        %v9203 = vadd.f32 0.0, %v9202
        %v9204 = vpop.f32.mrb[0].mxu0
        %9205 = vmatprep.mubr.bf16.mxu0 %v8878
        %9206 = vmatmul.mubr.bf16.gmra.mrb[0].mxu0 %v8782
        %v9207 = vpop.f32.mrb[0].mxu0
        %v9208 = vadd.f32 0.0, %v9207
        %v9209 = vpop.f32.mrb[0].mxu0
        %v9210 = vpop.f32.mrb[0].mxu0
        %v9211 = vadd.f32 0.0, %v9210
        %v9212 = vpop.f32.mrb[0].mxu0
        %9213 = vmatprep.mubr.bf16.mxu0 %v8879
        %9214 = vmatmul.mubr.bf16.gmra.mrb[0].mxu0 %v8783
        %v9215 = vpop.f32.mrb[0].mxu0
        %v9216 = vadd.f32 0.0, %v9215
        %v9217 = vpop.f32.mrb[0].mxu0
        %v9218 = vpop.f32.mrb[0].mxu0
        %v9219 = vadd.f32 0.0, %v9218
        %v9220 = vpop.f32.mrb[0].mxu0
        %9221 = vmatprep.mubr.bf16.mxu0 %v8880
        %9222 = vmatmul.mubr.bf16.gmra.mrb[0].mxu0 %v8784
        %v9223 = vpop.f32.mrb[0].mxu0
        %v9224 = vadd.f32 0.0, %v9223
        %v9225 = vpop.f32.mrb[0].mxu0
        %v9226 = vpop.f32.mrb[0].mxu0
        %v9227 = vadd.f32 0.0, %v9226
        %v9228 = vpop.f32.mrb[0].mxu0
        %9229 = vmatprep.mubr.bf16.mxu0 %v8881
        %9230 = vmatmul.mubr.bf16.gmra.mrb[0].mxu0 %v8785
        %v9231 = vpop.f32.mrb[0].mxu0
        %v9232 = vadd.f32 0.0, %v9231
        %v9233 = vpop.f32.mrb[0].mxu0
        %v9234 = vpop.f32.mrb[0].mxu0
        %v9235 = vadd.f32 0.0, %v9234
        %v9236 = vpop.f32.mrb[0].mxu0
        %9237 = vmatprep.mubr.bf16.mxu0 %v8882
        %9238 = vmatmul.mubr.bf16.gmra.mrb[0].mxu0 %v8786
        %v9239 = vpop.f32.mrb[0].mxu0
        %v9240 = vadd.f32 0.0, %v9239
        %v9241 = vpop.f32.mrb[0].mxu0
        %v9242 = vpop.f32.mrb[0].mxu0
        %v9243 = vadd.f32 0.0, %v9242
        %v9244 = vpop.f32.mrb[0].mxu0
        %9245 = vmatprep.mubr.bf16.mxu0 %v8883
        %9246 = vmatmul.mubr.bf16.gmra.mrb[0].mxu0 %v8787
        %v9247 = vpop.f32.mrb[0].mxu0
        %v9248 = vadd.f32 0.0, %v9247
        %v9249 = vpop.f32.mrb[0].mxu0
        %v9250 = vpop.f32.mrb[0].mxu0
        %v9251 = vadd.f32 0.0, %v9250
        %v9252 = vpop.f32.mrb[0].mxu0
        %9253 = vmatprep.mubr.bf16.mxu0 %v8884
        %9254 = vmatmul.mubr.bf16.gmra.mrb[0].mxu0 %v8788
        %v9255 = vpop.f32.mrb[0].mxu0
        %v9256 = vadd.f32 0.0, %v9255
        %v9257 = vpop.f32.mrb[0].mxu0
        %v9258 = vpop.f32.mrb[0].mxu0
        %v9259 = vadd.f32 0.0, %v9258
        %v9260 = vpop.f32.mrb[0].mxu0
        %9261 = vmatprep.mubr.bf16.mxu0 %v8885
        %9262 = vmatmul.mubr.bf16.gmra.mrb[0].mxu0 %v8789
        %v9263 = vpop.f32.mrb[0].mxu0
        %v9264 = vadd.f32 0.0, %v9263
        %v9265 = vpop.f32.mrb[0].mxu0
        %v9266 = vpop.f32.mrb[0].mxu0
        %v9267 = vadd.f32 0.0, %v9266
        %v9268 = vpop.f32.mrb[0].mxu0
        %9269 = vmatprep.mubr.bf16.mxu0 %v8886
        %9270 = vmatmul.mubr.bf16.gmra.mrb[0].mxu0 %v8790
        %v9271 = vpop.f32.mrb[0].mxu0
        %v9272 = vadd.f32 0.0, %v9271
        %v9273 = vpop.f32.mrb[0].mxu0
        %v9274 = vpop.f32.mrb[0].mxu0
        %v9275 = vadd.f32 0.0, %v9274
        %v9276 = vpop.f32.mrb[0].mxu0
        %9277 = vmatprep.mubr.bf16.mxu0 %v8887
        %9278 = vmatmul.mubr.bf16.gmra.mrb[0].mxu0 %v8791
        %v9279 = vpop.f32.mrb[0].mxu0
        %v9280 = vadd.f32 0.0, %v9279
        %v9281 = vpop.f32.mrb[0].mxu0
        %v9282 = vpop.f32.mrb[0].mxu0
        %v9283 = vadd.f32 0.0, %v9282
        %v9284 = vpop.f32.mrb[0].mxu0
        %9285 = vmatprep.mubr.bf16.mxu0 %v8888
        %9286 = vmatmul.mubr.bf16.gmra.mrb[0].mxu0 %v8792
        %v9287 = vpop.f32.mrb[0].mxu0
        %v9288 = vadd.f32 0.0, %v9287
        %v9289 = vpop.f32.mrb[0].mxu0
        %v9290 = vpop.f32.mrb[0].mxu0
        %v9291 = vadd.f32 0.0, %v9290
        %v9292 = vpop.f32.mrb[0].mxu0
        %9293 = vmatprep.mubr.bf16.mxu0 %v8889
        %9294 = vmatmul.mubr.bf16.gmra.mrb[0].mxu0 %v8793
        %v9295 = vpop.f32.mrb[0].mxu0
        %v9296 = vadd.f32 0.0, %v9295
        %v9297 = vpop.f32.mrb[0].mxu0
        %v9298 = vpop.f32.mrb[0].mxu0
        %v9299 = vadd.f32 0.0, %v9298
        %v9300 = vpop.f32.mrb[0].mxu0
        %9301 = vmatprep.mubr.bf16.mxu0 %v8890
        %9302 = vmatmul.mubr.bf16.gmra.mrb[0].mxu0 %v8794
        %v9303 = vpop.f32.mrb[0].mxu0
        %v9304 = vadd.f32 0.0, %v9303
        %v9305 = vpop.f32.mrb[0].mxu0
        %v9306 = vpop.f32.mrb[0].mxu0
        %v9307 = vadd.f32 0.0, %v9306
        %v9308 = vpop.f32.mrb[0].mxu0
        %9309 = vmatprep.mubr.bf16.mxu0 %v8891
        %9310 = vmatmul.mubr.bf16.gmra.mrb[0].mxu0 %v8795
        %v9311 = vpop.f32.mrb[0].mxu0
        %v9312 = vadd.f32 0.0, %v9311
        %v9313 = vpop.f32.mrb[0].mxu0
        %v9314 = vpop.f32.mrb[0].mxu0
        %v9315 = vadd.f32 0.0, %v9314
        %v9316 = vpop.f32.mrb[0].mxu0
        %9317 = vmatprep.mubr.bf16.mxu0 %v8892
        %9318 = vmatmul.mubr.bf16.gmra.mrb[0].mxu0 %v8796
        %v9319 = vpop.f32.mrb[0].mxu0
        %v9320 = vadd.f32 0.0, %v9319
        %v9321 = vpop.f32.mrb[0].mxu0
        %v9322 = vpop.f32.mrb[0].mxu0
        %v9323 = vadd.f32 0.0, %v9322
        %v9324 = vpop.f32.mrb[0].mxu0
        %9325 = vdwg.mxu0
        %9326 = vmatprep.subr.bf16.mxu0 0
        %9327 = vmatpush1.bf16.msra.mxu0 %v9133
        %9328 = vmatprep.subr.bf16.mxu0 0
        %9329 = vmatpush1.bf16.msra.mxu0 %v9134
        %9330 = vmatprep.subr.bf16.mxu0 0
        %9331 = vmatpush1.bf16.msra.mxu0 %v9135
        %9332 = vmatprep.subr.bf16.mxu0 0
        %9333 = vmatpush1.bf16.msra.mxu0 %v9136
        %9334 = vmatprep.subr.bf16.mxu0 0
        %9335 = vmatpush1.bf16.msra.mxu0 %v9137
        %9336 = vmatprep.subr.bf16.mxu0 0
        %9337 = vmatpush1.bf16.msra.mxu0 %v9138
        %9338 = vmatprep.subr.bf16.mxu0 0
        %9339 = vmatpush1.bf16.msra.mxu0 %v9139
        %9340 = vmatprep.subr.bf16.mxu0 0
        %9341 = vmatpush1.bf16.msra.mxu0 %v9140
        %9342 = vmatprep.subr.bf16.mxu0 0
        %9343 = vmatpush1.bf16.msra.mxu0 0
        %9344 = vmatprep.subr.bf16.mxu0 0
        %9345 = vmatpush1.bf16.msra.mxu0 0
        %9346 = vmatprep.subr.bf16.mxu0 0
        %9347 = vmatpush1.bf16.msra.mxu0 0
        %9348 = vmatprep.subr.bf16.mxu0 0
        %9349 = vmatpush1.bf16.msra.mxu0 0
        %9350 = vmatprep.subr.bf16.mxu0 0
        %9351 = vmatpush1.bf16.msra.mxu0 0
        %9352 = vmatprep.subr.bf16.mxu0 0
        %9353 = vmatpush1.bf16.msra.mxu0 0
        %9354 = vmatprep.subr.bf16.mxu0 0
        %9355 = vmatpush1.bf16.msra.mxu0 0
        %9356 = vmatprep.subr.bf16.mxu0 0
        %9357 = vmatpush1.bf16.msra.mxu0 0
        %9358 = vmatprep.mubr.bf16.mxu0 0
        %9359 = vmatmul.mubr.bf16.gmra.mrb[0].mxu0 %v8941
        %v9360 = vpop.f32.mrb[0].mxu0
        %v9361 = vadd.f32 %v9200, %v9360
        %v9362 = vpop.f32.mrb[0].mxu0
        %v9363 = vpop.f32.mrb[0].mxu0
        %v9364 = vadd.f32 %v9203, %v9363
        %v9365 = vpop.f32.mrb[0].mxu0
        %9366 = vmatprep.mubr.bf16.mxu0 0
        %9367 = vmatmul.mubr.bf16.gmra.mrb[0].mxu0 %v8942
        %v9368 = vpop.f32.mrb[0].mxu0
        %v9369 = vadd.f32 %v9208, %v9368
        %v9370 = vpop.f32.mrb[0].mxu0
        %v9371 = vpop.f32.mrb[0].mxu0
        %v9372 = vadd.f32 %v9211, %v9371
        %v9373 = vpop.f32.mrb[0].mxu0
        %9374 = vmatprep.mubr.bf16.mxu0 0
        %9375 = vmatmul.mubr.bf16.gmra.mrb[0].mxu0 %v8943
        %v9376 = vpop.f32.mrb[0].mxu0
        %v9377 = vadd.f32 %v9216, %v9376
        %v9378 = vpop.f32.mrb[0].mxu0
        %v9379 = vpop.f32.mrb[0].mxu0
        %v9380 = vadd.f32 %v9219, %v9379
        %v9381 = vpop.f32.mrb[0].mxu0
        %9382 = vmatprep.mubr.bf16.mxu0 0
        %9383 = vmatmul.mubr.bf16.gmra.mrb[0].mxu0 %v8944
        %v9384 = vpop.f32.mrb[0].mxu0
        %v9385 = vadd.f32 %v9224, %v9384
        %v9386 = vpop.f32.mrb[0].mxu0
        %v9387 = vpop.f32.mrb[0].mxu0
        %v9388 = vadd.f32 %v9227, %v9387
        %v9389 = vpop.f32.mrb[0].mxu0
        %9390 = vmatprep.mubr.bf16.mxu0 0
        %9391 = vmatmul.mubr.bf16.gmra.mrb[0].mxu0 %v8945
        %v9392 = vpop.f32.mrb[0].mxu0
        %v9393 = vadd.f32 %v9232, %v9392
        %v9394 = vpop.f32.mrb[0].mxu0
        %v9395 = vpop.f32.mrb[0].mxu0
        %v9396 = vadd.f32 %v9235, %v9395
        %v9397 = vpop.f32.mrb[0].mxu0
        %9398 = vmatprep.mubr.bf16.mxu0 0
        %9399 = vmatmul.mubr.bf16.gmra.mrb[0].mxu0 %v8946
        %v9400 = vpop.f32.mrb[0].mxu0
        %v9401 = vadd.f32 %v9240, %v9400
        %v9402 = vpop.f32.mrb[0].mxu0
        %v9403 = vpop.f32.mrb[0].mxu0
        %v9404 = vadd.f32 %v9243, %v9403
        %v9405 = vpop.f32.mrb[0].mxu0
        %9406 = vmatprep.mubr.bf16.mxu0 0
        %9407 = vmatmul.mubr.bf16.gmra.mrb[0].mxu0 %v8947
        %v9408 = vpop.f32.mrb[0].mxu0
        %v9409 = vadd.f32 %v9248, %v9408
        %v9410 = vpop.f32.mrb[0].mxu0
        %v9411 = vpop.f32.mrb[0].mxu0
        %v9412 = vadd.f32 %v9251, %v9411
        %v9413 = vpop.f32.mrb[0].mxu0
        %9414 = vmatprep.mubr.bf16.mxu0 0
        %9415 = vmatmul.mubr.bf16.gmra.mrb[0].mxu0 %v8948
        %v9416 = vpop.f32.mrb[0].mxu0
        %v9417 = vadd.f32 %v9256, %v9416
        %v9418 = vpop.f32.mrb[0].mxu0
        %v9419 = vpop.f32.mrb[0].mxu0
        %v9420 = vadd.f32 %v9259, %v9419
        %v9421 = vpop.f32.mrb[0].mxu0
        %9422 = vmatprep.mubr.bf16.mxu0 0
        %9423 = vmatmul.mubr.bf16.gmra.mrb[0].mxu0 %v8949
        %v9424 = vpop.f32.mrb[0].mxu0
        %v9425 = vadd.f32 %v9264, %v9424
        %v9426 = vpop.f32.mrb[0].mxu0
        %v9427 = vpop.f32.mrb[0].mxu0
        %v9428 = vadd.f32 %v9267, %v9427
        %v9429 = vpop.f32.mrb[0].mxu0
        %9430 = vmatprep.mubr.bf16.mxu0 0
        %9431 = vmatmul.mubr.bf16.gmra.mrb[0].mxu0 %v8950
        %v9432 = vpop.f32.mrb[0].mxu0
        %v9433 = vadd.f32 %v9272, %v9432
        %v9434 = vpop.f32.mrb[0].mxu0
        %v9435 = vpop.f32.mrb[0].mxu0
        %v9436 = vadd.f32 %v9275, %v9435
        %v9437 = vpop.f32.mrb[0].mxu0
        %9438 = vmatprep.mubr.bf16.mxu0 0
        %9439 = vmatmul.mubr.bf16.gmra.mrb[0].mxu0 %v8951
        %v9440 = vpop.f32.mrb[0].mxu0
        %v9441 = vadd.f32 %v9280, %v9440
        %v9442 = vpop.f32.mrb[0].mxu0
        %v9443 = vpop.f32.mrb[0].mxu0
        %v9444 = vadd.f32 %v9283, %v9443
        %v9445 = vpop.f32.mrb[0].mxu0
        %9446 = vmatprep.mubr.bf16.mxu0 0
        %9447 = vmatmul.mubr.bf16.gmra.mrb[0].mxu0 %v8952
        %v9448 = vpop.f32.mrb[0].mxu0
        %v9449 = vadd.f32 %v9288, %v9448
        %v9450 = vpop.f32.mrb[0].mxu0
        %v9451 = vpop.f32.mrb[0].mxu0
        %v9452 = vadd.f32 %v9291, %v9451
        %v9453 = vpop.f32.mrb[0].mxu0
        %9454 = vmatprep.mubr.bf16.mxu0 0
        %9455 = vmatmul.mubr.bf16.gmra.mrb[0].mxu0 %v8953
        %v9456 = vpop.f32.mrb[0].mxu0
        %v9457 = vadd.f32 %v9296, %v9456
        %v9458 = vpop.f32.mrb[0].mxu0
        %v9459 = vpop.f32.mrb[0].mxu0
        %v9460 = vadd.f32 %v9299, %v9459
        %v9461 = vpop.f32.mrb[0].mxu0
        %9462 = vmatprep.mubr.bf16.mxu0 0
        %9463 = vmatmul.mubr.bf16.gmra.mrb[0].mxu0 %v8954
        %v9464 = vpop.f32.mrb[0].mxu0
        %v9465 = vadd.f32 %v9304, %v9464
        %v9466 = vpop.f32.mrb[0].mxu0
        %v9467 = vpop.f32.mrb[0].mxu0
        %v9468 = vadd.f32 %v9307, %v9467
        %v9469 = vpop.f32.mrb[0].mxu0
        %9470 = vmatprep.mubr.bf16.mxu0 0
        %9471 = vmatmul.mubr.bf16.gmra.mrb[0].mxu0 %v8955
        %v9472 = vpop.f32.mrb[0].mxu0
        %v9473 = vadd.f32 %v9312, %v9472
        %v9474 = vpop.f32.mrb[0].mxu0
        %v9475 = vpop.f32.mrb[0].mxu0
        %v9476 = vadd.f32 %v9315, %v9475
        %v9477 = vpop.f32.mrb[0].mxu0
        %9478 = vmatprep.mubr.bf16.mxu0 0
        %9479 = vmatmul.mubr.bf16.gmra.mrb[0].mxu0 %v8956
        %v9480 = vpop.f32.mrb[0].mxu0
        %v9481 = vadd.f32 %v9320, %v9480
        %v9482 = vpop.f32.mrb[0].mxu0
        %v9483 = vpop.f32.mrb[0].mxu0
        %v9484 = vadd.f32 %v9323, %v9483
        %v9485 = vpop.f32.mrb[0].mxu0
        %9486 = vdwg.mxu0
        %v9487 = vadd.f32 %v7983, %v9361
        %v9488 = vadd.f32 %v7986, %v9364
        %v9489 = vadd.f32 %v7991, %v9369
        %v9490 = vadd.f32 %v7994, %v9372
        %v9491 = vadd.f32 %v7999, %v9377
        %v9492 = vadd.f32 %v8002, %v9380
        %v9493 = vadd.f32 %v8007, %v9385
        %v9494 = vadd.f32 %v8010, %v9388
        %v9495 = vadd.f32 %v8015, %v9393
        %v9496 = vadd.f32 %v8018, %v9396
        %v9497 = vadd.f32 %v8023, %v9401
        %v9498 = vadd.f32 %v8026, %v9404
        %v9499 = vadd.f32 %v8031, %v9409
        %v9500 = vadd.f32 %v8034, %v9412
        %v9501 = vadd.f32 %v8039, %v9417
        %v9502 = vadd.f32 %v8042, %v9420
        %v9503 = vadd.f32 %v8047, %v9425
        %v9504 = vadd.f32 %v8050, %v9428
        %v9505 = vadd.f32 %v8055, %v9433
        %v9506 = vadd.f32 %v8058, %v9436
        %v9507 = vadd.f32 %v8063, %v9441
        %v9508 = vadd.f32 %v8066, %v9444
        %v9509 = vadd.f32 %v8071, %v9449
        %v9510 = vadd.f32 %v8074, %v9452
        %v9511 = vadd.f32 %v8079, %v9457
        %v9512 = vadd.f32 %v8082, %v9460
        %v9513 = vadd.f32 %v8087, %v9465
        %v9514 = vadd.f32 %v8090, %v9468
        %v9515 = vadd.f32 %v8095, %v9473
        %v9516 = vadd.f32 %v8098, %v9476
        %v9517 = vadd.f32 %v8103, %v9481
        %v9518 = vadd.f32 %v8106, %v9484
        %v9520 = vlaneseq
        %v9521 = vshrl.u32 %v9520, 7
        %v9522 = vsub.s32 0, %v9521
        %v9523 = vrot.slane %v5352, %v9522
        %v9525 = vadd.f32 %v9487, %v9523
        %v9526 = vadd.f32 %v9488, %v9523
        %v9527 = vadd.f32 %v9489, %v9523
        %v9528 = vadd.f32 %v9490, %v9523
        %v9529 = vadd.f32 %v9491, %v9523
        %v9530 = vadd.f32 %v9492, %v9523
        %v9531 = vadd.f32 %v9493, %v9523
        %v9532 = vadd.f32 %v9494, %v9523
        %v9533 = vadd.f32 %v9495, %v9523
        %v9534 = vadd.f32 %v9496, %v9523
        %v9535 = vadd.f32 %v9497, %v9523
        %v9536 = vadd.f32 %v9498, %v9523
        %v9537 = vadd.f32 %v9499, %v9523
        %v9538 = vadd.f32 %v9500, %v9523
        %v9539 = vadd.f32 %v9501, %v9523
        %v9540 = vadd.f32 %v9502, %v9523
        %v9541 = vadd.f32 %v9503, %v9523
        %v9542 = vadd.f32 %v9504, %v9523
        %v9543 = vadd.f32 %v9505, %v9523
        %v9544 = vadd.f32 %v9506, %v9523
        %v9545 = vadd.f32 %v9507, %v9523
        %v9546 = vadd.f32 %v9508, %v9523
        %v9547 = vadd.f32 %v9509, %v9523
        %v9548 = vadd.f32 %v9510, %v9523
        %v9549 = vadd.f32 %v9511, %v9523
        %v9550 = vadd.f32 %v9512, %v9523
        %v9551 = vadd.f32 %v9513, %v9523
        %v9552 = vadd.f32 %v9514, %v9523
        %v9553 = vadd.f32 %v9515, %v9523
        %v9554 = vadd.f32 %v9516, %v9523
        %v9555 = vadd.f32 %v9517, %v9523
        %v9556 = vadd.f32 %v9518, %v9523
        %v9557 = vld [vmem:[%s237] sm:$0xff]
        %v9558 = vld [vmem:[%s237 + $0x8] sm:$0xff]
        %v9559 = vld [vmem:[%s237 + $0x10] sm:$0xff]
        %v9560 = vld [vmem:[%s237 + $0x18] sm:$0xff]
        %v9561 = vld [vmem:[%s237 + $0x20] sm:$0xff]
        %v9562 = vld [vmem:[%s237 + $0x28] sm:$0xff]
        %v9563 = vld [vmem:[%s237 + $0x30] sm:$0xff]
        %v9564 = vld [vmem:[%s237 + $0x38] sm:$0xff]
        %v9565 = vld [vmem:[%s237 + $0x40] sm:$0xff]
        %v9566 = vld [vmem:[%s237 + $0x48] sm:$0xff]
        %v9567 = vld [vmem:[%s237 + $0x50] sm:$0xff]
        %v9568 = vld [vmem:[%s237 + $0x58] sm:$0xff]
        %v9569 = vld [vmem:[%s237 + $0x60] sm:$0xff]
        %v9570 = vld [vmem:[%s237 + $0x68] sm:$0xff]
        %v9571 = vld [vmem:[%s237 + $0x70] sm:$0xff]
        %v9572 = vld [vmem:[%s237 + $0x78] sm:$0xff]
        %v9573 = vld [vmem:[%s237 + $0x80] sm:$0xff]
        %v9574 = vld [vmem:[%s237 + $0x88] sm:$0xff]
        %v9575 = vld [vmem:[%s237 + $0x90] sm:$0xff]
        %v9576 = vld [vmem:[%s237 + $0x98] sm:$0xff]
        %v9577 = vld [vmem:[%s237 + $0xa0] sm:$0xff]
        %v9578 = vld [vmem:[%s237 + $0xa8] sm:$0xff]
        %v9579 = vld [vmem:[%s237 + $0xb0] sm:$0xff]
        %v9580 = vld [vmem:[%s237 + $0xb8] sm:$0xff]
        %v9581 = vld [vmem:[%s237 + $0xc0] sm:$0xff]
        %v9582 = vld [vmem:[%s237 + $0xc8] sm:$0xff]
        %v9583 = vld [vmem:[%s237 + $0xd0] sm:$0xff]
        %v9584 = vld [vmem:[%s237 + $0xd8] sm:$0xff]
        %v9585 = vld [vmem:[%s237 + $0xe0] sm:$0xff]
        %v9586 = vld [vmem:[%s237 + $0xe8] sm:$0xff]
        %v9587 = vld [vmem:[%s237 + $0xf0] sm:$0xff]
        %v9588 = vld [vmem:[%s237 + $0xf8] sm:$0xff]
        %v9589 = vadd.f32 %v9557, %v9525
        %v9590 = vadd.f32 %v9558, %v9526
        %v9591 = vadd.f32 %v9559, %v9527
        %v9592 = vadd.f32 %v9560, %v9528
        %v9593 = vadd.f32 %v9561, %v9529
        %v9594 = vadd.f32 %v9562, %v9530
        %v9595 = vadd.f32 %v9563, %v9531
        %v9596 = vadd.f32 %v9564, %v9532
        %v9597 = vadd.f32 %v9565, %v9533
        %v9598 = vadd.f32 %v9566, %v9534
        %v9599 = vadd.f32 %v9567, %v9535
        %v9600 = vadd.f32 %v9568, %v9536
        %v9601 = vadd.f32 %v9569, %v9537
        %v9602 = vadd.f32 %v9570, %v9538
        %v9603 = vadd.f32 %v9571, %v9539
        %v9604 = vadd.f32 %v9572, %v9540
        %v9605 = vadd.f32 %v9573, %v9541
        %v9606 = vadd.f32 %v9574, %v9542
        %v9607 = vadd.f32 %v9575, %v9543
        %v9608 = vadd.f32 %v9576, %v9544
        %v9609 = vadd.f32 %v9577, %v9545
        %v9610 = vadd.f32 %v9578, %v9546
        %v9611 = vadd.f32 %v9579, %v9547
        %v9612 = vadd.f32 %v9580, %v9548
        %v9613 = vadd.f32 %v9581, %v9549
        %v9614 = vadd.f32 %v9582, %v9550
        %v9615 = vadd.f32 %v9583, %v9551
        %v9616 = vadd.f32 %v9584, %v9552
        %v9617 = vadd.f32 %v9585, %v9553
        %v9618 = vadd.f32 %v9586, %v9554
        %v9619 = vadd.f32 %v9587, %v9555
        %v9620 = vadd.f32 %v9588, %v9556
        %9621 = vst [vmem:[%s271] sm:$0xff] %v9589
        %9622 = vst [vmem:[%s271 + $0x8] sm:$0xff] %v9590
        %9623 = vst [vmem:[%s271 + $0x10] sm:$0xff] %v9591
        %9624 = vst [vmem:[%s271 + $0x18] sm:$0xff] %v9592
        %9625 = vst [vmem:[%s271 + $0x20] sm:$0xff] %v9593
        %9626 = vst [vmem:[%s271 + $0x28] sm:$0xff] %v9594
        %9627 = vst [vmem:[%s271 + $0x30] sm:$0xff] %v9595
        %9628 = vst [vmem:[%s271 + $0x38] sm:$0xff] %v9596
        %9629 = vst [vmem:[%s271 + $0x40] sm:$0xff] %v9597
        %9630 = vst [vmem:[%s271 + $0x48] sm:$0xff] %v9598
        %9631 = vst [vmem:[%s271 + $0x50] sm:$0xff] %v9599
        %9632 = vst [vmem:[%s271 + $0x58] sm:$0xff] %v9600
        %9633 = vst [vmem:[%s271 + $0x60] sm:$0xff] %v9601
        %9634 = vst [vmem:[%s271 + $0x68] sm:$0xff] %v9602
        %9635 = vst [vmem:[%s271 + $0x70] sm:$0xff] %v9603
        %9636 = vst [vmem:[%s271 + $0x78] sm:$0xff] %v9604
        %9637 = vst [vmem:[%s271 + $0x80] sm:$0xff] %v9605
        %9638 = vst [vmem:[%s271 + $0x88] sm:$0xff] %v9606
        %9639 = vst [vmem:[%s271 + $0x90] sm:$0xff] %v9607
        %9640 = vst [vmem:[%s271 + $0x98] sm:$0xff] %v9608
        %9641 = vst [vmem:[%s271 + $0xa0] sm:$0xff] %v9609
        %9642 = vst [vmem:[%s271 + $0xa8] sm:$0xff] %v9610
        %9643 = vst [vmem:[%s271 + $0xb0] sm:$0xff] %v9611
        %9644 = vst [vmem:[%s271 + $0xb8] sm:$0xff] %v9612
        %9645 = vst [vmem:[%s271 + $0xc0] sm:$0xff] %v9613
        %9646 = vst [vmem:[%s271 + $0xc8] sm:$0xff] %v9614
        %9647 = vst [vmem:[%s271 + $0xd0] sm:$0xff] %v9615
        %9648 = vst [vmem:[%s271 + $0xd8] sm:$0xff] %v9616
        %9649 = vst [vmem:[%s271 + $0xe0] sm:$0xff] %v9617
        %9650 = vst [vmem:[%s271 + $0xe8] sm:$0xff] %v9618
        %9651 = vst [vmem:[%s271 + $0xf0] sm:$0xff] %v9619
        %9652 = vst [vmem:[%s271 + $0xf8] sm:$0xff] %v9620
        %s9653 = sand.u32 %s141, 1
        %s9654 = scalar_lea.sflag [#allocation5], %s9653
        %s9655 = sand.u32 %s141, 1
        %s9656 = smul.addr %s9655, 256
        %s9657 = scalar_lea.vmem [#allocation9], %s9656
        // Predicated region
        $region53: #{tpu_custom_call.1} parent=39 // pred_check
          %p9658 = pneg %p151
        $region54: #{tpu_custom_call.1} parent=39 // pred_check_branch
          %9660 = sbr.rel (%p9658) target = $region56
        $region55: #{tpu_custom_call.1} parent=39 // pred_region
          %s9662 = ssub.s32 4096, 4096
          %9663 = vsyncadd %s9654, %s9662
          %s9664 = smul.addr %s23, 32
          %s9665 = smul.addr %s9664, 128
          %s9666 = scalar_lea.hbm %s5, %s9665
          %s9667 = sshll.u32 %s9657, 4
          %s9668 = int_to_ptr.vmem [resolvable:$true] %s9667
          %9673 = dma.vmem_to_hbm [thread:$0]  %s9668, 4096, %s9666, %s9654, 128, 128, 8
        $region56: #{tpu_custom_call.1} parent=39 // pred_fallthru
          _
      $region40: #{tpu_custom_call.1} parent=5 // pred_fallthru
        _
      %p9674 = scmp.le.s32.totalorder 2, %s18
      // Predicated region
      $region57: #{tpu_custom_call.1} parent=5 // pred_check
        %p9675 = pneg %p9674
      $region58: #{tpu_custom_call.1} parent=5 // pred_check_branch
        %9677 = sbr.rel (%p9675) target = $region60
      $region59: #{tpu_custom_call.1} parent=5 // pred_region
        %s9678 = ssub.s32 %s18, 2
        // Predicated region
        $region61: #{tpu_custom_call.1} parent=59 // pred_check
          %p9679 = pneg %p157
        $region62: #{tpu_custom_call.1} parent=59 // pred_check_branch
          %9681 = sbr.rel (%p9679) target = $region64
        $region63: #{tpu_custom_call.1} parent=59 // pred_region
          %s9682 = sand.u32 %s142, 1
          %s9683 = scalar_lea.sflag [#allocation5], %s9682
          %s9684 = sand.u32 %s142, 1
          %s9685 = smul.addr %s9684, 256
          %s9686 = scalar_lea.vmem [#allocation9], %s9685
          %9687 = dma.done %s9683, 4096
        $region64: #{tpu_custom_call.1} parent=59 // pred_fallthru
          _
      $region60: #{tpu_custom_call.1} parent=5 // pred_fallthru
        _
    $region6: #{tpu_custom_call.1} parent=1 // loop_footer
      %s22 = sadd.s32 1, %s18
    $region7: #{tpu_custom_call.1} parent=1 // loop_footer_branch
      %17 = sbr.rel target = $region3
    $region8: #{tpu_custom_call.1} parent=1 // loop_exit
      _
    %9688 = vsyncpa [#allocation4], 1
    %s9689 = scalar_lea.sflag [#allocation4], 1
    %9690 = vsyncpa %s9689, 1
    %9691 = vsyncpa [#allocation7], 1
    %9692 = vsyncpa [#allocation5], 1
    %s9693 = scalar_lea.sflag [#allocation5], 1
    %9694 = vsyncpa %s9693, 1

</llo_original>
